<compile_context>
chip_gen: v7x
topology: tpu7x:2x2x1
jax: 0.10.0
libtpu: 0.0.40
codegen_flags: <defaults>
</compile_context>

<pallas_src>
import math
import numpy as np
import jax
import jax.numpy as jnp
from jax import lax
from jax.experimental import pallas as pl
from jax.experimental.pallas import tpu as pltpu

F32 = jnp.float32
DIM = 320  # GraphUnet hidden width (matches the PyTorch default)


# ----------------------------------------------------------------------------
# helpers
# ----------------------------------------------------------------------------
def _sds(shape):
    return jax.ShapeDtypeStruct(shape, F32)


def _vmem_call(kernel, out_shape, *inputs):
    """pallas_call with whole-array VMEM blocks (no grid, no host padding)."""
    vspec = pl.BlockSpec(memory_space=pltpu.MemorySpace.VMEM)
    if isinstance(out_shape, (tuple, list)):
        out_specs = tuple(vspec for _ in out_shape)
    else:
        out_specs = vspec
    return pl.pallas_call(
        kernel,
        out_shape=out_shape,
        in_specs=[vspec] * len(inputs),
        out_specs=out_specs,
    )(*inputs)


def _fill_diag_one(x):
    ri = lax.broadcasted_iota(jnp.int32, x.shape, 0)
    ci = lax.broadcasted_iota(jnp.int32, x.shape, 1)
    return jnp.where(ri == ci, jnp.float32(1.0), x)


def _select_matrix(idx_col, n):
    """One-hot selection matrix S (k, n): S[r, c] = 1.0 iff idx[r] == c."""
    k = idx_col.shape[0]
    ci = lax.broadcasted_iota(jnp.int32, (k, n), 1)
    return (ci == idx_col).astype(F32)


def _host_eigh_vectors(a):
    # TODO(synk): no Pallas/TPU eigensolver; torch.linalg.eigh(UPLO='U') is run
    # on host LAPACK via jax.pure_callback (an on-TPU eigh would dominate).
    _, v = np.linalg.eigh(np.asarray(a, dtype=np.float64), UPLO="U")
    return np.asarray(v, dtype=np.float32)


# ----------------------------------------------------------------------------
# Pallas kernels (all single-block, whole arrays resident in VMEM)
# ----------------------------------------------------------------------------
def _prep_kernel(m_ref, swt_ref, sb_ref, dwt_ref, db_ref, pw_ref, pb_ref,
                 a_ref, x0_ref, xd_ref, s_ref):
    # normalize_adj_torch + start-GCN (X input is I, so A @ I == A and that
    # matmul disappears) + level-0 down-GCN + GraphPool score, fused:
    #   A[i,j] = r[i] * m[j,i] * r[j],  r = rowsum^-0.5 (0 where rowsum == 0)
    #   X0     = A @ Ws.T + bs          (start_gcn output / org_X)
    #   Xd0    = (A @ X0) @ Wd.T + bd   (down_gcns[0] output)
    #   scores = sigmoid(Xd0 @ pw.T + pb)   (/100 pre-folded into pw, pb)
    m = m_ref[...]
    rowsum = jnp.sum(m, axis=1, keepdims=True)
    r = jnp.where(rowsum == 0.0, 0.0, lax.rsqrt(rowsum))
    # m.T kept for exact normalize_adj_torch semantics on asymmetric input;
    # one-time (lr_dim, lr_dim) XLU op per forward.
    a = m.T * r * r.T
    a_ref[...] = a
    x0 = jnp.dot(a, swt_ref[...], preferred_element_type=F32) + sb_ref[...]
    x0_ref[...] = x0
    h = jnp.dot(a, x0, preferred_element_type=F32)
    xd = jnp.dot(h, dwt_ref[...], preferred_element_type=F32) + db_ref[...]
    xd_ref[...] = xd
    s = lax.dot_general(pw_ref[...], xd, (((1,), (1,)), ((), ())),
                        preferred_element_type=F32)          # lane-dense (1, n)
    s_ref[...] = jax.nn.sigmoid(s + pb_ref[...])


def _pool_down_pool_kernel(a_ref, x_ref, idx_ref, val_ref, wt_ref, b_ref,
                           pw_ref, pb_ref, ao_ref, xo_ref, so_ref):
    # Previous level's GraphPool gather folded in as one-hot selection matmuls,
    # followed by this level's down-GCN + pool score:
    #   S  = onehot(idx)                  (k, n)
    #   A' = S @ A @ S.T                  (== A[idx][:, idx])
    #   X' = (S @ X) * values             (== X[idx] * values)
    #   Xd = (A' @ X') @ W.T + b ; scores = sigmoid(Xd @ pw.T + pb)
    n = a_ref.shape[0]
    S = _select_matrix(idx_ref[...], n)
    xp = jnp.dot(S, x_ref[...], preferred_element_type=F32) * val_ref[...]
    a_s = lax.dot_general(a_ref[...], S, (((1,), (1,)), ((), ())),
                          preferred_element_type=F32)        # A @ S.T  (n, k)
    an = jnp.dot(S, a_s, preferred_element_type=F32)         # (k, k)
    ao_ref[...] = an
    h = jnp.dot(an, xp, preferred_element_type=F32)
    xn = jnp.dot(h, wt_ref[...], preferred_element_type=F32) + b_ref[...]
    xo_ref[...] = xn
    s = lax.dot_general(pw_ref[...], xn, (((1,), (1,)), ((), ())),
                        preferred_element_type=F32)
    so_ref[...] = jax.nn.sigmoid(s + pb_ref[...])


def _pool_gcn_kernel(a_ref, x_ref, idx_ref, val_ref, wt_ref, b_ref, o_ref):
    # Last level's GraphPool gather + bottom-GCN (pooled adjacency is not
    # needed afterwards, so only the GCN output is emitted).
    n = a_ref.shape[0]
    S = _select_matrix(idx_ref[...], n)
    xp = jnp.dot(S, x_ref[...], preferred_element_type=F32) * val_ref[...]
    a_s = lax.dot_general(a_ref[...], S, (((1,), (1,)), ((), ())),
                          preferred_element_type=F32)
    an = jnp.dot(S, a_s, preferred_element_type=F32)
    h = jnp.dot(an, xp, preferred_element_type=F32)
    o_ref[...] = jnp.dot(h, wt_ref[...], preferred_element_type=F32) + b_ref[...]


def _unpool_gcn_res_kernel(a_ref, x_ref, idx_ref, wt_ref, b_ref, res_ref, o_ref):
    # GraphUnpool scatter (zeros.at[idx].set(X)) folded in as S.T @ X, then the
    # up-GCN fused with the skip-connection add.
    n = a_ref.shape[0]
    S = _select_matrix(idx_ref[...], n)                       # (k, n)
    xu = lax.dot_general(S, x_ref[...], (((0,), (0,)), ((), ())),
                         preferred_element_type=F32)          # S.T @ X  (n, DIM)
    h = jnp.dot(a_ref[...], xu, preferred_element_type=F32)
    o_ref[...] = (jnp.dot(h, wt_ref[...], preferred_element_type=F32)
                  + b_ref[...] + res_ref[...])


def _end_gcn_kernel(a_ref, x_ref, xorg_ref, wlt_ref, wrt_ref, b_ref, o_ref):
    # end-GCN over concat([X, org_X], 1) with the feature-concat folded into
    # split weight halves: (A@[X|org]) @ W.T = (A@X)@Wl.T + (A@org)@Wr.T.
    # (An in-kernel lane concat at offset DIM=320 would not be 128-aligned, so
    # the split form is kept; it performs the same MXU work without a relayout.)
    h = jnp.dot(a_ref[...], x_ref[...], preferred_element_type=F32)
    ho = jnp.dot(a_ref[...], xorg_ref[...], preferred_element_type=F32)
    o_ref[...] = (jnp.dot(h, wlt_ref[...], preferred_element_type=F32)
                  + jnp.dot(ho, wrt_ref[...], preferred_element_type=F32)
                  + b_ref[...])


def _gsr_head_kernel(a_ref, u_ref, x_ref, w1_ref, w2_ref, adj_ref, out_ref):
    # GSRLayer core + gc1 + gc2 + final sym/fill_diag/abs in ONE launch; adj
    # and Z never leave VMEM between the two stages.
    #   b   = a @ U.T                (a = weights @ [I; I], precomputed)
    #   adj = fill_diag_1(|b @ X|)
    #   Z   = |fill_diag_1(adj @ adj.T)|   (adj@adj.T is exactly symmetric, so
    #                                       the (X + X.T)/2 of the reference is
    #                                       a bitwise no-op and was dropped)
    #   h1  = relu(adj @ (Z @ W1)); h2 = relu(adj @ (h1 @ W2))
    #   out = |fill_diag_1((h2 + h2.T) / 2)|
    b = lax.dot_general(a_ref[...], u_ref[...], (((1,), (1,)), ((), ())),
                        preferred_element_type=F32)           # a @ U.T  (hr, lr)
    f_d = jnp.dot(b, x_ref[...], preferred_element_type=F32)  # (hr, hr)
    adj = _fill_diag_one(jnp.abs(f_d))
    adj_ref[...] = adj
    g = lax.dot_general(adj, adj, (((1,), (1,)), ((), ())),
                        preferred_element_type=F32)           # adj @ adj.T
    z = jnp.abs(_fill_diag_one(g))
    s1 = jnp.dot(z, w1_ref[...], preferred_element_type=F32)
    h1 = jnp.maximum(jnp.dot(adj, s1, preferred_element_type=F32), 0.0)
    s2 = jnp.dot(h1, w2_ref[...], preferred_element_type=F32)
    h2 = jnp.maximum(jnp.dot(adj, s2, preferred_element_type=F32), 0.0)
    out = (h2 + h2.T) * 0.5
    out_ref[...] = jnp.abs(_fill_diag_one(out))


# ----------------------------------------------------------------------------
# forward pass (top_k stays in plain JAX, eigh on host)
# ----------------------------------------------------------------------------
def graph_unet_forward(p, lr, ks):
    """normalize_adj + GraphUnet(A, I).  Returns (end_out, start_gcn_outs, A0)."""
    n0 = lr.shape[0]
    swt, sb = p["start"]
    dwt0, db0 = p["down"][0]
    pw0, pb0 = p["pool"][0]

    A0, X0, Xd0, scores = _vmem_call(
        _prep_kernel,
        (_sds((n0, n0)), _sds((n0, DIM)), _sds((n0, DIM)), _sds((1, n0))),
        lr, swt, sb, dwt0, db0, pw0, pb0)

    adj_ms, down_outs, idx_list = [A0], [Xd0], []
    # TODO(synk): top_k stays in XLA; an in-kernel iterative masked argmax would
    # let the whole down path collapse into a single launch.
    values, idx = lax.top_k(scores[0], int(ks[0] * n0))
    idx_list.append(idx)
    idx2d, val2d = idx[:, None], values[:, None]

    A, X = A0, Xd0
    for i in range(1, len(ks)):
        dwt, db = p["down"][i]
        pw, pb = p["pool"][i]
        k = idx2d.shape[0]
        A, X, scores = _vmem_call(
            _pool_down_pool_kernel,
            (_sds((k, k)), _sds((k, DIM)), _sds((1, k))),
            A, X, idx2d, val2d, dwt, db, pw, pb)
        adj_ms.append(A)
        down_outs.append(X)
        values, idx = lax.top_k(scores[0], int(ks[i] * k))
        idx_list.append(idx)
        idx2d, val2d = idx[:, None], values[:, None]

    bwt, bb = p["bottom"]
    X = _vmem_call(_pool_gcn_kernel, _sds((idx2d.shape[0], DIM)),
                   A, X, idx2d, val2d, bwt, bb)

    for i in range(len(ks)):
        up = len(ks) - i - 1
        A_u, idx = adj_ms[up], idx_list[up]
        uwt, ub = p["up"][i]
        X = _vmem_call(_unpool_gcn_res_kernel, _sds((A_u.shape[0], DIM)),
                       A_u, X, idx[:, None], uwt, ub, down_outs[up])

    wlt, wrt, eb = p["end"]
    hr_dim = wlt.shape[1]
    X = _vmem_call(_end_gcn_kernel, _sds((n0, hr_dim)),
                   A0, X, X0, wlt, wrt, eb)
    return X, X0, A0


def agsr_net_forward(p, lr, ks, lr_dim):
    net_outs, start_gcn_outs, A0 = graph_unet_forward(p, lr.astype(F32), ks)

    # eigh off the TensorCore: host LAPACK via pure_callback.
    U = jax.pure_callback(_host_eigh_vectors, _sds((lr_dim, lr_dim)), A0)

    hr_dim = p["gsr_a"].shape[0]
    # TODO(synk): for hr_dim >~ 1k add an hr-row-tiled grid (or raise
    # vmem_limit_bytes) so this single-block kernel stays inside v7x's 64 MiB
    # VMEM; at these sizes everything is < 2 MiB and single-block is optimal.
    outputs, z = _vmem_call(
        _gsr_head_kernel,
        (_sds((hr_dim, hr_dim)), _sds((hr_dim, hr_dim))),
        p["gsr_a"], U, net_outs, p["gc1_w"], p["gc2_w"])
    return z, net_outs, start_gcn_outs, outputs


# ----------------------------------------------------------------------------
# deterministic parameter init (torch-like layout) + one-time kernel-layout prep
# ----------------------------------------------------------------------------
def _linear_init(key, out_dim, in_dim):
    k1, k2 = jax.random.split(key)
    bound = 1.0 / math.sqrt(in_dim)
    W = jax.random.uniform(k1, (out_dim, in_dim), F32, -bound, bound)
    b = jax.random.uniform(k2, (out_dim,), F32, -bound, bound)
    return W, b


def _xavier(key, shape):
    r = math.sqrt(6.0 / (shape[0] + shape[1]))
    return jax.random.uniform(key, shape, F32, -r, r)


def init_params(key, lr_dim, hr_dim, hidden_dim, ks, dim=DIM):
    keys = iter(jax.random.split(key, 32))
    unet = {}
    unet["start_w"], unet["start_b"] = _linear_init(next(keys), dim, lr_dim)
    unet["bottom_w"], unet["bottom_b"] = _linear_init(next(keys), dim, dim)
    unet["end_w"], unet["end_b"] = _linear_init(next(keys), hr_dim, 2 * dim)
    unet["down"] = [_linear_init(next(keys), dim, dim) for _ in ks]
    unet["up"] = [_linear_init(next(keys), dim, dim) for _ in ks]
    unet["pool"] = [_linear_init(next(keys), 1, dim) for _ in ks]
    glorot_r = math.sqrt(6.0 / (hr_dim + hr_dim))
    return {
        "unet": unet,
        "gsr_w": jax.random.uniform(next(keys), (hr_dim, hr_dim), F32, -glorot_r, glorot_r),
        "gc1_w": _xavier(next(keys), (hr_dim, hidden_dim)),
        "gc2_w": _xavier(next(keys), (hidden_dim, hr_dim)),
    }


def preprocess_params(params, lr_dim, dim=DIM):
    """One-time (outside jit) conversion to the layout the kernels consume:
    transposed linear weights, 2-D biases, split end-GCN weight halves, pool
    projection pre-scaled by 0.01 (folds the /100), and the GSR
    `weights @ [I; I]` folded into a column-half sum."""
    unet = params["unet"]

    def lin(W, b):
        return W.T.astype(F32), b.reshape(1, -1).astype(F32)

    p = {}
    p["start"] = lin(unet["start_w"], unet["start_b"])
    p["bottom"] = lin(unet["bottom_w"], unet["bottom_b"])
    ew, eb = unet["end_w"], unet["end_b"]
    p["end"] = (ew[:, :dim].T.astype(F32), ew[:, dim:].T.astype(F32),
                eb.reshape(1, -1).astype(F32))
    p["down"] = [lin(W, b) for W, b in unet["down"]]
    p["up"] = [lin(W, b) for W, b in unet["up"]]
    p["pool"] = [((pw * 0.01).astype(F32), (pb * 0.01).reshape(1, 1).astype(F32))
                 for pw, pb in unet["pool"]]
    gw = params["gsr_w"]
    p["gsr_a"] = (gw[:, :lr_dim] + gw[:, lr_dim:]).astype(F32)   # == gsr_w @ [I; I]
    p["gc1_w"] = params["gc1_w"].astype(F32)
    p["gc2_w"] = params["gc2_w"].astype(F32)
    return p


# ----------------------------------------------------------------------------
if __name__ == "__main__":
    KS = [0.9, 0.7, 0.6, 0.5]
    LR_DIM, HR_DIM, HIDDEN_DIM = 16, 32, 32     # GSRLayer requires hr_dim == 2*lr_dim

    key = jax.random.PRNGKey(0)
    kp, kx = jax.random.split(key)
    raw_params = init_params(kp, LR_DIM, HR_DIM, HIDDEN_DIM, KS)
    params = preprocess_params(raw_params, LR_DIM)

    lr_raw = jax.random.uniform(kx, (LR_DIM, LR_DIM), F32)
    lr = (lr_raw + lr_raw.T) / 2.0              # symmetric non-negative adjacency

    fwd = jax.jit(lambda p, x: agsr_net_forward(p, x, KS, LR_DIM))
    z, net_outs, start_gcn_outs, outputs = fwd(params, lr)
    jax.block_until_ready((z, net_outs, start_gcn_outs, outputs))

    assert z.shape == (HR_DIM, HR_DIM)
    assert net_outs.shape == (LR_DIM, HR_DIM)
    assert start_gcn_outs.shape == (LR_DIM, DIM)
    assert outputs.shape == (HR_DIM, HR_DIM)
    assert bool(jnp.all(jnp.isfinite(z)))
    print("KERNEL_OK")
</pallas_src>

<mosaic_0001>
module attributes {stable_mosaic.version = 11 : i64} {
  func.func @_prep_kernel(%arg0: memref<16x16xf32, #tpu.memory_space<vmem>>, %arg1: memref<16x320xf32, #tpu.memory_space<vmem>>, %arg2: memref<1x320xf32, #tpu.memory_space<vmem>>, %arg3: memref<320x320xf32, #tpu.memory_space<vmem>>, %arg4: memref<1x320xf32, #tpu.memory_space<vmem>>, %arg5: memref<1x320xf32, #tpu.memory_space<vmem>>, %arg6: memref<1x1xf32, #tpu.memory_space<vmem>>, %arg7: memref<16x16xf32, #tpu.memory_space<vmem>>, %arg8: memref<16x320xf32, #tpu.memory_space<vmem>>, %arg9: memref<16x320xf32, #tpu.memory_space<vmem>>, %arg10: memref<1x16xf32, #tpu.memory_space<vmem>>) attributes {dimension_semantics = [], scalar_prefetch = 0 : i64, scratch_operands = 0 : i64, tpu.core_type = #tpu.core_type<tc>} {
    %c0 = arith.constant 0 : index
    %c0_0 = arith.constant 0 : index
    %0 = vector.load %arg0[%c0, %c0_0] : memref<16x16xf32, #tpu.memory_space<vmem>>, vector<16x16xf32>
    %cst = arith.constant dense<0.000000e+00> : vector<16xf32>
    %1 = vector.multi_reduction <add>, %0, %cst [1] : vector<16x16xf32> to vector<16xf32>
    %2 = vector.shape_cast %1 : vector<16xf32> to vector<16x1xf32>
    %cst_1 = arith.constant 0.000000e+00 : f32
    %3 = vector.broadcast %cst_1 : f32 to vector<16x1xf32>
    %4 = arith.cmpf oeq, %2, %3 : vector<16x1xf32>
    %5 = math.rsqrt %2 : vector<16x1xf32>
    %cst_2 = arith.constant 0.000000e+00 : f32
    %6 = vector.broadcast %cst_2 : f32 to vector<16x1xf32>
    %7 = arith.select %4, %6, %5 : vector<16x1xi1>, vector<16x1xf32>
    %8 = tpu.transpose %0, [1, 0] : vector<16x16xf32> -> vector<16x16xf32>
    %9 = vector.broadcast %7 : vector<16x1xf32> to vector<16x16xf32>
    %10 = arith.mulf %8, %9 : vector<16x16xf32>
    %11 = tpu.transpose %7, [1, 0] : vector<16x1xf32> -> vector<1x16xf32>
    %12 = vector.broadcast %11 : vector<1x16xf32> to vector<16x16xf32>
    %13 = arith.mulf %10, %12 : vector<16x16xf32>
    %c0_3 = arith.constant 0 : index
    %c0_4 = arith.constant 0 : index
    %14 = vector.load %arg7[%c0_3, %c0_4] : memref<16x16xf32, #tpu.memory_space<vmem>>, vector<16x16xf32>
    tpu.vector_store %arg7[%c0_3, %c0_4], %13 {strides = array<i32>} : memref<16x16xf32, #tpu.memory_space<vmem>>, vector<16x16xf32>,
    %c0_5 = arith.constant 0 : index
    %c0_6 = arith.constant 0 : index
    %15 = vector.load %arg1[%c0_5, %c0_6] : memref<16x320xf32, #tpu.memory_space<vmem>>, vector<16x320xf32>
    %cst_7 = arith.constant dense<0.000000e+00> : vector<16x320xf32>
    %16 = tpu.matmul %13, %15, %cst_7 {dimension_numbers = #tpu.dot_dimension_numbers<[1], [0], [0], [1], [0, 0, 1, 1], [], []>} : vector<16x16xf32>, vector<16x320xf32>, vector<16x320xf32> -> vector<16x320xf32>
    %c0_8 = arith.constant 0 : index
    %c0_9 = arith.constant 0 : index
    %17 = vector.load %arg2[%c0_8, %c0_9] : memref<1x320xf32, #tpu.memory_space<vmem>>, vector<1x320xf32>
    %18 = vector.broadcast %17 : vector<1x320xf32> to vector<16x320xf32>
    %19 = arith.addf %16, %18 : vector<16x320xf32>
    %c0_10 = arith.constant 0 : index
    %c0_11 = arith.constant 0 : index
    %20 = vector.load %arg8[%c0_10, %c0_11] : memref<16x320xf32, #tpu.memory_space<vmem>>, vector<16x320xf32>
    tpu.vector_store %arg8[%c0_10, %c0_11], %19 {strides = array<i32>} : memref<16x320xf32, #tpu.memory_space<vmem>>, vector<16x320xf32>,
    %cst_12 = arith.constant dense<0.000000e+00> : vector<16x320xf32>
    %21 = tpu.matmul %13, %19, %cst_12 {dimension_numbers = #tpu.dot_dimension_numbers<[1], [0], [0], [1], [0, 0, 1, 1], [], []>} : vector<16x16xf32>, vector<16x320xf32>, vector<16x320xf32> -> vector<16x320xf32>
    %c0_13 = arith.constant 0 : index
    %c0_14 = arith.constant 0 : index
    %22 = vector.load %arg3[%c0_13, %c0_14] : memref<320x320xf32, #tpu.memory_space<vmem>>, vector<320x320xf32>
    %cst_15 = arith.constant dense<0.000000e+00> : vector<16x320xf32>
    %23 = tpu.matmul %21, %22, %cst_15 {dimension_numbers = #tpu.dot_dimension_numbers<[1], [0], [0], [1], [0, 0, 1, 1], [], []>} : vector<16x320xf32>, vector<320x320xf32>, vector<16x320xf32> -> vector<16x320xf32>
    %c0_16 = arith.constant 0 : index
    %c0_17 = arith.constant 0 : index
    %24 = vector.load %arg4[%c0_16, %c0_17] : memref<1x320xf32, #tpu.memory_space<vmem>>, vector<1x320xf32>
    %25 = vector.broadcast %24 : vector<1x320xf32> to vector<16x320xf32>
    %26 = arith.addf %23, %25 : vector<16x320xf32>
    %c0_18 = arith.constant 0 : index
    %c0_19 = arith.constant 0 : index
    %27 = vector.load %arg9[%c0_18, %c0_19] : memref<16x320xf32, #tpu.memory_space<vmem>>, vector<16x320xf32>
    tpu.vector_store %arg9[%c0_18, %c0_19], %26 {strides = array<i32>} : memref<16x320xf32, #tpu.memory_space<vmem>>, vector<16x320xf32>,
    %c0_20 = arith.constant 0 : index
    %c0_21 = arith.constant 0 : index
    %28 = vector.load %arg5[%c0_20, %c0_21] : memref<1x320xf32, #tpu.memory_space<vmem>>, vector<1x320xf32>
    %cst_22 = arith.constant dense<0.000000e+00> : vector<1x16xf32>
    %29 = tpu.matmul %28, %26, %cst_22 {dimension_numbers = #tpu.dot_dimension_numbers<[1], [1], [0], [0], [0, 0, 1, 0], [], []>} : vector<1x320xf32>, vector<16x320xf32>, vector<1x16xf32> -> vector<1x16xf32>
    %c0_23 = arith.constant 0 : index
    %c0_24 = arith.constant 0 : index
    %30 = vector.load %arg6[%c0_23, %c0_24] : memref<1x1xf32, #tpu.memory_space<vmem>>, vector<1x1xf32>
    %31 = vector.broadcast %30 : vector<1x1xf32> to vector<1x16xf32>
    %32 = arith.addf %29, %31 : vector<1x16xf32>
    %33 = arith.negf %32 : vector<1x16xf32>
    %34 = math.exp %33 : vector<1x16xf32>
    %cst_25 = arith.constant 1.000000e+00 : f32
    %35 = vector.broadcast %cst_25 : f32 to vector<1x16xf32>
    %36 = arith.addf %35, %34 : vector<1x16xf32>
    %37 = arith.divf %35, %36 : vector<1x16xf32>
    %c0_26 = arith.constant 0 : index
    %c0_27 = arith.constant 0 : index
    %38 = vector.load %arg10[%c0_26, %c0_27] : memref<1x16xf32, #tpu.memory_space<vmem>>, vector<1x16xf32>
    tpu.vector_store %arg10[%c0_26, %c0_27], %37 {strides = array<i32>} : memref<1x16xf32, #tpu.memory_space<vmem>>, vector<1x16xf32>,
    return
  }
}

module attributes {stable_mosaic.version = 11 : i64} {
  func.func @_pool_down_pool_kernel(%arg0: memref<16x16xf32, #tpu.memory_space<vmem>>, %arg1: memref<16x320xf32, #tpu.memory_space<vmem>>, %arg2: memref<14x1xi32, #tpu.memory_space<vmem>>, %arg3: memref<14x1xf32, #tpu.memory_space<vmem>>, %arg4: memref<320x320xf32, #tpu.memory_space<vmem>>, %arg5: memref<1x320xf32, #tpu.memory_space<vmem>>, %arg6: memref<1x320xf32, #tpu.memory_space<vmem>>, %arg7: memref<1x1xf32, #tpu.memory_space<vmem>>, %arg8: memref<14x14xf32, #tpu.memory_space<vmem>>, %arg9: memref<14x320xf32, #tpu.memory_space<vmem>>, %arg10: memref<1x14xf32, #tpu.memory_space<vmem>>) attributes {dimension_semantics = [], scalar_prefetch = 0 : i64, scratch_operands = 0 : i64, tpu.core_type = #tpu.core_type<tc>} {
    %c0 = arith.constant 0 : index
    %c0_0 = arith.constant 0 : index
    %0 = vector.load %arg2[%c0, %c0_0] : memref<14x1xi32, #tpu.memory_space<vmem>>, vector<14x1xi32>
    %1 = tpu.iota {dimensions = array<i32: 1>} : vector<14x16xi32>
    %2 = vector.broadcast %0 : vector<14x1xi32> to vector<14x16xi32>
    %3 = arith.cmpi eq, %1, %2 : vector<14x16xi32>
    %4 = arith.extui %3 : vector<14x16xi1> to vector<14x16xi32>
    %5 = arith.sitofp %4 : vector<14x16xi32> to vector<14x16xf32>
    %c0_1 = arith.constant 0 : index
    %c0_2 = arith.constant 0 : index
    %6 = vector.load %arg1[%c0_1, %c0_2] : memref<16x320xf32, #tpu.memory_space<vmem>>, vector<16x320xf32>
    %cst = arith.constant dense<0.000000e+00> : vector<14x320xf32>
    %7 = tpu.matmul %5, %6, %cst {dimension_numbers = #tpu.dot_dimension_numbers<[1], [0], [0], [1], [0, 0, 1, 1], [], []>} : vector<14x16xf32>, vector<16x320xf32>, vector<14x320xf32> -> vector<14x320xf32>
    %c0_3 = arith.constant 0 : index
    %c0_4 = arith.constant 0 : index
    %8 = vector.load %arg3[%c0_3, %c0_4] : memref<14x1xf32, #tpu.memory_space<vmem>>, vector<14x1xf32>
    %9 = vector.broadcast %8 : vector<14x1xf32> to vector<14x320xf32>
    %10 = arith.mulf %7, %9 : vector<14x320xf32>
    %c0_5 = arith.constant 0 : index
    %c0_6 = arith.constant 0 : index
    %11 = vector.load %arg0[%c0_5, %c0_6] : memref<16x16xf32, #tpu.memory_space<vmem>>, vector<16x16xf32>
    %cst_7 = arith.constant dense<0.000000e+00> : vector<16x14xf32>
    %12 = tpu.matmul %11, %5, %cst_7 {dimension_numbers = #tpu.dot_dimension_numbers<[1], [1], [0], [0], [0, 0, 1, 0], [], []>} : vector<16x16xf32>, vector<14x16xf32>, vector<16x14xf32> -> vector<16x14xf32>
    %cst_8 = arith.constant dense<0.000000e+00> : vector<14x14xf32>
    %13 = tpu.matmul %5, %12, %cst_8 {dimension_numbers = #tpu.dot_dimension_numbers<[1], [0], [0], [1], [0, 0, 1, 1], [], []>} : vector<14x16xf32>, vector<16x14xf32>, vector<14x14xf32> -> vector<14x14xf32>
    %c0_9 = arith.constant 0 : index
    %c0_10 = arith.constant 0 : index
    %14 = vector.load %arg8[%c0_9, %c0_10] : memref<14x14xf32, #tpu.memory_space<vmem>>, vector<14x14xf32>
    tpu.vector_store %arg8[%c0_9, %c0_10], %13 {strides = array<i32>} : memref<14x14xf32, #tpu.memory_space<vmem>>, vector<14x14xf32>,
    %cst_11 = arith.constant dense<0.000000e+00> : vector<14x320xf32>
    %15 = tpu.matmul %13, %10, %cst_11 {dimension_numbers = #tpu.dot_dimension_numbers<[1], [0], [0], [1], [0, 0, 1, 1], [], []>} : vector<14x14xf32>, vector<14x320xf32>, vector<14x320xf32> -> vector<14x320xf32>
    %c0_12 = arith.constant 0 : index
    %c0_13 = arith.constant 0 : index
    %16 = vector.load %arg4[%c0_12, %c0_13] : memref<320x320xf32, #tpu.memory_space<vmem>>, vector<320x320xf32>
    %cst_14 = arith.constant dense<0.000000e+00> : vector<14x320xf32>
    %17 = tpu.matmul %15, %16, %cst_14 {dimension_numbers = #tpu.dot_dimension_numbers<[1], [0], [0], [1], [0, 0, 1, 1], [], []>} : vector<14x320xf32>, vector<320x320xf32>, vector<14x320xf32> -> vector<14x320xf32>
    %c0_15 = arith.constant 0 : index
    %c0_16 = arith.constant 0 : index
    %18 = vector.load %arg5[%c0_15, %c0_16] : memref<1x320xf32, #tpu.memory_space<vmem>>, vector<1x320xf32>
    %19 = vector.broadcast %18 : vector<1x320xf32> to vector<14x320xf32>
    %20 = arith.addf %17, %19 : vector<14x320xf32>
    %c0_17 = arith.constant 0 : index
    %c0_18 = arith.constant 0 : index
    %21 = vector.load %arg9[%c0_17, %c0_18] : memref<14x320xf32, #tpu.memory_space<vmem>>, vector<14x320xf32>
    tpu.vector_store %arg9[%c0_17, %c0_18], %20 {strides = array<i32>} : memref<14x320xf32, #tpu.memory_space<vmem>>, vector<14x320xf32>,
    %c0_19 = arith.constant 0 : index
    %c0_20 = arith.constant 0 : index
    %22 = vector.load %arg6[%c0_19, %c0_20] : memref<1x320xf32, #tpu.memory_space<vmem>>, vector<1x320xf32>
    %cst_21 = arith.constant dense<0.000000e+00> : vector<1x14xf32>
    %23 = tpu.matmul %22, %20, %cst_21 {dimension_numbers = #tpu.dot_dimension_numbers<[1], [1], [0], [0], [0, 0, 1, 0], [], []>} : vector<1x320xf32>, vector<14x320xf32>, vector<1x14xf32> -> vector<1x14xf32>
    %c0_22 = arith.constant 0 : index
    %c0_23 = arith.constant 0 : index
    %24 = vector.load %arg7[%c0_22, %c0_23] : memref<1x1xf32, #tpu.memory_space<vmem>>, vector<1x1xf32>
    %25 = vector.broadcast %24 : vector<1x1xf32> to vector<1x14xf32>
    %26 = arith.addf %23, %25 : vector<1x14xf32>
    %27 = arith.negf %26 : vector<1x14xf32>
    %28 = math.exp %27 : vector<1x14xf32>
    %cst_24 = arith.constant 1.000000e+00 : f32
    %29 = vector.broadcast %cst_24 : f32 to vector<1x14xf32>
    %30 = arith.addf %29, %28 : vector<1x14xf32>
    %31 = arith.divf %29, %30 : vector<1x14xf32>
    %c0_25 = arith.constant 0 : index
    %c0_26 = arith.constant 0 : index
    %32 = vector.load %arg10[%c0_25, %c0_26] : memref<1x14xf32, #tpu.memory_space<vmem>>, vector<1x14xf32>
    tpu.vector_store %arg10[%c0_25, %c0_26], %31 {strides = array<i32>} : memref<1x14xf32, #tpu.memory_space<vmem>>, vector<1x14xf32>,
    return
  }
}

module attributes {stable_mosaic.version = 11 : i64} {
  func.func @_pool_down_pool_kernel(%arg0: memref<14x14xf32, #tpu.memory_space<vmem>>, %arg1: memref<14x320xf32, #tpu.memory_space<vmem>>, %arg2: memref<9x1xi32, #tpu.memory_space<vmem>>, %arg3: memref<9x1xf32, #tpu.memory_space<vmem>>, %arg4: memref<320x320xf32, #tpu.memory_space<vmem>>, %arg5: memref<1x320xf32, #tpu.memory_space<vmem>>, %arg6: memref<1x320xf32, #tpu.memory_space<vmem>>, %arg7: memref<1x1xf32, #tpu.memory_space<vmem>>, %arg8: memref<9x9xf32, #tpu.memory_space<vmem>>, %arg9: memref<9x320xf32, #tpu.memory_space<vmem>>, %arg10: memref<1x9xf32, #tpu.memory_space<vmem>>) attributes {dimension_semantics = [], scalar_prefetch = 0 : i64, scratch_operands = 0 : i64, tpu.core_type = #tpu.core_type<tc>} {
    %c0 = arith.constant 0 : index
    %c0_0 = arith.constant 0 : index
    %0 = vector.load %arg2[%c0, %c0_0] : memref<9x1xi32, #tpu.memory_space<vmem>>, vector<9x1xi32>
    %1 = tpu.iota {dimensions = array<i32: 1>} : vector<9x14xi32>
    %2 = vector.broadcast %0 : vector<9x1xi32> to vector<9x14xi32>
    %3 = arith.cmpi eq, %1, %2 : vector<9x14xi32>
    %4 = arith.extui %3 : vector<9x14xi1> to vector<9x14xi32>
    %5 = arith.sitofp %4 : vector<9x14xi32> to vector<9x14xf32>
    %c0_1 = arith.constant 0 : index
    %c0_2 = arith.constant 0 : index
    %6 = vector.load %arg1[%c0_1, %c0_2] : memref<14x320xf32, #tpu.memory_space<vmem>>, vector<14x320xf32>
    %cst = arith.constant dense<0.000000e+00> : vector<9x320xf32>
    %7 = tpu.matmul %5, %6, %cst {dimension_numbers = #tpu.dot_dimension_numbers<[1], [0], [0], [1], [0, 0, 1, 1], [], []>} : vector<9x14xf32>, vector<14x320xf32>, vector<9x320xf32> -> vector<9x320xf32>
    %c0_3 = arith.constant 0 : index
    %c0_4 = arith.constant 0 : index
    %8 = vector.load %arg3[%c0_3, %c0_4] : memref<9x1xf32, #tpu.memory_space<vmem>>, vector<9x1xf32>
    %9 = vector.broadcast %8 : vector<9x1xf32> to vector<9x320xf32>
    %10 = arith.mulf %7, %9 : vector<9x320xf32>
    %c0_5 = arith.constant 0 : index
    %c0_6 = arith.constant 0 : index
    %11 = vector.load %arg0[%c0_5, %c0_6] : memref<14x14xf32, #tpu.memory_space<vmem>>, vector<14x14xf32>
    %cst_7 = arith.constant dense<0.000000e+00> : vector<14x9xf32>
    %12 = tpu.matmul %11, %5, %cst_7 {dimension_numbers = #tpu.dot_dimension_numbers<[1], [1], [0], [0], [0, 0, 1, 0], [], []>} : vector<14x14xf32>, vector<9x14xf32>, vector<14x9xf32> -> vector<14x9xf32>
    %cst_8 = arith.constant dense<0.000000e+00> : vector<9x9xf32>
    %13 = tpu.matmul %5, %12, %cst_8 {dimension_numbers = #tpu.dot_dimension_numbers<[1], [0], [0], [1], [0, 0, 1, 1], [], []>} : vector<9x14xf32>, vector<14x9xf32>, vector<9x9xf32> -> vector<9x9xf32>
    %c0_9 = arith.constant 0 : index
    %c0_10 = arith.constant 0 : index
    %14 = vector.load %arg8[%c0_9, %c0_10] : memref<9x9xf32, #tpu.memory_space<vmem>>, vector<9x9xf32>
    tpu.vector_store %arg8[%c0_9, %c0_10], %13 {strides = array<i32>} : memref<9x9xf32, #tpu.memory_space<vmem>>, vector<9x9xf32>,
    %cst_11 = arith.constant dense<0.000000e+00> : vector<9x320xf32>
    %15 = tpu.matmul %13, %10, %cst_11 {dimension_numbers = #tpu.dot_dimension_numbers<[1], [0], [0], [1], [0, 0, 1, 1], [], []>} : vector<9x9xf32>, vector<9x320xf32>, vector<9x320xf32> -> vector<9x320xf32>
    %c0_12 = arith.constant 0 : index
    %c0_13 = arith.constant 0 : index
    %16 = vector.load %arg4[%c0_12, %c0_13] : memref<320x320xf32, #tpu.memory_space<vmem>>, vector<320x320xf32>
    %cst_14 = arith.constant dense<0.000000e+00> : vector<9x320xf32>
    %17 = tpu.matmul %15, %16, %cst_14 {dimension_numbers = #tpu.dot_dimension_numbers<[1], [0], [0], [1], [0, 0, 1, 1], [], []>} : vector<9x320xf32>, vector<320x320xf32>, vector<9x320xf32> -> vector<9x320xf32>
    %c0_15 = arith.constant 0 : index
    %c0_16 = arith.constant 0 : index
    %18 = vector.load %arg5[%c0_15, %c0_16] : memref<1x320xf32, #tpu.memory_space<vmem>>, vector<1x320xf32>
    %19 = vector.broadcast %18 : vector<1x320xf32> to vector<9x320xf32>
    %20 = arith.addf %17, %19 : vector<9x320xf32>
    %c0_17 = arith.constant 0 : index
    %c0_18 = arith.constant 0 : index
    %21 = vector.load %arg9[%c0_17, %c0_18] : memref<9x320xf32, #tpu.memory_space<vmem>>, vector<9x320xf32>
    tpu.vector_store %arg9[%c0_17, %c0_18], %20 {strides = array<i32>} : memref<9x320xf32, #tpu.memory_space<vmem>>, vector<9x320xf32>,
    %c0_19 = arith.constant 0 : index
    %c0_20 = arith.constant 0 : index
    %22 = vector.load %arg6[%c0_19, %c0_20] : memref<1x320xf32, #tpu.memory_space<vmem>>, vector<1x320xf32>
    %cst_21 = arith.constant dense<0.000000e+00> : vector<1x9xf32>
    %23 = tpu.matmul %22, %20, %cst_21 {dimension_numbers = #tpu.dot_dimension_numbers<[1], [1], [0], [0], [0, 0, 1, 0], [], []>} : vector<1x320xf32>, vector<9x320xf32>, vector<1x9xf32> -> vector<1x9xf32>
    %c0_22 = arith.constant 0 : index
    %c0_23 = arith.constant 0 : index
    %24 = vector.load %arg7[%c0_22, %c0_23] : memref<1x1xf32, #tpu.memory_space<vmem>>, vector<1x1xf32>
    %25 = vector.broadcast %24 : vector<1x1xf32> to vector<1x9xf32>
    %26 = arith.addf %23, %25 : vector<1x9xf32>
    %27 = arith.negf %26 : vector<1x9xf32>
    %28 = math.exp %27 : vector<1x9xf32>
    %cst_24 = arith.constant 1.000000e+00 : f32
    %29 = vector.broadcast %cst_24 : f32 to vector<1x9xf32>
    %30 = arith.addf %29, %28 : vector<1x9xf32>
    %31 = arith.divf %29, %30 : vector<1x9xf32>
    %c0_25 = arith.constant 0 : index
    %c0_26 = arith.constant 0 : index
    %32 = vector.load %arg10[%c0_25, %c0_26] : memref<1x9xf32, #tpu.memory_space<vmem>>, vector<1x9xf32>
    tpu.vector_store %arg10[%c0_25, %c0_26], %31 {strides = array<i32>} : memref<1x9xf32, #tpu.memory_space<vmem>>, vector<1x9xf32>,
    return
  }
}

module attributes {stable_mosaic.version = 11 : i64} {
  func.func @_pool_down_pool_kernel(%arg0: memref<9x9xf32, #tpu.memory_space<vmem>>, %arg1: memref<9x320xf32, #tpu.memory_space<vmem>>, %arg2: memref<5x1xi32, #tpu.memory_space<vmem>>, %arg3: memref<5x1xf32, #tpu.memory_space<vmem>>, %arg4: memref<320x320xf32, #tpu.memory_space<vmem>>, %arg5: memref<1x320xf32, #tpu.memory_space<vmem>>, %arg6: memref<1x320xf32, #tpu.memory_space<vmem>>, %arg7: memref<1x1xf32, #tpu.memory_space<vmem>>, %arg8: memref<5x5xf32, #tpu.memory_space<vmem>>, %arg9: memref<5x320xf32, #tpu.memory_space<vmem>>, %arg10: memref<1x5xf32, #tpu.memory_space<vmem>>) attributes {dimension_semantics = [], scalar_prefetch = 0 : i64, scratch_operands = 0 : i64, tpu.core_type = #tpu.core_type<tc>} {
    %c0 = arith.constant 0 : index
    %c0_0 = arith.constant 0 : index
    %0 = vector.load %arg2[%c0, %c0_0] : memref<5x1xi32, #tpu.memory_space<vmem>>, vector<5x1xi32>
    %1 = tpu.iota {dimensions = array<i32: 1>} : vector<5x9xi32>
    %2 = vector.broadcast %0 : vector<5x1xi32> to vector<5x9xi32>
    %3 = arith.cmpi eq, %1, %2 : vector<5x9xi32>
    %4 = arith.extui %3 : vector<5x9xi1> to vector<5x9xi32>
    %5 = arith.sitofp %4 : vector<5x9xi32> to vector<5x9xf32>
    %c0_1 = arith.constant 0 : index
    %c0_2 = arith.constant 0 : index
    %6 = vector.load %arg1[%c0_1, %c0_2] : memref<9x320xf32, #tpu.memory_space<vmem>>, vector<9x320xf32>
    %cst = arith.constant dense<0.000000e+00> : vector<5x320xf32>
    %7 = tpu.matmul %5, %6, %cst {dimension_numbers = #tpu.dot_dimension_numbers<[1], [0], [0], [1], [0, 0, 1, 1], [], []>} : vector<5x9xf32>, vector<9x320xf32>, vector<5x320xf32> -> vector<5x320xf32>
    %c0_3 = arith.constant 0 : index
    %c0_4 = arith.constant 0 : index
    %8 = vector.load %arg3[%c0_3, %c0_4] : memref<5x1xf32, #tpu.memory_space<vmem>>, vector<5x1xf32>
    %9 = vector.broadcast %8 : vector<5x1xf32> to vector<5x320xf32>
    %10 = arith.mulf %7, %9 : vector<5x320xf32>
    %c0_5 = arith.constant 0 : index
    %c0_6 = arith.constant 0 : index
    %11 = vector.load %arg0[%c0_5, %c0_6] : memref<9x9xf32, #tpu.memory_space<vmem>>, vector<9x9xf32>
    %cst_7 = arith.constant dense<0.000000e+00> : vector<9x5xf32>
    %12 = tpu.matmul %11, %5, %cst_7 {dimension_numbers = #tpu.dot_dimension_numbers<[1], [1], [0], [0], [0, 0, 1, 0], [], []>} : vector<9x9xf32>, vector<5x9xf32>, vector<9x5xf32> -> vector<9x5xf32>
    %cst_8 = arith.constant dense<0.000000e+00> : vector<5x5xf32>
    %13 = tpu.matmul %5, %12, %cst_8 {dimension_numbers = #tpu.dot_dimension_numbers<[1], [0], [0], [1], [0, 0, 1, 1], [], []>} : vector<5x9xf32>, vector<9x5xf32>, vector<5x5xf32> -> vector<5x5xf32>
    %c0_9 = arith.constant 0 : index
    %c0_10 = arith.constant 0 : index
    %14 = vector.load %arg8[%c0_9, %c0_10] : memref<5x5xf32, #tpu.memory_space<vmem>>, vector<5x5xf32>
    tpu.vector_store %arg8[%c0_9, %c0_10], %13 {strides = array<i32>} : memref<5x5xf32, #tpu.memory_space<vmem>>, vector<5x5xf32>,
    %cst_11 = arith.constant dense<0.000000e+00> : vector<5x320xf32>
    %15 = tpu.matmul %13, %10, %cst_11 {dimension_numbers = #tpu.dot_dimension_numbers<[1], [0], [0], [1], [0, 0, 1, 1], [], []>} : vector<5x5xf32>, vector<5x320xf32>, vector<5x320xf32> -> vector<5x320xf32>
    %c0_12 = arith.constant 0 : index
    %c0_13 = arith.constant 0 : index
    %16 = vector.load %arg4[%c0_12, %c0_13] : memref<320x320xf32, #tpu.memory_space<vmem>>, vector<320x320xf32>
    %cst_14 = arith.constant dense<0.000000e+00> : vector<5x320xf32>
    %17 = tpu.matmul %15, %16, %cst_14 {dimension_numbers = #tpu.dot_dimension_numbers<[1], [0], [0], [1], [0, 0, 1, 1], [], []>} : vector<5x320xf32>, vector<320x320xf32>, vector<5x320xf32> -> vector<5x320xf32>
    %c0_15 = arith.constant 0 : index
    %c0_16 = arith.constant 0 : index
    %18 = vector.load %arg5[%c0_15, %c0_16] : memref<1x320xf32, #tpu.memory_space<vmem>>, vector<1x320xf32>
    %19 = vector.broadcast %18 : vector<1x320xf32> to vector<5x320xf32>
    %20 = arith.addf %17, %19 : vector<5x320xf32>
    %c0_17 = arith.constant 0 : index
    %c0_18 = arith.constant 0 : index
    %21 = vector.load %arg9[%c0_17, %c0_18] : memref<5x320xf32, #tpu.memory_space<vmem>>, vector<5x320xf32>
    tpu.vector_store %arg9[%c0_17, %c0_18], %20 {strides = array<i32>} : memref<5x320xf32, #tpu.memory_space<vmem>>, vector<5x320xf32>,
    %c0_19 = arith.constant 0 : index
    %c0_20 = arith.constant 0 : index
    %22 = vector.load %arg6[%c0_19, %c0_20] : memref<1x320xf32, #tpu.memory_space<vmem>>, vector<1x320xf32>
    %cst_21 = arith.constant dense<0.000000e+00> : vector<1x5xf32>
    %23 = tpu.matmul %22, %20, %cst_21 {dimension_numbers = #tpu.dot_dimension_numbers<[1], [1], [0], [0], [0, 0, 1, 0], [], []>} : vector<1x320xf32>, vector<5x320xf32>, vector<1x5xf32> -> vector<1x5xf32>
    %c0_22 = arith.constant 0 : index
    %c0_23 = arith.constant 0 : index
    %24 = vector.load %arg7[%c0_22, %c0_23] : memref<1x1xf32, #tpu.memory_space<vmem>>, vector<1x1xf32>
    %25 = vector.broadcast %24 : vector<1x1xf32> to vector<1x5xf32>
    %26 = arith.addf %23, %25 : vector<1x5xf32>
    %27 = arith.negf %26 : vector<1x5xf32>
    %28 = math.exp %27 : vector<1x5xf32>
    %cst_24 = arith.constant 1.000000e+00 : f32
    %29 = vector.broadcast %cst_24 : f32 to vector<1x5xf32>
    %30 = arith.addf %29, %28 : vector<1x5xf32>
    %31 = arith.divf %29, %30 : vector<1x5xf32>
    %c0_25 = arith.constant 0 : index
    %c0_26 = arith.constant 0 : index
    %32 = vector.load %arg10[%c0_25, %c0_26] : memref<1x5xf32, #tpu.memory_space<vmem>>, vector<1x5xf32>
    tpu.vector_store %arg10[%c0_25, %c0_26], %31 {strides = array<i32>} : memref<1x5xf32, #tpu.memory_space<vmem>>, vector<1x5xf32>,
    return
  }
}

module attributes {stable_mosaic.version = 11 : i64} {
  func.func @_unpool_gcn_res_kernel(%arg0: memref<5x5xf32, #tpu.memory_space<vmem>>, %arg1: memref<2x320xf32, #tpu.memory_space<vmem>>, %arg2: memref<2x1xi32, #tpu.memory_space<vmem>>, %arg3: memref<320x320xf32, #tpu.memory_space<vmem>>, %arg4: memref<1x320xf32, #tpu.memory_space<vmem>>, %arg5: memref<5x320xf32, #tpu.memory_space<vmem>>, %arg6: memref<5x320xf32, #tpu.memory_space<vmem>>) attributes {dimension_semantics = [], scalar_prefetch = 0 : i64, scratch_operands = 0 : i64, tpu.core_type = #tpu.core_type<tc>} {
    %c0 = arith.constant 0 : index
    %c0_0 = arith.constant 0 : index
    %0 = vector.load %arg2[%c0, %c0_0] : memref<2x1xi32, #tpu.memory_space<vmem>>, vector<2x1xi32>
    %1 = tpu.iota {dimensions = array<i32: 1>} : vector<2x5xi32>
    %2 = vector.broadcast %0 : vector<2x1xi32> to vector<2x5xi32>
    %3 = arith.cmpi eq, %1, %2 : vector<2x5xi32>
    %4 = arith.extui %3 : vector<2x5xi1> to vector<2x5xi32>
    %5 = arith.sitofp %4 : vector<2x5xi32> to vector<2x5xf32>
    %c0_1 = arith.constant 0 : index
    %c0_2 = arith.constant 0 : index
    %6 = vector.load %arg1[%c0_1, %c0_2] : memref<2x320xf32, #tpu.memory_space<vmem>>, vector<2x320xf32>
    %cst = arith.constant dense<0.000000e+00> : vector<5x320xf32>
    %7 = tpu.matmul %5, %6, %cst {dimension_numbers = #tpu.dot_dimension_numbers<[0], [0], [1], [1], [0, 1, 1, 1], [], []>} : vector<2x5xf32>, vector<2x320xf32>, vector<5x320xf32> -> vector<5x320xf32>
    %c0_3 = arith.constant 0 : index
    %c0_4 = arith.constant 0 : index
    %8 = vector.load %arg0[%c0_3, %c0_4] : memref<5x5xf32, #tpu.memory_space<vmem>>, vector<5x5xf32>
    %cst_5 = arith.constant dense<0.000000e+00> : vector<5x320xf32>
    %9 = tpu.matmul %8, %7, %cst_5 {dimension_numbers = #tpu.dot_dimension_numbers<[1], [0], [0], [1], [0, 0, 1, 1], [], []>} : vector<5x5xf32>, vector<5x320xf32>, vector<5x320xf32> -> vector<5x320xf32>
    %c0_6 = arith.constant 0 : index
    %c0_7 = arith.constant 0 : index
    %10 = vector.load %arg3[%c0_6, %c0_7] : memref<320x320xf32, #tpu.memory_space<vmem>>, vector<320x320xf32>
    %cst_8 = arith.constant dense<0.000000e+00> : vector<5x320xf32>
    %11 = tpu.matmul %9, %10, %cst_8 {dimension_numbers = #tpu.dot_dimension_numbers<[1], [0], [0], [1], [0, 0, 1, 1], [], []>} : vector<5x320xf32>, vector<320x320xf32>, vector<5x320xf32> -> vector<5x320xf32>
    %c0_9 = arith.constant 0 : index
    %c0_10 = arith.constant 0 : index
    %12 = vector.load %arg4[%c0_9, %c0_10] : memref<1x320xf32, #tpu.memory_space<vmem>>, vector<1x320xf32>
    %13 = vector.broadcast %12 : vector<1x320xf32> to vector<5x320xf32>
    %14 = arith.addf %11, %13 : vector<5x320xf32>
    %c0_11 = arith.constant 0 : index
    %c0_12 = arith.constant 0 : index
    %15 = vector.load %arg5[%c0_11, %c0_12] : memref<5x320xf32, #tpu.memory_space<vmem>>, vector<5x320xf32>
    %16 = arith.addf %14, %15 : vector<5x320xf32>
    %c0_13 = arith.constant 0 : index
    %c0_14 = arith.constant 0 : index
    %17 = vector.load %arg6[%c0_13, %c0_14] : memref<5x320xf32, #tpu.memory_space<vmem>>, vector<5x320xf32>
    tpu.vector_store %arg6[%c0_13, %c0_14], %16 {strides = array<i32>} : memref<5x320xf32, #tpu.memory_space<vmem>>, vector<5x320xf32>,
    return
  }
}

module attributes {stable_mosaic.version = 11 : i64} {
  func.func @_unpool_gcn_res_kernel(%arg0: memref<9x9xf32, #tpu.memory_space<vmem>>, %arg1: memref<5x320xf32, #tpu.memory_space<vmem>>, %arg2: memref<5x1xi32, #tpu.memory_space<vmem>>, %arg3: memref<320x320xf32, #tpu.memory_space<vmem>>, %arg4: memref<1x320xf32, #tpu.memory_space<vmem>>, %arg5: memref<9x320xf32, #tpu.memory_space<vmem>>, %arg6: memref<9x320xf32, #tpu.memory_space<vmem>>) attributes {dimension_semantics = [], scalar_prefetch = 0 : i64, scratch_operands = 0 : i64, tpu.core_type = #tpu.core_type<tc>} {
    %c0 = arith.constant 0 : index
    %c0_0 = arith.constant 0 : index
    %0 = vector.load %arg2[%c0, %c0_0] : memref<5x1xi32, #tpu.memory_space<vmem>>, vector<5x1xi32>
    %1 = tpu.iota {dimensions = array<i32: 1>} : vector<5x9xi32>
    %2 = vector.broadcast %0 : vector<5x1xi32> to vector<5x9xi32>
    %3 = arith.cmpi eq, %1, %2 : vector<5x9xi32>
    %4 = arith.extui %3 : vector<5x9xi1> to vector<5x9xi32>
    %5 = arith.sitofp %4 : vector<5x9xi32> to vector<5x9xf32>
    %c0_1 = arith.constant 0 : index
    %c0_2 = arith.constant 0 : index
    %6 = vector.load %arg1[%c0_1, %c0_2] : memref<5x320xf32, #tpu.memory_space<vmem>>, vector<5x320xf32>
    %cst = arith.constant dense<0.000000e+00> : vector<9x320xf32>
    %7 = tpu.matmul %5, %6, %cst {dimension_numbers = #tpu.dot_dimension_numbers<[0], [0], [1], [1], [0, 1, 1, 1], [], []>} : vector<5x9xf32>, vector<5x320xf32>, vector<9x320xf32> -> vector<9x320xf32>
    %c0_3 = arith.constant 0 : index
    %c0_4 = arith.constant 0 : index
    %8 = vector.load %arg0[%c0_3, %c0_4] : memref<9x9xf32, #tpu.memory_space<vmem>>, vector<9x9xf32>
    %cst_5 = arith.constant dense<0.000000e+00> : vector<9x320xf32>
    %9 = tpu.matmul %8, %7, %cst_5 {dimension_numbers = #tpu.dot_dimension_numbers<[1], [0], [0], [1], [0, 0, 1, 1], [], []>} : vector<9x9xf32>, vector<9x320xf32>, vector<9x320xf32> -> vector<9x320xf32>
    %c0_6 = arith.constant 0 : index
    %c0_7 = arith.constant 0 : index
    %10 = vector.load %arg3[%c0_6, %c0_7] : memref<320x320xf32, #tpu.memory_space<vmem>>, vector<320x320xf32>
    %cst_8 = arith.constant dense<0.000000e+00> : vector<9x320xf32>
    %11 = tpu.matmul %9, %10, %cst_8 {dimension_numbers = #tpu.dot_dimension_numbers<[1], [0], [0], [1], [0, 0, 1, 1], [], []>} : vector<9x320xf32>, vector<320x320xf32>, vector<9x320xf32> -> vector<9x320xf32>
    %c0_9 = arith.constant 0 : index
    %c0_10 = arith.constant 0 : index
    %12 = vector.load %arg4[%c0_9, %c0_10] : memref<1x320xf32, #tpu.memory_space<vmem>>, vector<1x320xf32>
    %13 = vector.broadcast %12 : vector<1x320xf32> to vector<9x320xf32>
    %14 = arith.addf %11, %13 : vector<9x320xf32>
    %c0_11 = arith.constant 0 : index
    %c0_12 = arith.constant 0 : index
    %15 = vector.load %arg5[%c0_11, %c0_12] : memref<9x320xf32, #tpu.memory_space<vmem>>, vector<9x320xf32>
    %16 = arith.addf %14, %15 : vector<9x320xf32>
    %c0_13 = arith.constant 0 : index
    %c0_14 = arith.constant 0 : index
    %17 = vector.load %arg6[%c0_13, %c0_14] : memref<9x320xf32, #tpu.memory_space<vmem>>, vector<9x320xf32>
    tpu.vector_store %arg6[%c0_13, %c0_14], %16 {strides = array<i32>} : memref<9x320xf32, #tpu.memory_space<vmem>>, vector<9x320xf32>,
    return
  }
}

module attributes {stable_mosaic.version = 11 : i64} {
  func.func @_pool_gcn_kernel(%arg0: memref<5x5xf32, #tpu.memory_space<vmem>>, %arg1: memref<5x320xf32, #tpu.memory_space<vmem>>, %arg2: memref<2x1xi32, #tpu.memory_space<vmem>>, %arg3: memref<2x1xf32, #tpu.memory_space<vmem>>, %arg4: memref<320x320xf32, #tpu.memory_space<vmem>>, %arg5: memref<1x320xf32, #tpu.memory_space<vmem>>, %arg6: memref<2x320xf32, #tpu.memory_space<vmem>>) attributes {dimension_semantics = [], scalar_prefetch = 0 : i64, scratch_operands = 0 : i64, tpu.core_type = #tpu.core_type<tc>} {
    %c0 = arith.constant 0 : index
    %c0_0 = arith.constant 0 : index
    %0 = vector.load %arg2[%c0, %c0_0] : memref<2x1xi32, #tpu.memory_space<vmem>>, vector<2x1xi32>
    %1 = tpu.iota {dimensions = array<i32: 1>} : vector<2x5xi32>
    %2 = vector.broadcast %0 : vector<2x1xi32> to vector<2x5xi32>
    %3 = arith.cmpi eq, %1, %2 : vector<2x5xi32>
    %4 = arith.extui %3 : vector<2x5xi1> to vector<2x5xi32>
    %5 = arith.sitofp %4 : vector<2x5xi32> to vector<2x5xf32>
    %c0_1 = arith.constant 0 : index
    %c0_2 = arith.constant 0 : index
    %6 = vector.load %arg1[%c0_1, %c0_2] : memref<5x320xf32, #tpu.memory_space<vmem>>, vector<5x320xf32>
    %cst = arith.constant dense<0.000000e+00> : vector<2x320xf32>
    %7 = tpu.matmul %5, %6, %cst {dimension_numbers = #tpu.dot_dimension_numbers<[1], [0], [0], [1], [0, 0, 1, 1], [], []>} : vector<2x5xf32>, vector<5x320xf32>, vector<2x320xf32> -> vector<2x320xf32>
    %c0_3 = arith.constant 0 : index
    %c0_4 = arith.constant 0 : index
    %8 = vector.load %arg3[%c0_3, %c0_4] : memref<2x1xf32, #tpu.memory_space<vmem>>, vector<2x1xf32>
    %9 = vector.broadcast %8 : vector<2x1xf32> to vector<2x320xf32>
    %10 = arith.mulf %7, %9 : vector<2x320xf32>
    %c0_5 = arith.constant 0 : index
    %c0_6 = arith.constant 0 : index
    %11 = vector.load %arg0[%c0_5, %c0_6] : memref<5x5xf32, #tpu.memory_space<vmem>>, vector<5x5xf32>
    %cst_7 = arith.constant dense<0.000000e+00> : vector<5x2xf32>
    %12 = tpu.matmul %11, %5, %cst_7 {dimension_numbers = #tpu.dot_dimension_numbers<[1], [1], [0], [0], [0, 0, 1, 0], [], []>} : vector<5x5xf32>, vector<2x5xf32>, vector<5x2xf32> -> vector<5x2xf32>
    %cst_8 = arith.constant dense<0.000000e+00> : vector<2x2xf32>
    %13 = tpu.matmul %5, %12, %cst_8 {dimension_numbers = #tpu.dot_dimension_numbers<[1], [0], [0], [1], [0, 0, 1, 1], [], []>} : vector<2x5xf32>, vector<5x2xf32>, vector<2x2xf32> -> vector<2x2xf32>
    %cst_9 = arith.constant dense<0.000000e+00> : vector<2x320xf32>
    %14 = tpu.matmul %13, %10, %cst_9 {dimension_numbers = #tpu.dot_dimension_numbers<[1], [0], [0], [1], [0, 0, 1, 1], [], []>} : vector<2x2xf32>, vector<2x320xf32>, vector<2x320xf32> -> vector<2x320xf32>
    %c0_10 = arith.constant 0 : index
    %c0_11 = arith.constant 0 : index
    %15 = vector.load %arg4[%c0_10, %c0_11] : memref<320x320xf32, #tpu.memory_space<vmem>>, vector<320x320xf32>
    %cst_12 = arith.constant dense<0.000000e+00> : vector<2x320xf32>
    %16 = tpu.matmul %14, %15, %cst_12 {dimension_numbers = #tpu.dot_dimension_numbers<[1], [0], [0], [1], [0, 0, 1, 1], [], []>} : vector<2x320xf32>, vector<320x320xf32>, vector<2x320xf32> -> vector<2x320xf32>
    %c0_13 = arith.constant 0 : index
    %c0_14 = arith.constant 0 : index
    %17 = vector.load %arg5[%c0_13, %c0_14] : memref<1x320xf32, #tpu.memory_space<vmem>>, vector<1x320xf32>
    %18 = vector.broadcast %17 : vector<1x320xf32> to vector<2x320xf32>
    %19 = arith.addf %16, %18 : vector<2x320xf32>
    %c0_15 = arith.constant 0 : index
    %c0_16 = arith.constant 0 : index
    %20 = vector.load %arg6[%c0_15, %c0_16] : memref<2x320xf32, #tpu.memory_space<vmem>>, vector<2x320xf32>
    tpu.vector_store %arg6[%c0_15, %c0_16], %19 {strides = array<i32>} : memref<2x320xf32, #tpu.memory_space<vmem>>, vector<2x320xf32>,
    return
  }
}

module attributes {stable_mosaic.version = 11 : i64} {
  func.func @_unpool_gcn_res_kernel(%arg0: memref<14x14xf32, #tpu.memory_space<vmem>>, %arg1: memref<9x320xf32, #tpu.memory_space<vmem>>, %arg2: memref<9x1xi32, #tpu.memory_space<vmem>>, %arg3: memref<320x320xf32, #tpu.memory_space<vmem>>, %arg4: memref<1x320xf32, #tpu.memory_space<vmem>>, %arg5: memref<14x320xf32, #tpu.memory_space<vmem>>, %arg6: memref<14x320xf32, #tpu.memory_space<vmem>>) attributes {dimension_semantics = [], scalar_prefetch = 0 : i64, scratch_operands = 0 : i64, tpu.core_type = #tpu.core_type<tc>} {
    %c0 = arith.constant 0 : index
    %c0_0 = arith.constant 0 : index
    %0 = vector.load %arg2[%c0, %c0_0] : memref<9x1xi32, #tpu.memory_space<vmem>>, vector<9x1xi32>
    %1 = tpu.iota {dimensions = array<i32: 1>} : vector<9x14xi32>
    %2 = vector.broadcast %0 : vector<9x1xi32> to vector<9x14xi32>
    %3 = arith.cmpi eq, %1, %2 : vector<9x14xi32>
    %4 = arith.extui %3 : vector<9x14xi1> to vector<9x14xi32>
    %5 = arith.sitofp %4 : vector<9x14xi32> to vector<9x14xf32>
    %c0_1 = arith.constant 0 : index
    %c0_2 = arith.constant 0 : index
    %6 = vector.load %arg1[%c0_1, %c0_2] : memref<9x320xf32, #tpu.memory_space<vmem>>, vector<9x320xf32>
    %cst = arith.constant dense<0.000000e+00> : vector<14x320xf32>
    %7 = tpu.matmul %5, %6, %cst {dimension_numbers = #tpu.dot_dimension_numbers<[0], [0], [1], [1], [0, 1, 1, 1], [], []>} : vector<9x14xf32>, vector<9x320xf32>, vector<14x320xf32> -> vector<14x320xf32>
    %c0_3 = arith.constant 0 : index
    %c0_4 = arith.constant 0 : index
    %8 = vector.load %arg0[%c0_3, %c0_4] : memref<14x14xf32, #tpu.memory_space<vmem>>, vector<14x14xf32>
    %cst_5 = arith.constant dense<0.000000e+00> : vector<14x320xf32>
    %9 = tpu.matmul %8, %7, %cst_5 {dimension_numbers = #tpu.dot_dimension_numbers<[1], [0], [0], [1], [0, 0, 1, 1], [], []>} : vector<14x14xf32>, vector<14x320xf32>, vector<14x320xf32> -> vector<14x320xf32>
    %c0_6 = arith.constant 0 : index
    %c0_7 = arith.constant 0 : index
    %10 = vector.load %arg3[%c0_6, %c0_7] : memref<320x320xf32, #tpu.memory_space<vmem>>, vector<320x320xf32>
    %cst_8 = arith.constant dense<0.000000e+00> : vector<14x320xf32>
    %11 = tpu.matmul %9, %10, %cst_8 {dimension_numbers = #tpu.dot_dimension_numbers<[1], [0], [0], [1], [0, 0, 1, 1], [], []>} : vector<14x320xf32>, vector<320x320xf32>, vector<14x320xf32> -> vector<14x320xf32>
    %c0_9 = arith.constant 0 : index
    %c0_10 = arith.constant 0 : index
    %12 = vector.load %arg4[%c0_9, %c0_10] : memref<1x320xf32, #tpu.memory_space<vmem>>, vector<1x320xf32>
    %13 = vector.broadcast %12 : vector<1x320xf32> to vector<14x320xf32>
    %14 = arith.addf %11, %13 : vector<14x320xf32>
    %c0_11 = arith.constant 0 : index
    %c0_12 = arith.constant 0 : index
    %15 = vector.load %arg5[%c0_11, %c0_12] : memref<14x320xf32, #tpu.memory_space<vmem>>, vector<14x320xf32>
    %16 = arith.addf %14, %15 : vector<14x320xf32>
    %c0_13 = arith.constant 0 : index
    %c0_14 = arith.constant 0 : index
    %17 = vector.load %arg6[%c0_13, %c0_14] : memref<14x320xf32, #tpu.memory_space<vmem>>, vector<14x320xf32>
    tpu.vector_store %arg6[%c0_13, %c0_14], %16 {strides = array<i32>} : memref<14x320xf32, #tpu.memory_space<vmem>>, vector<14x320xf32>,
    return
  }
}

module attributes {stable_mosaic.version = 11 : i64} {
  func.func @_unpool_gcn_res_kernel(%arg0: memref<16x16xf32, #tpu.memory_space<vmem>>, %arg1: memref<14x320xf32, #tpu.memory_space<vmem>>, %arg2: memref<14x1xi32, #tpu.memory_space<vmem>>, %arg3: memref<320x320xf32, #tpu.memory_space<vmem>>, %arg4: memref<1x320xf32, #tpu.memory_space<vmem>>, %arg5: memref<16x320xf32, #tpu.memory_space<vmem>>, %arg6: memref<16x320xf32, #tpu.memory_space<vmem>>) attributes {dimension_semantics = [], scalar_prefetch = 0 : i64, scratch_operands = 0 : i64, tpu.core_type = #tpu.core_type<tc>} {
    %c0 = arith.constant 0 : index
    %c0_0 = arith.constant 0 : index
    %0 = vector.load %arg2[%c0, %c0_0] : memref<14x1xi32, #tpu.memory_space<vmem>>, vector<14x1xi32>
    %1 = tpu.iota {dimensions = array<i32: 1>} : vector<14x16xi32>
    %2 = vector.broadcast %0 : vector<14x1xi32> to vector<14x16xi32>
    %3 = arith.cmpi eq, %1, %2 : vector<14x16xi32>
    %4 = arith.extui %3 : vector<14x16xi1> to vector<14x16xi32>
    %5 = arith.sitofp %4 : vector<14x16xi32> to vector<14x16xf32>
    %c0_1 = arith.constant 0 : index
    %c0_2 = arith.constant 0 : index
    %6 = vector.load %arg1[%c0_1, %c0_2] : memref<14x320xf32, #tpu.memory_space<vmem>>, vector<14x320xf32>
    %cst = arith.constant dense<0.000000e+00> : vector<16x320xf32>
    %7 = tpu.matmul %5, %6, %cst {dimension_numbers = #tpu.dot_dimension_numbers<[0], [0], [1], [1], [0, 1, 1, 1], [], []>} : vector<14x16xf32>, vector<14x320xf32>, vector<16x320xf32> -> vector<16x320xf32>
    %c0_3 = arith.constant 0 : index
    %c0_4 = arith.constant 0 : index
    %8 = vector.load %arg0[%c0_3, %c0_4] : memref<16x16xf32, #tpu.memory_space<vmem>>, vector<16x16xf32>
    %cst_5 = arith.constant dense<0.000000e+00> : vector<16x320xf32>
    %9 = tpu.matmul %8, %7, %cst_5 {dimension_numbers = #tpu.dot_dimension_numbers<[1], [0], [0], [1], [0, 0, 1, 1], [], []>} : vector<16x16xf32>, vector<16x320xf32>, vector<16x320xf32> -> vector<16x320xf32>
    %c0_6 = arith.constant 0 : index
    %c0_7 = arith.constant 0 : index
    %10 = vector.load %arg3[%c0_6, %c0_7] : memref<320x320xf32, #tpu.memory_space<vmem>>, vector<320x320xf32>
    %cst_8 = arith.constant dense<0.000000e+00> : vector<16x320xf32>
    %11 = tpu.matmul %9, %10, %cst_8 {dimension_numbers = #tpu.dot_dimension_numbers<[1], [0], [0], [1], [0, 0, 1, 1], [], []>} : vector<16x320xf32>, vector<320x320xf32>, vector<16x320xf32> -> vector<16x320xf32>
    %c0_9 = arith.constant 0 : index
    %c0_10 = arith.constant 0 : index
    %12 = vector.load %arg4[%c0_9, %c0_10] : memref<1x320xf32, #tpu.memory_space<vmem>>, vector<1x320xf32>
    %13 = vector.broadcast %12 : vector<1x320xf32> to vector<16x320xf32>
    %14 = arith.addf %11, %13 : vector<16x320xf32>
    %c0_11 = arith.constant 0 : index
    %c0_12 = arith.constant 0 : index
    %15 = vector.load %arg5[%c0_11, %c0_12] : memref<16x320xf32, #tpu.memory_space<vmem>>, vector<16x320xf32>
    %16 = arith.addf %14, %15 : vector<16x320xf32>
    %c0_13 = arith.constant 0 : index
    %c0_14 = arith.constant 0 : index
    %17 = vector.load %arg6[%c0_13, %c0_14] : memref<16x320xf32, #tpu.memory_space<vmem>>, vector<16x320xf32>
    tpu.vector_store %arg6[%c0_13, %c0_14], %16 {strides = array<i32>} : memref<16x320xf32, #tpu.memory_space<vmem>>, vector<16x320xf32>,
    return
  }
}

module attributes {stable_mosaic.version = 11 : i64} {
  func.func @_end_gcn_kernel(%arg0: memref<16x16xf32, #tpu.memory_space<vmem>>, %arg1: memref<16x320xf32, #tpu.memory_space<vmem>>, %arg2: memref<16x320xf32, #tpu.memory_space<vmem>>, %arg3: memref<320x32xf32, #tpu.memory_space<vmem>>, %arg4: memref<320x32xf32, #tpu.memory_space<vmem>>, %arg5: memref<1x32xf32, #tpu.memory_space<vmem>>, %arg6: memref<16x32xf32, #tpu.memory_space<vmem>>) attributes {dimension_semantics = [], scalar_prefetch = 0 : i64, scratch_operands = 0 : i64, tpu.core_type = #tpu.core_type<tc>} {
    %c0 = arith.constant 0 : index
    %c0_0 = arith.constant 0 : index
    %0 = vector.load %arg0[%c0, %c0_0] : memref<16x16xf32, #tpu.memory_space<vmem>>, vector<16x16xf32>
    %c0_1 = arith.constant 0 : index
    %c0_2 = arith.constant 0 : index
    %1 = vector.load %arg1[%c0_1, %c0_2] : memref<16x320xf32, #tpu.memory_space<vmem>>, vector<16x320xf32>
    %cst = arith.constant dense<0.000000e+00> : vector<16x320xf32>
    %2 = tpu.matmul %0, %1, %cst {dimension_numbers = #tpu.dot_dimension_numbers<[1], [0], [0], [1], [0, 0, 1, 1], [], []>} : vector<16x16xf32>, vector<16x320xf32>, vector<16x320xf32> -> vector<16x320xf32>
    %c0_3 = arith.constant 0 : index
    %c0_4 = arith.constant 0 : index
    %3 = vector.load %arg0[%c0_3, %c0_4] : memref<16x16xf32, #tpu.memory_space<vmem>>, vector<16x16xf32>
    %c0_5 = arith.constant 0 : index
    %c0_6 = arith.constant 0 : index
    %4 = vector.load %arg2[%c0_5, %c0_6] : memref<16x320xf32, #tpu.memory_space<vmem>>, vector<16x320xf32>
    %cst_7 = arith.constant dense<0.000000e+00> : vector<16x320xf32>
    %5 = tpu.matmul %3, %4, %cst_7 {dimension_numbers = #tpu.dot_dimension_numbers<[1], [0], [0], [1], [0, 0, 1, 1], [], []>} : vector<16x16xf32>, vector<16x320xf32>, vector<16x320xf32> -> vector<16x320xf32>
    %c0_8 = arith.constant 0 : index
    %c0_9 = arith.constant 0 : index
    %6 = vector.load %arg3[%c0_8, %c0_9] : memref<320x32xf32, #tpu.memory_space<vmem>>, vector<320x32xf32>
    %cst_10 = arith.constant dense<0.000000e+00> : vector<16x32xf32>
    %7 = tpu.matmul %2, %6, %cst_10 {dimension_numbers = #tpu.dot_dimension_numbers<[1], [0], [0], [1], [0, 0, 1, 1], [], []>} : vector<16x320xf32>, vector<320x32xf32>, vector<16x32xf32> -> vector<16x32xf32>
    %c0_11 = arith.constant 0 : index
    %c0_12 = arith.constant 0 : index
    %8 = vector.load %arg4[%c0_11, %c0_12] : memref<320x32xf32, #tpu.memory_space<vmem>>, vector<320x32xf32>
    %cst_13 = arith.constant dense<0.000000e+00> : vector<16x32xf32>
    %9 = tpu.matmul %5, %8, %cst_13 {dimension_numbers = #tpu.dot_dimension_numbers<[1], [0], [0], [1], [0, 0, 1, 1], [], []>} : vector<16x320xf32>, vector<320x32xf32>, vector<16x32xf32> -> vector<16x32xf32>
    %10 = arith.addf %7, %9 : vector<16x32xf32>
    %c0_14 = arith.constant 0 : index
    %c0_15 = arith.constant 0 : index
    %11 = vector.load %arg5[%c0_14, %c0_15] : memref<1x32xf32, #tpu.memory_space<vmem>>, vector<1x32xf32>
    %12 = vector.broadcast %11 : vector<1x32xf32> to vector<16x32xf32>
    %13 = arith.addf %10, %12 : vector<16x32xf32>
    %c0_16 = arith.constant 0 : index
    %c0_17 = arith.constant 0 : index
    %14 = vector.load %arg6[%c0_16, %c0_17] : memref<16x32xf32, #tpu.memory_space<vmem>>, vector<16x32xf32>
    tpu.vector_store %arg6[%c0_16, %c0_17], %13 {strides = array<i32>} : memref<16x32xf32, #tpu.memory_space<vmem>>, vector<16x32xf32>,
    return
  }
}

module attributes {stable_mosaic.version = 11 : i64} {
  func.func @_gsr_head_kernel(%arg0: memref<32x16xf32, #tpu.memory_space<vmem>>, %arg1: memref<16x16xf32, #tpu.memory_space<vmem>>, %arg2: memref<16x32xf32, #tpu.memory_space<vmem>>, %arg3: memref<32x32xf32, #tpu.memory_space<vmem>>, %arg4: memref<32x32xf32, #tpu.memory_space<vmem>>, %arg5: memref<32x32xf32, #tpu.memory_space<vmem>>, %arg6: memref<32x32xf32, #tpu.memory_space<vmem>>) attributes {dimension_semantics = [], scalar_prefetch = 0 : i64, scratch_operands = 0 : i64, tpu.core_type = #tpu.core_type<tc>} {
    %c0 = arith.constant 0 : index
    %c0_0 = arith.constant 0 : index
    %0 = vector.load %arg0[%c0, %c0_0] : memref<32x16xf32, #tpu.memory_space<vmem>>, vector<32x16xf32>
    %c0_1 = arith.constant 0 : index
    %c0_2 = arith.constant 0 : index
    %1 = vector.load %arg1[%c0_1, %c0_2] : memref<16x16xf32, #tpu.memory_space<vmem>>, vector<16x16xf32>
    %cst = arith.constant dense<0.000000e+00> : vector<32x16xf32>
    %2 = tpu.matmul %0, %1, %cst {dimension_numbers = #tpu.dot_dimension_numbers<[1], [1], [0], [0], [0, 0, 1, 0], [], []>} : vector<32x16xf32>, vector<16x16xf32>, vector<32x16xf32> -> vector<32x16xf32>
    %c0_3 = arith.constant 0 : index
    %c0_4 = arith.constant 0 : index
    %3 = vector.load %arg2[%c0_3, %c0_4] : memref<16x32xf32, #tpu.memory_space<vmem>>, vector<16x32xf32>
    %cst_5 = arith.constant dense<0.000000e+00> : vector<32x32xf32>
    %4 = tpu.matmul %2, %3, %cst_5 {dimension_numbers = #tpu.dot_dimension_numbers<[1], [0], [0], [1], [0, 0, 1, 1], [], []>} : vector<32x16xf32>, vector<16x32xf32>, vector<32x32xf32> -> vector<32x32xf32>
    %5 = math.absf %4 : vector<32x32xf32>
    %6 = tpu.iota {dimensions = array<i32: 0>} : vector<32x32xi32>
    %7 = tpu.iota {dimensions = array<i32: 1>} : vector<32x32xi32>
    %8 = arith.cmpi eq, %6, %7 : vector<32x32xi32>
    %cst_6 = arith.constant 1.000000e+00 : f32
    %9 = vector.broadcast %cst_6 : f32 to vector<32x32xf32>
    %10 = arith.select %8, %9, %5 : vector<32x32xi1>, vector<32x32xf32>
    %c0_7 = arith.constant 0 : index
    %c0_8 = arith.constant 0 : index
    %11 = vector.load %arg5[%c0_7, %c0_8] : memref<32x32xf32, #tpu.memory_space<vmem>>, vector<32x32xf32>
    tpu.vector_store %arg5[%c0_7, %c0_8], %10 {strides = array<i32>} : memref<32x32xf32, #tpu.memory_space<vmem>>, vector<32x32xf32>,
    %cst_9 = arith.constant dense<0.000000e+00> : vector<32x32xf32>
    %12 = tpu.matmul %10, %10, %cst_9 {dimension_numbers = #tpu.dot_dimension_numbers<[1], [1], [0], [0], [0, 0, 1, 0], [], []>} : vector<32x32xf32>, vector<32x32xf32>, vector<32x32xf32> -> vector<32x32xf32>
    %13 = tpu.iota {dimensions = array<i32: 0>} : vector<32x32xi32>
    %14 = tpu.iota {dimensions = array<i32: 1>} : vector<32x32xi32>
    %15 = arith.cmpi eq, %13, %14 : vector<32x32xi32>
    %cst_10 = arith.constant 1.000000e+00 : f32
    %16 = vector.broadcast %cst_10 : f32 to vector<32x32xf32>
    %17 = arith.select %15, %16, %12 : vector<32x32xi1>, vector<32x32xf32>
    %18 = math.absf %17 : vector<32x32xf32>
    %c0_11 = arith.constant 0 : index
    %c0_12 = arith.constant 0 : index
    %19 = vector.load %arg3[%c0_11, %c0_12] : memref<32x32xf32, #tpu.memory_space<vmem>>, vector<32x32xf32>
    %cst_13 = arith.constant dense<0.000000e+00> : vector<32x32xf32>
    %20 = tpu.matmul %18, %19, %cst_13 {dimension_numbers = #tpu.dot_dimension_numbers<[1], [0], [0], [1], [0, 0, 1, 1], [], []>} : vector<32x32xf32>, vector<32x32xf32>, vector<32x32xf32> -> vector<32x32xf32>
    %cst_14 = arith.constant dense<0.000000e+00> : vector<32x32xf32>
    %21 = tpu.matmul %10, %20, %cst_14 {dimension_numbers = #tpu.dot_dimension_numbers<[1], [0], [0], [1], [0, 0, 1, 1], [], []>} : vector<32x32xf32>, vector<32x32xf32>, vector<32x32xf32> -> vector<32x32xf32>
    %cst_15 = arith.constant 0.000000e+00 : f32
    %22 = vector.broadcast %cst_15 : f32 to vector<32x32xf32>
    %23 = arith.maximumf %21, %22 : vector<32x32xf32>
    %c0_16 = arith.constant 0 : index
    %c0_17 = arith.constant 0 : index
    %24 = vector.load %arg4[%c0_16, %c0_17] : memref<32x32xf32, #tpu.memory_space<vmem>>, vector<32x32xf32>
    %cst_18 = arith.constant dense<0.000000e+00> : vector<32x32xf32>
    %25 = tpu.matmul %23, %24, %cst_18 {dimension_numbers = #tpu.dot_dimension_numbers<[1], [0], [0], [1], [0, 0, 1, 1], [], []>} : vector<32x32xf32>, vector<32x32xf32>, vector<32x32xf32> -> vector<32x32xf32>
    %cst_19 = arith.constant dense<0.000000e+00> : vector<32x32xf32>
    %26 = tpu.matmul %10, %25, %cst_19 {dimension_numbers = #tpu.dot_dimension_numbers<[1], [0], [0], [1], [0, 0, 1, 1], [], []>} : vector<32x32xf32>, vector<32x32xf32>, vector<32x32xf32> -> vector<32x32xf32>
    %cst_20 = arith.constant 0.000000e+00 : f32
    %27 = vector.broadcast %cst_20 : f32 to vector<32x32xf32>
    %28 = arith.maximumf %26, %27 : vector<32x32xf32>
    %29 = tpu.transpose %28, [1, 0] : vector<32x32xf32> -> vector<32x32xf32>
    %30 = arith.addf %28, %29 : vector<32x32xf32>
    %cst_21 = arith.constant 5.000000e-01 : f32
    %31 = vector.broadcast %cst_21 : f32 to vector<32x32xf32>
    %32 = arith.mulf %30, %31 : vector<32x32xf32>
    %33 = tpu.iota {dimensions = array<i32: 0>} : vector<32x32xi32>
    %34 = tpu.iota {dimensions = array<i32: 1>} : vector<32x32xi32>
    %35 = arith.cmpi eq, %33, %34 : vector<32x32xi32>
    %cst_22 = arith.constant 1.000000e+00 : f32
    %36 = vector.broadcast %cst_22 : f32 to vector<32x32xf32>
    %37 = arith.select %35, %36, %32 : vector<32x32xi1>, vector<32x32xf32>
    %38 = math.absf %37 : vector<32x32xf32>
    %c0_23 = arith.constant 0 : index
    %c0_24 = arith.constant 0 : index
    %39 = vector.load %arg6[%c0_23, %c0_24] : memref<32x32xf32, #tpu.memory_space<vmem>>, vector<32x32xf32>
    tpu.vector_store %arg6[%c0_23, %c0_24], %38 {strides = array<i32>} : memref<32x32xf32, #tpu.memory_space<vmem>>, vector<32x32xf32>,
    return
  }
}

</mosaic_0001>

<llo_original>
// kernel: _lambda_.11
$region0: #{_lambda_.11}
  #allocation0 [shape = 'u32[]', space=smem, size = 0x4, offset = 0x4, fixed_abs, tag = 'smem constant byte address 0x4 - core index']
  #allocation1 [shape = 'u32[144,128]{1,0:T(1,128)}', space=vmem, size = 0x12000, scoped, tag = 'internal scratch']
  #allocation2 [shape = 'f32[1,1]{1,0:T(1,128)S(1)}', space=vmem, size = 0x200, scoped, tag = 'scoped memory for _lambda_.11']
  %s0 = inlined_call_operand.hbm [shape: f32[16,16], index: 0, kind: input, shape index: {}]
  %s1 = inlined_call_operand.hbm [shape: f32[16,320], index: 1, kind: input, shape index: {}]
  %s2 = inlined_call_operand.hbm [shape: f32[1,320], index: 2, kind: input, shape index: {}]
  %s3 = inlined_call_operand.hbm [shape: f32[320,320], index: 3, kind: input, shape index: {}]
  %s4 = inlined_call_operand.vmem [shape: f32[1,320], index: 4, kind: input, shape index: {}]
  %s5 = inlined_call_operand.hbm [shape: f32[1,320], index: 5, kind: input, shape index: {}]
  %s6 = inlined_call_operand.<no memory space> [shape: f32[1,1], index: 6, kind: input, shape index: {}]
  %s7 = inlined_call_operand.hbm [shape: f32[16,16], index: 7, kind: output, shape index: {0}]
  %s8 = inlined_call_operand.vmem [shape: f32[16,320], index: 8, kind: output, shape index: {1}]
  %s9 = inlined_call_operand.vmem [shape: f32[16,320], index: 9, kind: output, shape index: {2}]
  %s10 = inlined_call_operand.vmem [shape: f32[1,16], index: 10, kind: output, shape index: {3}]
  %11 = xla_tuple %s7, %s8, %s9, %s10
  %s12 = sld [smem:[#allocation0]]
  $region82: #{_lambda_.11} parent=0
    _
  %s14 = ssub.s32 1, %s12
  %s15 = scalar_select 0, %s14, %s12
  %v16 = vstv %s6
  %17 = vst [vmem:[#allocation2] sm:$0x1] %v16
  $region1: #{_lambda_.11} parent=0
    #allocation3 [shape = 'u8[8192]{0}', space=vmem, size = 0x2000, scoped, tag = 'input window, operand 0, single buffered']
    #allocation4 [shape = 's32[1]{0}', space=sflag, size = 0x4, scoped, tag = 'scoped memory for _lambda_.11']
    #allocation5 [shape = 's32[1]{0}', space=sflag, size = 0x4, scoped, tag = 'scoped memory for _lambda_.11']
    #allocation6 [shape = 'u8[24576]{0}', space=vmem, size = 0x6000, scoped, tag = 'input window, operand 1, single buffered']
    #allocation7 [shape = 's32[1]{0}', space=sflag, size = 0x4, scoped, tag = 'scoped memory for _lambda_.11']
    #allocation8 [shape = 'u8[1536]{0}', space=vmem, size = 0x800, scoped, tag = 'input window, operand 2, single buffered']
    #allocation9 [shape = 'u8[491520]{0}', space=vmem, size = 0x78000, scoped, tag = 'input window, operand 3, single buffered']
    #allocation10 [shape = 's32[1]{0}', space=sflag, size = 0x4, scoped, tag = 'scoped memory for _lambda_.11']
    #allocation11 [shape = 'u8[1536]{0}', space=vmem, size = 0x800, scoped, tag = 'input window, operand 5, single buffered']
    #allocation12 [shape = 'u8[8192]{0}', space=vmem, size = 0x2000, scoped, tag = 'output window, operand 0, single buffered']
    %18 = vsyncpa [#allocation4], 0
    %19 = vsyncpa [#allocation7], 0
    %20 = vsyncpa [#allocation10], 0
    %21 = vsyncpa [#allocation5], 0
    // Predicated region
    $region2: #{_lambda_.11} parent=1 // pred_check
      _
    $region3: #{_lambda_.11} parent=1 // pred_check_branch
      %23 = sbr.rel (0) target = $region5
    $region4: #{_lambda_.11} parent=1 // pred_region
      %s25 = ssub.s32 256, 256
      %26 = vsyncadd [#allocation4], %s25
      %s27 = sshll.u32 [#allocation3], 4
      %s28 = int_to_ptr.vmem [resolvable:$true] %s27
      %33 = dma.hbm_to_vmem [thread:$0]  %s0, 256, %s28, [#allocation4], 128, 128, 8
    $region5: #{_lambda_.11} parent=1 // pred_fallthru
      _
    // Predicated region
    $region6: #{_lambda_.11} parent=1 // pred_check
      _
    $region7: #{_lambda_.11} parent=1 // pred_check_branch
      %35 = sbr.rel (0) target = $region9
    $region8: #{_lambda_.11} parent=1 // pred_region
      %s37 = ssub.s32 768, 768
      %38 = vsyncadd [#allocation7], %s37
      %s39 = sshll.u32 [#allocation6], 4
      %s40 = int_to_ptr.vmem [resolvable:$true] %s39
      %45 = dma.hbm_to_vmem [thread:$0]  %s1, 768, %s40, [#allocation7], 384, 384, 24
    $region9: #{_lambda_.11} parent=1 // pred_fallthru
      _
    // Predicated region
    $region10: #{_lambda_.11} parent=1 // pred_check
      _
    $region11: #{_lambda_.11} parent=1 // pred_check_branch
      %47 = sbr.rel (0) target = $region13
    $region12: #{_lambda_.11} parent=1 // pred_region
      %s49 = ssub.s32 48, 48
      %50 = vsyncadd [#allocation7], %s49
      %s52 = sshll.u32 [#allocation8], 4
      %s53 = int_to_ptr.vmem [resolvable:$true] %s52
      %55 = dma.hbm_to_vmem [thread:$0]  %s2, 48, %s53, [#allocation7]
    $region13: #{_lambda_.11} parent=1 // pred_fallthru
      _
    // Predicated region
    $region14: #{_lambda_.11} parent=1 // pred_check
      _
    $region15: #{_lambda_.11} parent=1 // pred_check_branch
      %57 = sbr.rel (0) target = $region17
    $region16: #{_lambda_.11} parent=1 // pred_region
      %s59 = ssub.s32 15360, 15360
      %60 = vsyncadd [#allocation10], %s59
      %s61 = sshll.u32 [#allocation9], 4
      %s62 = int_to_ptr.vmem [resolvable:$true] %s61
      %67 = dma.hbm_to_vmem [thread:$0]  %s3, 15360, %s62, [#allocation10], 384, 384, 24
    $region17: #{_lambda_.11} parent=1 // pred_fallthru
      _
    // Predicated region
    $region18: #{_lambda_.11} parent=1 // pred_check
      _
    $region19: #{_lambda_.11} parent=1 // pred_check_branch
      %69 = sbr.rel (0) target = $region21
    $region20: #{_lambda_.11} parent=1 // pred_region
      _
    $region21: #{_lambda_.11} parent=1 // pred_fallthru
      _
    // Predicated region
    $region22: #{_lambda_.11} parent=1 // pred_check
      _
    $region23: #{_lambda_.11} parent=1 // pred_check_branch
      %71 = sbr.rel (0) target = $region25
    $region24: #{_lambda_.11} parent=1 // pred_region
      %s73 = ssub.s32 48, 48
      %74 = vsyncadd [#allocation10], %s73
      %s76 = sshll.u32 [#allocation11], 4
      %s77 = int_to_ptr.vmem [resolvable:$true] %s76
      %79 = dma.hbm_to_vmem [thread:$0]  %s5, 48, %s77, [#allocation10]
    $region25: #{_lambda_.11} parent=1 // pred_fallthru
      _
    // Predicated region
    $region26: #{_lambda_.11} parent=1 // pred_check
      _
    $region27: #{_lambda_.11} parent=1 // pred_check_branch
      %81 = sbr.rel (0) target = $region29
    $region28: #{_lambda_.11} parent=1 // pred_region
      _
    $region29: #{_lambda_.11} parent=1 // pred_fallthru
      _
    // Predicated region
    $region30: #{_lambda_.11} parent=1 // pred_check
      _
    $region31: #{_lambda_.11} parent=1 // pred_check_branch
      %83 = sbr.rel (0) target = $region33
    $region32: #{_lambda_.11} parent=1 // pred_region
      %84 = dma.done [#allocation4], 256
    $region33: #{_lambda_.11} parent=1 // pred_fallthru
      _
    // Predicated region
    $region34: #{_lambda_.11} parent=1 // pred_check
      _
    $region35: #{_lambda_.11} parent=1 // pred_check_branch
      %86 = sbr.rel (0) target = $region37
    $region36: #{_lambda_.11} parent=1 // pred_region
      %87 = dma.done [#allocation7], 768
    $region37: #{_lambda_.11} parent=1 // pred_fallthru
      _
    // Predicated region
    $region38: #{_lambda_.11} parent=1 // pred_check
      _
    $region39: #{_lambda_.11} parent=1 // pred_check_branch
      %89 = sbr.rel (0) target = $region41
    $region40: #{_lambda_.11} parent=1 // pred_region
      %90 = dma.done [#allocation7], 48
    $region41: #{_lambda_.11} parent=1 // pred_fallthru
      _
    // Predicated region
    $region42: #{_lambda_.11} parent=1 // pred_check
      _
    $region43: #{_lambda_.11} parent=1 // pred_check_branch
      %92 = sbr.rel (0) target = $region45
    $region44: #{_lambda_.11} parent=1 // pred_region
      %93 = dma.done [#allocation10], 15360
    $region45: #{_lambda_.11} parent=1 // pred_fallthru
      _
    // Predicated region
    $region46: #{_lambda_.11} parent=1 // pred_check
      _
    $region47: #{_lambda_.11} parent=1 // pred_check_branch
      %95 = sbr.rel (0) target = $region49
    $region48: #{_lambda_.11} parent=1 // pred_region
      %96 = dma.done [#allocation10], 48
    $region49: #{_lambda_.11} parent=1 // pred_fallthru
      _
    %v97 = vld [vmem:[#allocation3] sm:$0xff]
    %v98 = vld [vmem:[#allocation3 + $0x8] sm:$0xff]
    %vm99 = vcmask 130048
    %v100 = vsel %vm99, %v97, 0.0
    %101 = vadd.xlane.f32.xlu0 %v100
    %v102 = vpop.xlane.xlu0 %101
    %v103 = vsel %vm99, %v98, 0.0
    %104 = vadd.xlane.f32.xlu0 %v103
    %v105 = vpop.xlane.xlu0 %104
    %vm106 = vcmp.eq.f32.partialorder %v102, 0.0
    %vm107 = vcmp.eq.f32.partialorder %v105, 0.0
    %v108 = vrsqrt.pop %v102
    %v109 = vrsqrt.pop %v105
    %v110 = vsel %vm106, 0.0, %v108
    %v111 = vsel %vm107, 0.0, %v109
    %112 = vxpose.xlu0.b32.start [1/16] %v97, 128
    %113 = vxpose.xlu0.b32.cont [2/16] %v98, 128
    %114 = vxpose.xlu0.b32.cont [3/16] 0.0, 128
    %115 = vxpose.xlu0.b32.cont [4/16] 0.0, 128
    %116 = vxpose.xlu0.b32.cont [5/16] 0.0, 128
    %117 = vxpose.xlu0.b32.cont [6/16] 0.0, 128
    %118 = vxpose.xlu0.b32.cont [7/16] 0.0, 128
    %119 = vxpose.xlu0.b32.cont [8/16] 0.0, 128
    %120 = vxpose.xlu0.b32.cont [9/16] 0.0, 128
    %121 = vxpose.xlu0.b32.cont [10/16] 0.0, 128
    %122 = vxpose.xlu0.b32.cont [11/16] 0.0, 128
    %123 = vxpose.xlu0.b32.cont [12/16] 0.0, 128
    %124 = vxpose.xlu0.b32.cont [13/16] 0.0, 128
    %125 = vxpose.xlu0.b32.cont [14/16] 0.0, 128
    %126 = vxpose.xlu0.b32.cont [15/16] 0.0, 128
    %127 = vxpose.xlu0.b32.end [16/16] 0.0, 128
    %v128 = vpop.trf.xlu0
    %v129 = vpop.trf.xlu0
    %v130 = vpop.trf.xlu0
    %v131 = vpop.trf.xlu0
    %v132 = vpop.trf.xlu0
    %v133 = vpop.trf.xlu0
    %v134 = vpop.trf.xlu0
    %v135 = vpop.trf.xlu0
    %v136 = vpop.trf.xlu0
    %v137 = vpop.trf.xlu0
    %v138 = vpop.trf.xlu0
    %v139 = vpop.trf.xlu0
    %v140 = vpop.trf.xlu0
    %v141 = vpop.trf.xlu0
    %v142 = vpop.trf.xlu0
    %v143 = vpop.trf.xlu0
    %v144 = vmul.f32 %v128, %v110
    %v145 = vmul.f32 %v129, %v111
    %146 = vxpose.xlu0.b32.start [1/16] %v110, 128
    %147 = vxpose.xlu0.b32.cont [2/16] %v111, 128
    %148 = vxpose.xlu0.b32.cont [3/16] 0.0, 128
    %149 = vxpose.xlu0.b32.cont [4/16] 0.0, 128
    %150 = vxpose.xlu0.b32.cont [5/16] 0.0, 128
    %151 = vxpose.xlu0.b32.cont [6/16] 0.0, 128
    %152 = vxpose.xlu0.b32.cont [7/16] 0.0, 128
    %153 = vxpose.xlu0.b32.cont [8/16] 0.0, 128
    %154 = vxpose.xlu0.b32.cont [9/16] 0.0, 128
    %155 = vxpose.xlu0.b32.cont [10/16] 0.0, 128
    %156 = vxpose.xlu0.b32.cont [11/16] 0.0, 128
    %157 = vxpose.xlu0.b32.cont [12/16] 0.0, 128
    %158 = vxpose.xlu0.b32.cont [13/16] 0.0, 128
    %159 = vxpose.xlu0.b32.cont [14/16] 0.0, 128
    %160 = vxpose.xlu0.b32.cont [15/16] 0.0, 128
    %161 = vxpose.xlu0.b32.end [16/16] 0.0, 128
    %v162 = vpop.trf.xlu0
    %v163 = vpop.trf.xlu0
    %v164 = vpop.trf.xlu0
    %v165 = vpop.trf.xlu0
    %v166 = vpop.trf.xlu0
    %v167 = vpop.trf.xlu0
    %v168 = vpop.trf.xlu0
    %v169 = vpop.trf.xlu0
    %v170 = vpop.trf.xlu0
    %v171 = vpop.trf.xlu0
    %v172 = vpop.trf.xlu0
    %v173 = vpop.trf.xlu0
    %v174 = vpop.trf.xlu0
    %v175 = vpop.trf.xlu0
    %v176 = vpop.trf.xlu0
    %v177 = vpop.trf.xlu0
    %v178 = vlaneseq
    %v179 = vshrl.u32 %v178, 7
    %v180 = vsub.s32 0, %v179
    %v181 = vrot.slane %v162, %v180
    %v182 = vmul.f32 %v144, %v181
    %v183 = vmul.f32 %v145, %v181
    %184 = vst.msk [vmem:[#allocation12] sm:$0xff] %vm99, %v182
    %185 = vst.msk [vmem:[#allocation12 + $0x8] sm:$0xff] %vm99, %v183
    %v186 = vld [vmem:[#allocation6] sm:$0xff]
    %v187 = vld [vmem:[#allocation6 + $0x8] sm:$0xff]
    %v188 = vld [vmem:[#allocation6 + $0x10] sm:$0xff]
    %v189 = vld [vmem:[#allocation6 + $0x18] sm:$0xff]
    %v190 = vld [vmem:[#allocation6 + $0x20] sm:$0xff]
    %v191 = vld [vmem:[#allocation6 + $0x28] sm:$0xff]
    %v192 = vld [vmem:[#allocation8] sm:$0x7]
    %v194 = vlaneseq
    %v195 = vshrl.u32 %v194, 7
    %v196 = vsub.s32 0, %v195
    %v197 = vrot.slane %v192, %v196
    %v198 = vlaneseq
    %v199 = vshrl.u32 %v198, 7
    %v200 = vsub.s32 1, %v199
    %v201 = vrot.slane %v192, %v200
    %v202 = vlaneseq
    %v203 = vshrl.u32 %v202, 7
    %v204 = vsub.s32 2, %v203
    %v205 = vrot.slane %v192, %v204
    %v210 = vsel %vm99, %v182, 0
    %v213 = vsel %vm99, %v183, 0
    %215 = vmatprep.subr.mxu0 %v187
    %216 = vmatpush1.msra.mxu0 %v186
    %217 = vmatprep.subr.mxu0 %v190
    %218 = vmatpush1.msra.mxu0 %v189
    %219 = vmatprep.subr.mxu0 0.0
    %220 = vmatpush1.msra.mxu0 0.0
    %221 = vmatprep.subr.mxu0 0.0
    %222 = vmatpush1.msra.mxu0 0.0
    %223 = vmatprep.subr.mxu0 0.0
    %224 = vmatpush1.msra.mxu0 0.0
    %225 = vmatprep.subr.mxu0 0.0
    %226 = vmatpush1.msra.mxu0 0.0
    %227 = vmatprep.subr.mxu0 0.0
    %228 = vmatpush1.msra.mxu0 0.0
    %229 = vmatprep.subr.mxu0 0.0
    %230 = vmatpush1.msra.mxu0 0.0
    %231 = vmatprep.subr.mxu0 0.0
    %232 = vmatpush1.msra.mxu0 0.0
    %233 = vmatprep.subr.mxu0 0.0
    %234 = vmatpush1.msra.mxu0 0.0
    %235 = vmatprep.subr.mxu0 0.0
    %236 = vmatpush1.msra.mxu0 0.0
    %237 = vmatprep.subr.mxu0 0.0
    %238 = vmatpush1.msra.mxu0 0.0
    %239 = vmatprep.subr.mxu0 0.0
    %240 = vmatpush1.msra.mxu0 0.0
    %241 = vmatprep.subr.mxu0 0.0
    %242 = vmatpush1.msra.mxu0 0.0
    %243 = vmatprep.subr.mxu0 0.0
    %244 = vmatpush1.msra.mxu0 0.0
    %245 = vmatprep.subr.mxu0 0.0
    %246 = vmatpush1.msra.mxu0 0.0
    %247 = vmatprep.subr.mxu0 0.0
    %248 = vmatpush1.msra.mxu0 0.0
    %249 = vmatprep.subr.mxu0 0.0
    %250 = vmatpush1.msra.mxu0 0.0
    %251 = vmatprep.subr.mxu0 0.0
    %252 = vmatpush1.msra.mxu0 0.0
    %253 = vmatprep.subr.mxu0 0.0
    %254 = vmatpush1.msra.mxu0 0.0
    %255 = vmatprep.subr.mxu0 0.0
    %256 = vmatpush1.msra.mxu0 0.0
    %257 = vmatprep.subr.mxu0 0.0
    %258 = vmatpush1.msra.mxu0 0.0
    %259 = vmatprep.subr.mxu0 0.0
    %260 = vmatpush1.msra.mxu0 0.0
    %261 = vmatprep.subr.mxu0 0.0
    %262 = vmatpush1.msra.mxu0 0.0
    %263 = vmatprep.subr.mxu0 0.0
    %264 = vmatpush1.msra.mxu0 0.0
    %265 = vmatprep.subr.mxu0 0.0
    %266 = vmatpush1.msra.mxu0 0.0
    %267 = vmatprep.subr.mxu0 0.0
    %268 = vmatpush1.msra.mxu0 0.0
    %269 = vmatprep.subr.mxu0 0.0
    %270 = vmatpush1.msra.mxu0 0.0
    %271 = vmatprep.subr.mxu0 0.0
    %272 = vmatpush1.msra.mxu0 0.0
    %273 = vmatprep.subr.mxu0 0.0
    %274 = vmatpush1.msra.mxu0 0.0
    %275 = vmatprep.subr.mxu0 0.0
    %276 = vmatpush1.msra.mxu0 0.0
    %277 = vmatprep.subr.mxu0 0.0
    %278 = vmatpush1.msra.mxu0 0.0
    %279 = vmatprep.mubr.f32.mxu0 0.0
    %280 = vmatmul.mubr.f32.gmra.mrb[0].mxu0 %v210
    %v281 = vpop.f32.mrb[0].mxu0
    %v282 = vadd.f32 %v197, %v281
    %v283 = vpop.f32.mrb[0].mxu0
    %v284 = vadd.f32 %v201, %v283
    %285 = vmatprep.mubr.f32.mxu0 0.0
    %286 = vmatmul.mubr.f32.gmra.mrb[0].mxu0 %v213
    %v287 = vpop.f32.mrb[0].mxu0
    %v288 = vadd.f32 %v197, %v287
    %v289 = vpop.f32.mrb[0].mxu0
    %v290 = vadd.f32 %v201, %v289
    %291 = vdwg.mxu0
    %292 = vmatprep.subr.mxu0 0.0
    %293 = vmatpush1.msra.mxu0 %v188
    %294 = vmatprep.subr.mxu0 0.0
    %295 = vmatpush1.msra.mxu0 %v191
    %296 = vmatprep.subr.mxu0 0.0
    %297 = vmatpush1.msra.mxu0 0.0
    %298 = vmatprep.subr.mxu0 0.0
    %299 = vmatpush1.msra.mxu0 0.0
    %300 = vmatprep.subr.mxu0 0.0
    %301 = vmatpush1.msra.mxu0 0.0
    %302 = vmatprep.subr.mxu0 0.0
    %303 = vmatpush1.msra.mxu0 0.0
    %304 = vmatprep.subr.mxu0 0.0
    %305 = vmatpush1.msra.mxu0 0.0
    %306 = vmatprep.subr.mxu0 0.0
    %307 = vmatpush1.msra.mxu0 0.0
    %308 = vmatprep.subr.mxu0 0.0
    %309 = vmatpush1.msra.mxu0 0.0
    %310 = vmatprep.subr.mxu0 0.0
    %311 = vmatpush1.msra.mxu0 0.0
    %312 = vmatprep.subr.mxu0 0.0
    %313 = vmatpush1.msra.mxu0 0.0
    %314 = vmatprep.subr.mxu0 0.0
    %315 = vmatpush1.msra.mxu0 0.0
    %316 = vmatprep.subr.mxu0 0.0
    %317 = vmatpush1.msra.mxu0 0.0
    %318 = vmatprep.subr.mxu0 0.0
    %319 = vmatpush1.msra.mxu0 0.0
    %320 = vmatprep.subr.mxu0 0.0
    %321 = vmatpush1.msra.mxu0 0.0
    %322 = vmatprep.subr.mxu0 0.0
    %323 = vmatpush1.msra.mxu0 0.0
    %324 = vmatprep.subr.mxu0 0.0
    %325 = vmatpush1.msra.mxu0 0.0
    %326 = vmatprep.subr.mxu0 0.0
    %327 = vmatpush1.msra.mxu0 0.0
    %328 = vmatprep.subr.mxu0 0.0
    %329 = vmatpush1.msra.mxu0 0.0
    %330 = vmatprep.subr.mxu0 0.0
    %331 = vmatpush1.msra.mxu0 0.0
    %332 = vmatprep.subr.mxu0 0.0
    %333 = vmatpush1.msra.mxu0 0.0
    %334 = vmatprep.subr.mxu0 0.0
    %335 = vmatpush1.msra.mxu0 0.0
    %336 = vmatprep.subr.mxu0 0.0
    %337 = vmatpush1.msra.mxu0 0.0
    %338 = vmatprep.subr.mxu0 0.0
    %339 = vmatpush1.msra.mxu0 0.0
    %340 = vmatprep.subr.mxu0 0.0
    %341 = vmatpush1.msra.mxu0 0.0
    %342 = vmatprep.subr.mxu0 0.0
    %343 = vmatpush1.msra.mxu0 0.0
    %344 = vmatprep.subr.mxu0 0.0
    %345 = vmatpush1.msra.mxu0 0.0
    %346 = vmatprep.subr.mxu0 0.0
    %347 = vmatpush1.msra.mxu0 0.0
    %348 = vmatprep.subr.mxu0 0.0
    %349 = vmatpush1.msra.mxu0 0.0
    %350 = vmatprep.subr.mxu0 0.0
    %351 = vmatpush1.msra.mxu0 0.0
    %352 = vmatprep.subr.mxu0 0.0
    %353 = vmatpush1.msra.mxu0 0.0
    %354 = vmatprep.subr.mxu0 0.0
    %355 = vmatpush1.msra.mxu0 0.0
    %356 = vmatprep.mubr.f32.mxu0 0.0
    %357 = vmatmul.mubr.f32.gmra.mrb[0].mxu0 %v210
    %v358 = vpop.f32.mrb[0].mxu0
    %v359 = vadd.f32 %v205, %v358
    %v360 = vpop.f32.mrb[0].mxu0
    %361 = vmatprep.mubr.f32.mxu0 0.0
    %362 = vmatmul.mubr.f32.gmra.mrb[0].mxu0 %v213
    %v363 = vpop.f32.mrb[0].mxu0
    %v364 = vadd.f32 %v205, %v363
    %v365 = vpop.f32.mrb[0].mxu0
    %366 = vdwg.mxu0
    %367 = vst [vmem:[%s8] sm:$0xff] %v282
    %368 = vst [vmem:[%s8 + $0x8] sm:$0xff] %v284
    %vm369 = vcmask 523264
    %370 = vst.msk [vmem:[%s8 + $0x10] sm:$0xff] %vm369, %v359
    %371 = vst [vmem:[%s8 + $0x18] sm:$0xff] %v288
    %372 = vst [vmem:[%s8 + $0x20] sm:$0xff] %v290
    %373 = vst.msk [vmem:[%s8 + $0x28] sm:$0xff] %vm369, %v364
    %374 = vmatprep.subr.mxu0 %v284
    %375 = vmatpush1.msra.mxu0 %v282
    %376 = vmatprep.subr.mxu0 %v290
    %377 = vmatpush1.msra.mxu0 %v288
    %378 = vmatprep.subr.mxu0 0.0
    %379 = vmatpush1.msra.mxu0 0.0
    %380 = vmatprep.subr.mxu0 0.0
    %381 = vmatpush1.msra.mxu0 0.0
    %382 = vmatprep.subr.mxu0 0.0
    %383 = vmatpush1.msra.mxu0 0.0
    %384 = vmatprep.subr.mxu0 0.0
    %385 = vmatpush1.msra.mxu0 0.0
    %386 = vmatprep.subr.mxu0 0.0
    %387 = vmatpush1.msra.mxu0 0.0
    %388 = vmatprep.subr.mxu0 0.0
    %389 = vmatpush1.msra.mxu0 0.0
    %390 = vmatprep.subr.mxu0 0.0
    %391 = vmatpush1.msra.mxu0 0.0
    %392 = vmatprep.subr.mxu0 0.0
    %393 = vmatpush1.msra.mxu0 0.0
    %394 = vmatprep.subr.mxu0 0.0
    %395 = vmatpush1.msra.mxu0 0.0
    %396 = vmatprep.subr.mxu0 0.0
    %397 = vmatpush1.msra.mxu0 0.0
    %398 = vmatprep.subr.mxu0 0.0
    %399 = vmatpush1.msra.mxu0 0.0
    %400 = vmatprep.subr.mxu0 0.0
    %401 = vmatpush1.msra.mxu0 0.0
    %402 = vmatprep.subr.mxu0 0.0
    %403 = vmatpush1.msra.mxu0 0.0
    %404 = vmatprep.subr.mxu0 0.0
    %405 = vmatpush1.msra.mxu0 0.0
    %406 = vmatprep.subr.mxu0 0.0
    %407 = vmatpush1.msra.mxu0 0.0
    %408 = vmatprep.subr.mxu0 0.0
    %409 = vmatpush1.msra.mxu0 0.0
    %410 = vmatprep.subr.mxu0 0.0
    %411 = vmatpush1.msra.mxu0 0.0
    %412 = vmatprep.subr.mxu0 0.0
    %413 = vmatpush1.msra.mxu0 0.0
    %414 = vmatprep.subr.mxu0 0.0
    %415 = vmatpush1.msra.mxu0 0.0
    %416 = vmatprep.subr.mxu0 0.0
    %417 = vmatpush1.msra.mxu0 0.0
    %418 = vmatprep.subr.mxu0 0.0
    %419 = vmatpush1.msra.mxu0 0.0
    %420 = vmatprep.subr.mxu0 0.0
    %421 = vmatpush1.msra.mxu0 0.0
    %422 = vmatprep.subr.mxu0 0.0
    %423 = vmatpush1.msra.mxu0 0.0
    %424 = vmatprep.subr.mxu0 0.0
    %425 = vmatpush1.msra.mxu0 0.0
    %426 = vmatprep.subr.mxu0 0.0
    %427 = vmatpush1.msra.mxu0 0.0
    %428 = vmatprep.subr.mxu0 0.0
    %429 = vmatpush1.msra.mxu0 0.0
    %430 = vmatprep.subr.mxu0 0.0
    %431 = vmatpush1.msra.mxu0 0.0
    %432 = vmatprep.subr.mxu0 0.0
    %433 = vmatpush1.msra.mxu0 0.0
    %434 = vmatprep.subr.mxu0 0.0
    %435 = vmatpush1.msra.mxu0 0.0
    %436 = vmatprep.subr.mxu0 0.0
    %437 = vmatpush1.msra.mxu0 0.0
    %438 = vmatprep.mubr.f32.mxu0 0.0
    %439 = vmatmul.mubr.f32.gmra.mrb[0].mxu0 %v210
    %v440 = vpop.f32.mrb[0].mxu0
    %v441 = vadd.f32 0.0, %v440
    %v442 = vpop.f32.mrb[0].mxu0
    %v443 = vadd.f32 0.0, %v442
    %444 = vmatprep.mubr.f32.mxu0 0.0
    %445 = vmatmul.mubr.f32.gmra.mrb[0].mxu0 %v213
    %v446 = vpop.f32.mrb[0].mxu0
    %v447 = vadd.f32 0.0, %v446
    %v448 = vpop.f32.mrb[0].mxu0
    %v449 = vadd.f32 0.0, %v448
    %450 = vdwg.mxu0
    %451 = vmatprep.subr.mxu0 0.0
    %452 = vmatpush1.msra.mxu0 %v359
    %453 = vmatprep.subr.mxu0 0.0
    %454 = vmatpush1.msra.mxu0 %v364
    %455 = vmatprep.subr.mxu0 0.0
    %456 = vmatpush1.msra.mxu0 0.0
    %457 = vmatprep.subr.mxu0 0.0
    %458 = vmatpush1.msra.mxu0 0.0
    %459 = vmatprep.subr.mxu0 0.0
    %460 = vmatpush1.msra.mxu0 0.0
    %461 = vmatprep.subr.mxu0 0.0
    %462 = vmatpush1.msra.mxu0 0.0
    %463 = vmatprep.subr.mxu0 0.0
    %464 = vmatpush1.msra.mxu0 0.0
    %465 = vmatprep.subr.mxu0 0.0
    %466 = vmatpush1.msra.mxu0 0.0
    %467 = vmatprep.subr.mxu0 0.0
    %468 = vmatpush1.msra.mxu0 0.0
    %469 = vmatprep.subr.mxu0 0.0
    %470 = vmatpush1.msra.mxu0 0.0
    %471 = vmatprep.subr.mxu0 0.0
    %472 = vmatpush1.msra.mxu0 0.0
    %473 = vmatprep.subr.mxu0 0.0
    %474 = vmatpush1.msra.mxu0 0.0
    %475 = vmatprep.subr.mxu0 0.0
    %476 = vmatpush1.msra.mxu0 0.0
    %477 = vmatprep.subr.mxu0 0.0
    %478 = vmatpush1.msra.mxu0 0.0
    %479 = vmatprep.subr.mxu0 0.0
    %480 = vmatpush1.msra.mxu0 0.0
    %481 = vmatprep.subr.mxu0 0.0
    %482 = vmatpush1.msra.mxu0 0.0
    %483 = vmatprep.subr.mxu0 0.0
    %484 = vmatpush1.msra.mxu0 0.0
    %485 = vmatprep.subr.mxu0 0.0
    %486 = vmatpush1.msra.mxu0 0.0
    %487 = vmatprep.subr.mxu0 0.0
    %488 = vmatpush1.msra.mxu0 0.0
    %489 = vmatprep.subr.mxu0 0.0
    %490 = vmatpush1.msra.mxu0 0.0
    %491 = vmatprep.subr.mxu0 0.0
    %492 = vmatpush1.msra.mxu0 0.0
    %493 = vmatprep.subr.mxu0 0.0
    %494 = vmatpush1.msra.mxu0 0.0
    %495 = vmatprep.subr.mxu0 0.0
    %496 = vmatpush1.msra.mxu0 0.0
    %497 = vmatprep.subr.mxu0 0.0
    %498 = vmatpush1.msra.mxu0 0.0
    %499 = vmatprep.subr.mxu0 0.0
    %500 = vmatpush1.msra.mxu0 0.0
    %501 = vmatprep.subr.mxu0 0.0
    %502 = vmatpush1.msra.mxu0 0.0
    %503 = vmatprep.subr.mxu0 0.0
    %504 = vmatpush1.msra.mxu0 0.0
    %505 = vmatprep.subr.mxu0 0.0
    %506 = vmatpush1.msra.mxu0 0.0
    %507 = vmatprep.subr.mxu0 0.0
    %508 = vmatpush1.msra.mxu0 0.0
    %509 = vmatprep.subr.mxu0 0.0
    %510 = vmatpush1.msra.mxu0 0.0
    %511 = vmatprep.subr.mxu0 0.0
    %512 = vmatpush1.msra.mxu0 0.0
    %513 = vmatprep.subr.mxu0 0.0
    %514 = vmatpush1.msra.mxu0 0.0
    %515 = vmatprep.mubr.f32.mxu0 0.0
    %516 = vmatmul.mubr.f32.gmra.mrb[0].mxu0 %v210
    %v517 = vpop.f32.mrb[0].mxu0
    %v518 = vadd.f32 0.0, %v517
    %v519 = vpop.f32.mrb[0].mxu0
    %520 = vmatprep.mubr.f32.mxu0 0.0
    %521 = vmatmul.mubr.f32.gmra.mrb[0].mxu0 %v213
    %v522 = vpop.f32.mrb[0].mxu0
    %v523 = vadd.f32 0.0, %v522
    %v524 = vpop.f32.mrb[0].mxu0
    %525 = vdwg.mxu0
    %v526 = vld [vmem:[#allocation9] sm:$0xff]
    %v527 = vld [vmem:[#allocation9 + $0x8] sm:$0xff]
    %v528 = vld [vmem:[#allocation9 + $0x10] sm:$0xff]
    %v529 = vld [vmem:[#allocation9 + $0x18] sm:$0xff]
    %v530 = vld [vmem:[#allocation9 + $0x20] sm:$0xff]
    %v531 = vld [vmem:[#allocation9 + $0x28] sm:$0xff]
    %v532 = vld [vmem:[#allocation9 + $0x30] sm:$0xff]
    %v533 = vld [vmem:[#allocation9 + $0x38] sm:$0xff]
    %v534 = vld [vmem:[#allocation9 + $0x40] sm:$0xff]
    %v535 = vld [vmem:[#allocation9 + $0x48] sm:$0xff]
    %v536 = vld [vmem:[#allocation9 + $0x50] sm:$0xff]
    %v537 = vld [vmem:[#allocation9 + $0x58] sm:$0xff]
    %v538 = vld [vmem:[#allocation9 + $0x60] sm:$0xff]
    %v539 = vld [vmem:[#allocation9 + $0x68] sm:$0xff]
    %v540 = vld [vmem:[#allocation9 + $0x70] sm:$0xff]
    %v541 = vld [vmem:[#allocation9 + $0x78] sm:$0xff]
    %v542 = vld [vmem:[#allocation9 + $0x80] sm:$0xff]
    %v543 = vld [vmem:[#allocation9 + $0x88] sm:$0xff]
    %v544 = vld [vmem:[#allocation9 + $0x90] sm:$0xff]
    %v545 = vld [vmem:[#allocation9 + $0x98] sm:$0xff]
    %v546 = vld [vmem:[#allocation9 + $0xa0] sm:$0xff]
    %v547 = vld [vmem:[#allocation9 + $0xa8] sm:$0xff]
    %v548 = vld [vmem:[#allocation9 + $0xb0] sm:$0xff]
    %v549 = vld [vmem:[#allocation9 + $0xb8] sm:$0xff]
    %v550 = vld [vmem:[#allocation9 + $0xc0] sm:$0xff]
    %v551 = vld [vmem:[#allocation9 + $0xc8] sm:$0xff]
    %v552 = vld [vmem:[#allocation9 + $0xd0] sm:$0xff]
    %v553 = vld [vmem:[#allocation9 + $0xd8] sm:$0xff]
    %v554 = vld [vmem:[#allocation9 + $0xe0] sm:$0xff]
    %v555 = vld [vmem:[#allocation9 + $0xe8] sm:$0xff]
    %v556 = vld [vmem:[#allocation9 + $0xf0] sm:$0xff]
    %v557 = vld [vmem:[#allocation9 + $0xf8] sm:$0xff]
    %v558 = vld [vmem:[#allocation9 + $0x100] sm:$0xff]
    %v559 = vld [vmem:[#allocation9 + $0x108] sm:$0xff]
    %v560 = vld [vmem:[#allocation9 + $0x110] sm:$0xff]
    %v561 = vld [vmem:[#allocation9 + $0x118] sm:$0xff]
    %v562 = vld [vmem:[#allocation9 + $0x120] sm:$0xff]
    %v563 = vld [vmem:[#allocation9 + $0x128] sm:$0xff]
    %v564 = vld [vmem:[#allocation9 + $0x130] sm:$0xff]
    %v565 = vld [vmem:[#allocation9 + $0x138] sm:$0xff]
    %v566 = vld [vmem:[#allocation9 + $0x140] sm:$0xff]
    %v567 = vld [vmem:[#allocation9 + $0x148] sm:$0xff]
    %v568 = vld [vmem:[#allocation9 + $0x150] sm:$0xff]
    %v569 = vld [vmem:[#allocation9 + $0x158] sm:$0xff]
    %v570 = vld [vmem:[#allocation9 + $0x160] sm:$0xff]
    %v571 = vld [vmem:[#allocation9 + $0x168] sm:$0xff]
    %v572 = vld [vmem:[#allocation9 + $0x170] sm:$0xff]
    %v573 = vld [vmem:[#allocation9 + $0x178] sm:$0xff]
    %v574 = vld [vmem:[#allocation9 + $0x180] sm:$0xff]
    %v575 = vld [vmem:[#allocation9 + $0x188] sm:$0xff]
    %v576 = vld [vmem:[#allocation9 + $0x190] sm:$0xff]
    %v577 = vld [vmem:[#allocation9 + $0x198] sm:$0xff]
    %v578 = vld [vmem:[#allocation9 + $0x1a0] sm:$0xff]
    %v579 = vld [vmem:[#allocation9 + $0x1a8] sm:$0xff]
    %v580 = vld [vmem:[#allocation9 + $0x1b0] sm:$0xff]
    %v581 = vld [vmem:[#allocation9 + $0x1b8] sm:$0xff]
    %v582 = vld [vmem:[#allocation9 + $0x1c0] sm:$0xff]
    %v583 = vld [vmem:[#allocation9 + $0x1c8] sm:$0xff]
    %v584 = vld [vmem:[#allocation9 + $0x1d0] sm:$0xff]
    %v585 = vld [vmem:[#allocation9 + $0x1d8] sm:$0xff]
    %v586 = vld [vmem:[#allocation9 + $0x1e0] sm:$0xff]
    %v587 = vld [vmem:[#allocation9 + $0x1e8] sm:$0xff]
    %v588 = vld [vmem:[#allocation9 + $0x1f0] sm:$0xff]
    %v589 = vld [vmem:[#allocation9 + $0x1f8] sm:$0xff]
    %v590 = vld [vmem:[#allocation9 + $0x200] sm:$0xff]
    %v591 = vld [vmem:[#allocation9 + $0x208] sm:$0xff]
    %v592 = vld [vmem:[#allocation9 + $0x210] sm:$0xff]
    %v593 = vld [vmem:[#allocation9 + $0x218] sm:$0xff]
    %v594 = vld [vmem:[#allocation9 + $0x220] sm:$0xff]
    %v595 = vld [vmem:[#allocation9 + $0x228] sm:$0xff]
    %v596 = vld [vmem:[#allocation9 + $0x230] sm:$0xff]
    %v597 = vld [vmem:[#allocation9 + $0x238] sm:$0xff]
    %v598 = vld [vmem:[#allocation9 + $0x240] sm:$0xff]
    %v599 = vld [vmem:[#allocation9 + $0x248] sm:$0xff]
    %v600 = vld [vmem:[#allocation9 + $0x250] sm:$0xff]
    %v601 = vld [vmem:[#allocation9 + $0x258] sm:$0xff]
    %v602 = vld [vmem:[#allocation9 + $0x260] sm:$0xff]
    %v603 = vld [vmem:[#allocation9 + $0x268] sm:$0xff]
    %v604 = vld [vmem:[#allocation9 + $0x270] sm:$0xff]
    %v605 = vld [vmem:[#allocation9 + $0x278] sm:$0xff]
    %v606 = vld [vmem:[#allocation9 + $0x280] sm:$0xff]
    %v607 = vld [vmem:[#allocation9 + $0x288] sm:$0xff]
    %v608 = vld [vmem:[#allocation9 + $0x290] sm:$0xff]
    %v609 = vld [vmem:[#allocation9 + $0x298] sm:$0xff]
    %v610 = vld [vmem:[#allocation9 + $0x2a0] sm:$0xff]
    %v611 = vld [vmem:[#allocation9 + $0x2a8] sm:$0xff]
    %v612 = vld [vmem:[#allocation9 + $0x2b0] sm:$0xff]
    %v613 = vld [vmem:[#allocation9 + $0x2b8] sm:$0xff]
    %v614 = vld [vmem:[#allocation9 + $0x2c0] sm:$0xff]
    %v615 = vld [vmem:[#allocation9 + $0x2c8] sm:$0xff]
    %v616 = vld [vmem:[#allocation9 + $0x2d0] sm:$0xff]
    %v617 = vld [vmem:[#allocation9 + $0x2d8] sm:$0xff]
    %v618 = vld [vmem:[#allocation9 + $0x2e0] sm:$0xff]
    %v619 = vld [vmem:[#allocation9 + $0x2e8] sm:$0xff]
    %v620 = vld [vmem:[#allocation9 + $0x2f0] sm:$0xff]
    %v621 = vld [vmem:[#allocation9 + $0x2f8] sm:$0xff]
    %v622 = vld [vmem:[#allocation9 + $0x300] sm:$0xff]
    %v623 = vld [vmem:[#allocation9 + $0x308] sm:$0xff]
    %v624 = vld [vmem:[#allocation9 + $0x310] sm:$0xff]
    %v625 = vld [vmem:[#allocation9 + $0x318] sm:$0xff]
    %v626 = vld [vmem:[#allocation9 + $0x320] sm:$0xff]
    %v627 = vld [vmem:[#allocation9 + $0x328] sm:$0xff]
    %v628 = vld [vmem:[#allocation9 + $0x330] sm:$0xff]
    %v629 = vld [vmem:[#allocation9 + $0x338] sm:$0xff]
    %v630 = vld [vmem:[#allocation9 + $0x340] sm:$0xff]
    %v631 = vld [vmem:[#allocation9 + $0x348] sm:$0xff]
    %v632 = vld [vmem:[#allocation9 + $0x350] sm:$0xff]
    %v633 = vld [vmem:[#allocation9 + $0x358] sm:$0xff]
    %v634 = vld [vmem:[#allocation9 + $0x360] sm:$0xff]
    %v635 = vld [vmem:[#allocation9 + $0x368] sm:$0xff]
    %v636 = vld [vmem:[#allocation9 + $0x370] sm:$0xff]
    %v637 = vld [vmem:[#allocation9 + $0x378] sm:$0xff]
    %v638 = vld [vmem:[#allocation9 + $0x380] sm:$0xff]
    %v639 = vld [vmem:[#allocation9 + $0x388] sm:$0xff]
    %v640 = vld [vmem:[#allocation9 + $0x390] sm:$0xff]
    %v641 = vld [vmem:[#allocation9 + $0x398] sm:$0xff]
    %v642 = vld [vmem:[#allocation9 + $0x3a0] sm:$0xff]
    %v643 = vld [vmem:[#allocation9 + $0x3a8] sm:$0xff]
    %v644 = vld [vmem:[#allocation9 + $0x3b0] sm:$0xff]
    %v645 = vld [vmem:[#allocation9 + $0x3b8] sm:$0xff]
    %v646 = vld [vmem:[%s4] sm:$0x7]
    %v648 = vlaneseq
    %v649 = vshrl.u32 %v648, 7
    %v650 = vsub.s32 0, %v649
    %v651 = vrot.slane %v646, %v650
    %v652 = vlaneseq
    %v653 = vshrl.u32 %v652, 7
    %v654 = vsub.s32 1, %v653
    %v655 = vrot.slane %v646, %v654
    %v656 = vlaneseq
    %v657 = vshrl.u32 %v656, 7
    %v658 = vsub.s32 2, %v657
    %v659 = vrot.slane %v646, %v658
    %v664 = vsel %vm369, %v518, 0
    %v667 = vsel %vm369, %v523, 0
    %669 = vmatprep.subr.mxu0 %v527
    %670 = vmatpush1.msra.mxu0 %v526
    %671 = vmatprep.subr.mxu0 %v530
    %672 = vmatpush1.msra.mxu0 %v529
    %673 = vmatprep.subr.mxu0 %v533
    %674 = vmatpush1.msra.mxu0 %v532
    %675 = vmatprep.subr.mxu0 %v536
    %676 = vmatpush1.msra.mxu0 %v535
    %677 = vmatprep.subr.mxu0 %v539
    %678 = vmatpush1.msra.mxu0 %v538
    %679 = vmatprep.subr.mxu0 %v542
    %680 = vmatpush1.msra.mxu0 %v541
    %681 = vmatprep.subr.mxu0 %v545
    %682 = vmatpush1.msra.mxu0 %v544
    %683 = vmatprep.subr.mxu0 %v548
    %684 = vmatpush1.msra.mxu0 %v547
    %685 = vmatprep.subr.mxu0 %v551
    %686 = vmatpush1.msra.mxu0 %v550
    %687 = vmatprep.subr.mxu0 %v554
    %688 = vmatpush1.msra.mxu0 %v553
    %689 = vmatprep.subr.mxu0 %v557
    %690 = vmatpush1.msra.mxu0 %v556
    %691 = vmatprep.subr.mxu0 %v560
    %692 = vmatpush1.msra.mxu0 %v559
    %693 = vmatprep.subr.mxu0 %v563
    %694 = vmatpush1.msra.mxu0 %v562
    %695 = vmatprep.subr.mxu0 %v566
    %696 = vmatpush1.msra.mxu0 %v565
    %697 = vmatprep.subr.mxu0 %v569
    %698 = vmatpush1.msra.mxu0 %v568
    %699 = vmatprep.subr.mxu0 %v572
    %700 = vmatpush1.msra.mxu0 %v571
    %701 = vmatprep.subr.mxu0 %v575
    %702 = vmatpush1.msra.mxu0 %v574
    %703 = vmatprep.subr.mxu0 %v578
    %704 = vmatpush1.msra.mxu0 %v577
    %705 = vmatprep.subr.mxu0 %v581
    %706 = vmatpush1.msra.mxu0 %v580
    %707 = vmatprep.subr.mxu0 %v584
    %708 = vmatpush1.msra.mxu0 %v583
    %709 = vmatprep.subr.mxu0 %v587
    %710 = vmatpush1.msra.mxu0 %v586
    %711 = vmatprep.subr.mxu0 %v590
    %712 = vmatpush1.msra.mxu0 %v589
    %713 = vmatprep.subr.mxu0 %v593
    %714 = vmatpush1.msra.mxu0 %v592
    %715 = vmatprep.subr.mxu0 %v596
    %716 = vmatpush1.msra.mxu0 %v595
    %717 = vmatprep.subr.mxu0 %v599
    %718 = vmatpush1.msra.mxu0 %v598
    %719 = vmatprep.subr.mxu0 %v602
    %720 = vmatpush1.msra.mxu0 %v601
    %721 = vmatprep.subr.mxu0 %v605
    %722 = vmatpush1.msra.mxu0 %v604
    %723 = vmatprep.subr.mxu0 %v608
    %724 = vmatpush1.msra.mxu0 %v607
    %725 = vmatprep.subr.mxu0 %v611
    %726 = vmatpush1.msra.mxu0 %v610
    %727 = vmatprep.subr.mxu0 %v614
    %728 = vmatpush1.msra.mxu0 %v613
    %729 = vmatprep.subr.mxu0 %v617
    %730 = vmatpush1.msra.mxu0 %v616
    %731 = vmatprep.subr.mxu0 %v620
    %732 = vmatpush1.msra.mxu0 %v619
    %733 = vmatprep.mubr.f32.mxu0 %v443
    %734 = vmatmul.mubr.f32.gmra.mrb[0].mxu0 %v441
    %v735 = vpop.f32.mrb[0].mxu0
    %v736 = vadd.f32 %v651, %v735
    %v737 = vpop.f32.mrb[0].mxu0
    %v738 = vadd.f32 %v655, %v737
    %739 = vmatprep.mubr.f32.mxu0 %v449
    %740 = vmatmul.mubr.f32.gmra.mrb[0].mxu0 %v447
    %v741 = vpop.f32.mrb[0].mxu0
    %v742 = vadd.f32 %v651, %v741
    %v743 = vpop.f32.mrb[0].mxu0
    %v744 = vadd.f32 %v655, %v743
    %745 = vdwg.mxu0
    %746 = vmatprep.subr.mxu0 %v623
    %747 = vmatpush1.msra.mxu0 %v622
    %748 = vmatprep.subr.mxu0 %v626
    %749 = vmatpush1.msra.mxu0 %v625
    %750 = vmatprep.subr.mxu0 %v629
    %751 = vmatpush1.msra.mxu0 %v628
    %752 = vmatprep.subr.mxu0 %v632
    %753 = vmatpush1.msra.mxu0 %v631
    %754 = vmatprep.subr.mxu0 %v635
    %755 = vmatpush1.msra.mxu0 %v634
    %756 = vmatprep.subr.mxu0 %v638
    %757 = vmatpush1.msra.mxu0 %v637
    %758 = vmatprep.subr.mxu0 %v641
    %759 = vmatpush1.msra.mxu0 %v640
    %760 = vmatprep.subr.mxu0 %v644
    %761 = vmatpush1.msra.mxu0 %v643
    %762 = vmatprep.subr.mxu0 0.0
    %763 = vmatpush1.msra.mxu0 0.0
    %764 = vmatprep.subr.mxu0 0.0
    %765 = vmatpush1.msra.mxu0 0.0
    %766 = vmatprep.subr.mxu0 0.0
    %767 = vmatpush1.msra.mxu0 0.0
    %768 = vmatprep.subr.mxu0 0.0
    %769 = vmatpush1.msra.mxu0 0.0
    %770 = vmatprep.subr.mxu0 0.0
    %771 = vmatpush1.msra.mxu0 0.0
    %772 = vmatprep.subr.mxu0 0.0
    %773 = vmatpush1.msra.mxu0 0.0
    %774 = vmatprep.subr.mxu0 0.0
    %775 = vmatpush1.msra.mxu0 0.0
    %776 = vmatprep.subr.mxu0 0.0
    %777 = vmatpush1.msra.mxu0 0.0
    %778 = vmatprep.subr.mxu0 0.0
    %779 = vmatpush1.msra.mxu0 0.0
    %780 = vmatprep.subr.mxu0 0.0
    %781 = vmatpush1.msra.mxu0 0.0
    %782 = vmatprep.subr.mxu0 0.0
    %783 = vmatpush1.msra.mxu0 0.0
    %784 = vmatprep.subr.mxu0 0.0
    %785 = vmatpush1.msra.mxu0 0.0
    %786 = vmatprep.subr.mxu0 0.0
    %787 = vmatpush1.msra.mxu0 0.0
    %788 = vmatprep.subr.mxu0 0.0
    %789 = vmatpush1.msra.mxu0 0.0
    %790 = vmatprep.subr.mxu0 0.0
    %791 = vmatpush1.msra.mxu0 0.0
    %792 = vmatprep.subr.mxu0 0.0
    %793 = vmatpush1.msra.mxu0 0.0
    %794 = vmatprep.subr.mxu0 0.0
    %795 = vmatpush1.msra.mxu0 0.0
    %796 = vmatprep.subr.mxu0 0.0
    %797 = vmatpush1.msra.mxu0 0.0
    %798 = vmatprep.subr.mxu0 0.0
    %799 = vmatpush1.msra.mxu0 0.0
    %800 = vmatprep.subr.mxu0 0.0
    %801 = vmatpush1.msra.mxu0 0.0
    %802 = vmatprep.subr.mxu0 0.0
    %803 = vmatpush1.msra.mxu0 0.0
    %804 = vmatprep.subr.mxu0 0.0
    %805 = vmatpush1.msra.mxu0 0.0
    %806 = vmatprep.subr.mxu0 0.0
    %807 = vmatpush1.msra.mxu0 0.0
    %808 = vmatprep.subr.mxu0 0.0
    %809 = vmatpush1.msra.mxu0 0.0
    %810 = vmatprep.mubr.f32.mxu0 0.0
    %811 = vmatmul.mubr.f32.gmra.mrb[0].mxu0 %v664
    %v812 = vpop.f32.mrb[0].mxu0
    %v813 = vadd.f32 %v736, %v812
    %v814 = vpop.f32.mrb[0].mxu0
    %v815 = vadd.f32 %v738, %v814
    %816 = vmatprep.mubr.f32.mxu0 0.0
    %817 = vmatmul.mubr.f32.gmra.mrb[0].mxu0 %v667
    %v818 = vpop.f32.mrb[0].mxu0
    %v819 = vadd.f32 %v742, %v818
    %v820 = vpop.f32.mrb[0].mxu0
    %v821 = vadd.f32 %v744, %v820
    %822 = vdwg.mxu0
    %823 = vmatprep.subr.mxu0 0.0
    %824 = vmatpush1.msra.mxu0 %v528
    %825 = vmatprep.subr.mxu0 0.0
    %826 = vmatpush1.msra.mxu0 %v531
    %827 = vmatprep.subr.mxu0 0.0
    %828 = vmatpush1.msra.mxu0 %v534
    %829 = vmatprep.subr.mxu0 0.0
    %830 = vmatpush1.msra.mxu0 %v537
    %831 = vmatprep.subr.mxu0 0.0
    %832 = vmatpush1.msra.mxu0 %v540
    %833 = vmatprep.subr.mxu0 0.0
    %834 = vmatpush1.msra.mxu0 %v543
    %835 = vmatprep.subr.mxu0 0.0
    %836 = vmatpush1.msra.mxu0 %v546
    %837 = vmatprep.subr.mxu0 0.0
    %838 = vmatpush1.msra.mxu0 %v549
    %839 = vmatprep.subr.mxu0 0.0
    %840 = vmatpush1.msra.mxu0 %v552
    %841 = vmatprep.subr.mxu0 0.0
    %842 = vmatpush1.msra.mxu0 %v555
    %843 = vmatprep.subr.mxu0 0.0
    %844 = vmatpush1.msra.mxu0 %v558
    %845 = vmatprep.subr.mxu0 0.0
    %846 = vmatpush1.msra.mxu0 %v561
    %847 = vmatprep.subr.mxu0 0.0
    %848 = vmatpush1.msra.mxu0 %v564
    %849 = vmatprep.subr.mxu0 0.0
    %850 = vmatpush1.msra.mxu0 %v567
    %851 = vmatprep.subr.mxu0 0.0
    %852 = vmatpush1.msra.mxu0 %v570
    %853 = vmatprep.subr.mxu0 0.0
    %854 = vmatpush1.msra.mxu0 %v573
    %855 = vmatprep.subr.mxu0 0.0
    %856 = vmatpush1.msra.mxu0 %v576
    %857 = vmatprep.subr.mxu0 0.0
    %858 = vmatpush1.msra.mxu0 %v579
    %859 = vmatprep.subr.mxu0 0.0
    %860 = vmatpush1.msra.mxu0 %v582
    %861 = vmatprep.subr.mxu0 0.0
    %862 = vmatpush1.msra.mxu0 %v585
    %863 = vmatprep.subr.mxu0 0.0
    %864 = vmatpush1.msra.mxu0 %v588
    %865 = vmatprep.subr.mxu0 0.0
    %866 = vmatpush1.msra.mxu0 %v591
    %867 = vmatprep.subr.mxu0 0.0
    %868 = vmatpush1.msra.mxu0 %v594
    %869 = vmatprep.subr.mxu0 0.0
    %870 = vmatpush1.msra.mxu0 %v597
    %871 = vmatprep.subr.mxu0 0.0
    %872 = vmatpush1.msra.mxu0 %v600
    %873 = vmatprep.subr.mxu0 0.0
    %874 = vmatpush1.msra.mxu0 %v603
    %875 = vmatprep.subr.mxu0 0.0
    %876 = vmatpush1.msra.mxu0 %v606
    %877 = vmatprep.subr.mxu0 0.0
    %878 = vmatpush1.msra.mxu0 %v609
    %879 = vmatprep.subr.mxu0 0.0
    %880 = vmatpush1.msra.mxu0 %v612
    %881 = vmatprep.subr.mxu0 0.0
    %882 = vmatpush1.msra.mxu0 %v615
    %883 = vmatprep.subr.mxu0 0.0
    %884 = vmatpush1.msra.mxu0 %v618
    %885 = vmatprep.subr.mxu0 0.0
    %886 = vmatpush1.msra.mxu0 %v621
    %887 = vmatprep.mubr.f32.mxu0 %v443
    %888 = vmatmul.mubr.f32.gmra.mrb[0].mxu0 %v441
    %v889 = vpop.f32.mrb[0].mxu0
    %v890 = vadd.f32 %v659, %v889
    %v891 = vpop.f32.mrb[0].mxu0
    %892 = vmatprep.mubr.f32.mxu0 %v449
    %893 = vmatmul.mubr.f32.gmra.mrb[0].mxu0 %v447
    %v894 = vpop.f32.mrb[0].mxu0
    %v895 = vadd.f32 %v659, %v894
    %v896 = vpop.f32.mrb[0].mxu0
    %897 = vdwg.mxu0
    %898 = vmatprep.subr.mxu0 0.0
    %899 = vmatpush1.msra.mxu0 %v624
    %900 = vmatprep.subr.mxu0 0.0
    %901 = vmatpush1.msra.mxu0 %v627
    %902 = vmatprep.subr.mxu0 0.0
    %903 = vmatpush1.msra.mxu0 %v630
    %904 = vmatprep.subr.mxu0 0.0
    %905 = vmatpush1.msra.mxu0 %v633
    %906 = vmatprep.subr.mxu0 0.0
    %907 = vmatpush1.msra.mxu0 %v636
    %908 = vmatprep.subr.mxu0 0.0
    %909 = vmatpush1.msra.mxu0 %v639
    %910 = vmatprep.subr.mxu0 0.0
    %911 = vmatpush1.msra.mxu0 %v642
    %912 = vmatprep.subr.mxu0 0.0
    %913 = vmatpush1.msra.mxu0 %v645
    %914 = vmatprep.subr.mxu0 0.0
    %915 = vmatpush1.msra.mxu0 0.0
    %916 = vmatprep.subr.mxu0 0.0
    %917 = vmatpush1.msra.mxu0 0.0
    %918 = vmatprep.subr.mxu0 0.0
    %919 = vmatpush1.msra.mxu0 0.0
    %920 = vmatprep.subr.mxu0 0.0
    %921 = vmatpush1.msra.mxu0 0.0
    %922 = vmatprep.subr.mxu0 0.0
    %923 = vmatpush1.msra.mxu0 0.0
    %924 = vmatprep.subr.mxu0 0.0
    %925 = vmatpush1.msra.mxu0 0.0
    %926 = vmatprep.subr.mxu0 0.0
    %927 = vmatpush1.msra.mxu0 0.0
    %928 = vmatprep.subr.mxu0 0.0
    %929 = vmatpush1.msra.mxu0 0.0
    %930 = vmatprep.subr.mxu0 0.0
    %931 = vmatpush1.msra.mxu0 0.0
    %932 = vmatprep.subr.mxu0 0.0
    %933 = vmatpush1.msra.mxu0 0.0
    %934 = vmatprep.subr.mxu0 0.0
    %935 = vmatpush1.msra.mxu0 0.0
    %936 = vmatprep.subr.mxu0 0.0
    %937 = vmatpush1.msra.mxu0 0.0
    %938 = vmatprep.subr.mxu0 0.0
    %939 = vmatpush1.msra.mxu0 0.0
    %940 = vmatprep.subr.mxu0 0.0
    %941 = vmatpush1.msra.mxu0 0.0
    %942 = vmatprep.subr.mxu0 0.0
    %943 = vmatpush1.msra.mxu0 0.0
    %944 = vmatprep.subr.mxu0 0.0
    %945 = vmatpush1.msra.mxu0 0.0
    %946 = vmatprep.subr.mxu0 0.0
    %947 = vmatpush1.msra.mxu0 0.0
    %948 = vmatprep.subr.mxu0 0.0
    %949 = vmatpush1.msra.mxu0 0.0
    %950 = vmatprep.subr.mxu0 0.0
    %951 = vmatpush1.msra.mxu0 0.0
    %952 = vmatprep.subr.mxu0 0.0
    %953 = vmatpush1.msra.mxu0 0.0
    %954 = vmatprep.subr.mxu0 0.0
    %955 = vmatpush1.msra.mxu0 0.0
    %956 = vmatprep.subr.mxu0 0.0
    %957 = vmatpush1.msra.mxu0 0.0
    %958 = vmatprep.subr.mxu0 0.0
    %959 = vmatpush1.msra.mxu0 0.0
    %960 = vmatprep.subr.mxu0 0.0
    %961 = vmatpush1.msra.mxu0 0.0
    %962 = vmatprep.mubr.f32.mxu0 0.0
    %963 = vmatmul.mubr.f32.gmra.mrb[0].mxu0 %v664
    %v964 = vpop.f32.mrb[0].mxu0
    %v965 = vadd.f32 %v890, %v964
    %v966 = vpop.f32.mrb[0].mxu0
    %967 = vmatprep.mubr.f32.mxu0 0.0
    %968 = vmatmul.mubr.f32.gmra.mrb[0].mxu0 %v667
    %v969 = vpop.f32.mrb[0].mxu0
    %v970 = vadd.f32 %v895, %v969
    %v971 = vpop.f32.mrb[0].mxu0
    %972 = vdwg.mxu0
    %973 = vst [vmem:[%s9] sm:$0xff] %v813
    %974 = vst [vmem:[%s9 + $0x8] sm:$0xff] %v815
    %975 = vst.msk [vmem:[%s9 + $0x10] sm:$0xff] %vm369, %v965
    %976 = vst [vmem:[%s9 + $0x18] sm:$0xff] %v819
    %977 = vst [vmem:[%s9 + $0x20] sm:$0xff] %v821
    %978 = vst.msk [vmem:[%s9 + $0x28] sm:$0xff] %vm369, %v970
    %v979 = vld [vmem:[#allocation11] sm:$0x7]
    %v980 = vld [vmem:[#allocation2] sm:$0x1]
    %982 = vset.pattern.permute.xlu0 0
    %983 = vperm.xlu0 %982, %v980
    %v984 = vpop.permute.xlu0 %983
    %v986 = vlaneseq
    %v987 = vshrl.u32 %v986, 7
    %v988 = vsub.s32 0, %v987
    %v989 = vrot.slane %v984, %v988
    %v991 = vlaneseq
    %v992 = vshrl.u32 %v991, 7
    %v993 = vsub.s32 0, %v992
    %v994 = vrot.slane %v979, %v993
    %v995 = vlaneseq
    %v996 = vshrl.u32 %v995, 7
    %v997 = vsub.s32 1, %v996
    %v998 = vrot.slane %v979, %v997
    %v999 = vlaneseq
    %v1000 = vshrl.u32 %v999, 7
    %v1001 = vsub.s32 2, %v1000
    %v1002 = vrot.slane %v979, %v1001
    %v1005 = vsel %vm369, %v1002, 0
    %v1008 = vsel %vm369, %v965, 0
    %v1011 = vsel %vm369, %v970, 0
    %1013 = vmatprep.subr.mxu0 %v815
    %1014 = vmatpush1.xpose.msra.mxu0 %v813
    %1015 = vmatprep.subr.mxu0 %v821
    %1016 = vmatpush1.xpose.msra.mxu0 %v819
    %1017 = vmatprep.subr.mxu0 0.0
    %1018 = vmatpush1.xpose.msra.mxu0 0.0
    %1019 = vmatprep.subr.mxu0 0.0
    %1020 = vmatpush1.xpose.msra.mxu0 0.0
    %1021 = vmatprep.subr.mxu0 0.0
    %1022 = vmatpush1.xpose.msra.mxu0 0.0
    %1023 = vmatprep.subr.mxu0 0.0
    %1024 = vmatpush1.xpose.msra.mxu0 0.0
    %1025 = vmatprep.subr.mxu0 0.0
    %1026 = vmatpush1.xpose.msra.mxu0 0.0
    %1027 = vmatprep.subr.mxu0 0.0
    %1028 = vmatpush1.xpose.msra.mxu0 0.0
    %1029 = vmatprep.subr.mxu0 0.0
    %1030 = vmatpush1.xpose.msra.mxu0 0.0
    %1031 = vmatprep.subr.mxu0 0.0
    %1032 = vmatpush1.xpose.msra.mxu0 0.0
    %1033 = vmatprep.subr.mxu0 0.0
    %1034 = vmatpush1.xpose.msra.mxu0 0.0
    %1035 = vmatprep.subr.mxu0 0.0
    %1036 = vmatpush1.xpose.msra.mxu0 0.0
    %1037 = vmatprep.subr.mxu0 0.0
    %1038 = vmatpush1.xpose.msra.mxu0 0.0
    %1039 = vmatprep.subr.mxu0 0.0
    %1040 = vmatpush1.xpose.msra.mxu0 0.0
    %1041 = vmatprep.subr.mxu0 0.0
    %1042 = vmatpush1.xpose.msra.mxu0 0.0
    %1043 = vmatprep.subr.mxu0 0.0
    %1044 = vmatpush1.xpose.msra.mxu0 0.0
    %1045 = vmatprep.subr.mxu0 0.0
    %1046 = vmatpush1.xpose.msra.mxu0 0.0
    %1047 = vmatprep.subr.mxu0 0.0
    %1048 = vmatpush1.xpose.msra.mxu0 0.0
    %1049 = vmatprep.subr.mxu0 0.0
    %1050 = vmatpush1.xpose.msra.mxu0 0.0
    %1051 = vmatprep.subr.mxu0 0.0
    %1052 = vmatpush1.xpose.msra.mxu0 0.0
    %1053 = vmatprep.subr.mxu0 0.0
    %1054 = vmatpush1.xpose.msra.mxu0 0.0
    %1055 = vmatprep.subr.mxu0 0.0
    %1056 = vmatpush1.xpose.msra.mxu0 0.0
    %1057 = vmatprep.subr.mxu0 0.0
    %1058 = vmatpush1.xpose.msra.mxu0 0.0
    %1059 = vmatprep.subr.mxu0 0.0
    %1060 = vmatpush1.xpose.msra.mxu0 0.0
    %1061 = vmatprep.subr.mxu0 0.0
    %1062 = vmatpush1.xpose.msra.mxu0 0.0
    %1063 = vmatprep.subr.mxu0 0.0
    %1064 = vmatpush1.xpose.msra.mxu0 0.0
    %1065 = vmatprep.subr.mxu0 0.0
    %1066 = vmatpush1.xpose.msra.mxu0 0.0
    %1067 = vmatprep.subr.mxu0 0.0
    %1068 = vmatpush1.xpose.msra.mxu0 0.0
    %1069 = vmatprep.subr.mxu0 0.0
    %1070 = vmatpush1.xpose.msra.mxu0 0.0
    %1071 = vmatprep.subr.mxu0 0.0
    %1072 = vmatpush1.xpose.msra.mxu0 0.0
    %1073 = vmatprep.subr.mxu0 0.0
    %1074 = vmatpush1.xpose.msra.mxu0 0.0
    %1075 = vmatprep.subr.mxu0 0.0
    %1076 = vmatpush1.xpose.msra.mxu0 0.0
    %1077 = vmatprep.mubr.f32.mxu0 %v998
    %1078 = vmatmul.mubr.f32.gmra.mrb[0].mxu0 %v994
    %v1079 = vpop.f32.mrb[0].mxu0
    %v1080 = vadd.f32 %v989, %v1079
    %v1081 = vpop.f32.mrb[0].mxu0
    %1082 = vdwg.mxu0
    %1083 = vmatprep.subr.mxu0 0.0
    %1084 = vmatpush1.xpose.msra.mxu0 %v1008
    %1085 = vmatprep.subr.mxu0 0.0
    %1086 = vmatpush1.xpose.msra.mxu0 %v1011
    %1087 = vmatprep.subr.mxu0 0.0
    %1088 = vmatpush1.xpose.msra.mxu0 0.0
    %1089 = vmatprep.subr.mxu0 0.0
    %1090 = vmatpush1.xpose.msra.mxu0 0.0
    %1091 = vmatprep.subr.mxu0 0.0
    %1092 = vmatpush1.xpose.msra.mxu0 0.0
    %1093 = vmatprep.subr.mxu0 0.0
    %1094 = vmatpush1.xpose.msra.mxu0 0.0
    %1095 = vmatprep.subr.mxu0 0.0
    %1096 = vmatpush1.xpose.msra.mxu0 0.0
    %1097 = vmatprep.subr.mxu0 0.0
    %1098 = vmatpush1.xpose.msra.mxu0 0.0
    %1099 = vmatprep.subr.mxu0 0.0
    %1100 = vmatpush1.xpose.msra.mxu0 0.0
    %1101 = vmatprep.subr.mxu0 0.0
    %1102 = vmatpush1.xpose.msra.mxu0 0.0
    %1103 = vmatprep.subr.mxu0 0.0
    %1104 = vmatpush1.xpose.msra.mxu0 0.0
    %1105 = vmatprep.subr.mxu0 0.0
    %1106 = vmatpush1.xpose.msra.mxu0 0.0
    %1107 = vmatprep.subr.mxu0 0.0
    %1108 = vmatpush1.xpose.msra.mxu0 0.0
    %1109 = vmatprep.subr.mxu0 0.0
    %1110 = vmatpush1.xpose.msra.mxu0 0.0
    %1111 = vmatprep.subr.mxu0 0.0
    %1112 = vmatpush1.xpose.msra.mxu0 0.0
    %1113 = vmatprep.subr.mxu0 0.0
    %1114 = vmatpush1.xpose.msra.mxu0 0.0
    %1115 = vmatprep.subr.mxu0 0.0
    %1116 = vmatpush1.xpose.msra.mxu0 0.0
    %1117 = vmatprep.subr.mxu0 0.0
    %1118 = vmatpush1.xpose.msra.mxu0 0.0
    %1119 = vmatprep.subr.mxu0 0.0
    %1120 = vmatpush1.xpose.msra.mxu0 0.0
    %1121 = vmatprep.subr.mxu0 0.0
    %1122 = vmatpush1.xpose.msra.mxu0 0.0
    %1123 = vmatprep.subr.mxu0 0.0
    %1124 = vmatpush1.xpose.msra.mxu0 0.0
    %1125 = vmatprep.subr.mxu0 0.0
    %1126 = vmatpush1.xpose.msra.mxu0 0.0
    %1127 = vmatprep.subr.mxu0 0.0
    %1128 = vmatpush1.xpose.msra.mxu0 0.0
    %1129 = vmatprep.subr.mxu0 0.0
    %1130 = vmatpush1.xpose.msra.mxu0 0.0
    %1131 = vmatprep.subr.mxu0 0.0
    %1132 = vmatpush1.xpose.msra.mxu0 0.0
    %1133 = vmatprep.subr.mxu0 0.0
    %1134 = vmatpush1.xpose.msra.mxu0 0.0
    %1135 = vmatprep.subr.mxu0 0.0
    %1136 = vmatpush1.xpose.msra.mxu0 0.0
    %1137 = vmatprep.subr.mxu0 0.0
    %1138 = vmatpush1.xpose.msra.mxu0 0.0
    %1139 = vmatprep.subr.mxu0 0.0
    %1140 = vmatpush1.xpose.msra.mxu0 0.0
    %1141 = vmatprep.subr.mxu0 0.0
    %1142 = vmatpush1.xpose.msra.mxu0 0.0
    %1143 = vmatprep.subr.mxu0 0.0
    %1144 = vmatpush1.xpose.msra.mxu0 0.0
    %1145 = vmatprep.subr.mxu0 0.0
    %1146 = vmatpush1.xpose.msra.mxu0 0.0
    %1147 = vmatprep.mubr.f32.mxu0 0.0
    %1148 = vmatmul.mubr.f32.gmra.mrb[0].mxu0 %v1005
    %v1149 = vpop.f32.mrb[0].mxu0
    %v1150 = vadd.f32 %v1080, %v1149
    %v1151 = vpop.f32.mrb[0].mxu0
    %1152 = vdwg.mxu0
    %v1153 = vxor.u32 %v1150, 2147483648
    %v1154 = vmul.f32 %v1153, 1.442695
    %v1155 = vpow.pop %v1154
    %v1156 = vadd.f32 %v1155, 1.0
    %v1157 = vrcp.pop %v1156
    %v1158 = vmul.f32 1.0, %v1157
    %vm1159 = vcmask 122880
    %1160 = vst.msk [vmem:[%s10] sm:$0x1] %vm1159, %v1158
    // Predicated region
    $region50: #{_lambda_.11} parent=1 // pred_check
      _
    $region51: #{_lambda_.11} parent=1 // pred_check_branch
      %1162 = sbr.rel (0) target = $region53
    $region52: #{_lambda_.11} parent=1 // pred_region
      %s1164 = ssub.s32 256, 256
      %1165 = vsyncadd [#allocation5], %s1164
      %s1166 = sshll.u32 [#allocation12], 4
      %s1167 = int_to_ptr.vmem [resolvable:$true] %s1166
      %1172 = dma.vmem_to_hbm [thread:$0]  %s1167, 256, %s7, [#allocation5], 128, 128, 8
    $region53: #{_lambda_.11} parent=1 // pred_fallthru
      _
    // Predicated region
    $region54: #{_lambda_.11} parent=1 // pred_check
      _
    $region55: #{_lambda_.11} parent=1 // pred_check_branch
      %1174 = sbr.rel (0) target = $region57
    $region56: #{_lambda_.11} parent=1 // pred_region
      _
    $region57: #{_lambda_.11} parent=1 // pred_fallthru
      _
    // Predicated region
    $region58: #{_lambda_.11} parent=1 // pred_check
      _
    $region59: #{_lambda_.11} parent=1 // pred_check_branch
      %1176 = sbr.rel (0) target = $region61
    $region60: #{_lambda_.11} parent=1 // pred_region
      _
    $region61: #{_lambda_.11} parent=1 // pred_fallthru
      _
    // Predicated region
    $region62: #{_lambda_.11} parent=1 // pred_check
      _
    $region63: #{_lambda_.11} parent=1 // pred_check_branch
      %1178 = sbr.rel (0) target = $region65
    $region64: #{_lambda_.11} parent=1 // pred_region
      _
    $region65: #{_lambda_.11} parent=1 // pred_fallthru
      _
    // Predicated region
    $region66: #{_lambda_.11} parent=1 // pred_check
      _
    $region67: #{_lambda_.11} parent=1 // pred_check_branch
      %1180 = sbr.rel (0) target = $region69
    $region68: #{_lambda_.11} parent=1 // pred_region
      %1181 = dma.done [#allocation5], 256
    $region69: #{_lambda_.11} parent=1 // pred_fallthru
      _
    // Predicated region
    $region70: #{_lambda_.11} parent=1 // pred_check
      _
    $region71: #{_lambda_.11} parent=1 // pred_check_branch
      %1183 = sbr.rel (0) target = $region73
    $region72: #{_lambda_.11} parent=1 // pred_region
      _
    $region73: #{_lambda_.11} parent=1 // pred_fallthru
      _
    // Predicated region
    $region74: #{_lambda_.11} parent=1 // pred_check
      _
    $region75: #{_lambda_.11} parent=1 // pred_check_branch
      %1185 = sbr.rel (0) target = $region77
    $region76: #{_lambda_.11} parent=1 // pred_region
      _
    $region77: #{_lambda_.11} parent=1 // pred_fallthru
      _
    // Predicated region
    $region78: #{_lambda_.11} parent=1 // pred_check
      _
    $region79: #{_lambda_.11} parent=1 // pred_check_branch
      %1187 = sbr.rel (0) target = $region81
    $region80: #{_lambda_.11} parent=1 // pred_region
      _
    $region81: #{_lambda_.11} parent=1 // pred_fallthru
      _
    %1188 = vsyncpa [#allocation4], 1
    %1189 = vsyncpa [#allocation7], 1
    %1190 = vsyncpa [#allocation10], 1
    %1191 = vsyncpa [#allocation5], 1

// kernel: _lambda_.12
$region0: #{_lambda_.12}
  #allocation0 [shape = 'u32[]', space=smem, size = 0x4, offset = 0x4, fixed_abs, tag = 'smem constant byte address 0x4 - core index']
  #allocation1 [shape = 'u32[144,128]{1,0:T(1,128)}', space=vmem, size = 0x12000, scoped, tag = 'internal scratch']
  #allocation2 [shape = 'f32[1,1]{1,0:T(1,128)S(1)}', space=vmem, size = 0x200, scoped, tag = 'scoped memory for _lambda_.12']
  %s0 = inlined_call_operand.hbm [shape: f32[16,16], index: 0, kind: input, shape index: {}]
  %s1 = inlined_call_operand.vmem [shape: f32[16,320], index: 1, kind: input, shape index: {}]
  %s2 = inlined_call_operand.vmem [shape: s32[14,1], index: 2, kind: input, shape index: {}]
  %s3 = inlined_call_operand.vmem [shape: f32[14,1], index: 3, kind: input, shape index: {}]
  %s4 = inlined_call_operand.vmem [shape: f32[320,320], index: 4, kind: input, shape index: {}]
  %s5 = inlined_call_operand.vmem [shape: f32[1,320], index: 5, kind: input, shape index: {}]
  %s6 = inlined_call_operand.vmem [shape: f32[1,320], index: 6, kind: input, shape index: {}]
  %s7 = inlined_call_operand.<no memory space> [shape: f32[1,1], index: 7, kind: input, shape index: {}]
  %s8 = inlined_call_operand.vmem [shape: f32[14,14], index: 8, kind: output, shape index: {0}]
  %s9 = inlined_call_operand.vmem [shape: f32[14,320], index: 9, kind: output, shape index: {1}]
  %s10 = inlined_call_operand.vmem [shape: f32[1,14], index: 10, kind: output, shape index: {2}]
  %11 = xla_tuple %s8, %s9, %s10
  %s12 = sld [smem:[#allocation0]]
  $region62: #{_lambda_.12} parent=0
    _
  %s14 = ssub.s32 1, %s12
  %s15 = scalar_select 0, %s14, %s12
  %v16 = vstv %s7
  %17 = vst [vmem:[#allocation2] sm:$0x1] %v16
  $region1: #{_lambda_.12} parent=0
    #allocation3 [shape = 'u8[8192]{0}', space=vmem, size = 0x2000, scoped, tag = 'input window, operand 0, single buffered']
    #allocation4 [shape = 's32[1]{0}', space=sflag, size = 0x4, scoped, tag = 'scoped memory for _lambda_.12']
    %18 = vsyncpa [#allocation4], 0
    // Predicated region
    $region2: #{_lambda_.12} parent=1 // pred_check
      _
    $region3: #{_lambda_.12} parent=1 // pred_check_branch
      %20 = sbr.rel (0) target = $region5
    $region4: #{_lambda_.12} parent=1 // pred_region
      %s22 = ssub.s32 256, 256
      %23 = vsyncadd [#allocation4], %s22
      %s24 = sshll.u32 [#allocation3], 4
      %s25 = int_to_ptr.vmem [resolvable:$true] %s24
      %30 = dma.hbm_to_vmem [thread:$0]  %s0, 256, %s25, [#allocation4], 128, 128, 8
    $region5: #{_lambda_.12} parent=1 // pred_fallthru
      _
    // Predicated region
    $region6: #{_lambda_.12} parent=1 // pred_check
      _
    $region7: #{_lambda_.12} parent=1 // pred_check_branch
      %32 = sbr.rel (0) target = $region9
    $region8: #{_lambda_.12} parent=1 // pred_region
      _
    $region9: #{_lambda_.12} parent=1 // pred_fallthru
      _
    // Predicated region
    $region10: #{_lambda_.12} parent=1 // pred_check
      _
    $region11: #{_lambda_.12} parent=1 // pred_check_branch
      %34 = sbr.rel (0) target = $region13
    $region12: #{_lambda_.12} parent=1 // pred_region
      _
    $region13: #{_lambda_.12} parent=1 // pred_fallthru
      _
    // Predicated region
    $region14: #{_lambda_.12} parent=1 // pred_check
      _
    $region15: #{_lambda_.12} parent=1 // pred_check_branch
      %36 = sbr.rel (0) target = $region17
    $region16: #{_lambda_.12} parent=1 // pred_region
      _
    $region17: #{_lambda_.12} parent=1 // pred_fallthru
      _
    // Predicated region
    $region18: #{_lambda_.12} parent=1 // pred_check
      _
    $region19: #{_lambda_.12} parent=1 // pred_check_branch
      %38 = sbr.rel (0) target = $region21
    $region20: #{_lambda_.12} parent=1 // pred_region
      _
    $region21: #{_lambda_.12} parent=1 // pred_fallthru
      _
    // Predicated region
    $region22: #{_lambda_.12} parent=1 // pred_check
      _
    $region23: #{_lambda_.12} parent=1 // pred_check_branch
      %40 = sbr.rel (0) target = $region25
    $region24: #{_lambda_.12} parent=1 // pred_region
      _
    $region25: #{_lambda_.12} parent=1 // pred_fallthru
      _
    // Predicated region
    $region26: #{_lambda_.12} parent=1 // pred_check
      _
    $region27: #{_lambda_.12} parent=1 // pred_check_branch
      %42 = sbr.rel (0) target = $region29
    $region28: #{_lambda_.12} parent=1 // pred_region
      _
    $region29: #{_lambda_.12} parent=1 // pred_fallthru
      _
    // Predicated region
    $region30: #{_lambda_.12} parent=1 // pred_check
      _
    $region31: #{_lambda_.12} parent=1 // pred_check_branch
      %44 = sbr.rel (0) target = $region33
    $region32: #{_lambda_.12} parent=1 // pred_region
      _
    $region33: #{_lambda_.12} parent=1 // pred_fallthru
      _
    // Predicated region
    $region34: #{_lambda_.12} parent=1 // pred_check
      _
    $region35: #{_lambda_.12} parent=1 // pred_check_branch
      %46 = sbr.rel (0) target = $region37
    $region36: #{_lambda_.12} parent=1 // pred_region
      %47 = dma.done [#allocation4], 256
    $region37: #{_lambda_.12} parent=1 // pred_fallthru
      _
    %v48 = vld [vmem:[%s2] sm:$0xff]
    %v49 = vld [vmem:[%s2 + $0x8] sm:$0x3f]
    %v50 = vlaneseq
    %v51 = vand.u32 %v50, 127
    %52 = vset.pattern.permute.xlu0 0
    %53 = vperm.xlu0 %52, %v48
    %v54 = vpop.permute.xlu0 %53
    %55 = vset.pattern.permute.xlu0 0
    %56 = vperm.xlu0 %55, %v49
    %v57 = vpop.permute.xlu0 %56
    %vm58 = vcmp.eq.s32.totalorder %v51, %v54
    %vm59 = vcmp.eq.s32.totalorder %v51, %v57
    %v60 = vsel %vm58, 1, 0
    %v61 = vsel %vm59, 1, 0
    %v62 = vcvt.s32.f32 %v60
    %v63 = vcvt.s32.f32 %v61
    %v64 = vld [vmem:[%s1] sm:$0xff]
    %v65 = vld [vmem:[%s1 + $0x8] sm:$0xff]
    %v66 = vld [vmem:[%s1 + $0x10] sm:$0xff]
    %v67 = vld [vmem:[%s1 + $0x18] sm:$0xff]
    %v68 = vld [vmem:[%s1 + $0x20] sm:$0xff]
    %v69 = vld [vmem:[%s1 + $0x28] sm:$0xff]
    %vm70 = vcmask 130048
    %v72 = vsel %vm70, %v62, 0
    %v75 = vsel %vm70, %v63, 0
    %77 = vmatprep.subr.mxu0 %v65
    %78 = vmatpush1.msra.mxu0 %v64
    %79 = vmatprep.subr.mxu0 %v68
    %80 = vmatpush1.msra.mxu0 %v67
    %81 = vmatprep.subr.mxu0 0.0
    %82 = vmatpush1.msra.mxu0 0.0
    %83 = vmatprep.subr.mxu0 0.0
    %84 = vmatpush1.msra.mxu0 0.0
    %85 = vmatprep.subr.mxu0 0.0
    %86 = vmatpush1.msra.mxu0 0.0
    %87 = vmatprep.subr.mxu0 0.0
    %88 = vmatpush1.msra.mxu0 0.0
    %89 = vmatprep.subr.mxu0 0.0
    %90 = vmatpush1.msra.mxu0 0.0
    %91 = vmatprep.subr.mxu0 0.0
    %92 = vmatpush1.msra.mxu0 0.0
    %93 = vmatprep.subr.mxu0 0.0
    %94 = vmatpush1.msra.mxu0 0.0
    %95 = vmatprep.subr.mxu0 0.0
    %96 = vmatpush1.msra.mxu0 0.0
    %97 = vmatprep.subr.mxu0 0.0
    %98 = vmatpush1.msra.mxu0 0.0
    %99 = vmatprep.subr.mxu0 0.0
    %100 = vmatpush1.msra.mxu0 0.0
    %101 = vmatprep.subr.mxu0 0.0
    %102 = vmatpush1.msra.mxu0 0.0
    %103 = vmatprep.subr.mxu0 0.0
    %104 = vmatpush1.msra.mxu0 0.0
    %105 = vmatprep.subr.mxu0 0.0
    %106 = vmatpush1.msra.mxu0 0.0
    %107 = vmatprep.subr.mxu0 0.0
    %108 = vmatpush1.msra.mxu0 0.0
    %109 = vmatprep.subr.mxu0 0.0
    %110 = vmatpush1.msra.mxu0 0.0
    %111 = vmatprep.subr.mxu0 0.0
    %112 = vmatpush1.msra.mxu0 0.0
    %113 = vmatprep.subr.mxu0 0.0
    %114 = vmatpush1.msra.mxu0 0.0
    %115 = vmatprep.subr.mxu0 0.0
    %116 = vmatpush1.msra.mxu0 0.0
    %117 = vmatprep.subr.mxu0 0.0
    %118 = vmatpush1.msra.mxu0 0.0
    %119 = vmatprep.subr.mxu0 0.0
    %120 = vmatpush1.msra.mxu0 0.0
    %121 = vmatprep.subr.mxu0 0.0
    %122 = vmatpush1.msra.mxu0 0.0
    %123 = vmatprep.subr.mxu0 0.0
    %124 = vmatpush1.msra.mxu0 0.0
    %125 = vmatprep.subr.mxu0 0.0
    %126 = vmatpush1.msra.mxu0 0.0
    %127 = vmatprep.subr.mxu0 0.0
    %128 = vmatpush1.msra.mxu0 0.0
    %129 = vmatprep.subr.mxu0 0.0
    %130 = vmatpush1.msra.mxu0 0.0
    %131 = vmatprep.subr.mxu0 0.0
    %132 = vmatpush1.msra.mxu0 0.0
    %133 = vmatprep.subr.mxu0 0.0
    %134 = vmatpush1.msra.mxu0 0.0
    %135 = vmatprep.subr.mxu0 0.0
    %136 = vmatpush1.msra.mxu0 0.0
    %137 = vmatprep.subr.mxu0 0.0
    %138 = vmatpush1.msra.mxu0 0.0
    %139 = vmatprep.subr.mxu0 0.0
    %140 = vmatpush1.msra.mxu0 0.0
    %141 = vmatprep.mubr.f32.mxu0 0.0
    %142 = vmatmul.mubr.f32.gmra.mrb[0].mxu0 %v72
    %v143 = vpop.f32.mrb[0].mxu0
    %v144 = vadd.f32 0.0, %v143
    %v145 = vpop.f32.mrb[0].mxu0
    %v146 = vadd.f32 0.0, %v145
    %147 = vmatprep.mubr.f32.mxu0 0.0
    %148 = vmatmul.mubr.f32.gmra.mrb[0].mxu0 %v75
    %v149 = vpop.f32.mrb[0].mxu0
    %v150 = vadd.f32 0.0, %v149
    %v151 = vpop.f32.mrb[0].mxu0
    %v152 = vadd.f32 0.0, %v151
    %153 = vdwg.mxu0
    %154 = vmatprep.subr.mxu0 0.0
    %155 = vmatpush1.msra.mxu0 %v66
    %156 = vmatprep.subr.mxu0 0.0
    %157 = vmatpush1.msra.mxu0 %v69
    %158 = vmatprep.subr.mxu0 0.0
    %159 = vmatpush1.msra.mxu0 0.0
    %160 = vmatprep.subr.mxu0 0.0
    %161 = vmatpush1.msra.mxu0 0.0
    %162 = vmatprep.subr.mxu0 0.0
    %163 = vmatpush1.msra.mxu0 0.0
    %164 = vmatprep.subr.mxu0 0.0
    %165 = vmatpush1.msra.mxu0 0.0
    %166 = vmatprep.subr.mxu0 0.0
    %167 = vmatpush1.msra.mxu0 0.0
    %168 = vmatprep.subr.mxu0 0.0
    %169 = vmatpush1.msra.mxu0 0.0
    %170 = vmatprep.subr.mxu0 0.0
    %171 = vmatpush1.msra.mxu0 0.0
    %172 = vmatprep.subr.mxu0 0.0
    %173 = vmatpush1.msra.mxu0 0.0
    %174 = vmatprep.subr.mxu0 0.0
    %175 = vmatpush1.msra.mxu0 0.0
    %176 = vmatprep.subr.mxu0 0.0
    %177 = vmatpush1.msra.mxu0 0.0
    %178 = vmatprep.subr.mxu0 0.0
    %179 = vmatpush1.msra.mxu0 0.0
    %180 = vmatprep.subr.mxu0 0.0
    %181 = vmatpush1.msra.mxu0 0.0
    %182 = vmatprep.subr.mxu0 0.0
    %183 = vmatpush1.msra.mxu0 0.0
    %184 = vmatprep.subr.mxu0 0.0
    %185 = vmatpush1.msra.mxu0 0.0
    %186 = vmatprep.subr.mxu0 0.0
    %187 = vmatpush1.msra.mxu0 0.0
    %188 = vmatprep.subr.mxu0 0.0
    %189 = vmatpush1.msra.mxu0 0.0
    %190 = vmatprep.subr.mxu0 0.0
    %191 = vmatpush1.msra.mxu0 0.0
    %192 = vmatprep.subr.mxu0 0.0
    %193 = vmatpush1.msra.mxu0 0.0
    %194 = vmatprep.subr.mxu0 0.0
    %195 = vmatpush1.msra.mxu0 0.0
    %196 = vmatprep.subr.mxu0 0.0
    %197 = vmatpush1.msra.mxu0 0.0
    %198 = vmatprep.subr.mxu0 0.0
    %199 = vmatpush1.msra.mxu0 0.0
    %200 = vmatprep.subr.mxu0 0.0
    %201 = vmatpush1.msra.mxu0 0.0
    %202 = vmatprep.subr.mxu0 0.0
    %203 = vmatpush1.msra.mxu0 0.0
    %204 = vmatprep.subr.mxu0 0.0
    %205 = vmatpush1.msra.mxu0 0.0
    %206 = vmatprep.subr.mxu0 0.0
    %207 = vmatpush1.msra.mxu0 0.0
    %208 = vmatprep.subr.mxu0 0.0
    %209 = vmatpush1.msra.mxu0 0.0
    %210 = vmatprep.subr.mxu0 0.0
    %211 = vmatpush1.msra.mxu0 0.0
    %212 = vmatprep.subr.mxu0 0.0
    %213 = vmatpush1.msra.mxu0 0.0
    %214 = vmatprep.subr.mxu0 0.0
    %215 = vmatpush1.msra.mxu0 0.0
    %216 = vmatprep.subr.mxu0 0.0
    %217 = vmatpush1.msra.mxu0 0.0
    %218 = vmatprep.mubr.f32.mxu0 0.0
    %219 = vmatmul.mubr.f32.gmra.mrb[0].mxu0 %v72
    %v220 = vpop.f32.mrb[0].mxu0
    %v221 = vadd.f32 0.0, %v220
    %v222 = vpop.f32.mrb[0].mxu0
    %223 = vmatprep.mubr.f32.mxu0 0.0
    %224 = vmatmul.mubr.f32.gmra.mrb[0].mxu0 %v75
    %v225 = vpop.f32.mrb[0].mxu0
    %v226 = vadd.f32 0.0, %v225
    %v227 = vpop.f32.mrb[0].mxu0
    %228 = vdwg.mxu0
    %v229 = vld [vmem:[%s3] sm:$0xff]
    %v230 = vld [vmem:[%s3 + $0x8] sm:$0x3f]
    %232 = vset.pattern.permute.xlu0 0
    %233 = vperm.xlu0 %232, %v229
    %v234 = vpop.permute.xlu0 %233
    %237 = vset.pattern.permute.xlu0 0
    %238 = vperm.xlu0 %237, %v230
    %v239 = vpop.permute.xlu0 %238
    %v241 = vmul.f32 %v144, %v234
    %v242 = vmul.f32 %v146, %v234
    %v243 = vmul.f32 %v221, %v234
    %v244 = vmul.f32 %v150, %v239
    %v245 = vmul.f32 %v152, %v239
    %v246 = vmul.f32 %v226, %v239
    %v247 = vld [vmem:[#allocation3] sm:$0xff]
    %v248 = vld [vmem:[#allocation3 + $0x8] sm:$0xff]
    %v250 = vsel %vm70, %v247, 0
    %v253 = vsel %vm70, %v248, 0
    %255 = vmatprep.subr.mxu0 0.0
    %256 = vmatpush1.xpose.msra.mxu0 %v72
    %257 = vmatprep.subr.mxu0 0.0
    %258 = vmatpush1.xpose.msra.mxu0 %v75
    %259 = vmatprep.subr.mxu0 0.0
    %260 = vmatpush1.xpose.msra.mxu0 0.0
    %261 = vmatprep.subr.mxu0 0.0
    %262 = vmatpush1.xpose.msra.mxu0 0.0
    %263 = vmatprep.subr.mxu0 0.0
    %264 = vmatpush1.xpose.msra.mxu0 0.0
    %265 = vmatprep.subr.mxu0 0.0
    %266 = vmatpush1.xpose.msra.mxu0 0.0
    %267 = vmatprep.subr.mxu0 0.0
    %268 = vmatpush1.xpose.msra.mxu0 0.0
    %269 = vmatprep.subr.mxu0 0.0
    %270 = vmatpush1.xpose.msra.mxu0 0.0
    %271 = vmatprep.subr.mxu0 0.0
    %272 = vmatpush1.xpose.msra.mxu0 0.0
    %273 = vmatprep.subr.mxu0 0.0
    %274 = vmatpush1.xpose.msra.mxu0 0.0
    %275 = vmatprep.subr.mxu0 0.0
    %276 = vmatpush1.xpose.msra.mxu0 0.0
    %277 = vmatprep.subr.mxu0 0.0
    %278 = vmatpush1.xpose.msra.mxu0 0.0
    %279 = vmatprep.subr.mxu0 0.0
    %280 = vmatpush1.xpose.msra.mxu0 0.0
    %281 = vmatprep.subr.mxu0 0.0
    %282 = vmatpush1.xpose.msra.mxu0 0.0
    %283 = vmatprep.subr.mxu0 0.0
    %284 = vmatpush1.xpose.msra.mxu0 0.0
    %285 = vmatprep.subr.mxu0 0.0
    %286 = vmatpush1.xpose.msra.mxu0 0.0
    %287 = vmatprep.subr.mxu0 0.0
    %288 = vmatpush1.xpose.msra.mxu0 0.0
    %289 = vmatprep.subr.mxu0 0.0
    %290 = vmatpush1.xpose.msra.mxu0 0.0
    %291 = vmatprep.subr.mxu0 0.0
    %292 = vmatpush1.xpose.msra.mxu0 0.0
    %293 = vmatprep.subr.mxu0 0.0
    %294 = vmatpush1.xpose.msra.mxu0 0.0
    %295 = vmatprep.subr.mxu0 0.0
    %296 = vmatpush1.xpose.msra.mxu0 0.0
    %297 = vmatprep.subr.mxu0 0.0
    %298 = vmatpush1.xpose.msra.mxu0 0.0
    %299 = vmatprep.subr.mxu0 0.0
    %300 = vmatpush1.xpose.msra.mxu0 0.0
    %301 = vmatprep.subr.mxu0 0.0
    %302 = vmatpush1.xpose.msra.mxu0 0.0
    %303 = vmatprep.subr.mxu0 0.0
    %304 = vmatpush1.xpose.msra.mxu0 0.0
    %305 = vmatprep.subr.mxu0 0.0
    %306 = vmatpush1.xpose.msra.mxu0 0.0
    %307 = vmatprep.subr.mxu0 0.0
    %308 = vmatpush1.xpose.msra.mxu0 0.0
    %309 = vmatprep.subr.mxu0 0.0
    %310 = vmatpush1.xpose.msra.mxu0 0.0
    %311 = vmatprep.subr.mxu0 0.0
    %312 = vmatpush1.xpose.msra.mxu0 0.0
    %313 = vmatprep.subr.mxu0 0.0
    %314 = vmatpush1.xpose.msra.mxu0 0.0
    %315 = vmatprep.subr.mxu0 0.0
    %316 = vmatpush1.xpose.msra.mxu0 0.0
    %317 = vmatprep.subr.mxu0 0.0
    %318 = vmatpush1.xpose.msra.mxu0 0.0
    %319 = vmatprep.mubr.f32.mxu0 0.0
    %320 = vmatmul.mubr.f32.gmra.mrb[0].mxu0 %v250
    %v321 = vpop.f32.mrb[0].mxu0
    %v322 = vadd.f32 0.0, %v321
    %v323 = vpop.f32.mrb[0].mxu0
    %324 = vmatprep.mubr.f32.mxu0 0.0
    %325 = vmatmul.mubr.f32.gmra.mrb[0].mxu0 %v253
    %v326 = vpop.f32.mrb[0].mxu0
    %v327 = vadd.f32 0.0, %v326
    %v328 = vpop.f32.mrb[0].mxu0
    %329 = vdwg.mxu0
    %330 = vmatprep.subr.mxu0 0.0
    %331 = vmatpush1.msra.mxu0 %v322
    %332 = vmatprep.subr.mxu0 0.0
    %333 = vmatpush1.msra.mxu0 %v327
    %334 = vmatprep.subr.mxu0 0.0
    %335 = vmatpush1.msra.mxu0 0.0
    %336 = vmatprep.subr.mxu0 0.0
    %337 = vmatpush1.msra.mxu0 0.0
    %338 = vmatprep.subr.mxu0 0.0
    %339 = vmatpush1.msra.mxu0 0.0
    %340 = vmatprep.subr.mxu0 0.0
    %341 = vmatpush1.msra.mxu0 0.0
    %342 = vmatprep.subr.mxu0 0.0
    %343 = vmatpush1.msra.mxu0 0.0
    %344 = vmatprep.subr.mxu0 0.0
    %345 = vmatpush1.msra.mxu0 0.0
    %346 = vmatprep.subr.mxu0 0.0
    %347 = vmatpush1.msra.mxu0 0.0
    %348 = vmatprep.subr.mxu0 0.0
    %349 = vmatpush1.msra.mxu0 0.0
    %350 = vmatprep.subr.mxu0 0.0
    %351 = vmatpush1.msra.mxu0 0.0
    %352 = vmatprep.subr.mxu0 0.0
    %353 = vmatpush1.msra.mxu0 0.0
    %354 = vmatprep.subr.mxu0 0.0
    %355 = vmatpush1.msra.mxu0 0.0
    %356 = vmatprep.subr.mxu0 0.0
    %357 = vmatpush1.msra.mxu0 0.0
    %358 = vmatprep.subr.mxu0 0.0
    %359 = vmatpush1.msra.mxu0 0.0
    %360 = vmatprep.subr.mxu0 0.0
    %361 = vmatpush1.msra.mxu0 0.0
    %362 = vmatprep.subr.mxu0 0.0
    %363 = vmatpush1.msra.mxu0 0.0
    %364 = vmatprep.subr.mxu0 0.0
    %365 = vmatpush1.msra.mxu0 0.0
    %366 = vmatprep.subr.mxu0 0.0
    %367 = vmatpush1.msra.mxu0 0.0
    %368 = vmatprep.subr.mxu0 0.0
    %369 = vmatpush1.msra.mxu0 0.0
    %370 = vmatprep.subr.mxu0 0.0
    %371 = vmatpush1.msra.mxu0 0.0
    %372 = vmatprep.subr.mxu0 0.0
    %373 = vmatpush1.msra.mxu0 0.0
    %374 = vmatprep.subr.mxu0 0.0
    %375 = vmatpush1.msra.mxu0 0.0
    %376 = vmatprep.subr.mxu0 0.0
    %377 = vmatpush1.msra.mxu0 0.0
    %378 = vmatprep.subr.mxu0 0.0
    %379 = vmatpush1.msra.mxu0 0.0
    %380 = vmatprep.subr.mxu0 0.0
    %381 = vmatpush1.msra.mxu0 0.0
    %382 = vmatprep.subr.mxu0 0.0
    %383 = vmatpush1.msra.mxu0 0.0
    %384 = vmatprep.subr.mxu0 0.0
    %385 = vmatpush1.msra.mxu0 0.0
    %386 = vmatprep.subr.mxu0 0.0
    %387 = vmatpush1.msra.mxu0 0.0
    %388 = vmatprep.subr.mxu0 0.0
    %389 = vmatpush1.msra.mxu0 0.0
    %390 = vmatprep.subr.mxu0 0.0
    %391 = vmatpush1.msra.mxu0 0.0
    %392 = vmatprep.subr.mxu0 0.0
    %393 = vmatpush1.msra.mxu0 0.0
    %394 = vmatprep.mubr.f32.mxu0 0.0
    %395 = vmatmul.mubr.f32.gmra.mrb[0].mxu0 %v72
    %v396 = vpop.f32.mrb[0].mxu0
    %v397 = vadd.f32 0.0, %v396
    %v398 = vpop.f32.mrb[0].mxu0
    %399 = vmatprep.mubr.f32.mxu0 0.0
    %400 = vmatmul.mubr.f32.gmra.mrb[0].mxu0 %v75
    %v401 = vpop.f32.mrb[0].mxu0
    %v402 = vadd.f32 0.0, %v401
    %v403 = vpop.f32.mrb[0].mxu0
    %404 = vdwg.mxu0
    %vm405 = vcmask 113664
    %406 = vst.msk [vmem:[%s8] sm:$0xff] %vm405, %v397
    %vm407 = vcmask 111616
    %408 = vst.msk [vmem:[%s8 + $0x8] sm:$0x3f] %vm407, %v402
    %v410 = vsel %vm405, %v397, 0
    %v413 = vsel %vm405, %v402, 0
    %vm415 = vcmask 1045504
    %v417 = vsel %vm415, %v244, 0
    %v420 = vsel %vm415, %v245, 0
    %v423 = vsel %vm415, %v246, 0
    %425 = vmatprep.subr.mxu0 %v242
    %426 = vmatpush1.msra.mxu0 %v241
    %427 = vmatprep.subr.mxu0 %v420
    %428 = vmatpush1.msra.mxu0 %v417
    %429 = vmatprep.subr.mxu0 0.0
    %430 = vmatpush1.msra.mxu0 0.0
    %431 = vmatprep.subr.mxu0 0.0
    %432 = vmatpush1.msra.mxu0 0.0
    %433 = vmatprep.subr.mxu0 0.0
    %434 = vmatpush1.msra.mxu0 0.0
    %435 = vmatprep.subr.mxu0 0.0
    %436 = vmatpush1.msra.mxu0 0.0
    %437 = vmatprep.subr.mxu0 0.0
    %438 = vmatpush1.msra.mxu0 0.0
    %439 = vmatprep.subr.mxu0 0.0
    %440 = vmatpush1.msra.mxu0 0.0
    %441 = vmatprep.subr.mxu0 0.0
    %442 = vmatpush1.msra.mxu0 0.0
    %443 = vmatprep.subr.mxu0 0.0
    %444 = vmatpush1.msra.mxu0 0.0
    %445 = vmatprep.subr.mxu0 0.0
    %446 = vmatpush1.msra.mxu0 0.0
    %447 = vmatprep.subr.mxu0 0.0
    %448 = vmatpush1.msra.mxu0 0.0
    %449 = vmatprep.subr.mxu0 0.0
    %450 = vmatpush1.msra.mxu0 0.0
    %451 = vmatprep.subr.mxu0 0.0
    %452 = vmatpush1.msra.mxu0 0.0
    %453 = vmatprep.subr.mxu0 0.0
    %454 = vmatpush1.msra.mxu0 0.0
    %455 = vmatprep.subr.mxu0 0.0
    %456 = vmatpush1.msra.mxu0 0.0
    %457 = vmatprep.subr.mxu0 0.0
    %458 = vmatpush1.msra.mxu0 0.0
    %459 = vmatprep.subr.mxu0 0.0
    %460 = vmatpush1.msra.mxu0 0.0
    %461 = vmatprep.subr.mxu0 0.0
    %462 = vmatpush1.msra.mxu0 0.0
    %463 = vmatprep.subr.mxu0 0.0
    %464 = vmatpush1.msra.mxu0 0.0
    %465 = vmatprep.subr.mxu0 0.0
    %466 = vmatpush1.msra.mxu0 0.0
    %467 = vmatprep.subr.mxu0 0.0
    %468 = vmatpush1.msra.mxu0 0.0
    %469 = vmatprep.subr.mxu0 0.0
    %470 = vmatpush1.msra.mxu0 0.0
    %471 = vmatprep.subr.mxu0 0.0
    %472 = vmatpush1.msra.mxu0 0.0
    %473 = vmatprep.subr.mxu0 0.0
    %474 = vmatpush1.msra.mxu0 0.0
    %475 = vmatprep.subr.mxu0 0.0
    %476 = vmatpush1.msra.mxu0 0.0
    %477 = vmatprep.subr.mxu0 0.0
    %478 = vmatpush1.msra.mxu0 0.0
    %479 = vmatprep.subr.mxu0 0.0
    %480 = vmatpush1.msra.mxu0 0.0
    %481 = vmatprep.subr.mxu0 0.0
    %482 = vmatpush1.msra.mxu0 0.0
    %483 = vmatprep.subr.mxu0 0.0
    %484 = vmatpush1.msra.mxu0 0.0
    %485 = vmatprep.subr.mxu0 0.0
    %486 = vmatpush1.msra.mxu0 0.0
    %487 = vmatprep.subr.mxu0 0.0
    %488 = vmatpush1.msra.mxu0 0.0
    %489 = vmatprep.mubr.f32.mxu0 0.0
    %490 = vmatmul.mubr.f32.gmra.mrb[0].mxu0 %v410
    %v491 = vpop.f32.mrb[0].mxu0
    %v492 = vadd.f32 0.0, %v491
    %v493 = vpop.f32.mrb[0].mxu0
    %v494 = vadd.f32 0.0, %v493
    %495 = vmatprep.mubr.f32.mxu0 0.0
    %496 = vmatmul.mubr.f32.gmra.mrb[0].mxu0 %v413
    %v497 = vpop.f32.mrb[0].mxu0
    %v498 = vadd.f32 0.0, %v497
    %v499 = vpop.f32.mrb[0].mxu0
    %v500 = vadd.f32 0.0, %v499
    %501 = vdwg.mxu0
    %502 = vmatprep.subr.mxu0 0.0
    %503 = vmatpush1.msra.mxu0 %v243
    %504 = vmatprep.subr.mxu0 0.0
    %505 = vmatpush1.msra.mxu0 %v423
    %506 = vmatprep.subr.mxu0 0.0
    %507 = vmatpush1.msra.mxu0 0.0
    %508 = vmatprep.subr.mxu0 0.0
    %509 = vmatpush1.msra.mxu0 0.0
    %510 = vmatprep.subr.mxu0 0.0
    %511 = vmatpush1.msra.mxu0 0.0
    %512 = vmatprep.subr.mxu0 0.0
    %513 = vmatpush1.msra.mxu0 0.0
    %514 = vmatprep.subr.mxu0 0.0
    %515 = vmatpush1.msra.mxu0 0.0
    %516 = vmatprep.subr.mxu0 0.0
    %517 = vmatpush1.msra.mxu0 0.0
    %518 = vmatprep.subr.mxu0 0.0
    %519 = vmatpush1.msra.mxu0 0.0
    %520 = vmatprep.subr.mxu0 0.0
    %521 = vmatpush1.msra.mxu0 0.0
    %522 = vmatprep.subr.mxu0 0.0
    %523 = vmatpush1.msra.mxu0 0.0
    %524 = vmatprep.subr.mxu0 0.0
    %525 = vmatpush1.msra.mxu0 0.0
    %526 = vmatprep.subr.mxu0 0.0
    %527 = vmatpush1.msra.mxu0 0.0
    %528 = vmatprep.subr.mxu0 0.0
    %529 = vmatpush1.msra.mxu0 0.0
    %530 = vmatprep.subr.mxu0 0.0
    %531 = vmatpush1.msra.mxu0 0.0
    %532 = vmatprep.subr.mxu0 0.0
    %533 = vmatpush1.msra.mxu0 0.0
    %534 = vmatprep.subr.mxu0 0.0
    %535 = vmatpush1.msra.mxu0 0.0
    %536 = vmatprep.subr.mxu0 0.0
    %537 = vmatpush1.msra.mxu0 0.0
    %538 = vmatprep.subr.mxu0 0.0
    %539 = vmatpush1.msra.mxu0 0.0
    %540 = vmatprep.subr.mxu0 0.0
    %541 = vmatpush1.msra.mxu0 0.0
    %542 = vmatprep.subr.mxu0 0.0
    %543 = vmatpush1.msra.mxu0 0.0
    %544 = vmatprep.subr.mxu0 0.0
    %545 = vmatpush1.msra.mxu0 0.0
    %546 = vmatprep.subr.mxu0 0.0
    %547 = vmatpush1.msra.mxu0 0.0
    %548 = vmatprep.subr.mxu0 0.0
    %549 = vmatpush1.msra.mxu0 0.0
    %550 = vmatprep.subr.mxu0 0.0
    %551 = vmatpush1.msra.mxu0 0.0
    %552 = vmatprep.subr.mxu0 0.0
    %553 = vmatpush1.msra.mxu0 0.0
    %554 = vmatprep.subr.mxu0 0.0
    %555 = vmatpush1.msra.mxu0 0.0
    %556 = vmatprep.subr.mxu0 0.0
    %557 = vmatpush1.msra.mxu0 0.0
    %558 = vmatprep.subr.mxu0 0.0
    %559 = vmatpush1.msra.mxu0 0.0
    %560 = vmatprep.subr.mxu0 0.0
    %561 = vmatpush1.msra.mxu0 0.0
    %562 = vmatprep.subr.mxu0 0.0
    %563 = vmatpush1.msra.mxu0 0.0
    %564 = vmatprep.subr.mxu0 0.0
    %565 = vmatpush1.msra.mxu0 0.0
    %566 = vmatprep.mubr.f32.mxu0 0.0
    %567 = vmatmul.mubr.f32.gmra.mrb[0].mxu0 %v410
    %v568 = vpop.f32.mrb[0].mxu0
    %v569 = vadd.f32 0.0, %v568
    %v570 = vpop.f32.mrb[0].mxu0
    %571 = vmatprep.mubr.f32.mxu0 0.0
    %572 = vmatmul.mubr.f32.gmra.mrb[0].mxu0 %v413
    %v573 = vpop.f32.mrb[0].mxu0
    %v574 = vadd.f32 0.0, %v573
    %v575 = vpop.f32.mrb[0].mxu0
    %576 = vdwg.mxu0
    %v577 = vld [vmem:[%s4] sm:$0xff]
    %v578 = vld [vmem:[%s4 + $0x8] sm:$0xff]
    %v579 = vld [vmem:[%s4 + $0x10] sm:$0xff]
    %v580 = vld [vmem:[%s4 + $0x18] sm:$0xff]
    %v581 = vld [vmem:[%s4 + $0x20] sm:$0xff]
    %v582 = vld [vmem:[%s4 + $0x28] sm:$0xff]
    %v583 = vld [vmem:[%s4 + $0x30] sm:$0xff]
    %v584 = vld [vmem:[%s4 + $0x38] sm:$0xff]
    %v585 = vld [vmem:[%s4 + $0x40] sm:$0xff]
    %v586 = vld [vmem:[%s4 + $0x48] sm:$0xff]
    %v587 = vld [vmem:[%s4 + $0x50] sm:$0xff]
    %v588 = vld [vmem:[%s4 + $0x58] sm:$0xff]
    %v589 = vld [vmem:[%s4 + $0x60] sm:$0xff]
    %v590 = vld [vmem:[%s4 + $0x68] sm:$0xff]
    %v591 = vld [vmem:[%s4 + $0x70] sm:$0xff]
    %v592 = vld [vmem:[%s4 + $0x78] sm:$0xff]
    %v593 = vld [vmem:[%s4 + $0x80] sm:$0xff]
    %v594 = vld [vmem:[%s4 + $0x88] sm:$0xff]
    %v595 = vld [vmem:[%s4 + $0x90] sm:$0xff]
    %v596 = vld [vmem:[%s4 + $0x98] sm:$0xff]
    %v597 = vld [vmem:[%s4 + $0xa0] sm:$0xff]
    %v598 = vld [vmem:[%s4 + $0xa8] sm:$0xff]
    %v599 = vld [vmem:[%s4 + $0xb0] sm:$0xff]
    %v600 = vld [vmem:[%s4 + $0xb8] sm:$0xff]
    %v601 = vld [vmem:[%s4 + $0xc0] sm:$0xff]
    %v602 = vld [vmem:[%s4 + $0xc8] sm:$0xff]
    %v603 = vld [vmem:[%s4 + $0xd0] sm:$0xff]
    %v604 = vld [vmem:[%s4 + $0xd8] sm:$0xff]
    %v605 = vld [vmem:[%s4 + $0xe0] sm:$0xff]
    %v606 = vld [vmem:[%s4 + $0xe8] sm:$0xff]
    %v607 = vld [vmem:[%s4 + $0xf0] sm:$0xff]
    %v608 = vld [vmem:[%s4 + $0xf8] sm:$0xff]
    %v609 = vld [vmem:[%s4 + $0x100] sm:$0xff]
    %v610 = vld [vmem:[%s4 + $0x108] sm:$0xff]
    %v611 = vld [vmem:[%s4 + $0x110] sm:$0xff]
    %v612 = vld [vmem:[%s4 + $0x118] sm:$0xff]
    %v613 = vld [vmem:[%s4 + $0x120] sm:$0xff]
    %v614 = vld [vmem:[%s4 + $0x128] sm:$0xff]
    %v615 = vld [vmem:[%s4 + $0x130] sm:$0xff]
    %v616 = vld [vmem:[%s4 + $0x138] sm:$0xff]
    %v617 = vld [vmem:[%s4 + $0x140] sm:$0xff]
    %v618 = vld [vmem:[%s4 + $0x148] sm:$0xff]
    %v619 = vld [vmem:[%s4 + $0x150] sm:$0xff]
    %v620 = vld [vmem:[%s4 + $0x158] sm:$0xff]
    %v621 = vld [vmem:[%s4 + $0x160] sm:$0xff]
    %v622 = vld [vmem:[%s4 + $0x168] sm:$0xff]
    %v623 = vld [vmem:[%s4 + $0x170] sm:$0xff]
    %v624 = vld [vmem:[%s4 + $0x178] sm:$0xff]
    %v625 = vld [vmem:[%s4 + $0x180] sm:$0xff]
    %v626 = vld [vmem:[%s4 + $0x188] sm:$0xff]
    %v627 = vld [vmem:[%s4 + $0x190] sm:$0xff]
    %v628 = vld [vmem:[%s4 + $0x198] sm:$0xff]
    %v629 = vld [vmem:[%s4 + $0x1a0] sm:$0xff]
    %v630 = vld [vmem:[%s4 + $0x1a8] sm:$0xff]
    %v631 = vld [vmem:[%s4 + $0x1b0] sm:$0xff]
    %v632 = vld [vmem:[%s4 + $0x1b8] sm:$0xff]
    %v633 = vld [vmem:[%s4 + $0x1c0] sm:$0xff]
    %v634 = vld [vmem:[%s4 + $0x1c8] sm:$0xff]
    %v635 = vld [vmem:[%s4 + $0x1d0] sm:$0xff]
    %v636 = vld [vmem:[%s4 + $0x1d8] sm:$0xff]
    %v637 = vld [vmem:[%s4 + $0x1e0] sm:$0xff]
    %v638 = vld [vmem:[%s4 + $0x1e8] sm:$0xff]
    %v639 = vld [vmem:[%s4 + $0x1f0] sm:$0xff]
    %v640 = vld [vmem:[%s4 + $0x1f8] sm:$0xff]
    %v641 = vld [vmem:[%s4 + $0x200] sm:$0xff]
    %v642 = vld [vmem:[%s4 + $0x208] sm:$0xff]
    %v643 = vld [vmem:[%s4 + $0x210] sm:$0xff]
    %v644 = vld [vmem:[%s4 + $0x218] sm:$0xff]
    %v645 = vld [vmem:[%s4 + $0x220] sm:$0xff]
    %v646 = vld [vmem:[%s4 + $0x228] sm:$0xff]
    %v647 = vld [vmem:[%s4 + $0x230] sm:$0xff]
    %v648 = vld [vmem:[%s4 + $0x238] sm:$0xff]
    %v649 = vld [vmem:[%s4 + $0x240] sm:$0xff]
    %v650 = vld [vmem:[%s4 + $0x248] sm:$0xff]
    %v651 = vld [vmem:[%s4 + $0x250] sm:$0xff]
    %v652 = vld [vmem:[%s4 + $0x258] sm:$0xff]
    %v653 = vld [vmem:[%s4 + $0x260] sm:$0xff]
    %v654 = vld [vmem:[%s4 + $0x268] sm:$0xff]
    %v655 = vld [vmem:[%s4 + $0x270] sm:$0xff]
    %v656 = vld [vmem:[%s4 + $0x278] sm:$0xff]
    %v657 = vld [vmem:[%s4 + $0x280] sm:$0xff]
    %v658 = vld [vmem:[%s4 + $0x288] sm:$0xff]
    %v659 = vld [vmem:[%s4 + $0x290] sm:$0xff]
    %v660 = vld [vmem:[%s4 + $0x298] sm:$0xff]
    %v661 = vld [vmem:[%s4 + $0x2a0] sm:$0xff]
    %v662 = vld [vmem:[%s4 + $0x2a8] sm:$0xff]
    %v663 = vld [vmem:[%s4 + $0x2b0] sm:$0xff]
    %v664 = vld [vmem:[%s4 + $0x2b8] sm:$0xff]
    %v665 = vld [vmem:[%s4 + $0x2c0] sm:$0xff]
    %v666 = vld [vmem:[%s4 + $0x2c8] sm:$0xff]
    %v667 = vld [vmem:[%s4 + $0x2d0] sm:$0xff]
    %v668 = vld [vmem:[%s4 + $0x2d8] sm:$0xff]
    %v669 = vld [vmem:[%s4 + $0x2e0] sm:$0xff]
    %v670 = vld [vmem:[%s4 + $0x2e8] sm:$0xff]
    %v671 = vld [vmem:[%s4 + $0x2f0] sm:$0xff]
    %v672 = vld [vmem:[%s4 + $0x2f8] sm:$0xff]
    %v673 = vld [vmem:[%s4 + $0x300] sm:$0xff]
    %v674 = vld [vmem:[%s4 + $0x308] sm:$0xff]
    %v675 = vld [vmem:[%s4 + $0x310] sm:$0xff]
    %v676 = vld [vmem:[%s4 + $0x318] sm:$0xff]
    %v677 = vld [vmem:[%s4 + $0x320] sm:$0xff]
    %v678 = vld [vmem:[%s4 + $0x328] sm:$0xff]
    %v679 = vld [vmem:[%s4 + $0x330] sm:$0xff]
    %v680 = vld [vmem:[%s4 + $0x338] sm:$0xff]
    %v681 = vld [vmem:[%s4 + $0x340] sm:$0xff]
    %v682 = vld [vmem:[%s4 + $0x348] sm:$0xff]
    %v683 = vld [vmem:[%s4 + $0x350] sm:$0xff]
    %v684 = vld [vmem:[%s4 + $0x358] sm:$0xff]
    %v685 = vld [vmem:[%s4 + $0x360] sm:$0xff]
    %v686 = vld [vmem:[%s4 + $0x368] sm:$0xff]
    %v687 = vld [vmem:[%s4 + $0x370] sm:$0xff]
    %v688 = vld [vmem:[%s4 + $0x378] sm:$0xff]
    %v689 = vld [vmem:[%s4 + $0x380] sm:$0xff]
    %v690 = vld [vmem:[%s4 + $0x388] sm:$0xff]
    %v691 = vld [vmem:[%s4 + $0x390] sm:$0xff]
    %v692 = vld [vmem:[%s4 + $0x398] sm:$0xff]
    %v693 = vld [vmem:[%s4 + $0x3a0] sm:$0xff]
    %v694 = vld [vmem:[%s4 + $0x3a8] sm:$0xff]
    %v695 = vld [vmem:[%s4 + $0x3b0] sm:$0xff]
    %v696 = vld [vmem:[%s4 + $0x3b8] sm:$0xff]
    %v697 = vld [vmem:[%s5] sm:$0x7]
    %v699 = vlaneseq
    %v700 = vshrl.u32 %v699, 7
    %v701 = vsub.s32 0, %v700
    %v702 = vrot.slane %v697, %v701
    %v703 = vlaneseq
    %v704 = vshrl.u32 %v703, 7
    %v705 = vsub.s32 1, %v704
    %v706 = vrot.slane %v697, %v705
    %v707 = vlaneseq
    %v708 = vshrl.u32 %v707, 7
    %v709 = vsub.s32 2, %v708
    %v710 = vrot.slane %v697, %v709
    %vm714 = vcmask 523264
    %v716 = vsel %vm714, %v569, 0
    %v719 = vsel %vm714, %v574, 0
    %721 = vmatprep.subr.mxu0 %v578
    %722 = vmatpush1.msra.mxu0 %v577
    %723 = vmatprep.subr.mxu0 %v581
    %724 = vmatpush1.msra.mxu0 %v580
    %725 = vmatprep.subr.mxu0 %v584
    %726 = vmatpush1.msra.mxu0 %v583
    %727 = vmatprep.subr.mxu0 %v587
    %728 = vmatpush1.msra.mxu0 %v586
    %729 = vmatprep.subr.mxu0 %v590
    %730 = vmatpush1.msra.mxu0 %v589
    %731 = vmatprep.subr.mxu0 %v593
    %732 = vmatpush1.msra.mxu0 %v592
    %733 = vmatprep.subr.mxu0 %v596
    %734 = vmatpush1.msra.mxu0 %v595
    %735 = vmatprep.subr.mxu0 %v599
    %736 = vmatpush1.msra.mxu0 %v598
    %737 = vmatprep.subr.mxu0 %v602
    %738 = vmatpush1.msra.mxu0 %v601
    %739 = vmatprep.subr.mxu0 %v605
    %740 = vmatpush1.msra.mxu0 %v604
    %741 = vmatprep.subr.mxu0 %v608
    %742 = vmatpush1.msra.mxu0 %v607
    %743 = vmatprep.subr.mxu0 %v611
    %744 = vmatpush1.msra.mxu0 %v610
    %745 = vmatprep.subr.mxu0 %v614
    %746 = vmatpush1.msra.mxu0 %v613
    %747 = vmatprep.subr.mxu0 %v617
    %748 = vmatpush1.msra.mxu0 %v616
    %749 = vmatprep.subr.mxu0 %v620
    %750 = vmatpush1.msra.mxu0 %v619
    %751 = vmatprep.subr.mxu0 %v623
    %752 = vmatpush1.msra.mxu0 %v622
    %753 = vmatprep.subr.mxu0 %v626
    %754 = vmatpush1.msra.mxu0 %v625
    %755 = vmatprep.subr.mxu0 %v629
    %756 = vmatpush1.msra.mxu0 %v628
    %757 = vmatprep.subr.mxu0 %v632
    %758 = vmatpush1.msra.mxu0 %v631
    %759 = vmatprep.subr.mxu0 %v635
    %760 = vmatpush1.msra.mxu0 %v634
    %761 = vmatprep.subr.mxu0 %v638
    %762 = vmatpush1.msra.mxu0 %v637
    %763 = vmatprep.subr.mxu0 %v641
    %764 = vmatpush1.msra.mxu0 %v640
    %765 = vmatprep.subr.mxu0 %v644
    %766 = vmatpush1.msra.mxu0 %v643
    %767 = vmatprep.subr.mxu0 %v647
    %768 = vmatpush1.msra.mxu0 %v646
    %769 = vmatprep.subr.mxu0 %v650
    %770 = vmatpush1.msra.mxu0 %v649
    %771 = vmatprep.subr.mxu0 %v653
    %772 = vmatpush1.msra.mxu0 %v652
    %773 = vmatprep.subr.mxu0 %v656
    %774 = vmatpush1.msra.mxu0 %v655
    %775 = vmatprep.subr.mxu0 %v659
    %776 = vmatpush1.msra.mxu0 %v658
    %777 = vmatprep.subr.mxu0 %v662
    %778 = vmatpush1.msra.mxu0 %v661
    %779 = vmatprep.subr.mxu0 %v665
    %780 = vmatpush1.msra.mxu0 %v664
    %781 = vmatprep.subr.mxu0 %v668
    %782 = vmatpush1.msra.mxu0 %v667
    %783 = vmatprep.subr.mxu0 %v671
    %784 = vmatpush1.msra.mxu0 %v670
    %785 = vmatprep.mubr.f32.mxu0 %v494
    %786 = vmatmul.mubr.f32.gmra.mrb[0].mxu0 %v492
    %v787 = vpop.f32.mrb[0].mxu0
    %v788 = vadd.f32 %v702, %v787
    %v789 = vpop.f32.mrb[0].mxu0
    %v790 = vadd.f32 %v706, %v789
    %791 = vmatprep.mubr.f32.mxu0 %v500
    %792 = vmatmul.mubr.f32.gmra.mrb[0].mxu0 %v498
    %v793 = vpop.f32.mrb[0].mxu0
    %v794 = vadd.f32 %v702, %v793
    %v795 = vpop.f32.mrb[0].mxu0
    %v796 = vadd.f32 %v706, %v795
    %797 = vdwg.mxu0
    %798 = vmatprep.subr.mxu0 %v674
    %799 = vmatpush1.msra.mxu0 %v673
    %800 = vmatprep.subr.mxu0 %v677
    %801 = vmatpush1.msra.mxu0 %v676
    %802 = vmatprep.subr.mxu0 %v680
    %803 = vmatpush1.msra.mxu0 %v679
    %804 = vmatprep.subr.mxu0 %v683
    %805 = vmatpush1.msra.mxu0 %v682
    %806 = vmatprep.subr.mxu0 %v686
    %807 = vmatpush1.msra.mxu0 %v685
    %808 = vmatprep.subr.mxu0 %v689
    %809 = vmatpush1.msra.mxu0 %v688
    %810 = vmatprep.subr.mxu0 %v692
    %811 = vmatpush1.msra.mxu0 %v691
    %812 = vmatprep.subr.mxu0 %v695
    %813 = vmatpush1.msra.mxu0 %v694
    %814 = vmatprep.subr.mxu0 0.0
    %815 = vmatpush1.msra.mxu0 0.0
    %816 = vmatprep.subr.mxu0 0.0
    %817 = vmatpush1.msra.mxu0 0.0
    %818 = vmatprep.subr.mxu0 0.0
    %819 = vmatpush1.msra.mxu0 0.0
    %820 = vmatprep.subr.mxu0 0.0
    %821 = vmatpush1.msra.mxu0 0.0
    %822 = vmatprep.subr.mxu0 0.0
    %823 = vmatpush1.msra.mxu0 0.0
    %824 = vmatprep.subr.mxu0 0.0
    %825 = vmatpush1.msra.mxu0 0.0
    %826 = vmatprep.subr.mxu0 0.0
    %827 = vmatpush1.msra.mxu0 0.0
    %828 = vmatprep.subr.mxu0 0.0
    %829 = vmatpush1.msra.mxu0 0.0
    %830 = vmatprep.subr.mxu0 0.0
    %831 = vmatpush1.msra.mxu0 0.0
    %832 = vmatprep.subr.mxu0 0.0
    %833 = vmatpush1.msra.mxu0 0.0
    %834 = vmatprep.subr.mxu0 0.0
    %835 = vmatpush1.msra.mxu0 0.0
    %836 = vmatprep.subr.mxu0 0.0
    %837 = vmatpush1.msra.mxu0 0.0
    %838 = vmatprep.subr.mxu0 0.0
    %839 = vmatpush1.msra.mxu0 0.0
    %840 = vmatprep.subr.mxu0 0.0
    %841 = vmatpush1.msra.mxu0 0.0
    %842 = vmatprep.subr.mxu0 0.0
    %843 = vmatpush1.msra.mxu0 0.0
    %844 = vmatprep.subr.mxu0 0.0
    %845 = vmatpush1.msra.mxu0 0.0
    %846 = vmatprep.subr.mxu0 0.0
    %847 = vmatpush1.msra.mxu0 0.0
    %848 = vmatprep.subr.mxu0 0.0
    %849 = vmatpush1.msra.mxu0 0.0
    %850 = vmatprep.subr.mxu0 0.0
    %851 = vmatpush1.msra.mxu0 0.0
    %852 = vmatprep.subr.mxu0 0.0
    %853 = vmatpush1.msra.mxu0 0.0
    %854 = vmatprep.subr.mxu0 0.0
    %855 = vmatpush1.msra.mxu0 0.0
    %856 = vmatprep.subr.mxu0 0.0
    %857 = vmatpush1.msra.mxu0 0.0
    %858 = vmatprep.subr.mxu0 0.0
    %859 = vmatpush1.msra.mxu0 0.0
    %860 = vmatprep.subr.mxu0 0.0
    %861 = vmatpush1.msra.mxu0 0.0
    %862 = vmatprep.mubr.f32.mxu0 0.0
    %863 = vmatmul.mubr.f32.gmra.mrb[0].mxu0 %v716
    %v864 = vpop.f32.mrb[0].mxu0
    %v865 = vadd.f32 %v788, %v864
    %v866 = vpop.f32.mrb[0].mxu0
    %v867 = vadd.f32 %v790, %v866
    %868 = vmatprep.mubr.f32.mxu0 0.0
    %869 = vmatmul.mubr.f32.gmra.mrb[0].mxu0 %v719
    %v870 = vpop.f32.mrb[0].mxu0
    %v871 = vadd.f32 %v794, %v870
    %v872 = vpop.f32.mrb[0].mxu0
    %v873 = vadd.f32 %v796, %v872
    %874 = vdwg.mxu0
    %875 = vmatprep.subr.mxu0 0.0
    %876 = vmatpush1.msra.mxu0 %v579
    %877 = vmatprep.subr.mxu0 0.0
    %878 = vmatpush1.msra.mxu0 %v582
    %879 = vmatprep.subr.mxu0 0.0
    %880 = vmatpush1.msra.mxu0 %v585
    %881 = vmatprep.subr.mxu0 0.0
    %882 = vmatpush1.msra.mxu0 %v588
    %883 = vmatprep.subr.mxu0 0.0
    %884 = vmatpush1.msra.mxu0 %v591
    %885 = vmatprep.subr.mxu0 0.0
    %886 = vmatpush1.msra.mxu0 %v594
    %887 = vmatprep.subr.mxu0 0.0
    %888 = vmatpush1.msra.mxu0 %v597
    %889 = vmatprep.subr.mxu0 0.0
    %890 = vmatpush1.msra.mxu0 %v600
    %891 = vmatprep.subr.mxu0 0.0
    %892 = vmatpush1.msra.mxu0 %v603
    %893 = vmatprep.subr.mxu0 0.0
    %894 = vmatpush1.msra.mxu0 %v606
    %895 = vmatprep.subr.mxu0 0.0
    %896 = vmatpush1.msra.mxu0 %v609
    %897 = vmatprep.subr.mxu0 0.0
    %898 = vmatpush1.msra.mxu0 %v612
    %899 = vmatprep.subr.mxu0 0.0
    %900 = vmatpush1.msra.mxu0 %v615
    %901 = vmatprep.subr.mxu0 0.0
    %902 = vmatpush1.msra.mxu0 %v618
    %903 = vmatprep.subr.mxu0 0.0
    %904 = vmatpush1.msra.mxu0 %v621
    %905 = vmatprep.subr.mxu0 0.0
    %906 = vmatpush1.msra.mxu0 %v624
    %907 = vmatprep.subr.mxu0 0.0
    %908 = vmatpush1.msra.mxu0 %v627
    %909 = vmatprep.subr.mxu0 0.0
    %910 = vmatpush1.msra.mxu0 %v630
    %911 = vmatprep.subr.mxu0 0.0
    %912 = vmatpush1.msra.mxu0 %v633
    %913 = vmatprep.subr.mxu0 0.0
    %914 = vmatpush1.msra.mxu0 %v636
    %915 = vmatprep.subr.mxu0 0.0
    %916 = vmatpush1.msra.mxu0 %v639
    %917 = vmatprep.subr.mxu0 0.0
    %918 = vmatpush1.msra.mxu0 %v642
    %919 = vmatprep.subr.mxu0 0.0
    %920 = vmatpush1.msra.mxu0 %v645
    %921 = vmatprep.subr.mxu0 0.0
    %922 = vmatpush1.msra.mxu0 %v648
    %923 = vmatprep.subr.mxu0 0.0
    %924 = vmatpush1.msra.mxu0 %v651
    %925 = vmatprep.subr.mxu0 0.0
    %926 = vmatpush1.msra.mxu0 %v654
    %927 = vmatprep.subr.mxu0 0.0
    %928 = vmatpush1.msra.mxu0 %v657
    %929 = vmatprep.subr.mxu0 0.0
    %930 = vmatpush1.msra.mxu0 %v660
    %931 = vmatprep.subr.mxu0 0.0
    %932 = vmatpush1.msra.mxu0 %v663
    %933 = vmatprep.subr.mxu0 0.0
    %934 = vmatpush1.msra.mxu0 %v666
    %935 = vmatprep.subr.mxu0 0.0
    %936 = vmatpush1.msra.mxu0 %v669
    %937 = vmatprep.subr.mxu0 0.0
    %938 = vmatpush1.msra.mxu0 %v672
    %939 = vmatprep.mubr.f32.mxu0 %v494
    %940 = vmatmul.mubr.f32.gmra.mrb[0].mxu0 %v492
    %v941 = vpop.f32.mrb[0].mxu0
    %v942 = vadd.f32 %v710, %v941
    %v943 = vpop.f32.mrb[0].mxu0
    %944 = vmatprep.mubr.f32.mxu0 %v500
    %945 = vmatmul.mubr.f32.gmra.mrb[0].mxu0 %v498
    %v946 = vpop.f32.mrb[0].mxu0
    %v947 = vadd.f32 %v710, %v946
    %v948 = vpop.f32.mrb[0].mxu0
    %949 = vdwg.mxu0
    %950 = vmatprep.subr.mxu0 0.0
    %951 = vmatpush1.msra.mxu0 %v675
    %952 = vmatprep.subr.mxu0 0.0
    %953 = vmatpush1.msra.mxu0 %v678
    %954 = vmatprep.subr.mxu0 0.0
    %955 = vmatpush1.msra.mxu0 %v681
    %956 = vmatprep.subr.mxu0 0.0
    %957 = vmatpush1.msra.mxu0 %v684
    %958 = vmatprep.subr.mxu0 0.0
    %959 = vmatpush1.msra.mxu0 %v687
    %960 = vmatprep.subr.mxu0 0.0
    %961 = vmatpush1.msra.mxu0 %v690
    %962 = vmatprep.subr.mxu0 0.0
    %963 = vmatpush1.msra.mxu0 %v693
    %964 = vmatprep.subr.mxu0 0.0
    %965 = vmatpush1.msra.mxu0 %v696
    %966 = vmatprep.subr.mxu0 0.0
    %967 = vmatpush1.msra.mxu0 0.0
    %968 = vmatprep.subr.mxu0 0.0
    %969 = vmatpush1.msra.mxu0 0.0
    %970 = vmatprep.subr.mxu0 0.0
    %971 = vmatpush1.msra.mxu0 0.0
    %972 = vmatprep.subr.mxu0 0.0
    %973 = vmatpush1.msra.mxu0 0.0
    %974 = vmatprep.subr.mxu0 0.0
    %975 = vmatpush1.msra.mxu0 0.0
    %976 = vmatprep.subr.mxu0 0.0
    %977 = vmatpush1.msra.mxu0 0.0
    %978 = vmatprep.subr.mxu0 0.0
    %979 = vmatpush1.msra.mxu0 0.0
    %980 = vmatprep.subr.mxu0 0.0
    %981 = vmatpush1.msra.mxu0 0.0
    %982 = vmatprep.subr.mxu0 0.0
    %983 = vmatpush1.msra.mxu0 0.0
    %984 = vmatprep.subr.mxu0 0.0
    %985 = vmatpush1.msra.mxu0 0.0
    %986 = vmatprep.subr.mxu0 0.0
    %987 = vmatpush1.msra.mxu0 0.0
    %988 = vmatprep.subr.mxu0 0.0
    %989 = vmatpush1.msra.mxu0 0.0
    %990 = vmatprep.subr.mxu0 0.0
    %991 = vmatpush1.msra.mxu0 0.0
    %992 = vmatprep.subr.mxu0 0.0
    %993 = vmatpush1.msra.mxu0 0.0
    %994 = vmatprep.subr.mxu0 0.0
    %995 = vmatpush1.msra.mxu0 0.0
    %996 = vmatprep.subr.mxu0 0.0
    %997 = vmatpush1.msra.mxu0 0.0
    %998 = vmatprep.subr.mxu0 0.0
    %999 = vmatpush1.msra.mxu0 0.0
    %1000 = vmatprep.subr.mxu0 0.0
    %1001 = vmatpush1.msra.mxu0 0.0
    %1002 = vmatprep.subr.mxu0 0.0
    %1003 = vmatpush1.msra.mxu0 0.0
    %1004 = vmatprep.subr.mxu0 0.0
    %1005 = vmatpush1.msra.mxu0 0.0
    %1006 = vmatprep.subr.mxu0 0.0
    %1007 = vmatpush1.msra.mxu0 0.0
    %1008 = vmatprep.subr.mxu0 0.0
    %1009 = vmatpush1.msra.mxu0 0.0
    %1010 = vmatprep.subr.mxu0 0.0
    %1011 = vmatpush1.msra.mxu0 0.0
    %1012 = vmatprep.subr.mxu0 0.0
    %1013 = vmatpush1.msra.mxu0 0.0
    %1014 = vmatprep.mubr.f32.mxu0 0.0
    %1015 = vmatmul.mubr.f32.gmra.mrb[0].mxu0 %v716
    %v1016 = vpop.f32.mrb[0].mxu0
    %v1017 = vadd.f32 %v942, %v1016
    %v1018 = vpop.f32.mrb[0].mxu0
    %1019 = vmatprep.mubr.f32.mxu0 0.0
    %1020 = vmatmul.mubr.f32.gmra.mrb[0].mxu0 %v719
    %v1021 = vpop.f32.mrb[0].mxu0
    %v1022 = vadd.f32 %v947, %v1021
    %v1023 = vpop.f32.mrb[0].mxu0
    %1024 = vdwg.mxu0
    %1025 = vst [vmem:[%s9] sm:$0xff] %v865
    %1026 = vst [vmem:[%s9 + $0x8] sm:$0xff] %v867
    %1027 = vst.msk [vmem:[%s9 + $0x10] sm:$0xff] %vm714, %v1017
    %1028 = vst [vmem:[%s9 + $0x18] sm:$0x3f] %v871
    %1029 = vst [vmem:[%s9 + $0x20] sm:$0x3f] %v873
    %vm1030 = vcmask 521216
    %1031 = vst.msk [vmem:[%s9 + $0x28] sm:$0x3f] %vm1030, %v1022
    %v1032 = vld [vmem:[%s6] sm:$0x7]
    %v1033 = vld [vmem:[#allocation2] sm:$0x1]
    %1035 = vset.pattern.permute.xlu0 0
    %1036 = vperm.xlu0 %1035, %v1033
    %v1037 = vpop.permute.xlu0 %1036
    %v1039 = vlaneseq
    %v1040 = vshrl.u32 %v1039, 7
    %v1041 = vsub.s32 0, %v1040
    %v1042 = vrot.slane %v1037, %v1041
    %v1044 = vlaneseq
    %v1045 = vshrl.u32 %v1044, 7
    %v1046 = vsub.s32 0, %v1045
    %v1047 = vrot.slane %v1032, %v1046
    %v1048 = vlaneseq
    %v1049 = vshrl.u32 %v1048, 7
    %v1050 = vsub.s32 1, %v1049
    %v1051 = vrot.slane %v1032, %v1050
    %v1052 = vlaneseq
    %v1053 = vshrl.u32 %v1052, 7
    %v1054 = vsub.s32 2, %v1053
    %v1055 = vrot.slane %v1032, %v1054
    %v1058 = vsel %vm714, %v1055, 0
    %v1061 = vsel %vm714, %v1017, 0
    %v1064 = vsel %vm714, %v1022, 0
    %1066 = vmatprep.subr.mxu0 %v867
    %1067 = vmatpush1.xpose.msra.mxu0 %v865
    %1068 = vmatprep.subr.mxu0 %v873
    %1069 = vmatpush1.xpose.msra.mxu0 %v871
    %1070 = vmatprep.subr.mxu0 0.0
    %1071 = vmatpush1.xpose.msra.mxu0 0.0
    %1072 = vmatprep.subr.mxu0 0.0
    %1073 = vmatpush1.xpose.msra.mxu0 0.0
    %1074 = vmatprep.subr.mxu0 0.0
    %1075 = vmatpush1.xpose.msra.mxu0 0.0
    %1076 = vmatprep.subr.mxu0 0.0
    %1077 = vmatpush1.xpose.msra.mxu0 0.0
    %1078 = vmatprep.subr.mxu0 0.0
    %1079 = vmatpush1.xpose.msra.mxu0 0.0
    %1080 = vmatprep.subr.mxu0 0.0
    %1081 = vmatpush1.xpose.msra.mxu0 0.0
    %1082 = vmatprep.subr.mxu0 0.0
    %1083 = vmatpush1.xpose.msra.mxu0 0.0
    %1084 = vmatprep.subr.mxu0 0.0
    %1085 = vmatpush1.xpose.msra.mxu0 0.0
    %1086 = vmatprep.subr.mxu0 0.0
    %1087 = vmatpush1.xpose.msra.mxu0 0.0
    %1088 = vmatprep.subr.mxu0 0.0
    %1089 = vmatpush1.xpose.msra.mxu0 0.0
    %1090 = vmatprep.subr.mxu0 0.0
    %1091 = vmatpush1.xpose.msra.mxu0 0.0
    %1092 = vmatprep.subr.mxu0 0.0
    %1093 = vmatpush1.xpose.msra.mxu0 0.0
    %1094 = vmatprep.subr.mxu0 0.0
    %1095 = vmatpush1.xpose.msra.mxu0 0.0
    %1096 = vmatprep.subr.mxu0 0.0
    %1097 = vmatpush1.xpose.msra.mxu0 0.0
    %1098 = vmatprep.subr.mxu0 0.0
    %1099 = vmatpush1.xpose.msra.mxu0 0.0
    %1100 = vmatprep.subr.mxu0 0.0
    %1101 = vmatpush1.xpose.msra.mxu0 0.0
    %1102 = vmatprep.subr.mxu0 0.0
    %1103 = vmatpush1.xpose.msra.mxu0 0.0
    %1104 = vmatprep.subr.mxu0 0.0
    %1105 = vmatpush1.xpose.msra.mxu0 0.0
    %1106 = vmatprep.subr.mxu0 0.0
    %1107 = vmatpush1.xpose.msra.mxu0 0.0
    %1108 = vmatprep.subr.mxu0 0.0
    %1109 = vmatpush1.xpose.msra.mxu0 0.0
    %1110 = vmatprep.subr.mxu0 0.0
    %1111 = vmatpush1.xpose.msra.mxu0 0.0
    %1112 = vmatprep.subr.mxu0 0.0
    %1113 = vmatpush1.xpose.msra.mxu0 0.0
    %1114 = vmatprep.subr.mxu0 0.0
    %1115 = vmatpush1.xpose.msra.mxu0 0.0
    %1116 = vmatprep.subr.mxu0 0.0
    %1117 = vmatpush1.xpose.msra.mxu0 0.0
    %1118 = vmatprep.subr.mxu0 0.0
    %1119 = vmatpush1.xpose.msra.mxu0 0.0
    %1120 = vmatprep.subr.mxu0 0.0
    %1121 = vmatpush1.xpose.msra.mxu0 0.0
    %1122 = vmatprep.subr.mxu0 0.0
    %1123 = vmatpush1.xpose.msra.mxu0 0.0
    %1124 = vmatprep.subr.mxu0 0.0
    %1125 = vmatpush1.xpose.msra.mxu0 0.0
    %1126 = vmatprep.subr.mxu0 0.0
    %1127 = vmatpush1.xpose.msra.mxu0 0.0
    %1128 = vmatprep.subr.mxu0 0.0
    %1129 = vmatpush1.xpose.msra.mxu0 0.0
    %1130 = vmatprep.mubr.f32.mxu0 %v1051
    %1131 = vmatmul.mubr.f32.gmra.mrb[0].mxu0 %v1047
    %v1132 = vpop.f32.mrb[0].mxu0
    %v1133 = vadd.f32 %v1042, %v1132
    %v1134 = vpop.f32.mrb[0].mxu0
    %1135 = vdwg.mxu0
    %1136 = vmatprep.subr.mxu0 0.0
    %1137 = vmatpush1.xpose.msra.mxu0 %v1061
    %1138 = vmatprep.subr.mxu0 0.0
    %1139 = vmatpush1.xpose.msra.mxu0 %v1064
    %1140 = vmatprep.subr.mxu0 0.0
    %1141 = vmatpush1.xpose.msra.mxu0 0.0
    %1142 = vmatprep.subr.mxu0 0.0
    %1143 = vmatpush1.xpose.msra.mxu0 0.0
    %1144 = vmatprep.subr.mxu0 0.0
    %1145 = vmatpush1.xpose.msra.mxu0 0.0
    %1146 = vmatprep.subr.mxu0 0.0
    %1147 = vmatpush1.xpose.msra.mxu0 0.0
    %1148 = vmatprep.subr.mxu0 0.0
    %1149 = vmatpush1.xpose.msra.mxu0 0.0
    %1150 = vmatprep.subr.mxu0 0.0
    %1151 = vmatpush1.xpose.msra.mxu0 0.0
    %1152 = vmatprep.subr.mxu0 0.0
    %1153 = vmatpush1.xpose.msra.mxu0 0.0
    %1154 = vmatprep.subr.mxu0 0.0
    %1155 = vmatpush1.xpose.msra.mxu0 0.0
    %1156 = vmatprep.subr.mxu0 0.0
    %1157 = vmatpush1.xpose.msra.mxu0 0.0
    %1158 = vmatprep.subr.mxu0 0.0
    %1159 = vmatpush1.xpose.msra.mxu0 0.0
    %1160 = vmatprep.subr.mxu0 0.0
    %1161 = vmatpush1.xpose.msra.mxu0 0.0
    %1162 = vmatprep.subr.mxu0 0.0
    %1163 = vmatpush1.xpose.msra.mxu0 0.0
    %1164 = vmatprep.subr.mxu0 0.0
    %1165 = vmatpush1.xpose.msra.mxu0 0.0
    %1166 = vmatprep.subr.mxu0 0.0
    %1167 = vmatpush1.xpose.msra.mxu0 0.0
    %1168 = vmatprep.subr.mxu0 0.0
    %1169 = vmatpush1.xpose.msra.mxu0 0.0
    %1170 = vmatprep.subr.mxu0 0.0
    %1171 = vmatpush1.xpose.msra.mxu0 0.0
    %1172 = vmatprep.subr.mxu0 0.0
    %1173 = vmatpush1.xpose.msra.mxu0 0.0
    %1174 = vmatprep.subr.mxu0 0.0
    %1175 = vmatpush1.xpose.msra.mxu0 0.0
    %1176 = vmatprep.subr.mxu0 0.0
    %1177 = vmatpush1.xpose.msra.mxu0 0.0
    %1178 = vmatprep.subr.mxu0 0.0
    %1179 = vmatpush1.xpose.msra.mxu0 0.0
    %1180 = vmatprep.subr.mxu0 0.0
    %1181 = vmatpush1.xpose.msra.mxu0 0.0
    %1182 = vmatprep.subr.mxu0 0.0
    %1183 = vmatpush1.xpose.msra.mxu0 0.0
    %1184 = vmatprep.subr.mxu0 0.0
    %1185 = vmatpush1.xpose.msra.mxu0 0.0
    %1186 = vmatprep.subr.mxu0 0.0
    %1187 = vmatpush1.xpose.msra.mxu0 0.0
    %1188 = vmatprep.subr.mxu0 0.0
    %1189 = vmatpush1.xpose.msra.mxu0 0.0
    %1190 = vmatprep.subr.mxu0 0.0
    %1191 = vmatpush1.xpose.msra.mxu0 0.0
    %1192 = vmatprep.subr.mxu0 0.0
    %1193 = vmatpush1.xpose.msra.mxu0 0.0
    %1194 = vmatprep.subr.mxu0 0.0
    %1195 = vmatpush1.xpose.msra.mxu0 0.0
    %1196 = vmatprep.subr.mxu0 0.0
    %1197 = vmatpush1.xpose.msra.mxu0 0.0
    %1198 = vmatprep.subr.mxu0 0.0
    %1199 = vmatpush1.xpose.msra.mxu0 0.0
    %1200 = vmatprep.mubr.f32.mxu0 0.0
    %1201 = vmatmul.mubr.f32.gmra.mrb[0].mxu0 %v1058
    %v1202 = vpop.f32.mrb[0].mxu0
    %v1203 = vadd.f32 %v1133, %v1202
    %v1204 = vpop.f32.mrb[0].mxu0
    %1205 = vdwg.mxu0
    %v1206 = vxor.u32 %v1203, 2147483648
    %v1207 = vmul.f32 %v1206, 1.442695
    %v1208 = vpow.pop %v1207
    %v1209 = vadd.f32 %v1208, 1.0
    %v1210 = vrcp.pop %v1209
    %v1211 = vmul.f32 1.0, %v1210
    %vm1212 = vcmask 106496
    %1213 = vst.msk [vmem:[%s10] sm:$0x1] %vm1212, %v1211
    // Predicated region
    $region38: #{_lambda_.12} parent=1 // pred_check
      _
    $region39: #{_lambda_.12} parent=1 // pred_check_branch
      %1215 = sbr.rel (0) target = $region41
    $region40: #{_lambda_.12} parent=1 // pred_region
      _
    $region41: #{_lambda_.12} parent=1 // pred_fallthru
      _
    // Predicated region
    $region42: #{_lambda_.12} parent=1 // pred_check
      _
    $region43: #{_lambda_.12} parent=1 // pred_check_branch
      %1217 = sbr.rel (0) target = $region45
    $region44: #{_lambda_.12} parent=1 // pred_region
      _
    $region45: #{_lambda_.12} parent=1 // pred_fallthru
      _
    // Predicated region
    $region46: #{_lambda_.12} parent=1 // pred_check
      _
    $region47: #{_lambda_.12} parent=1 // pred_check_branch
      %1219 = sbr.rel (0) target = $region49
    $region48: #{_lambda_.12} parent=1 // pred_region
      _
    $region49: #{_lambda_.12} parent=1 // pred_fallthru
      _
    // Predicated region
    $region50: #{_lambda_.12} parent=1 // pred_check
      _
    $region51: #{_lambda_.12} parent=1 // pred_check_branch
      %1221 = sbr.rel (0) target = $region53
    $region52: #{_lambda_.12} parent=1 // pred_region
      _
    $region53: #{_lambda_.12} parent=1 // pred_fallthru
      _
    // Predicated region
    $region54: #{_lambda_.12} parent=1 // pred_check
      _
    $region55: #{_lambda_.12} parent=1 // pred_check_branch
      %1223 = sbr.rel (0) target = $region57
    $region56: #{_lambda_.12} parent=1 // pred_region
      _
    $region57: #{_lambda_.12} parent=1 // pred_fallthru
      _
    // Predicated region
    $region58: #{_lambda_.12} parent=1 // pred_check
      _
    $region59: #{_lambda_.12} parent=1 // pred_check_branch
      %1225 = sbr.rel (0) target = $region61
    $region60: #{_lambda_.12} parent=1 // pred_region
      _
    $region61: #{_lambda_.12} parent=1 // pred_fallthru
      _
    %1226 = vsyncpa [#allocation4], 1

// kernel: _lambda_.13
$region0: #{_lambda_.13}
  #allocation0 [shape = 'u32[]', space=smem, size = 0x4, offset = 0x4, fixed_abs, tag = 'smem constant byte address 0x4 - core index']
  #allocation1 [shape = 'u32[144,128]{1,0:T(1,128)}', space=vmem, size = 0x12000, scoped, tag = 'internal scratch']
  #allocation2 [shape = 'f32[1,1]{1,0:T(1,128)S(1)}', space=vmem, size = 0x200, scoped, tag = 'scoped memory for _lambda_.13']
  %s0 = inlined_call_operand.vmem [shape: f32[14,14], index: 0, kind: input, shape index: {}]
  %s1 = inlined_call_operand.vmem [shape: f32[14,320], index: 1, kind: input, shape index: {}]
  %s2 = inlined_call_operand.vmem [shape: s32[9,1], index: 2, kind: input, shape index: {}]
  %s3 = inlined_call_operand.vmem [shape: f32[9,1], index: 3, kind: input, shape index: {}]
  %s4 = inlined_call_operand.vmem [shape: f32[320,320], index: 4, kind: input, shape index: {}]
  %s5 = inlined_call_operand.vmem [shape: f32[1,320], index: 5, kind: input, shape index: {}]
  %s6 = inlined_call_operand.vmem [shape: f32[1,320], index: 6, kind: input, shape index: {}]
  %s7 = inlined_call_operand.<no memory space> [shape: f32[1,1], index: 7, kind: input, shape index: {}]
  %s8 = inlined_call_operand.vmem [shape: f32[9,9], index: 8, kind: output, shape index: {0}]
  %s9 = inlined_call_operand.vmem [shape: f32[9,320], index: 9, kind: output, shape index: {1}]
  %s10 = inlined_call_operand.vmem [shape: f32[1,9], index: 10, kind: output, shape index: {2}]
  %11 = xla_tuple %s8, %s9, %s10
  %s12 = sld [smem:[#allocation0]]
  $region58: #{_lambda_.13} parent=0
    _
  %s14 = ssub.s32 1, %s12
  %s15 = scalar_select 0, %s14, %s12
  %v16 = vstv %s7
  %17 = vst [vmem:[#allocation2] sm:$0x1] %v16
  // Predicated region
  $region2: #{_lambda_.13} parent=0 // pred_check
    _
  $region3: #{_lambda_.13} parent=0 // pred_check_branch
    %19 = sbr.rel (0) target = $region5
  $region4: #{_lambda_.13} parent=0 // pred_region
    _
  $region5: #{_lambda_.13} parent=0 // pred_fallthru
    _
  // Predicated region
  $region6: #{_lambda_.13} parent=0 // pred_check
    _
  $region7: #{_lambda_.13} parent=0 // pred_check_branch
    %21 = sbr.rel (0) target = $region9
  $region8: #{_lambda_.13} parent=0 // pred_region
    _
  $region9: #{_lambda_.13} parent=0 // pred_fallthru
    _
  // Predicated region
  $region10: #{_lambda_.13} parent=0 // pred_check
    _
  $region11: #{_lambda_.13} parent=0 // pred_check_branch
    %23 = sbr.rel (0) target = $region13
  $region12: #{_lambda_.13} parent=0 // pred_region
    _
  $region13: #{_lambda_.13} parent=0 // pred_fallthru
    _
  // Predicated region
  $region14: #{_lambda_.13} parent=0 // pred_check
    _
  $region15: #{_lambda_.13} parent=0 // pred_check_branch
    %25 = sbr.rel (0) target = $region17
  $region16: #{_lambda_.13} parent=0 // pred_region
    _
  $region17: #{_lambda_.13} parent=0 // pred_fallthru
    _
  // Predicated region
  $region18: #{_lambda_.13} parent=0 // pred_check
    _
  $region19: #{_lambda_.13} parent=0 // pred_check_branch
    %27 = sbr.rel (0) target = $region21
  $region20: #{_lambda_.13} parent=0 // pred_region
    _
  $region21: #{_lambda_.13} parent=0 // pred_fallthru
    _
  // Predicated region
  $region22: #{_lambda_.13} parent=0 // pred_check
    _
  $region23: #{_lambda_.13} parent=0 // pred_check_branch
    %29 = sbr.rel (0) target = $region25
  $region24: #{_lambda_.13} parent=0 // pred_region
    _
  $region25: #{_lambda_.13} parent=0 // pred_fallthru
    _
  // Predicated region
  $region26: #{_lambda_.13} parent=0 // pred_check
    _
  $region27: #{_lambda_.13} parent=0 // pred_check_branch
    %31 = sbr.rel (0) target = $region29
  $region28: #{_lambda_.13} parent=0 // pred_region
    _
  $region29: #{_lambda_.13} parent=0 // pred_fallthru
    _
  // Predicated region
  $region30: #{_lambda_.13} parent=0 // pred_check
    _
  $region31: #{_lambda_.13} parent=0 // pred_check_branch
    %33 = sbr.rel (0) target = $region33
  $region32: #{_lambda_.13} parent=0 // pred_region
    _
  $region33: #{_lambda_.13} parent=0 // pred_fallthru
    _
  %v34 = vld [vmem:[%s2] sm:$0xff]
  %v35 = vld [vmem:[%s2 + $0x8] sm:$0x1]
  %v36 = vlaneseq
  %v37 = vand.u32 %v36, 127
  %38 = vset.pattern.permute.xlu0 0
  %39 = vperm.xlu0 %38, %v34
  %v40 = vpop.permute.xlu0 %39
  %41 = vset.pattern.permute.xlu0 0
  %42 = vperm.xlu0 %41, %v35
  %v43 = vpop.permute.xlu0 %42
  %vm44 = vcmp.eq.s32.totalorder %v37, %v40
  %vm45 = vcmp.eq.s32.totalorder %v37, %v43
  %v46 = vsel %vm44, 1, 0
  %v47 = vsel %vm45, 1, 0
  %v48 = vcvt.s32.f32 %v46
  %v49 = vcvt.s32.f32 %v47
  %v50 = vld [vmem:[%s1] sm:$0xff]
  %v51 = vld [vmem:[%s1 + $0x8] sm:$0xff]
  %v52 = vld [vmem:[%s1 + $0x10] sm:$0xff]
  %v53 = vld [vmem:[%s1 + $0x18] sm:$0x3f]
  %v54 = vld [vmem:[%s1 + $0x20] sm:$0x3f]
  %v55 = vld [vmem:[%s1 + $0x28] sm:$0x3f]
  %vm56 = vcmask 113664
  %v58 = vsel %vm56, %v48, 0
  %v61 = vsel %vm56, %v49, 0
  %vm63 = vcmask 1045504
  %v65 = vsel %vm63, %v53, 0
  %v68 = vsel %vm63, %v54, 0
  %v71 = vsel %vm63, %v55, 0
  %73 = vmatprep.subr.mxu0 %v51
  %74 = vmatpush1.msra.mxu0 %v50
  %75 = vmatprep.subr.mxu0 %v68
  %76 = vmatpush1.msra.mxu0 %v65
  %77 = vmatprep.subr.mxu0 0.0
  %78 = vmatpush1.msra.mxu0 0.0
  %79 = vmatprep.subr.mxu0 0.0
  %80 = vmatpush1.msra.mxu0 0.0
  %81 = vmatprep.subr.mxu0 0.0
  %82 = vmatpush1.msra.mxu0 0.0
  %83 = vmatprep.subr.mxu0 0.0
  %84 = vmatpush1.msra.mxu0 0.0
  %85 = vmatprep.subr.mxu0 0.0
  %86 = vmatpush1.msra.mxu0 0.0
  %87 = vmatprep.subr.mxu0 0.0
  %88 = vmatpush1.msra.mxu0 0.0
  %89 = vmatprep.subr.mxu0 0.0
  %90 = vmatpush1.msra.mxu0 0.0
  %91 = vmatprep.subr.mxu0 0.0
  %92 = vmatpush1.msra.mxu0 0.0
  %93 = vmatprep.subr.mxu0 0.0
  %94 = vmatpush1.msra.mxu0 0.0
  %95 = vmatprep.subr.mxu0 0.0
  %96 = vmatpush1.msra.mxu0 0.0
  %97 = vmatprep.subr.mxu0 0.0
  %98 = vmatpush1.msra.mxu0 0.0
  %99 = vmatprep.subr.mxu0 0.0
  %100 = vmatpush1.msra.mxu0 0.0
  %101 = vmatprep.subr.mxu0 0.0
  %102 = vmatpush1.msra.mxu0 0.0
  %103 = vmatprep.subr.mxu0 0.0
  %104 = vmatpush1.msra.mxu0 0.0
  %105 = vmatprep.subr.mxu0 0.0
  %106 = vmatpush1.msra.mxu0 0.0
  %107 = vmatprep.subr.mxu0 0.0
  %108 = vmatpush1.msra.mxu0 0.0
  %109 = vmatprep.subr.mxu0 0.0
  %110 = vmatpush1.msra.mxu0 0.0
  %111 = vmatprep.subr.mxu0 0.0
  %112 = vmatpush1.msra.mxu0 0.0
  %113 = vmatprep.subr.mxu0 0.0
  %114 = vmatpush1.msra.mxu0 0.0
  %115 = vmatprep.subr.mxu0 0.0
  %116 = vmatpush1.msra.mxu0 0.0
  %117 = vmatprep.subr.mxu0 0.0
  %118 = vmatpush1.msra.mxu0 0.0
  %119 = vmatprep.subr.mxu0 0.0
  %120 = vmatpush1.msra.mxu0 0.0
  %121 = vmatprep.subr.mxu0 0.0
  %122 = vmatpush1.msra.mxu0 0.0
  %123 = vmatprep.subr.mxu0 0.0
  %124 = vmatpush1.msra.mxu0 0.0
  %125 = vmatprep.subr.mxu0 0.0
  %126 = vmatpush1.msra.mxu0 0.0
  %127 = vmatprep.subr.mxu0 0.0
  %128 = vmatpush1.msra.mxu0 0.0
  %129 = vmatprep.subr.mxu0 0.0
  %130 = vmatpush1.msra.mxu0 0.0
  %131 = vmatprep.subr.mxu0 0.0
  %132 = vmatpush1.msra.mxu0 0.0
  %133 = vmatprep.subr.mxu0 0.0
  %134 = vmatpush1.msra.mxu0 0.0
  %135 = vmatprep.subr.mxu0 0.0
  %136 = vmatpush1.msra.mxu0 0.0
  %137 = vmatprep.mubr.f32.mxu0 0.0
  %138 = vmatmul.mubr.f32.gmra.mrb[0].mxu0 %v58
  %v139 = vpop.f32.mrb[0].mxu0
  %v140 = vadd.f32 0.0, %v139
  %v141 = vpop.f32.mrb[0].mxu0
  %v142 = vadd.f32 0.0, %v141
  %143 = vmatprep.mubr.f32.mxu0 0.0
  %144 = vmatmul.mubr.f32.gmra.mrb[0].mxu0 %v61
  %v145 = vpop.f32.mrb[0].mxu0
  %v146 = vadd.f32 0.0, %v145
  %v147 = vpop.f32.mrb[0].mxu0
  %v148 = vadd.f32 0.0, %v147
  %149 = vdwg.mxu0
  %150 = vmatprep.subr.mxu0 0.0
  %151 = vmatpush1.msra.mxu0 %v52
  %152 = vmatprep.subr.mxu0 0.0
  %153 = vmatpush1.msra.mxu0 %v71
  %154 = vmatprep.subr.mxu0 0.0
  %155 = vmatpush1.msra.mxu0 0.0
  %156 = vmatprep.subr.mxu0 0.0
  %157 = vmatpush1.msra.mxu0 0.0
  %158 = vmatprep.subr.mxu0 0.0
  %159 = vmatpush1.msra.mxu0 0.0
  %160 = vmatprep.subr.mxu0 0.0
  %161 = vmatpush1.msra.mxu0 0.0
  %162 = vmatprep.subr.mxu0 0.0
  %163 = vmatpush1.msra.mxu0 0.0
  %164 = vmatprep.subr.mxu0 0.0
  %165 = vmatpush1.msra.mxu0 0.0
  %166 = vmatprep.subr.mxu0 0.0
  %167 = vmatpush1.msra.mxu0 0.0
  %168 = vmatprep.subr.mxu0 0.0
  %169 = vmatpush1.msra.mxu0 0.0
  %170 = vmatprep.subr.mxu0 0.0
  %171 = vmatpush1.msra.mxu0 0.0
  %172 = vmatprep.subr.mxu0 0.0
  %173 = vmatpush1.msra.mxu0 0.0
  %174 = vmatprep.subr.mxu0 0.0
  %175 = vmatpush1.msra.mxu0 0.0
  %176 = vmatprep.subr.mxu0 0.0
  %177 = vmatpush1.msra.mxu0 0.0
  %178 = vmatprep.subr.mxu0 0.0
  %179 = vmatpush1.msra.mxu0 0.0
  %180 = vmatprep.subr.mxu0 0.0
  %181 = vmatpush1.msra.mxu0 0.0
  %182 = vmatprep.subr.mxu0 0.0
  %183 = vmatpush1.msra.mxu0 0.0
  %184 = vmatprep.subr.mxu0 0.0
  %185 = vmatpush1.msra.mxu0 0.0
  %186 = vmatprep.subr.mxu0 0.0
  %187 = vmatpush1.msra.mxu0 0.0
  %188 = vmatprep.subr.mxu0 0.0
  %189 = vmatpush1.msra.mxu0 0.0
  %190 = vmatprep.subr.mxu0 0.0
  %191 = vmatpush1.msra.mxu0 0.0
  %192 = vmatprep.subr.mxu0 0.0
  %193 = vmatpush1.msra.mxu0 0.0
  %194 = vmatprep.subr.mxu0 0.0
  %195 = vmatpush1.msra.mxu0 0.0
  %196 = vmatprep.subr.mxu0 0.0
  %197 = vmatpush1.msra.mxu0 0.0
  %198 = vmatprep.subr.mxu0 0.0
  %199 = vmatpush1.msra.mxu0 0.0
  %200 = vmatprep.subr.mxu0 0.0
  %201 = vmatpush1.msra.mxu0 0.0
  %202 = vmatprep.subr.mxu0 0.0
  %203 = vmatpush1.msra.mxu0 0.0
  %204 = vmatprep.subr.mxu0 0.0
  %205 = vmatpush1.msra.mxu0 0.0
  %206 = vmatprep.subr.mxu0 0.0
  %207 = vmatpush1.msra.mxu0 0.0
  %208 = vmatprep.subr.mxu0 0.0
  %209 = vmatpush1.msra.mxu0 0.0
  %210 = vmatprep.subr.mxu0 0.0
  %211 = vmatpush1.msra.mxu0 0.0
  %212 = vmatprep.subr.mxu0 0.0
  %213 = vmatpush1.msra.mxu0 0.0
  %214 = vmatprep.mubr.f32.mxu0 0.0
  %215 = vmatmul.mubr.f32.gmra.mrb[0].mxu0 %v58
  %v216 = vpop.f32.mrb[0].mxu0
  %v217 = vadd.f32 0.0, %v216
  %v218 = vpop.f32.mrb[0].mxu0
  %219 = vmatprep.mubr.f32.mxu0 0.0
  %220 = vmatmul.mubr.f32.gmra.mrb[0].mxu0 %v61
  %v221 = vpop.f32.mrb[0].mxu0
  %v222 = vadd.f32 0.0, %v221
  %v223 = vpop.f32.mrb[0].mxu0
  %224 = vdwg.mxu0
  %v225 = vld [vmem:[%s3] sm:$0xff]
  %v226 = vld [vmem:[%s3 + $0x8] sm:$0x1]
  %228 = vset.pattern.permute.xlu0 0
  %229 = vperm.xlu0 %228, %v225
  %v230 = vpop.permute.xlu0 %229
  %233 = vset.pattern.permute.xlu0 0
  %234 = vperm.xlu0 %233, %v226
  %v235 = vpop.permute.xlu0 %234
  %v237 = vmul.f32 %v140, %v230
  %v238 = vmul.f32 %v142, %v230
  %v239 = vmul.f32 %v217, %v230
  %v240 = vmul.f32 %v146, %v235
  %v241 = vmul.f32 %v148, %v235
  %v242 = vmul.f32 %v222, %v235
  %v243 = vld [vmem:[%s0] sm:$0xff]
  %v244 = vld [vmem:[%s0 + $0x8] sm:$0x3f]
  %v246 = vsel %vm56, %v243, 0
  %v249 = vsel %vm56, %v244, 0
  %251 = vmatprep.subr.mxu0 0.0
  %252 = vmatpush1.xpose.msra.mxu0 %v58
  %253 = vmatprep.subr.mxu0 0.0
  %254 = vmatpush1.xpose.msra.mxu0 %v61
  %255 = vmatprep.subr.mxu0 0.0
  %256 = vmatpush1.xpose.msra.mxu0 0.0
  %257 = vmatprep.subr.mxu0 0.0
  %258 = vmatpush1.xpose.msra.mxu0 0.0
  %259 = vmatprep.subr.mxu0 0.0
  %260 = vmatpush1.xpose.msra.mxu0 0.0
  %261 = vmatprep.subr.mxu0 0.0
  %262 = vmatpush1.xpose.msra.mxu0 0.0
  %263 = vmatprep.subr.mxu0 0.0
  %264 = vmatpush1.xpose.msra.mxu0 0.0
  %265 = vmatprep.subr.mxu0 0.0
  %266 = vmatpush1.xpose.msra.mxu0 0.0
  %267 = vmatprep.subr.mxu0 0.0
  %268 = vmatpush1.xpose.msra.mxu0 0.0
  %269 = vmatprep.subr.mxu0 0.0
  %270 = vmatpush1.xpose.msra.mxu0 0.0
  %271 = vmatprep.subr.mxu0 0.0
  %272 = vmatpush1.xpose.msra.mxu0 0.0
  %273 = vmatprep.subr.mxu0 0.0
  %274 = vmatpush1.xpose.msra.mxu0 0.0
  %275 = vmatprep.subr.mxu0 0.0
  %276 = vmatpush1.xpose.msra.mxu0 0.0
  %277 = vmatprep.subr.mxu0 0.0
  %278 = vmatpush1.xpose.msra.mxu0 0.0
  %279 = vmatprep.subr.mxu0 0.0
  %280 = vmatpush1.xpose.msra.mxu0 0.0
  %281 = vmatprep.subr.mxu0 0.0
  %282 = vmatpush1.xpose.msra.mxu0 0.0
  %283 = vmatprep.subr.mxu0 0.0
  %284 = vmatpush1.xpose.msra.mxu0 0.0
  %285 = vmatprep.subr.mxu0 0.0
  %286 = vmatpush1.xpose.msra.mxu0 0.0
  %287 = vmatprep.subr.mxu0 0.0
  %288 = vmatpush1.xpose.msra.mxu0 0.0
  %289 = vmatprep.subr.mxu0 0.0
  %290 = vmatpush1.xpose.msra.mxu0 0.0
  %291 = vmatprep.subr.mxu0 0.0
  %292 = vmatpush1.xpose.msra.mxu0 0.0
  %293 = vmatprep.subr.mxu0 0.0
  %294 = vmatpush1.xpose.msra.mxu0 0.0
  %295 = vmatprep.subr.mxu0 0.0
  %296 = vmatpush1.xpose.msra.mxu0 0.0
  %297 = vmatprep.subr.mxu0 0.0
  %298 = vmatpush1.xpose.msra.mxu0 0.0
  %299 = vmatprep.subr.mxu0 0.0
  %300 = vmatpush1.xpose.msra.mxu0 0.0
  %301 = vmatprep.subr.mxu0 0.0
  %302 = vmatpush1.xpose.msra.mxu0 0.0
  %303 = vmatprep.subr.mxu0 0.0
  %304 = vmatpush1.xpose.msra.mxu0 0.0
  %305 = vmatprep.subr.mxu0 0.0
  %306 = vmatpush1.xpose.msra.mxu0 0.0
  %307 = vmatprep.subr.mxu0 0.0
  %308 = vmatpush1.xpose.msra.mxu0 0.0
  %309 = vmatprep.subr.mxu0 0.0
  %310 = vmatpush1.xpose.msra.mxu0 0.0
  %311 = vmatprep.subr.mxu0 0.0
  %312 = vmatpush1.xpose.msra.mxu0 0.0
  %313 = vmatprep.subr.mxu0 0.0
  %314 = vmatpush1.xpose.msra.mxu0 0.0
  %315 = vmatprep.mubr.f32.mxu0 0.0
  %316 = vmatmul.mubr.f32.gmra.mrb[0].mxu0 %v246
  %v317 = vpop.f32.mrb[0].mxu0
  %v318 = vadd.f32 0.0, %v317
  %v319 = vpop.f32.mrb[0].mxu0
  %320 = vmatprep.mubr.f32.mxu0 0.0
  %321 = vmatmul.mubr.f32.gmra.mrb[0].mxu0 %v249
  %v322 = vpop.f32.mrb[0].mxu0
  %v323 = vadd.f32 0.0, %v322
  %v324 = vpop.f32.mrb[0].mxu0
  %325 = vdwg.mxu0
  %v327 = vsel %vm63, %v323, 0
  %329 = vmatprep.subr.mxu0 0.0
  %330 = vmatpush1.msra.mxu0 %v318
  %331 = vmatprep.subr.mxu0 0.0
  %332 = vmatpush1.msra.mxu0 %v327
  %333 = vmatprep.subr.mxu0 0.0
  %334 = vmatpush1.msra.mxu0 0.0
  %335 = vmatprep.subr.mxu0 0.0
  %336 = vmatpush1.msra.mxu0 0.0
  %337 = vmatprep.subr.mxu0 0.0
  %338 = vmatpush1.msra.mxu0 0.0
  %339 = vmatprep.subr.mxu0 0.0
  %340 = vmatpush1.msra.mxu0 0.0
  %341 = vmatprep.subr.mxu0 0.0
  %342 = vmatpush1.msra.mxu0 0.0
  %343 = vmatprep.subr.mxu0 0.0
  %344 = vmatpush1.msra.mxu0 0.0
  %345 = vmatprep.subr.mxu0 0.0
  %346 = vmatpush1.msra.mxu0 0.0
  %347 = vmatprep.subr.mxu0 0.0
  %348 = vmatpush1.msra.mxu0 0.0
  %349 = vmatprep.subr.mxu0 0.0
  %350 = vmatpush1.msra.mxu0 0.0
  %351 = vmatprep.subr.mxu0 0.0
  %352 = vmatpush1.msra.mxu0 0.0
  %353 = vmatprep.subr.mxu0 0.0
  %354 = vmatpush1.msra.mxu0 0.0
  %355 = vmatprep.subr.mxu0 0.0
  %356 = vmatpush1.msra.mxu0 0.0
  %357 = vmatprep.subr.mxu0 0.0
  %358 = vmatpush1.msra.mxu0 0.0
  %359 = vmatprep.subr.mxu0 0.0
  %360 = vmatpush1.msra.mxu0 0.0
  %361 = vmatprep.subr.mxu0 0.0
  %362 = vmatpush1.msra.mxu0 0.0
  %363 = vmatprep.subr.mxu0 0.0
  %364 = vmatpush1.msra.mxu0 0.0
  %365 = vmatprep.subr.mxu0 0.0
  %366 = vmatpush1.msra.mxu0 0.0
  %367 = vmatprep.subr.mxu0 0.0
  %368 = vmatpush1.msra.mxu0 0.0
  %369 = vmatprep.subr.mxu0 0.0
  %370 = vmatpush1.msra.mxu0 0.0
  %371 = vmatprep.subr.mxu0 0.0
  %372 = vmatpush1.msra.mxu0 0.0
  %373 = vmatprep.subr.mxu0 0.0
  %374 = vmatpush1.msra.mxu0 0.0
  %375 = vmatprep.subr.mxu0 0.0
  %376 = vmatpush1.msra.mxu0 0.0
  %377 = vmatprep.subr.mxu0 0.0
  %378 = vmatpush1.msra.mxu0 0.0
  %379 = vmatprep.subr.mxu0 0.0
  %380 = vmatpush1.msra.mxu0 0.0
  %381 = vmatprep.subr.mxu0 0.0
  %382 = vmatpush1.msra.mxu0 0.0
  %383 = vmatprep.subr.mxu0 0.0
  %384 = vmatpush1.msra.mxu0 0.0
  %385 = vmatprep.subr.mxu0 0.0
  %386 = vmatpush1.msra.mxu0 0.0
  %387 = vmatprep.subr.mxu0 0.0
  %388 = vmatpush1.msra.mxu0 0.0
  %389 = vmatprep.subr.mxu0 0.0
  %390 = vmatpush1.msra.mxu0 0.0
  %391 = vmatprep.subr.mxu0 0.0
  %392 = vmatpush1.msra.mxu0 0.0
  %393 = vmatprep.mubr.f32.mxu0 0.0
  %394 = vmatmul.mubr.f32.gmra.mrb[0].mxu0 %v58
  %v395 = vpop.f32.mrb[0].mxu0
  %v396 = vadd.f32 0.0, %v395
  %v397 = vpop.f32.mrb[0].mxu0
  %398 = vmatprep.mubr.f32.mxu0 0.0
  %399 = vmatmul.mubr.f32.gmra.mrb[0].mxu0 %v61
  %v400 = vpop.f32.mrb[0].mxu0
  %v401 = vadd.f32 0.0, %v400
  %v402 = vpop.f32.mrb[0].mxu0
  %403 = vdwg.mxu0
  %vm404 = vcmask 72704
  %405 = vst.msk [vmem:[%s8] sm:$0xff] %vm404, %v396
  %vm406 = vcmask 65536
  %407 = vst.msk [vmem:[%s8 + $0x8] sm:$0x1] %vm406, %v401
  %v409 = vsel %vm404, %v396, 0
  %v412 = vsel %vm404, %v401, 0
  %vm414 = vcmask 1040384
  %v416 = vsel %vm414, %v240, 0
  %v419 = vsel %vm414, %v241, 0
  %v422 = vsel %vm414, %v242, 0
  %424 = vmatprep.subr.mxu0 %v238
  %425 = vmatpush1.msra.mxu0 %v237
  %426 = vmatprep.subr.mxu0 %v419
  %427 = vmatpush1.msra.mxu0 %v416
  %428 = vmatprep.subr.mxu0 0.0
  %429 = vmatpush1.msra.mxu0 0.0
  %430 = vmatprep.subr.mxu0 0.0
  %431 = vmatpush1.msra.mxu0 0.0
  %432 = vmatprep.subr.mxu0 0.0
  %433 = vmatpush1.msra.mxu0 0.0
  %434 = vmatprep.subr.mxu0 0.0
  %435 = vmatpush1.msra.mxu0 0.0
  %436 = vmatprep.subr.mxu0 0.0
  %437 = vmatpush1.msra.mxu0 0.0
  %438 = vmatprep.subr.mxu0 0.0
  %439 = vmatpush1.msra.mxu0 0.0
  %440 = vmatprep.subr.mxu0 0.0
  %441 = vmatpush1.msra.mxu0 0.0
  %442 = vmatprep.subr.mxu0 0.0
  %443 = vmatpush1.msra.mxu0 0.0
  %444 = vmatprep.subr.mxu0 0.0
  %445 = vmatpush1.msra.mxu0 0.0
  %446 = vmatprep.subr.mxu0 0.0
  %447 = vmatpush1.msra.mxu0 0.0
  %448 = vmatprep.subr.mxu0 0.0
  %449 = vmatpush1.msra.mxu0 0.0
  %450 = vmatprep.subr.mxu0 0.0
  %451 = vmatpush1.msra.mxu0 0.0
  %452 = vmatprep.subr.mxu0 0.0
  %453 = vmatpush1.msra.mxu0 0.0
  %454 = vmatprep.subr.mxu0 0.0
  %455 = vmatpush1.msra.mxu0 0.0
  %456 = vmatprep.subr.mxu0 0.0
  %457 = vmatpush1.msra.mxu0 0.0
  %458 = vmatprep.subr.mxu0 0.0
  %459 = vmatpush1.msra.mxu0 0.0
  %460 = vmatprep.subr.mxu0 0.0
  %461 = vmatpush1.msra.mxu0 0.0
  %462 = vmatprep.subr.mxu0 0.0
  %463 = vmatpush1.msra.mxu0 0.0
  %464 = vmatprep.subr.mxu0 0.0
  %465 = vmatpush1.msra.mxu0 0.0
  %466 = vmatprep.subr.mxu0 0.0
  %467 = vmatpush1.msra.mxu0 0.0
  %468 = vmatprep.subr.mxu0 0.0
  %469 = vmatpush1.msra.mxu0 0.0
  %470 = vmatprep.subr.mxu0 0.0
  %471 = vmatpush1.msra.mxu0 0.0
  %472 = vmatprep.subr.mxu0 0.0
  %473 = vmatpush1.msra.mxu0 0.0
  %474 = vmatprep.subr.mxu0 0.0
  %475 = vmatpush1.msra.mxu0 0.0
  %476 = vmatprep.subr.mxu0 0.0
  %477 = vmatpush1.msra.mxu0 0.0
  %478 = vmatprep.subr.mxu0 0.0
  %479 = vmatpush1.msra.mxu0 0.0
  %480 = vmatprep.subr.mxu0 0.0
  %481 = vmatpush1.msra.mxu0 0.0
  %482 = vmatprep.subr.mxu0 0.0
  %483 = vmatpush1.msra.mxu0 0.0
  %484 = vmatprep.subr.mxu0 0.0
  %485 = vmatpush1.msra.mxu0 0.0
  %486 = vmatprep.subr.mxu0 0.0
  %487 = vmatpush1.msra.mxu0 0.0
  %488 = vmatprep.mubr.f32.mxu0 0.0
  %489 = vmatmul.mubr.f32.gmra.mrb[0].mxu0 %v409
  %v490 = vpop.f32.mrb[0].mxu0
  %v491 = vadd.f32 0.0, %v490
  %v492 = vpop.f32.mrb[0].mxu0
  %v493 = vadd.f32 0.0, %v492
  %494 = vmatprep.mubr.f32.mxu0 0.0
  %495 = vmatmul.mubr.f32.gmra.mrb[0].mxu0 %v412
  %v496 = vpop.f32.mrb[0].mxu0
  %v497 = vadd.f32 0.0, %v496
  %v498 = vpop.f32.mrb[0].mxu0
  %v499 = vadd.f32 0.0, %v498
  %500 = vdwg.mxu0
  %501 = vmatprep.subr.mxu0 0.0
  %502 = vmatpush1.msra.mxu0 %v239
  %503 = vmatprep.subr.mxu0 0.0
  %504 = vmatpush1.msra.mxu0 %v422
  %505 = vmatprep.subr.mxu0 0.0
  %506 = vmatpush1.msra.mxu0 0.0
  %507 = vmatprep.subr.mxu0 0.0
  %508 = vmatpush1.msra.mxu0 0.0
  %509 = vmatprep.subr.mxu0 0.0
  %510 = vmatpush1.msra.mxu0 0.0
  %511 = vmatprep.subr.mxu0 0.0
  %512 = vmatpush1.msra.mxu0 0.0
  %513 = vmatprep.subr.mxu0 0.0
  %514 = vmatpush1.msra.mxu0 0.0
  %515 = vmatprep.subr.mxu0 0.0
  %516 = vmatpush1.msra.mxu0 0.0
  %517 = vmatprep.subr.mxu0 0.0
  %518 = vmatpush1.msra.mxu0 0.0
  %519 = vmatprep.subr.mxu0 0.0
  %520 = vmatpush1.msra.mxu0 0.0
  %521 = vmatprep.subr.mxu0 0.0
  %522 = vmatpush1.msra.mxu0 0.0
  %523 = vmatprep.subr.mxu0 0.0
  %524 = vmatpush1.msra.mxu0 0.0
  %525 = vmatprep.subr.mxu0 0.0
  %526 = vmatpush1.msra.mxu0 0.0
  %527 = vmatprep.subr.mxu0 0.0
  %528 = vmatpush1.msra.mxu0 0.0
  %529 = vmatprep.subr.mxu0 0.0
  %530 = vmatpush1.msra.mxu0 0.0
  %531 = vmatprep.subr.mxu0 0.0
  %532 = vmatpush1.msra.mxu0 0.0
  %533 = vmatprep.subr.mxu0 0.0
  %534 = vmatpush1.msra.mxu0 0.0
  %535 = vmatprep.subr.mxu0 0.0
  %536 = vmatpush1.msra.mxu0 0.0
  %537 = vmatprep.subr.mxu0 0.0
  %538 = vmatpush1.msra.mxu0 0.0
  %539 = vmatprep.subr.mxu0 0.0
  %540 = vmatpush1.msra.mxu0 0.0
  %541 = vmatprep.subr.mxu0 0.0
  %542 = vmatpush1.msra.mxu0 0.0
  %543 = vmatprep.subr.mxu0 0.0
  %544 = vmatpush1.msra.mxu0 0.0
  %545 = vmatprep.subr.mxu0 0.0
  %546 = vmatpush1.msra.mxu0 0.0
  %547 = vmatprep.subr.mxu0 0.0
  %548 = vmatpush1.msra.mxu0 0.0
  %549 = vmatprep.subr.mxu0 0.0
  %550 = vmatpush1.msra.mxu0 0.0
  %551 = vmatprep.subr.mxu0 0.0
  %552 = vmatpush1.msra.mxu0 0.0
  %553 = vmatprep.subr.mxu0 0.0
  %554 = vmatpush1.msra.mxu0 0.0
  %555 = vmatprep.subr.mxu0 0.0
  %556 = vmatpush1.msra.mxu0 0.0
  %557 = vmatprep.subr.mxu0 0.0
  %558 = vmatpush1.msra.mxu0 0.0
  %559 = vmatprep.subr.mxu0 0.0
  %560 = vmatpush1.msra.mxu0 0.0
  %561 = vmatprep.subr.mxu0 0.0
  %562 = vmatpush1.msra.mxu0 0.0
  %563 = vmatprep.subr.mxu0 0.0
  %564 = vmatpush1.msra.mxu0 0.0
  %565 = vmatprep.mubr.f32.mxu0 0.0
  %566 = vmatmul.mubr.f32.gmra.mrb[0].mxu0 %v409
  %v567 = vpop.f32.mrb[0].mxu0
  %v568 = vadd.f32 0.0, %v567
  %v569 = vpop.f32.mrb[0].mxu0
  %570 = vmatprep.mubr.f32.mxu0 0.0
  %571 = vmatmul.mubr.f32.gmra.mrb[0].mxu0 %v412
  %v572 = vpop.f32.mrb[0].mxu0
  %v573 = vadd.f32 0.0, %v572
  %v574 = vpop.f32.mrb[0].mxu0
  %575 = vdwg.mxu0
  %v576 = vld [vmem:[%s4] sm:$0xff]
  %v577 = vld [vmem:[%s4 + $0x8] sm:$0xff]
  %v578 = vld [vmem:[%s4 + $0x10] sm:$0xff]
  %v579 = vld [vmem:[%s4 + $0x18] sm:$0xff]
  %v580 = vld [vmem:[%s4 + $0x20] sm:$0xff]
  %v581 = vld [vmem:[%s4 + $0x28] sm:$0xff]
  %v582 = vld [vmem:[%s4 + $0x30] sm:$0xff]
  %v583 = vld [vmem:[%s4 + $0x38] sm:$0xff]
  %v584 = vld [vmem:[%s4 + $0x40] sm:$0xff]
  %v585 = vld [vmem:[%s4 + $0x48] sm:$0xff]
  %v586 = vld [vmem:[%s4 + $0x50] sm:$0xff]
  %v587 = vld [vmem:[%s4 + $0x58] sm:$0xff]
  %v588 = vld [vmem:[%s4 + $0x60] sm:$0xff]
  %v589 = vld [vmem:[%s4 + $0x68] sm:$0xff]
  %v590 = vld [vmem:[%s4 + $0x70] sm:$0xff]
  %v591 = vld [vmem:[%s4 + $0x78] sm:$0xff]
  %v592 = vld [vmem:[%s4 + $0x80] sm:$0xff]
  %v593 = vld [vmem:[%s4 + $0x88] sm:$0xff]
  %v594 = vld [vmem:[%s4 + $0x90] sm:$0xff]
  %v595 = vld [vmem:[%s4 + $0x98] sm:$0xff]
  %v596 = vld [vmem:[%s4 + $0xa0] sm:$0xff]
  %v597 = vld [vmem:[%s4 + $0xa8] sm:$0xff]
  %v598 = vld [vmem:[%s4 + $0xb0] sm:$0xff]
  %v599 = vld [vmem:[%s4 + $0xb8] sm:$0xff]
  %v600 = vld [vmem:[%s4 + $0xc0] sm:$0xff]
  %v601 = vld [vmem:[%s4 + $0xc8] sm:$0xff]
  %v602 = vld [vmem:[%s4 + $0xd0] sm:$0xff]
  %v603 = vld [vmem:[%s4 + $0xd8] sm:$0xff]
  %v604 = vld [vmem:[%s4 + $0xe0] sm:$0xff]
  %v605 = vld [vmem:[%s4 + $0xe8] sm:$0xff]
  %v606 = vld [vmem:[%s4 + $0xf0] sm:$0xff]
  %v607 = vld [vmem:[%s4 + $0xf8] sm:$0xff]
  %v608 = vld [vmem:[%s4 + $0x100] sm:$0xff]
  %v609 = vld [vmem:[%s4 + $0x108] sm:$0xff]
  %v610 = vld [vmem:[%s4 + $0x110] sm:$0xff]
  %v611 = vld [vmem:[%s4 + $0x118] sm:$0xff]
  %v612 = vld [vmem:[%s4 + $0x120] sm:$0xff]
  %v613 = vld [vmem:[%s4 + $0x128] sm:$0xff]
  %v614 = vld [vmem:[%s4 + $0x130] sm:$0xff]
  %v615 = vld [vmem:[%s4 + $0x138] sm:$0xff]
  %v616 = vld [vmem:[%s4 + $0x140] sm:$0xff]
  %v617 = vld [vmem:[%s4 + $0x148] sm:$0xff]
  %v618 = vld [vmem:[%s4 + $0x150] sm:$0xff]
  %v619 = vld [vmem:[%s4 + $0x158] sm:$0xff]
  %v620 = vld [vmem:[%s4 + $0x160] sm:$0xff]
  %v621 = vld [vmem:[%s4 + $0x168] sm:$0xff]
  %v622 = vld [vmem:[%s4 + $0x170] sm:$0xff]
  %v623 = vld [vmem:[%s4 + $0x178] sm:$0xff]
  %v624 = vld [vmem:[%s4 + $0x180] sm:$0xff]
  %v625 = vld [vmem:[%s4 + $0x188] sm:$0xff]
  %v626 = vld [vmem:[%s4 + $0x190] sm:$0xff]
  %v627 = vld [vmem:[%s4 + $0x198] sm:$0xff]
  %v628 = vld [vmem:[%s4 + $0x1a0] sm:$0xff]
  %v629 = vld [vmem:[%s4 + $0x1a8] sm:$0xff]
  %v630 = vld [vmem:[%s4 + $0x1b0] sm:$0xff]
  %v631 = vld [vmem:[%s4 + $0x1b8] sm:$0xff]
  %v632 = vld [vmem:[%s4 + $0x1c0] sm:$0xff]
  %v633 = vld [vmem:[%s4 + $0x1c8] sm:$0xff]
  %v634 = vld [vmem:[%s4 + $0x1d0] sm:$0xff]
  %v635 = vld [vmem:[%s4 + $0x1d8] sm:$0xff]
  %v636 = vld [vmem:[%s4 + $0x1e0] sm:$0xff]
  %v637 = vld [vmem:[%s4 + $0x1e8] sm:$0xff]
  %v638 = vld [vmem:[%s4 + $0x1f0] sm:$0xff]
  %v639 = vld [vmem:[%s4 + $0x1f8] sm:$0xff]
  %v640 = vld [vmem:[%s4 + $0x200] sm:$0xff]
  %v641 = vld [vmem:[%s4 + $0x208] sm:$0xff]
  %v642 = vld [vmem:[%s4 + $0x210] sm:$0xff]
  %v643 = vld [vmem:[%s4 + $0x218] sm:$0xff]
  %v644 = vld [vmem:[%s4 + $0x220] sm:$0xff]
  %v645 = vld [vmem:[%s4 + $0x228] sm:$0xff]
  %v646 = vld [vmem:[%s4 + $0x230] sm:$0xff]
  %v647 = vld [vmem:[%s4 + $0x238] sm:$0xff]
  %v648 = vld [vmem:[%s4 + $0x240] sm:$0xff]
  %v649 = vld [vmem:[%s4 + $0x248] sm:$0xff]
  %v650 = vld [vmem:[%s4 + $0x250] sm:$0xff]
  %v651 = vld [vmem:[%s4 + $0x258] sm:$0xff]
  %v652 = vld [vmem:[%s4 + $0x260] sm:$0xff]
  %v653 = vld [vmem:[%s4 + $0x268] sm:$0xff]
  %v654 = vld [vmem:[%s4 + $0x270] sm:$0xff]
  %v655 = vld [vmem:[%s4 + $0x278] sm:$0xff]
  %v656 = vld [vmem:[%s4 + $0x280] sm:$0xff]
  %v657 = vld [vmem:[%s4 + $0x288] sm:$0xff]
  %v658 = vld [vmem:[%s4 + $0x290] sm:$0xff]
  %v659 = vld [vmem:[%s4 + $0x298] sm:$0xff]
  %v660 = vld [vmem:[%s4 + $0x2a0] sm:$0xff]
  %v661 = vld [vmem:[%s4 + $0x2a8] sm:$0xff]
  %v662 = vld [vmem:[%s4 + $0x2b0] sm:$0xff]
  %v663 = vld [vmem:[%s4 + $0x2b8] sm:$0xff]
  %v664 = vld [vmem:[%s4 + $0x2c0] sm:$0xff]
  %v665 = vld [vmem:[%s4 + $0x2c8] sm:$0xff]
  %v666 = vld [vmem:[%s4 + $0x2d0] sm:$0xff]
  %v667 = vld [vmem:[%s4 + $0x2d8] sm:$0xff]
  %v668 = vld [vmem:[%s4 + $0x2e0] sm:$0xff]
  %v669 = vld [vmem:[%s4 + $0x2e8] sm:$0xff]
  %v670 = vld [vmem:[%s4 + $0x2f0] sm:$0xff]
  %v671 = vld [vmem:[%s4 + $0x2f8] sm:$0xff]
  %v672 = vld [vmem:[%s4 + $0x300] sm:$0xff]
  %v673 = vld [vmem:[%s4 + $0x308] sm:$0xff]
  %v674 = vld [vmem:[%s4 + $0x310] sm:$0xff]
  %v675 = vld [vmem:[%s4 + $0x318] sm:$0xff]
  %v676 = vld [vmem:[%s4 + $0x320] sm:$0xff]
  %v677 = vld [vmem:[%s4 + $0x328] sm:$0xff]
  %v678 = vld [vmem:[%s4 + $0x330] sm:$0xff]
  %v679 = vld [vmem:[%s4 + $0x338] sm:$0xff]
  %v680 = vld [vmem:[%s4 + $0x340] sm:$0xff]
  %v681 = vld [vmem:[%s4 + $0x348] sm:$0xff]
  %v682 = vld [vmem:[%s4 + $0x350] sm:$0xff]
  %v683 = vld [vmem:[%s4 + $0x358] sm:$0xff]
  %v684 = vld [vmem:[%s4 + $0x360] sm:$0xff]
  %v685 = vld [vmem:[%s4 + $0x368] sm:$0xff]
  %v686 = vld [vmem:[%s4 + $0x370] sm:$0xff]
  %v687 = vld [vmem:[%s4 + $0x378] sm:$0xff]
  %v688 = vld [vmem:[%s4 + $0x380] sm:$0xff]
  %v689 = vld [vmem:[%s4 + $0x388] sm:$0xff]
  %v690 = vld [vmem:[%s4 + $0x390] sm:$0xff]
  %v691 = vld [vmem:[%s4 + $0x398] sm:$0xff]
  %v692 = vld [vmem:[%s4 + $0x3a0] sm:$0xff]
  %v693 = vld [vmem:[%s4 + $0x3a8] sm:$0xff]
  %v694 = vld [vmem:[%s4 + $0x3b0] sm:$0xff]
  %v695 = vld [vmem:[%s4 + $0x3b8] sm:$0xff]
  %v696 = vld [vmem:[%s5] sm:$0x7]
  %v698 = vlaneseq
  %v699 = vshrl.u32 %v698, 7
  %v700 = vsub.s32 0, %v699
  %v701 = vrot.slane %v696, %v700
  %v702 = vlaneseq
  %v703 = vshrl.u32 %v702, 7
  %v704 = vsub.s32 1, %v703
  %v705 = vrot.slane %v696, %v704
  %v706 = vlaneseq
  %v707 = vshrl.u32 %v706, 7
  %v708 = vsub.s32 2, %v707
  %v709 = vrot.slane %v696, %v708
  %vm713 = vcmask 523264
  %v715 = vsel %vm713, %v568, 0
  %v718 = vsel %vm713, %v573, 0
  %720 = vmatprep.subr.mxu0 %v577
  %721 = vmatpush1.msra.mxu0 %v576
  %722 = vmatprep.subr.mxu0 %v580
  %723 = vmatpush1.msra.mxu0 %v579
  %724 = vmatprep.subr.mxu0 %v583
  %725 = vmatpush1.msra.mxu0 %v582
  %726 = vmatprep.subr.mxu0 %v586
  %727 = vmatpush1.msra.mxu0 %v585
  %728 = vmatprep.subr.mxu0 %v589
  %729 = vmatpush1.msra.mxu0 %v588
  %730 = vmatprep.subr.mxu0 %v592
  %731 = vmatpush1.msra.mxu0 %v591
  %732 = vmatprep.subr.mxu0 %v595
  %733 = vmatpush1.msra.mxu0 %v594
  %734 = vmatprep.subr.mxu0 %v598
  %735 = vmatpush1.msra.mxu0 %v597
  %736 = vmatprep.subr.mxu0 %v601
  %737 = vmatpush1.msra.mxu0 %v600
  %738 = vmatprep.subr.mxu0 %v604
  %739 = vmatpush1.msra.mxu0 %v603
  %740 = vmatprep.subr.mxu0 %v607
  %741 = vmatpush1.msra.mxu0 %v606
  %742 = vmatprep.subr.mxu0 %v610
  %743 = vmatpush1.msra.mxu0 %v609
  %744 = vmatprep.subr.mxu0 %v613
  %745 = vmatpush1.msra.mxu0 %v612
  %746 = vmatprep.subr.mxu0 %v616
  %747 = vmatpush1.msra.mxu0 %v615
  %748 = vmatprep.subr.mxu0 %v619
  %749 = vmatpush1.msra.mxu0 %v618
  %750 = vmatprep.subr.mxu0 %v622
  %751 = vmatpush1.msra.mxu0 %v621
  %752 = vmatprep.subr.mxu0 %v625
  %753 = vmatpush1.msra.mxu0 %v624
  %754 = vmatprep.subr.mxu0 %v628
  %755 = vmatpush1.msra.mxu0 %v627
  %756 = vmatprep.subr.mxu0 %v631
  %757 = vmatpush1.msra.mxu0 %v630
  %758 = vmatprep.subr.mxu0 %v634
  %759 = vmatpush1.msra.mxu0 %v633
  %760 = vmatprep.subr.mxu0 %v637
  %761 = vmatpush1.msra.mxu0 %v636
  %762 = vmatprep.subr.mxu0 %v640
  %763 = vmatpush1.msra.mxu0 %v639
  %764 = vmatprep.subr.mxu0 %v643
  %765 = vmatpush1.msra.mxu0 %v642
  %766 = vmatprep.subr.mxu0 %v646
  %767 = vmatpush1.msra.mxu0 %v645
  %768 = vmatprep.subr.mxu0 %v649
  %769 = vmatpush1.msra.mxu0 %v648
  %770 = vmatprep.subr.mxu0 %v652
  %771 = vmatpush1.msra.mxu0 %v651
  %772 = vmatprep.subr.mxu0 %v655
  %773 = vmatpush1.msra.mxu0 %v654
  %774 = vmatprep.subr.mxu0 %v658
  %775 = vmatpush1.msra.mxu0 %v657
  %776 = vmatprep.subr.mxu0 %v661
  %777 = vmatpush1.msra.mxu0 %v660
  %778 = vmatprep.subr.mxu0 %v664
  %779 = vmatpush1.msra.mxu0 %v663
  %780 = vmatprep.subr.mxu0 %v667
  %781 = vmatpush1.msra.mxu0 %v666
  %782 = vmatprep.subr.mxu0 %v670
  %783 = vmatpush1.msra.mxu0 %v669
  %784 = vmatprep.mubr.f32.mxu0 %v493
  %785 = vmatmul.mubr.f32.gmra.mrb[0].mxu0 %v491
  %v786 = vpop.f32.mrb[0].mxu0
  %v787 = vadd.f32 %v701, %v786
  %v788 = vpop.f32.mrb[0].mxu0
  %v789 = vadd.f32 %v705, %v788
  %790 = vmatprep.mubr.f32.mxu0 %v499
  %791 = vmatmul.mubr.f32.gmra.mrb[0].mxu0 %v497
  %v792 = vpop.f32.mrb[0].mxu0
  %v793 = vadd.f32 %v701, %v792
  %v794 = vpop.f32.mrb[0].mxu0
  %v795 = vadd.f32 %v705, %v794
  %796 = vdwg.mxu0
  %797 = vmatprep.subr.mxu0 %v673
  %798 = vmatpush1.msra.mxu0 %v672
  %799 = vmatprep.subr.mxu0 %v676
  %800 = vmatpush1.msra.mxu0 %v675
  %801 = vmatprep.subr.mxu0 %v679
  %802 = vmatpush1.msra.mxu0 %v678
  %803 = vmatprep.subr.mxu0 %v682
  %804 = vmatpush1.msra.mxu0 %v681
  %805 = vmatprep.subr.mxu0 %v685
  %806 = vmatpush1.msra.mxu0 %v684
  %807 = vmatprep.subr.mxu0 %v688
  %808 = vmatpush1.msra.mxu0 %v687
  %809 = vmatprep.subr.mxu0 %v691
  %810 = vmatpush1.msra.mxu0 %v690
  %811 = vmatprep.subr.mxu0 %v694
  %812 = vmatpush1.msra.mxu0 %v693
  %813 = vmatprep.subr.mxu0 0.0
  %814 = vmatpush1.msra.mxu0 0.0
  %815 = vmatprep.subr.mxu0 0.0
  %816 = vmatpush1.msra.mxu0 0.0
  %817 = vmatprep.subr.mxu0 0.0
  %818 = vmatpush1.msra.mxu0 0.0
  %819 = vmatprep.subr.mxu0 0.0
  %820 = vmatpush1.msra.mxu0 0.0
  %821 = vmatprep.subr.mxu0 0.0
  %822 = vmatpush1.msra.mxu0 0.0
  %823 = vmatprep.subr.mxu0 0.0
  %824 = vmatpush1.msra.mxu0 0.0
  %825 = vmatprep.subr.mxu0 0.0
  %826 = vmatpush1.msra.mxu0 0.0
  %827 = vmatprep.subr.mxu0 0.0
  %828 = vmatpush1.msra.mxu0 0.0
  %829 = vmatprep.subr.mxu0 0.0
  %830 = vmatpush1.msra.mxu0 0.0
  %831 = vmatprep.subr.mxu0 0.0
  %832 = vmatpush1.msra.mxu0 0.0
  %833 = vmatprep.subr.mxu0 0.0
  %834 = vmatpush1.msra.mxu0 0.0
  %835 = vmatprep.subr.mxu0 0.0
  %836 = vmatpush1.msra.mxu0 0.0
  %837 = vmatprep.subr.mxu0 0.0
  %838 = vmatpush1.msra.mxu0 0.0
  %839 = vmatprep.subr.mxu0 0.0
  %840 = vmatpush1.msra.mxu0 0.0
  %841 = vmatprep.subr.mxu0 0.0
  %842 = vmatpush1.msra.mxu0 0.0
  %843 = vmatprep.subr.mxu0 0.0
  %844 = vmatpush1.msra.mxu0 0.0
  %845 = vmatprep.subr.mxu0 0.0
  %846 = vmatpush1.msra.mxu0 0.0
  %847 = vmatprep.subr.mxu0 0.0
  %848 = vmatpush1.msra.mxu0 0.0
  %849 = vmatprep.subr.mxu0 0.0
  %850 = vmatpush1.msra.mxu0 0.0
  %851 = vmatprep.subr.mxu0 0.0
  %852 = vmatpush1.msra.mxu0 0.0
  %853 = vmatprep.subr.mxu0 0.0
  %854 = vmatpush1.msra.mxu0 0.0
  %855 = vmatprep.subr.mxu0 0.0
  %856 = vmatpush1.msra.mxu0 0.0
  %857 = vmatprep.subr.mxu0 0.0
  %858 = vmatpush1.msra.mxu0 0.0
  %859 = vmatprep.subr.mxu0 0.0
  %860 = vmatpush1.msra.mxu0 0.0
  %861 = vmatprep.mubr.f32.mxu0 0.0
  %862 = vmatmul.mubr.f32.gmra.mrb[0].mxu0 %v715
  %v863 = vpop.f32.mrb[0].mxu0
  %v864 = vadd.f32 %v787, %v863
  %v865 = vpop.f32.mrb[0].mxu0
  %v866 = vadd.f32 %v789, %v865
  %867 = vmatprep.mubr.f32.mxu0 0.0
  %868 = vmatmul.mubr.f32.gmra.mrb[0].mxu0 %v718
  %v869 = vpop.f32.mrb[0].mxu0
  %v870 = vadd.f32 %v793, %v869
  %v871 = vpop.f32.mrb[0].mxu0
  %v872 = vadd.f32 %v795, %v871
  %873 = vdwg.mxu0
  %874 = vmatprep.subr.mxu0 0.0
  %875 = vmatpush1.msra.mxu0 %v578
  %876 = vmatprep.subr.mxu0 0.0
  %877 = vmatpush1.msra.mxu0 %v581
  %878 = vmatprep.subr.mxu0 0.0
  %879 = vmatpush1.msra.mxu0 %v584
  %880 = vmatprep.subr.mxu0 0.0
  %881 = vmatpush1.msra.mxu0 %v587
  %882 = vmatprep.subr.mxu0 0.0
  %883 = vmatpush1.msra.mxu0 %v590
  %884 = vmatprep.subr.mxu0 0.0
  %885 = vmatpush1.msra.mxu0 %v593
  %886 = vmatprep.subr.mxu0 0.0
  %887 = vmatpush1.msra.mxu0 %v596
  %888 = vmatprep.subr.mxu0 0.0
  %889 = vmatpush1.msra.mxu0 %v599
  %890 = vmatprep.subr.mxu0 0.0
  %891 = vmatpush1.msra.mxu0 %v602
  %892 = vmatprep.subr.mxu0 0.0
  %893 = vmatpush1.msra.mxu0 %v605
  %894 = vmatprep.subr.mxu0 0.0
  %895 = vmatpush1.msra.mxu0 %v608
  %896 = vmatprep.subr.mxu0 0.0
  %897 = vmatpush1.msra.mxu0 %v611
  %898 = vmatprep.subr.mxu0 0.0
  %899 = vmatpush1.msra.mxu0 %v614
  %900 = vmatprep.subr.mxu0 0.0
  %901 = vmatpush1.msra.mxu0 %v617
  %902 = vmatprep.subr.mxu0 0.0
  %903 = vmatpush1.msra.mxu0 %v620
  %904 = vmatprep.subr.mxu0 0.0
  %905 = vmatpush1.msra.mxu0 %v623
  %906 = vmatprep.subr.mxu0 0.0
  %907 = vmatpush1.msra.mxu0 %v626
  %908 = vmatprep.subr.mxu0 0.0
  %909 = vmatpush1.msra.mxu0 %v629
  %910 = vmatprep.subr.mxu0 0.0
  %911 = vmatpush1.msra.mxu0 %v632
  %912 = vmatprep.subr.mxu0 0.0
  %913 = vmatpush1.msra.mxu0 %v635
  %914 = vmatprep.subr.mxu0 0.0
  %915 = vmatpush1.msra.mxu0 %v638
  %916 = vmatprep.subr.mxu0 0.0
  %917 = vmatpush1.msra.mxu0 %v641
  %918 = vmatprep.subr.mxu0 0.0
  %919 = vmatpush1.msra.mxu0 %v644
  %920 = vmatprep.subr.mxu0 0.0
  %921 = vmatpush1.msra.mxu0 %v647
  %922 = vmatprep.subr.mxu0 0.0
  %923 = vmatpush1.msra.mxu0 %v650
  %924 = vmatprep.subr.mxu0 0.0
  %925 = vmatpush1.msra.mxu0 %v653
  %926 = vmatprep.subr.mxu0 0.0
  %927 = vmatpush1.msra.mxu0 %v656
  %928 = vmatprep.subr.mxu0 0.0
  %929 = vmatpush1.msra.mxu0 %v659
  %930 = vmatprep.subr.mxu0 0.0
  %931 = vmatpush1.msra.mxu0 %v662
  %932 = vmatprep.subr.mxu0 0.0
  %933 = vmatpush1.msra.mxu0 %v665
  %934 = vmatprep.subr.mxu0 0.0
  %935 = vmatpush1.msra.mxu0 %v668
  %936 = vmatprep.subr.mxu0 0.0
  %937 = vmatpush1.msra.mxu0 %v671
  %938 = vmatprep.mubr.f32.mxu0 %v493
  %939 = vmatmul.mubr.f32.gmra.mrb[0].mxu0 %v491
  %v940 = vpop.f32.mrb[0].mxu0
  %v941 = vadd.f32 %v709, %v940
  %v942 = vpop.f32.mrb[0].mxu0
  %943 = vmatprep.mubr.f32.mxu0 %v499
  %944 = vmatmul.mubr.f32.gmra.mrb[0].mxu0 %v497
  %v945 = vpop.f32.mrb[0].mxu0
  %v946 = vadd.f32 %v709, %v945
  %v947 = vpop.f32.mrb[0].mxu0
  %948 = vdwg.mxu0
  %949 = vmatprep.subr.mxu0 0.0
  %950 = vmatpush1.msra.mxu0 %v674
  %951 = vmatprep.subr.mxu0 0.0
  %952 = vmatpush1.msra.mxu0 %v677
  %953 = vmatprep.subr.mxu0 0.0
  %954 = vmatpush1.msra.mxu0 %v680
  %955 = vmatprep.subr.mxu0 0.0
  %956 = vmatpush1.msra.mxu0 %v683
  %957 = vmatprep.subr.mxu0 0.0
  %958 = vmatpush1.msra.mxu0 %v686
  %959 = vmatprep.subr.mxu0 0.0
  %960 = vmatpush1.msra.mxu0 %v689
  %961 = vmatprep.subr.mxu0 0.0
  %962 = vmatpush1.msra.mxu0 %v692
  %963 = vmatprep.subr.mxu0 0.0
  %964 = vmatpush1.msra.mxu0 %v695
  %965 = vmatprep.subr.mxu0 0.0
  %966 = vmatpush1.msra.mxu0 0.0
  %967 = vmatprep.subr.mxu0 0.0
  %968 = vmatpush1.msra.mxu0 0.0
  %969 = vmatprep.subr.mxu0 0.0
  %970 = vmatpush1.msra.mxu0 0.0
  %971 = vmatprep.subr.mxu0 0.0
  %972 = vmatpush1.msra.mxu0 0.0
  %973 = vmatprep.subr.mxu0 0.0
  %974 = vmatpush1.msra.mxu0 0.0
  %975 = vmatprep.subr.mxu0 0.0
  %976 = vmatpush1.msra.mxu0 0.0
  %977 = vmatprep.subr.mxu0 0.0
  %978 = vmatpush1.msra.mxu0 0.0
  %979 = vmatprep.subr.mxu0 0.0
  %980 = vmatpush1.msra.mxu0 0.0
  %981 = vmatprep.subr.mxu0 0.0
  %982 = vmatpush1.msra.mxu0 0.0
  %983 = vmatprep.subr.mxu0 0.0
  %984 = vmatpush1.msra.mxu0 0.0
  %985 = vmatprep.subr.mxu0 0.0
  %986 = vmatpush1.msra.mxu0 0.0
  %987 = vmatprep.subr.mxu0 0.0
  %988 = vmatpush1.msra.mxu0 0.0
  %989 = vmatprep.subr.mxu0 0.0
  %990 = vmatpush1.msra.mxu0 0.0
  %991 = vmatprep.subr.mxu0 0.0
  %992 = vmatpush1.msra.mxu0 0.0
  %993 = vmatprep.subr.mxu0 0.0
  %994 = vmatpush1.msra.mxu0 0.0
  %995 = vmatprep.subr.mxu0 0.0
  %996 = vmatpush1.msra.mxu0 0.0
  %997 = vmatprep.subr.mxu0 0.0
  %998 = vmatpush1.msra.mxu0 0.0
  %999 = vmatprep.subr.mxu0 0.0
  %1000 = vmatpush1.msra.mxu0 0.0
  %1001 = vmatprep.subr.mxu0 0.0
  %1002 = vmatpush1.msra.mxu0 0.0
  %1003 = vmatprep.subr.mxu0 0.0
  %1004 = vmatpush1.msra.mxu0 0.0
  %1005 = vmatprep.subr.mxu0 0.0
  %1006 = vmatpush1.msra.mxu0 0.0
  %1007 = vmatprep.subr.mxu0 0.0
  %1008 = vmatpush1.msra.mxu0 0.0
  %1009 = vmatprep.subr.mxu0 0.0
  %1010 = vmatpush1.msra.mxu0 0.0
  %1011 = vmatprep.subr.mxu0 0.0
  %1012 = vmatpush1.msra.mxu0 0.0
  %1013 = vmatprep.mubr.f32.mxu0 0.0
  %1014 = vmatmul.mubr.f32.gmra.mrb[0].mxu0 %v715
  %v1015 = vpop.f32.mrb[0].mxu0
  %v1016 = vadd.f32 %v941, %v1015
  %v1017 = vpop.f32.mrb[0].mxu0
  %1018 = vmatprep.mubr.f32.mxu0 0.0
  %1019 = vmatmul.mubr.f32.gmra.mrb[0].mxu0 %v718
  %v1020 = vpop.f32.mrb[0].mxu0
  %v1021 = vadd.f32 %v946, %v1020
  %v1022 = vpop.f32.mrb[0].mxu0
  %1023 = vdwg.mxu0
  %1024 = vst [vmem:[%s9] sm:$0xff] %v864
  %1025 = vst [vmem:[%s9 + $0x8] sm:$0xff] %v866
  %1026 = vst.msk [vmem:[%s9 + $0x10] sm:$0xff] %vm713, %v1016
  %1027 = vst [vmem:[%s9 + $0x18] sm:$0x1] %v870
  %1028 = vst [vmem:[%s9 + $0x20] sm:$0x1] %v872
  %vm1029 = vcmask 516096
  %1030 = vst.msk [vmem:[%s9 + $0x28] sm:$0x1] %vm1029, %v1021
  %v1031 = vld [vmem:[%s6] sm:$0x7]
  %v1032 = vld [vmem:[#allocation2] sm:$0x1]
  %1034 = vset.pattern.permute.xlu0 0
  %1035 = vperm.xlu0 %1034, %v1032
  %v1036 = vpop.permute.xlu0 %1035
  %v1038 = vlaneseq
  %v1039 = vshrl.u32 %v1038, 7
  %v1040 = vsub.s32 0, %v1039
  %v1041 = vrot.slane %v1036, %v1040
  %v1043 = vlaneseq
  %v1044 = vshrl.u32 %v1043, 7
  %v1045 = vsub.s32 0, %v1044
  %v1046 = vrot.slane %v1031, %v1045
  %v1047 = vlaneseq
  %v1048 = vshrl.u32 %v1047, 7
  %v1049 = vsub.s32 1, %v1048
  %v1050 = vrot.slane %v1031, %v1049
  %v1051 = vlaneseq
  %v1052 = vshrl.u32 %v1051, 7
  %v1053 = vsub.s32 2, %v1052
  %v1054 = vrot.slane %v1031, %v1053
  %v1057 = vsel %vm713, %v1054, 0
  %v1060 = vsel %vm713, %v1016, 0
  %v1063 = vsel %vm713, %v1021, 0
  %1065 = vmatprep.subr.mxu0 %v866
  %1066 = vmatpush1.xpose.msra.mxu0 %v864
  %1067 = vmatprep.subr.mxu0 %v872
  %1068 = vmatpush1.xpose.msra.mxu0 %v870
  %1069 = vmatprep.subr.mxu0 0.0
  %1070 = vmatpush1.xpose.msra.mxu0 0.0
  %1071 = vmatprep.subr.mxu0 0.0
  %1072 = vmatpush1.xpose.msra.mxu0 0.0
  %1073 = vmatprep.subr.mxu0 0.0
  %1074 = vmatpush1.xpose.msra.mxu0 0.0
  %1075 = vmatprep.subr.mxu0 0.0
  %1076 = vmatpush1.xpose.msra.mxu0 0.0
  %1077 = vmatprep.subr.mxu0 0.0
  %1078 = vmatpush1.xpose.msra.mxu0 0.0
  %1079 = vmatprep.subr.mxu0 0.0
  %1080 = vmatpush1.xpose.msra.mxu0 0.0
  %1081 = vmatprep.subr.mxu0 0.0
  %1082 = vmatpush1.xpose.msra.mxu0 0.0
  %1083 = vmatprep.subr.mxu0 0.0
  %1084 = vmatpush1.xpose.msra.mxu0 0.0
  %1085 = vmatprep.subr.mxu0 0.0
  %1086 = vmatpush1.xpose.msra.mxu0 0.0
  %1087 = vmatprep.subr.mxu0 0.0
  %1088 = vmatpush1.xpose.msra.mxu0 0.0
  %1089 = vmatprep.subr.mxu0 0.0
  %1090 = vmatpush1.xpose.msra.mxu0 0.0
  %1091 = vmatprep.subr.mxu0 0.0
  %1092 = vmatpush1.xpose.msra.mxu0 0.0
  %1093 = vmatprep.subr.mxu0 0.0
  %1094 = vmatpush1.xpose.msra.mxu0 0.0
  %1095 = vmatprep.subr.mxu0 0.0
  %1096 = vmatpush1.xpose.msra.mxu0 0.0
  %1097 = vmatprep.subr.mxu0 0.0
  %1098 = vmatpush1.xpose.msra.mxu0 0.0
  %1099 = vmatprep.subr.mxu0 0.0
  %1100 = vmatpush1.xpose.msra.mxu0 0.0
  %1101 = vmatprep.subr.mxu0 0.0
  %1102 = vmatpush1.xpose.msra.mxu0 0.0
  %1103 = vmatprep.subr.mxu0 0.0
  %1104 = vmatpush1.xpose.msra.mxu0 0.0
  %1105 = vmatprep.subr.mxu0 0.0
  %1106 = vmatpush1.xpose.msra.mxu0 0.0
  %1107 = vmatprep.subr.mxu0 0.0
  %1108 = vmatpush1.xpose.msra.mxu0 0.0
  %1109 = vmatprep.subr.mxu0 0.0
  %1110 = vmatpush1.xpose.msra.mxu0 0.0
  %1111 = vmatprep.subr.mxu0 0.0
  %1112 = vmatpush1.xpose.msra.mxu0 0.0
  %1113 = vmatprep.subr.mxu0 0.0
  %1114 = vmatpush1.xpose.msra.mxu0 0.0
  %1115 = vmatprep.subr.mxu0 0.0
  %1116 = vmatpush1.xpose.msra.mxu0 0.0
  %1117 = vmatprep.subr.mxu0 0.0
  %1118 = vmatpush1.xpose.msra.mxu0 0.0
  %1119 = vmatprep.subr.mxu0 0.0
  %1120 = vmatpush1.xpose.msra.mxu0 0.0
  %1121 = vmatprep.subr.mxu0 0.0
  %1122 = vmatpush1.xpose.msra.mxu0 0.0
  %1123 = vmatprep.subr.mxu0 0.0
  %1124 = vmatpush1.xpose.msra.mxu0 0.0
  %1125 = vmatprep.subr.mxu0 0.0
  %1126 = vmatpush1.xpose.msra.mxu0 0.0
  %1127 = vmatprep.subr.mxu0 0.0
  %1128 = vmatpush1.xpose.msra.mxu0 0.0
  %1129 = vmatprep.mubr.f32.mxu0 %v1050
  %1130 = vmatmul.mubr.f32.gmra.mrb[0].mxu0 %v1046
  %v1131 = vpop.f32.mrb[0].mxu0
  %v1132 = vadd.f32 %v1041, %v1131
  %v1133 = vpop.f32.mrb[0].mxu0
  %1134 = vdwg.mxu0
  %1135 = vmatprep.subr.mxu0 0.0
  %1136 = vmatpush1.xpose.msra.mxu0 %v1060
  %1137 = vmatprep.subr.mxu0 0.0
  %1138 = vmatpush1.xpose.msra.mxu0 %v1063
  %1139 = vmatprep.subr.mxu0 0.0
  %1140 = vmatpush1.xpose.msra.mxu0 0.0
  %1141 = vmatprep.subr.mxu0 0.0
  %1142 = vmatpush1.xpose.msra.mxu0 0.0
  %1143 = vmatprep.subr.mxu0 0.0
  %1144 = vmatpush1.xpose.msra.mxu0 0.0
  %1145 = vmatprep.subr.mxu0 0.0
  %1146 = vmatpush1.xpose.msra.mxu0 0.0
  %1147 = vmatprep.subr.mxu0 0.0
  %1148 = vmatpush1.xpose.msra.mxu0 0.0
  %1149 = vmatprep.subr.mxu0 0.0
  %1150 = vmatpush1.xpose.msra.mxu0 0.0
  %1151 = vmatprep.subr.mxu0 0.0
  %1152 = vmatpush1.xpose.msra.mxu0 0.0
  %1153 = vmatprep.subr.mxu0 0.0
  %1154 = vmatpush1.xpose.msra.mxu0 0.0
  %1155 = vmatprep.subr.mxu0 0.0
  %1156 = vmatpush1.xpose.msra.mxu0 0.0
  %1157 = vmatprep.subr.mxu0 0.0
  %1158 = vmatpush1.xpose.msra.mxu0 0.0
  %1159 = vmatprep.subr.mxu0 0.0
  %1160 = vmatpush1.xpose.msra.mxu0 0.0
  %1161 = vmatprep.subr.mxu0 0.0
  %1162 = vmatpush1.xpose.msra.mxu0 0.0
  %1163 = vmatprep.subr.mxu0 0.0
  %1164 = vmatpush1.xpose.msra.mxu0 0.0
  %1165 = vmatprep.subr.mxu0 0.0
  %1166 = vmatpush1.xpose.msra.mxu0 0.0
  %1167 = vmatprep.subr.mxu0 0.0
  %1168 = vmatpush1.xpose.msra.mxu0 0.0
  %1169 = vmatprep.subr.mxu0 0.0
  %1170 = vmatpush1.xpose.msra.mxu0 0.0
  %1171 = vmatprep.subr.mxu0 0.0
  %1172 = vmatpush1.xpose.msra.mxu0 0.0
  %1173 = vmatprep.subr.mxu0 0.0
  %1174 = vmatpush1.xpose.msra.mxu0 0.0
  %1175 = vmatprep.subr.mxu0 0.0
  %1176 = vmatpush1.xpose.msra.mxu0 0.0
  %1177 = vmatprep.subr.mxu0 0.0
  %1178 = vmatpush1.xpose.msra.mxu0 0.0
  %1179 = vmatprep.subr.mxu0 0.0
  %1180 = vmatpush1.xpose.msra.mxu0 0.0
  %1181 = vmatprep.subr.mxu0 0.0
  %1182 = vmatpush1.xpose.msra.mxu0 0.0
  %1183 = vmatprep.subr.mxu0 0.0
  %1184 = vmatpush1.xpose.msra.mxu0 0.0
  %1185 = vmatprep.subr.mxu0 0.0
  %1186 = vmatpush1.xpose.msra.mxu0 0.0
  %1187 = vmatprep.subr.mxu0 0.0
  %1188 = vmatpush1.xpose.msra.mxu0 0.0
  %1189 = vmatprep.subr.mxu0 0.0
  %1190 = vmatpush1.xpose.msra.mxu0 0.0
  %1191 = vmatprep.subr.mxu0 0.0
  %1192 = vmatpush1.xpose.msra.mxu0 0.0
  %1193 = vmatprep.subr.mxu0 0.0
  %1194 = vmatpush1.xpose.msra.mxu0 0.0
  %1195 = vmatprep.subr.mxu0 0.0
  %1196 = vmatpush1.xpose.msra.mxu0 0.0
  %1197 = vmatprep.subr.mxu0 0.0
  %1198 = vmatpush1.xpose.msra.mxu0 0.0
  %1199 = vmatprep.mubr.f32.mxu0 0.0
  %1200 = vmatmul.mubr.f32.gmra.mrb[0].mxu0 %v1057
  %v1201 = vpop.f32.mrb[0].mxu0
  %v1202 = vadd.f32 %v1132, %v1201
  %v1203 = vpop.f32.mrb[0].mxu0
  %1204 = vdwg.mxu0
  %v1205 = vxor.u32 %v1202, 2147483648
  %v1206 = vmul.f32 %v1205, 1.442695
  %v1207 = vpow.pop %v1206
  %v1208 = vadd.f32 %v1207, 1.0
  %v1209 = vrcp.pop %v1208
  %v1210 = vmul.f32 1.0, %v1209
  %1211 = vst.msk [vmem:[%s10] sm:$0x1] %vm406, %v1210
  // Predicated region
  $region34: #{_lambda_.13} parent=0 // pred_check
    _
  $region35: #{_lambda_.13} parent=0 // pred_check_branch
    %1213 = sbr.rel (0) target = $region37
  $region36: #{_lambda_.13} parent=0 // pred_region
    _
  $region37: #{_lambda_.13} parent=0 // pred_fallthru
    _
  // Predicated region
  $region38: #{_lambda_.13} parent=0 // pred_check
    _
  $region39: #{_lambda_.13} parent=0 // pred_check_branch
    %1215 = sbr.rel (0) target = $region41
  $region40: #{_lambda_.13} parent=0 // pred_region
    _
  $region41: #{_lambda_.13} parent=0 // pred_fallthru
    _
  // Predicated region
  $region42: #{_lambda_.13} parent=0 // pred_check
    _
  $region43: #{_lambda_.13} parent=0 // pred_check_branch
    %1217 = sbr.rel (0) target = $region45
  $region44: #{_lambda_.13} parent=0 // pred_region
    _
  $region45: #{_lambda_.13} parent=0 // pred_fallthru
    _
  // Predicated region
  $region46: #{_lambda_.13} parent=0 // pred_check
    _
  $region47: #{_lambda_.13} parent=0 // pred_check_branch
    %1219 = sbr.rel (0) target = $region49
  $region48: #{_lambda_.13} parent=0 // pred_region
    _
  $region49: #{_lambda_.13} parent=0 // pred_fallthru
    _
  // Predicated region
  $region50: #{_lambda_.13} parent=0 // pred_check
    _
  $region51: #{_lambda_.13} parent=0 // pred_check_branch
    %1221 = sbr.rel (0) target = $region53
  $region52: #{_lambda_.13} parent=0 // pred_region
    _
  $region53: #{_lambda_.13} parent=0 // pred_fallthru
    _
  // Predicated region
  $region54: #{_lambda_.13} parent=0 // pred_check
    _
  $region55: #{_lambda_.13} parent=0 // pred_check_branch
    %1223 = sbr.rel (0) target = $region57
  $region56: #{_lambda_.13} parent=0 // pred_region
    _
  $region57: #{_lambda_.13} parent=0 // pred_fallthru
    _

// kernel: _lambda_.14
$region0: #{_lambda_.14}
  #allocation0 [shape = 'u32[]', space=smem, size = 0x4, offset = 0x4, fixed_abs, tag = 'smem constant byte address 0x4 - core index']
  #allocation1 [shape = 'u32[144,128]{1,0:T(1,128)}', space=vmem, size = 0x12000, scoped, tag = 'internal scratch']
  #allocation2 [shape = 'f32[1,1]{1,0:T(1,128)S(1)}', space=vmem, size = 0x200, scoped, tag = 'scoped memory for _lambda_.14']
  %s0 = inlined_call_operand.vmem [shape: f32[9,9], index: 0, kind: input, shape index: {}]
  %s1 = inlined_call_operand.vmem [shape: f32[9,320], index: 1, kind: input, shape index: {}]
  %s2 = inlined_call_operand.vmem [shape: s32[5,1], index: 2, kind: input, shape index: {}]
  %s3 = inlined_call_operand.vmem [shape: f32[5,1], index: 3, kind: input, shape index: {}]
  %s4 = inlined_call_operand.vmem [shape: f32[320,320], index: 4, kind: input, shape index: {}]
  %s5 = inlined_call_operand.vmem [shape: f32[1,320], index: 5, kind: input, shape index: {}]
  %s6 = inlined_call_operand.vmem [shape: f32[1,320], index: 6, kind: input, shape index: {}]
  %s7 = inlined_call_operand.<no memory space> [shape: f32[1,1], index: 7, kind: input, shape index: {}]
  %s8 = inlined_call_operand.vmem [shape: f32[5,5], index: 8, kind: output, shape index: {0}]
  %s9 = inlined_call_operand.vmem [shape: f32[5,320], index: 9, kind: output, shape index: {1}]
  %s10 = inlined_call_operand.vmem [shape: f32[1,5], index: 10, kind: output, shape index: {2}]
  %11 = xla_tuple %s8, %s9, %s10
  %s12 = sld [smem:[#allocation0]]
  $region58: #{_lambda_.14} parent=0
    _
  %s14 = ssub.s32 1, %s12
  %s15 = scalar_select 0, %s14, %s12
  %v16 = vstv %s7
  %17 = vst [vmem:[#allocation2] sm:$0x1] %v16
  // Predicated region
  $region2: #{_lambda_.14} parent=0 // pred_check
    _
  $region3: #{_lambda_.14} parent=0 // pred_check_branch
    %19 = sbr.rel (0) target = $region5
  $region4: #{_lambda_.14} parent=0 // pred_region
    _
  $region5: #{_lambda_.14} parent=0 // pred_fallthru
    _
  // Predicated region
  $region6: #{_lambda_.14} parent=0 // pred_check
    _
  $region7: #{_lambda_.14} parent=0 // pred_check_branch
    %21 = sbr.rel (0) target = $region9
  $region8: #{_lambda_.14} parent=0 // pred_region
    _
  $region9: #{_lambda_.14} parent=0 // pred_fallthru
    _
  // Predicated region
  $region10: #{_lambda_.14} parent=0 // pred_check
    _
  $region11: #{_lambda_.14} parent=0 // pred_check_branch
    %23 = sbr.rel (0) target = $region13
  $region12: #{_lambda_.14} parent=0 // pred_region
    _
  $region13: #{_lambda_.14} parent=0 // pred_fallthru
    _
  // Predicated region
  $region14: #{_lambda_.14} parent=0 // pred_check
    _
  $region15: #{_lambda_.14} parent=0 // pred_check_branch
    %25 = sbr.rel (0) target = $region17
  $region16: #{_lambda_.14} parent=0 // pred_region
    _
  $region17: #{_lambda_.14} parent=0 // pred_fallthru
    _
  // Predicated region
  $region18: #{_lambda_.14} parent=0 // pred_check
    _
  $region19: #{_lambda_.14} parent=0 // pred_check_branch
    %27 = sbr.rel (0) target = $region21
  $region20: #{_lambda_.14} parent=0 // pred_region
    _
  $region21: #{_lambda_.14} parent=0 // pred_fallthru
    _
  // Predicated region
  $region22: #{_lambda_.14} parent=0 // pred_check
    _
  $region23: #{_lambda_.14} parent=0 // pred_check_branch
    %29 = sbr.rel (0) target = $region25
  $region24: #{_lambda_.14} parent=0 // pred_region
    _
  $region25: #{_lambda_.14} parent=0 // pred_fallthru
    _
  // Predicated region
  $region26: #{_lambda_.14} parent=0 // pred_check
    _
  $region27: #{_lambda_.14} parent=0 // pred_check_branch
    %31 = sbr.rel (0) target = $region29
  $region28: #{_lambda_.14} parent=0 // pred_region
    _
  $region29: #{_lambda_.14} parent=0 // pred_fallthru
    _
  // Predicated region
  $region30: #{_lambda_.14} parent=0 // pred_check
    _
  $region31: #{_lambda_.14} parent=0 // pred_check_branch
    %33 = sbr.rel (0) target = $region33
  $region32: #{_lambda_.14} parent=0 // pred_region
    _
  $region33: #{_lambda_.14} parent=0 // pred_fallthru
    _
  %v34 = vld [vmem:[%s2] sm:$0x1f]
  %v35 = vlaneseq
  %v36 = vand.u32 %v35, 127
  %37 = vset.pattern.permute.xlu0 0
  %38 = vperm.xlu0 %37, %v34
  %v39 = vpop.permute.xlu0 %38
  %vm40 = vcmp.eq.s32.totalorder %v36, %v39
  %v41 = vsel %vm40, 1, 0
  %v42 = vcvt.s32.f32 %v41
  %v43 = vld [vmem:[%s1] sm:$0xff]
  %v44 = vld [vmem:[%s1 + $0x8] sm:$0xff]
  %v45 = vld [vmem:[%s1 + $0x10] sm:$0xff]
  %v46 = vld [vmem:[%s1 + $0x18] sm:$0x1]
  %v47 = vld [vmem:[%s1 + $0x20] sm:$0x1]
  %v48 = vld [vmem:[%s1 + $0x28] sm:$0x1]
  %vm49 = vcmask 72704
  %v51 = vsel %vm49, %v42, 0
  %vm53 = vcmask 1040384
  %v55 = vsel %vm53, %v46, 0
  %v58 = vsel %vm53, %v47, 0
  %v61 = vsel %vm53, %v48, 0
  %63 = vmatprep.subr.mxu0 %v44
  %64 = vmatpush1.msra.mxu0 %v43
  %65 = vmatprep.subr.mxu0 %v58
  %66 = vmatpush1.msra.mxu0 %v55
  %67 = vmatprep.subr.mxu0 0.0
  %68 = vmatpush1.msra.mxu0 0.0
  %69 = vmatprep.subr.mxu0 0.0
  %70 = vmatpush1.msra.mxu0 0.0
  %71 = vmatprep.subr.mxu0 0.0
  %72 = vmatpush1.msra.mxu0 0.0
  %73 = vmatprep.subr.mxu0 0.0
  %74 = vmatpush1.msra.mxu0 0.0
  %75 = vmatprep.subr.mxu0 0.0
  %76 = vmatpush1.msra.mxu0 0.0
  %77 = vmatprep.subr.mxu0 0.0
  %78 = vmatpush1.msra.mxu0 0.0
  %79 = vmatprep.subr.mxu0 0.0
  %80 = vmatpush1.msra.mxu0 0.0
  %81 = vmatprep.subr.mxu0 0.0
  %82 = vmatpush1.msra.mxu0 0.0
  %83 = vmatprep.subr.mxu0 0.0
  %84 = vmatpush1.msra.mxu0 0.0
  %85 = vmatprep.subr.mxu0 0.0
  %86 = vmatpush1.msra.mxu0 0.0
  %87 = vmatprep.subr.mxu0 0.0
  %88 = vmatpush1.msra.mxu0 0.0
  %89 = vmatprep.subr.mxu0 0.0
  %90 = vmatpush1.msra.mxu0 0.0
  %91 = vmatprep.subr.mxu0 0.0
  %92 = vmatpush1.msra.mxu0 0.0
  %93 = vmatprep.subr.mxu0 0.0
  %94 = vmatpush1.msra.mxu0 0.0
  %95 = vmatprep.subr.mxu0 0.0
  %96 = vmatpush1.msra.mxu0 0.0
  %97 = vmatprep.subr.mxu0 0.0
  %98 = vmatpush1.msra.mxu0 0.0
  %99 = vmatprep.subr.mxu0 0.0
  %100 = vmatpush1.msra.mxu0 0.0
  %101 = vmatprep.subr.mxu0 0.0
  %102 = vmatpush1.msra.mxu0 0.0
  %103 = vmatprep.subr.mxu0 0.0
  %104 = vmatpush1.msra.mxu0 0.0
  %105 = vmatprep.subr.mxu0 0.0
  %106 = vmatpush1.msra.mxu0 0.0
  %107 = vmatprep.subr.mxu0 0.0
  %108 = vmatpush1.msra.mxu0 0.0
  %109 = vmatprep.subr.mxu0 0.0
  %110 = vmatpush1.msra.mxu0 0.0
  %111 = vmatprep.subr.mxu0 0.0
  %112 = vmatpush1.msra.mxu0 0.0
  %113 = vmatprep.subr.mxu0 0.0
  %114 = vmatpush1.msra.mxu0 0.0
  %115 = vmatprep.subr.mxu0 0.0
  %116 = vmatpush1.msra.mxu0 0.0
  %117 = vmatprep.subr.mxu0 0.0
  %118 = vmatpush1.msra.mxu0 0.0
  %119 = vmatprep.subr.mxu0 0.0
  %120 = vmatpush1.msra.mxu0 0.0
  %121 = vmatprep.subr.mxu0 0.0
  %122 = vmatpush1.msra.mxu0 0.0
  %123 = vmatprep.subr.mxu0 0.0
  %124 = vmatpush1.msra.mxu0 0.0
  %125 = vmatprep.subr.mxu0 0.0
  %126 = vmatpush1.msra.mxu0 0.0
  %127 = vmatprep.mubr.f32.mxu0 0.0
  %128 = vmatmul.mubr.f32.gmra.mrb[0].mxu0 %v51
  %v129 = vpop.f32.mrb[0].mxu0
  %v130 = vadd.f32 0.0, %v129
  %v131 = vpop.f32.mrb[0].mxu0
  %v132 = vadd.f32 0.0, %v131
  %133 = vdwg.mxu0
  %134 = vmatprep.subr.mxu0 0.0
  %135 = vmatpush1.msra.mxu0 %v45
  %136 = vmatprep.subr.mxu0 0.0
  %137 = vmatpush1.msra.mxu0 %v61
  %138 = vmatprep.subr.mxu0 0.0
  %139 = vmatpush1.msra.mxu0 0.0
  %140 = vmatprep.subr.mxu0 0.0
  %141 = vmatpush1.msra.mxu0 0.0
  %142 = vmatprep.subr.mxu0 0.0
  %143 = vmatpush1.msra.mxu0 0.0
  %144 = vmatprep.subr.mxu0 0.0
  %145 = vmatpush1.msra.mxu0 0.0
  %146 = vmatprep.subr.mxu0 0.0
  %147 = vmatpush1.msra.mxu0 0.0
  %148 = vmatprep.subr.mxu0 0.0
  %149 = vmatpush1.msra.mxu0 0.0
  %150 = vmatprep.subr.mxu0 0.0
  %151 = vmatpush1.msra.mxu0 0.0
  %152 = vmatprep.subr.mxu0 0.0
  %153 = vmatpush1.msra.mxu0 0.0
  %154 = vmatprep.subr.mxu0 0.0
  %155 = vmatpush1.msra.mxu0 0.0
  %156 = vmatprep.subr.mxu0 0.0
  %157 = vmatpush1.msra.mxu0 0.0
  %158 = vmatprep.subr.mxu0 0.0
  %159 = vmatpush1.msra.mxu0 0.0
  %160 = vmatprep.subr.mxu0 0.0
  %161 = vmatpush1.msra.mxu0 0.0
  %162 = vmatprep.subr.mxu0 0.0
  %163 = vmatpush1.msra.mxu0 0.0
  %164 = vmatprep.subr.mxu0 0.0
  %165 = vmatpush1.msra.mxu0 0.0
  %166 = vmatprep.subr.mxu0 0.0
  %167 = vmatpush1.msra.mxu0 0.0
  %168 = vmatprep.subr.mxu0 0.0
  %169 = vmatpush1.msra.mxu0 0.0
  %170 = vmatprep.subr.mxu0 0.0
  %171 = vmatpush1.msra.mxu0 0.0
  %172 = vmatprep.subr.mxu0 0.0
  %173 = vmatpush1.msra.mxu0 0.0
  %174 = vmatprep.subr.mxu0 0.0
  %175 = vmatpush1.msra.mxu0 0.0
  %176 = vmatprep.subr.mxu0 0.0
  %177 = vmatpush1.msra.mxu0 0.0
  %178 = vmatprep.subr.mxu0 0.0
  %179 = vmatpush1.msra.mxu0 0.0
  %180 = vmatprep.subr.mxu0 0.0
  %181 = vmatpush1.msra.mxu0 0.0
  %182 = vmatprep.subr.mxu0 0.0
  %183 = vmatpush1.msra.mxu0 0.0
  %184 = vmatprep.subr.mxu0 0.0
  %185 = vmatpush1.msra.mxu0 0.0
  %186 = vmatprep.subr.mxu0 0.0
  %187 = vmatpush1.msra.mxu0 0.0
  %188 = vmatprep.subr.mxu0 0.0
  %189 = vmatpush1.msra.mxu0 0.0
  %190 = vmatprep.subr.mxu0 0.0
  %191 = vmatpush1.msra.mxu0 0.0
  %192 = vmatprep.subr.mxu0 0.0
  %193 = vmatpush1.msra.mxu0 0.0
  %194 = vmatprep.subr.mxu0 0.0
  %195 = vmatpush1.msra.mxu0 0.0
  %196 = vmatprep.subr.mxu0 0.0
  %197 = vmatpush1.msra.mxu0 0.0
  %198 = vmatprep.mubr.f32.mxu0 0.0
  %199 = vmatmul.mubr.f32.gmra.mrb[0].mxu0 %v51
  %v200 = vpop.f32.mrb[0].mxu0
  %v201 = vadd.f32 0.0, %v200
  %v202 = vpop.f32.mrb[0].mxu0
  %203 = vdwg.mxu0
  %v204 = vld [vmem:[%s3] sm:$0x1f]
  %206 = vset.pattern.permute.xlu0 0
  %207 = vperm.xlu0 %206, %v204
  %v208 = vpop.permute.xlu0 %207
  %v210 = vmul.f32 %v130, %v208
  %v211 = vmul.f32 %v132, %v208
  %v212 = vmul.f32 %v201, %v208
  %v213 = vld [vmem:[%s0] sm:$0xff]
  %v214 = vld [vmem:[%s0 + $0x8] sm:$0x1]
  %v216 = vsel %vm49, %v213, 0
  %v219 = vsel %vm49, %v214, 0
  %221 = vmatprep.subr.mxu0 0.0
  %222 = vmatpush1.xpose.msra.mxu0 %v51
  %223 = vmatprep.subr.mxu0 0.0
  %224 = vmatpush1.xpose.msra.mxu0 0.0
  %225 = vmatprep.subr.mxu0 0.0
  %226 = vmatpush1.xpose.msra.mxu0 0.0
  %227 = vmatprep.subr.mxu0 0.0
  %228 = vmatpush1.xpose.msra.mxu0 0.0
  %229 = vmatprep.subr.mxu0 0.0
  %230 = vmatpush1.xpose.msra.mxu0 0.0
  %231 = vmatprep.subr.mxu0 0.0
  %232 = vmatpush1.xpose.msra.mxu0 0.0
  %233 = vmatprep.subr.mxu0 0.0
  %234 = vmatpush1.xpose.msra.mxu0 0.0
  %235 = vmatprep.subr.mxu0 0.0
  %236 = vmatpush1.xpose.msra.mxu0 0.0
  %237 = vmatprep.subr.mxu0 0.0
  %238 = vmatpush1.xpose.msra.mxu0 0.0
  %239 = vmatprep.subr.mxu0 0.0
  %240 = vmatpush1.xpose.msra.mxu0 0.0
  %241 = vmatprep.subr.mxu0 0.0
  %242 = vmatpush1.xpose.msra.mxu0 0.0
  %243 = vmatprep.subr.mxu0 0.0
  %244 = vmatpush1.xpose.msra.mxu0 0.0
  %245 = vmatprep.subr.mxu0 0.0
  %246 = vmatpush1.xpose.msra.mxu0 0.0
  %247 = vmatprep.subr.mxu0 0.0
  %248 = vmatpush1.xpose.msra.mxu0 0.0
  %249 = vmatprep.subr.mxu0 0.0
  %250 = vmatpush1.xpose.msra.mxu0 0.0
  %251 = vmatprep.subr.mxu0 0.0
  %252 = vmatpush1.xpose.msra.mxu0 0.0
  %253 = vmatprep.subr.mxu0 0.0
  %254 = vmatpush1.xpose.msra.mxu0 0.0
  %255 = vmatprep.subr.mxu0 0.0
  %256 = vmatpush1.xpose.msra.mxu0 0.0
  %257 = vmatprep.subr.mxu0 0.0
  %258 = vmatpush1.xpose.msra.mxu0 0.0
  %259 = vmatprep.subr.mxu0 0.0
  %260 = vmatpush1.xpose.msra.mxu0 0.0
  %261 = vmatprep.subr.mxu0 0.0
  %262 = vmatpush1.xpose.msra.mxu0 0.0
  %263 = vmatprep.subr.mxu0 0.0
  %264 = vmatpush1.xpose.msra.mxu0 0.0
  %265 = vmatprep.subr.mxu0 0.0
  %266 = vmatpush1.xpose.msra.mxu0 0.0
  %267 = vmatprep.subr.mxu0 0.0
  %268 = vmatpush1.xpose.msra.mxu0 0.0
  %269 = vmatprep.subr.mxu0 0.0
  %270 = vmatpush1.xpose.msra.mxu0 0.0
  %271 = vmatprep.subr.mxu0 0.0
  %272 = vmatpush1.xpose.msra.mxu0 0.0
  %273 = vmatprep.subr.mxu0 0.0
  %274 = vmatpush1.xpose.msra.mxu0 0.0
  %275 = vmatprep.subr.mxu0 0.0
  %276 = vmatpush1.xpose.msra.mxu0 0.0
  %277 = vmatprep.subr.mxu0 0.0
  %278 = vmatpush1.xpose.msra.mxu0 0.0
  %279 = vmatprep.subr.mxu0 0.0
  %280 = vmatpush1.xpose.msra.mxu0 0.0
  %281 = vmatprep.subr.mxu0 0.0
  %282 = vmatpush1.xpose.msra.mxu0 0.0
  %283 = vmatprep.subr.mxu0 0.0
  %284 = vmatpush1.xpose.msra.mxu0 0.0
  %285 = vmatprep.mubr.f32.mxu0 0.0
  %286 = vmatmul.mubr.f32.gmra.mrb[0].mxu0 %v216
  %v287 = vpop.f32.mrb[0].mxu0
  %v288 = vadd.f32 0.0, %v287
  %v289 = vpop.f32.mrb[0].mxu0
  %290 = vmatprep.mubr.f32.mxu0 0.0
  %291 = vmatmul.mubr.f32.gmra.mrb[0].mxu0 %v219
  %v292 = vpop.f32.mrb[0].mxu0
  %v293 = vadd.f32 0.0, %v292
  %v294 = vpop.f32.mrb[0].mxu0
  %295 = vdwg.mxu0
  %v297 = vsel %vm53, %v293, 0
  %299 = vmatprep.subr.mxu0 0.0
  %300 = vmatpush1.msra.mxu0 %v288
  %301 = vmatprep.subr.mxu0 0.0
  %302 = vmatpush1.msra.mxu0 %v297
  %303 = vmatprep.subr.mxu0 0.0
  %304 = vmatpush1.msra.mxu0 0.0
  %305 = vmatprep.subr.mxu0 0.0
  %306 = vmatpush1.msra.mxu0 0.0
  %307 = vmatprep.subr.mxu0 0.0
  %308 = vmatpush1.msra.mxu0 0.0
  %309 = vmatprep.subr.mxu0 0.0
  %310 = vmatpush1.msra.mxu0 0.0
  %311 = vmatprep.subr.mxu0 0.0
  %312 = vmatpush1.msra.mxu0 0.0
  %313 = vmatprep.subr.mxu0 0.0
  %314 = vmatpush1.msra.mxu0 0.0
  %315 = vmatprep.subr.mxu0 0.0
  %316 = vmatpush1.msra.mxu0 0.0
  %317 = vmatprep.subr.mxu0 0.0
  %318 = vmatpush1.msra.mxu0 0.0
  %319 = vmatprep.subr.mxu0 0.0
  %320 = vmatpush1.msra.mxu0 0.0
  %321 = vmatprep.subr.mxu0 0.0
  %322 = vmatpush1.msra.mxu0 0.0
  %323 = vmatprep.subr.mxu0 0.0
  %324 = vmatpush1.msra.mxu0 0.0
  %325 = vmatprep.subr.mxu0 0.0
  %326 = vmatpush1.msra.mxu0 0.0
  %327 = vmatprep.subr.mxu0 0.0
  %328 = vmatpush1.msra.mxu0 0.0
  %329 = vmatprep.subr.mxu0 0.0
  %330 = vmatpush1.msra.mxu0 0.0
  %331 = vmatprep.subr.mxu0 0.0
  %332 = vmatpush1.msra.mxu0 0.0
  %333 = vmatprep.subr.mxu0 0.0
  %334 = vmatpush1.msra.mxu0 0.0
  %335 = vmatprep.subr.mxu0 0.0
  %336 = vmatpush1.msra.mxu0 0.0
  %337 = vmatprep.subr.mxu0 0.0
  %338 = vmatpush1.msra.mxu0 0.0
  %339 = vmatprep.subr.mxu0 0.0
  %340 = vmatpush1.msra.mxu0 0.0
  %341 = vmatprep.subr.mxu0 0.0
  %342 = vmatpush1.msra.mxu0 0.0
  %343 = vmatprep.subr.mxu0 0.0
  %344 = vmatpush1.msra.mxu0 0.0
  %345 = vmatprep.subr.mxu0 0.0
  %346 = vmatpush1.msra.mxu0 0.0
  %347 = vmatprep.subr.mxu0 0.0
  %348 = vmatpush1.msra.mxu0 0.0
  %349 = vmatprep.subr.mxu0 0.0
  %350 = vmatpush1.msra.mxu0 0.0
  %351 = vmatprep.subr.mxu0 0.0
  %352 = vmatpush1.msra.mxu0 0.0
  %353 = vmatprep.subr.mxu0 0.0
  %354 = vmatpush1.msra.mxu0 0.0
  %355 = vmatprep.subr.mxu0 0.0
  %356 = vmatpush1.msra.mxu0 0.0
  %357 = vmatprep.subr.mxu0 0.0
  %358 = vmatpush1.msra.mxu0 0.0
  %359 = vmatprep.subr.mxu0 0.0
  %360 = vmatpush1.msra.mxu0 0.0
  %361 = vmatprep.subr.mxu0 0.0
  %362 = vmatpush1.msra.mxu0 0.0
  %363 = vmatprep.mubr.f32.mxu0 0.0
  %364 = vmatmul.mubr.f32.gmra.mrb[0].mxu0 %v51
  %v365 = vpop.f32.mrb[0].mxu0
  %v366 = vadd.f32 0.0, %v365
  %v367 = vpop.f32.mrb[0].mxu0
  %368 = vdwg.mxu0
  %vm369 = vcmask 36864
  %370 = vst.msk [vmem:[%s8] sm:$0x1f] %vm369, %v366
  %vm371 = vcmask 39936
  %v373 = vsel %vm371, %v366, 0
  %vm375 = vcmask 1044480
  %v377 = vsel %vm375, %v210, 0
  %v380 = vsel %vm375, %v211, 0
  %v383 = vsel %vm375, %v212, 0
  %385 = vmatprep.subr.mxu0 %v380
  %386 = vmatpush1.msra.mxu0 %v377
  %387 = vmatprep.subr.mxu0 0.0
  %388 = vmatpush1.msra.mxu0 0.0
  %389 = vmatprep.subr.mxu0 0.0
  %390 = vmatpush1.msra.mxu0 0.0
  %391 = vmatprep.subr.mxu0 0.0
  %392 = vmatpush1.msra.mxu0 0.0
  %393 = vmatprep.subr.mxu0 0.0
  %394 = vmatpush1.msra.mxu0 0.0
  %395 = vmatprep.subr.mxu0 0.0
  %396 = vmatpush1.msra.mxu0 0.0
  %397 = vmatprep.subr.mxu0 0.0
  %398 = vmatpush1.msra.mxu0 0.0
  %399 = vmatprep.subr.mxu0 0.0
  %400 = vmatpush1.msra.mxu0 0.0
  %401 = vmatprep.subr.mxu0 0.0
  %402 = vmatpush1.msra.mxu0 0.0
  %403 = vmatprep.subr.mxu0 0.0
  %404 = vmatpush1.msra.mxu0 0.0
  %405 = vmatprep.subr.mxu0 0.0
  %406 = vmatpush1.msra.mxu0 0.0
  %407 = vmatprep.subr.mxu0 0.0
  %408 = vmatpush1.msra.mxu0 0.0
  %409 = vmatprep.subr.mxu0 0.0
  %410 = vmatpush1.msra.mxu0 0.0
  %411 = vmatprep.subr.mxu0 0.0
  %412 = vmatpush1.msra.mxu0 0.0
  %413 = vmatprep.subr.mxu0 0.0
  %414 = vmatpush1.msra.mxu0 0.0
  %415 = vmatprep.subr.mxu0 0.0
  %416 = vmatpush1.msra.mxu0 0.0
  %417 = vmatprep.subr.mxu0 0.0
  %418 = vmatpush1.msra.mxu0 0.0
  %419 = vmatprep.subr.mxu0 0.0
  %420 = vmatpush1.msra.mxu0 0.0
  %421 = vmatprep.subr.mxu0 0.0
  %422 = vmatpush1.msra.mxu0 0.0
  %423 = vmatprep.subr.mxu0 0.0
  %424 = vmatpush1.msra.mxu0 0.0
  %425 = vmatprep.subr.mxu0 0.0
  %426 = vmatpush1.msra.mxu0 0.0
  %427 = vmatprep.subr.mxu0 0.0
  %428 = vmatpush1.msra.mxu0 0.0
  %429 = vmatprep.subr.mxu0 0.0
  %430 = vmatpush1.msra.mxu0 0.0
  %431 = vmatprep.subr.mxu0 0.0
  %432 = vmatpush1.msra.mxu0 0.0
  %433 = vmatprep.subr.mxu0 0.0
  %434 = vmatpush1.msra.mxu0 0.0
  %435 = vmatprep.subr.mxu0 0.0
  %436 = vmatpush1.msra.mxu0 0.0
  %437 = vmatprep.subr.mxu0 0.0
  %438 = vmatpush1.msra.mxu0 0.0
  %439 = vmatprep.subr.mxu0 0.0
  %440 = vmatpush1.msra.mxu0 0.0
  %441 = vmatprep.subr.mxu0 0.0
  %442 = vmatpush1.msra.mxu0 0.0
  %443 = vmatprep.subr.mxu0 0.0
  %444 = vmatpush1.msra.mxu0 0.0
  %445 = vmatprep.subr.mxu0 0.0
  %446 = vmatpush1.msra.mxu0 0.0
  %447 = vmatprep.subr.mxu0 0.0
  %448 = vmatpush1.msra.mxu0 0.0
  %449 = vmatprep.mubr.f32.mxu0 0.0
  %450 = vmatmul.mubr.f32.gmra.mrb[0].mxu0 %v373
  %v451 = vpop.f32.mrb[0].mxu0
  %v452 = vadd.f32 0.0, %v451
  %v453 = vpop.f32.mrb[0].mxu0
  %v454 = vadd.f32 0.0, %v453
  %455 = vdwg.mxu0
  %456 = vmatprep.subr.mxu0 0.0
  %457 = vmatpush1.msra.mxu0 %v383
  %458 = vmatprep.subr.mxu0 0.0
  %459 = vmatpush1.msra.mxu0 0.0
  %460 = vmatprep.subr.mxu0 0.0
  %461 = vmatpush1.msra.mxu0 0.0
  %462 = vmatprep.subr.mxu0 0.0
  %463 = vmatpush1.msra.mxu0 0.0
  %464 = vmatprep.subr.mxu0 0.0
  %465 = vmatpush1.msra.mxu0 0.0
  %466 = vmatprep.subr.mxu0 0.0
  %467 = vmatpush1.msra.mxu0 0.0
  %468 = vmatprep.subr.mxu0 0.0
  %469 = vmatpush1.msra.mxu0 0.0
  %470 = vmatprep.subr.mxu0 0.0
  %471 = vmatpush1.msra.mxu0 0.0
  %472 = vmatprep.subr.mxu0 0.0
  %473 = vmatpush1.msra.mxu0 0.0
  %474 = vmatprep.subr.mxu0 0.0
  %475 = vmatpush1.msra.mxu0 0.0
  %476 = vmatprep.subr.mxu0 0.0
  %477 = vmatpush1.msra.mxu0 0.0
  %478 = vmatprep.subr.mxu0 0.0
  %479 = vmatpush1.msra.mxu0 0.0
  %480 = vmatprep.subr.mxu0 0.0
  %481 = vmatpush1.msra.mxu0 0.0
  %482 = vmatprep.subr.mxu0 0.0
  %483 = vmatpush1.msra.mxu0 0.0
  %484 = vmatprep.subr.mxu0 0.0
  %485 = vmatpush1.msra.mxu0 0.0
  %486 = vmatprep.subr.mxu0 0.0
  %487 = vmatpush1.msra.mxu0 0.0
  %488 = vmatprep.subr.mxu0 0.0
  %489 = vmatpush1.msra.mxu0 0.0
  %490 = vmatprep.subr.mxu0 0.0
  %491 = vmatpush1.msra.mxu0 0.0
  %492 = vmatprep.subr.mxu0 0.0
  %493 = vmatpush1.msra.mxu0 0.0
  %494 = vmatprep.subr.mxu0 0.0
  %495 = vmatpush1.msra.mxu0 0.0
  %496 = vmatprep.subr.mxu0 0.0
  %497 = vmatpush1.msra.mxu0 0.0
  %498 = vmatprep.subr.mxu0 0.0
  %499 = vmatpush1.msra.mxu0 0.0
  %500 = vmatprep.subr.mxu0 0.0
  %501 = vmatpush1.msra.mxu0 0.0
  %502 = vmatprep.subr.mxu0 0.0
  %503 = vmatpush1.msra.mxu0 0.0
  %504 = vmatprep.subr.mxu0 0.0
  %505 = vmatpush1.msra.mxu0 0.0
  %506 = vmatprep.subr.mxu0 0.0
  %507 = vmatpush1.msra.mxu0 0.0
  %508 = vmatprep.subr.mxu0 0.0
  %509 = vmatpush1.msra.mxu0 0.0
  %510 = vmatprep.subr.mxu0 0.0
  %511 = vmatpush1.msra.mxu0 0.0
  %512 = vmatprep.subr.mxu0 0.0
  %513 = vmatpush1.msra.mxu0 0.0
  %514 = vmatprep.subr.mxu0 0.0
  %515 = vmatpush1.msra.mxu0 0.0
  %516 = vmatprep.subr.mxu0 0.0
  %517 = vmatpush1.msra.mxu0 0.0
  %518 = vmatprep.subr.mxu0 0.0
  %519 = vmatpush1.msra.mxu0 0.0
  %520 = vmatprep.mubr.f32.mxu0 0.0
  %521 = vmatmul.mubr.f32.gmra.mrb[0].mxu0 %v373
  %v522 = vpop.f32.mrb[0].mxu0
  %v523 = vadd.f32 0.0, %v522
  %v524 = vpop.f32.mrb[0].mxu0
  %525 = vdwg.mxu0
  %v526 = vld [vmem:[%s4] sm:$0xff]
  %v527 = vld [vmem:[%s4 + $0x8] sm:$0xff]
  %v528 = vld [vmem:[%s4 + $0x10] sm:$0xff]
  %v529 = vld [vmem:[%s4 + $0x18] sm:$0xff]
  %v530 = vld [vmem:[%s4 + $0x20] sm:$0xff]
  %v531 = vld [vmem:[%s4 + $0x28] sm:$0xff]
  %v532 = vld [vmem:[%s4 + $0x30] sm:$0xff]
  %v533 = vld [vmem:[%s4 + $0x38] sm:$0xff]
  %v534 = vld [vmem:[%s4 + $0x40] sm:$0xff]
  %v535 = vld [vmem:[%s4 + $0x48] sm:$0xff]
  %v536 = vld [vmem:[%s4 + $0x50] sm:$0xff]
  %v537 = vld [vmem:[%s4 + $0x58] sm:$0xff]
  %v538 = vld [vmem:[%s4 + $0x60] sm:$0xff]
  %v539 = vld [vmem:[%s4 + $0x68] sm:$0xff]
  %v540 = vld [vmem:[%s4 + $0x70] sm:$0xff]
  %v541 = vld [vmem:[%s4 + $0x78] sm:$0xff]
  %v542 = vld [vmem:[%s4 + $0x80] sm:$0xff]
  %v543 = vld [vmem:[%s4 + $0x88] sm:$0xff]
  %v544 = vld [vmem:[%s4 + $0x90] sm:$0xff]
  %v545 = vld [vmem:[%s4 + $0x98] sm:$0xff]
  %v546 = vld [vmem:[%s4 + $0xa0] sm:$0xff]
  %v547 = vld [vmem:[%s4 + $0xa8] sm:$0xff]
  %v548 = vld [vmem:[%s4 + $0xb0] sm:$0xff]
  %v549 = vld [vmem:[%s4 + $0xb8] sm:$0xff]
  %v550 = vld [vmem:[%s4 + $0xc0] sm:$0xff]
  %v551 = vld [vmem:[%s4 + $0xc8] sm:$0xff]
  %v552 = vld [vmem:[%s4 + $0xd0] sm:$0xff]
  %v553 = vld [vmem:[%s4 + $0xd8] sm:$0xff]
  %v554 = vld [vmem:[%s4 + $0xe0] sm:$0xff]
  %v555 = vld [vmem:[%s4 + $0xe8] sm:$0xff]
  %v556 = vld [vmem:[%s4 + $0xf0] sm:$0xff]
  %v557 = vld [vmem:[%s4 + $0xf8] sm:$0xff]
  %v558 = vld [vmem:[%s4 + $0x100] sm:$0xff]
  %v559 = vld [vmem:[%s4 + $0x108] sm:$0xff]
  %v560 = vld [vmem:[%s4 + $0x110] sm:$0xff]
  %v561 = vld [vmem:[%s4 + $0x118] sm:$0xff]
  %v562 = vld [vmem:[%s4 + $0x120] sm:$0xff]
  %v563 = vld [vmem:[%s4 + $0x128] sm:$0xff]
  %v564 = vld [vmem:[%s4 + $0x130] sm:$0xff]
  %v565 = vld [vmem:[%s4 + $0x138] sm:$0xff]
  %v566 = vld [vmem:[%s4 + $0x140] sm:$0xff]
  %v567 = vld [vmem:[%s4 + $0x148] sm:$0xff]
  %v568 = vld [vmem:[%s4 + $0x150] sm:$0xff]
  %v569 = vld [vmem:[%s4 + $0x158] sm:$0xff]
  %v570 = vld [vmem:[%s4 + $0x160] sm:$0xff]
  %v571 = vld [vmem:[%s4 + $0x168] sm:$0xff]
  %v572 = vld [vmem:[%s4 + $0x170] sm:$0xff]
  %v573 = vld [vmem:[%s4 + $0x178] sm:$0xff]
  %v574 = vld [vmem:[%s4 + $0x180] sm:$0xff]
  %v575 = vld [vmem:[%s4 + $0x188] sm:$0xff]
  %v576 = vld [vmem:[%s4 + $0x190] sm:$0xff]
  %v577 = vld [vmem:[%s4 + $0x198] sm:$0xff]
  %v578 = vld [vmem:[%s4 + $0x1a0] sm:$0xff]
  %v579 = vld [vmem:[%s4 + $0x1a8] sm:$0xff]
  %v580 = vld [vmem:[%s4 + $0x1b0] sm:$0xff]
  %v581 = vld [vmem:[%s4 + $0x1b8] sm:$0xff]
  %v582 = vld [vmem:[%s4 + $0x1c0] sm:$0xff]
  %v583 = vld [vmem:[%s4 + $0x1c8] sm:$0xff]
  %v584 = vld [vmem:[%s4 + $0x1d0] sm:$0xff]
  %v585 = vld [vmem:[%s4 + $0x1d8] sm:$0xff]
  %v586 = vld [vmem:[%s4 + $0x1e0] sm:$0xff]
  %v587 = vld [vmem:[%s4 + $0x1e8] sm:$0xff]
  %v588 = vld [vmem:[%s4 + $0x1f0] sm:$0xff]
  %v589 = vld [vmem:[%s4 + $0x1f8] sm:$0xff]
  %v590 = vld [vmem:[%s4 + $0x200] sm:$0xff]
  %v591 = vld [vmem:[%s4 + $0x208] sm:$0xff]
  %v592 = vld [vmem:[%s4 + $0x210] sm:$0xff]
  %v593 = vld [vmem:[%s4 + $0x218] sm:$0xff]
  %v594 = vld [vmem:[%s4 + $0x220] sm:$0xff]
  %v595 = vld [vmem:[%s4 + $0x228] sm:$0xff]
  %v596 = vld [vmem:[%s4 + $0x230] sm:$0xff]
  %v597 = vld [vmem:[%s4 + $0x238] sm:$0xff]
  %v598 = vld [vmem:[%s4 + $0x240] sm:$0xff]
  %v599 = vld [vmem:[%s4 + $0x248] sm:$0xff]
  %v600 = vld [vmem:[%s4 + $0x250] sm:$0xff]
  %v601 = vld [vmem:[%s4 + $0x258] sm:$0xff]
  %v602 = vld [vmem:[%s4 + $0x260] sm:$0xff]
  %v603 = vld [vmem:[%s4 + $0x268] sm:$0xff]
  %v604 = vld [vmem:[%s4 + $0x270] sm:$0xff]
  %v605 = vld [vmem:[%s4 + $0x278] sm:$0xff]
  %v606 = vld [vmem:[%s4 + $0x280] sm:$0xff]
  %v607 = vld [vmem:[%s4 + $0x288] sm:$0xff]
  %v608 = vld [vmem:[%s4 + $0x290] sm:$0xff]
  %v609 = vld [vmem:[%s4 + $0x298] sm:$0xff]
  %v610 = vld [vmem:[%s4 + $0x2a0] sm:$0xff]
  %v611 = vld [vmem:[%s4 + $0x2a8] sm:$0xff]
  %v612 = vld [vmem:[%s4 + $0x2b0] sm:$0xff]
  %v613 = vld [vmem:[%s4 + $0x2b8] sm:$0xff]
  %v614 = vld [vmem:[%s4 + $0x2c0] sm:$0xff]
  %v615 = vld [vmem:[%s4 + $0x2c8] sm:$0xff]
  %v616 = vld [vmem:[%s4 + $0x2d0] sm:$0xff]
  %v617 = vld [vmem:[%s4 + $0x2d8] sm:$0xff]
  %v618 = vld [vmem:[%s4 + $0x2e0] sm:$0xff]
  %v619 = vld [vmem:[%s4 + $0x2e8] sm:$0xff]
  %v620 = vld [vmem:[%s4 + $0x2f0] sm:$0xff]
  %v621 = vld [vmem:[%s4 + $0x2f8] sm:$0xff]
  %v622 = vld [vmem:[%s4 + $0x300] sm:$0xff]
  %v623 = vld [vmem:[%s4 + $0x308] sm:$0xff]
  %v624 = vld [vmem:[%s4 + $0x310] sm:$0xff]
  %v625 = vld [vmem:[%s4 + $0x318] sm:$0xff]
  %v626 = vld [vmem:[%s4 + $0x320] sm:$0xff]
  %v627 = vld [vmem:[%s4 + $0x328] sm:$0xff]
  %v628 = vld [vmem:[%s4 + $0x330] sm:$0xff]
  %v629 = vld [vmem:[%s4 + $0x338] sm:$0xff]
  %v630 = vld [vmem:[%s4 + $0x340] sm:$0xff]
  %v631 = vld [vmem:[%s4 + $0x348] sm:$0xff]
  %v632 = vld [vmem:[%s4 + $0x350] sm:$0xff]
  %v633 = vld [vmem:[%s4 + $0x358] sm:$0xff]
  %v634 = vld [vmem:[%s4 + $0x360] sm:$0xff]
  %v635 = vld [vmem:[%s4 + $0x368] sm:$0xff]
  %v636 = vld [vmem:[%s4 + $0x370] sm:$0xff]
  %v637 = vld [vmem:[%s4 + $0x378] sm:$0xff]
  %v638 = vld [vmem:[%s4 + $0x380] sm:$0xff]
  %v639 = vld [vmem:[%s4 + $0x388] sm:$0xff]
  %v640 = vld [vmem:[%s4 + $0x390] sm:$0xff]
  %v641 = vld [vmem:[%s4 + $0x398] sm:$0xff]
  %v642 = vld [vmem:[%s4 + $0x3a0] sm:$0xff]
  %v643 = vld [vmem:[%s4 + $0x3a8] sm:$0xff]
  %v644 = vld [vmem:[%s4 + $0x3b0] sm:$0xff]
  %v645 = vld [vmem:[%s4 + $0x3b8] sm:$0xff]
  %v646 = vld [vmem:[%s5] sm:$0x7]
  %v648 = vlaneseq
  %v649 = vshrl.u32 %v648, 7
  %v650 = vsub.s32 0, %v649
  %v651 = vrot.slane %v646, %v650
  %v652 = vlaneseq
  %v653 = vshrl.u32 %v652, 7
  %v654 = vsub.s32 1, %v653
  %v655 = vrot.slane %v646, %v654
  %v656 = vlaneseq
  %v657 = vshrl.u32 %v656, 7
  %v658 = vsub.s32 2, %v657
  %v659 = vrot.slane %v646, %v658
  %vm663 = vcmask 523264
  %v665 = vsel %vm663, %v523, 0
  %667 = vmatprep.subr.mxu0 %v527
  %668 = vmatpush1.msra.mxu0 %v526
  %669 = vmatprep.subr.mxu0 %v530
  %670 = vmatpush1.msra.mxu0 %v529
  %671 = vmatprep.subr.mxu0 %v533
  %672 = vmatpush1.msra.mxu0 %v532
  %673 = vmatprep.subr.mxu0 %v536
  %674 = vmatpush1.msra.mxu0 %v535
  %675 = vmatprep.subr.mxu0 %v539
  %676 = vmatpush1.msra.mxu0 %v538
  %677 = vmatprep.subr.mxu0 %v542
  %678 = vmatpush1.msra.mxu0 %v541
  %679 = vmatprep.subr.mxu0 %v545
  %680 = vmatpush1.msra.mxu0 %v544
  %681 = vmatprep.subr.mxu0 %v548
  %682 = vmatpush1.msra.mxu0 %v547
  %683 = vmatprep.subr.mxu0 %v551
  %684 = vmatpush1.msra.mxu0 %v550
  %685 = vmatprep.subr.mxu0 %v554
  %686 = vmatpush1.msra.mxu0 %v553
  %687 = vmatprep.subr.mxu0 %v557
  %688 = vmatpush1.msra.mxu0 %v556
  %689 = vmatprep.subr.mxu0 %v560
  %690 = vmatpush1.msra.mxu0 %v559
  %691 = vmatprep.subr.mxu0 %v563
  %692 = vmatpush1.msra.mxu0 %v562
  %693 = vmatprep.subr.mxu0 %v566
  %694 = vmatpush1.msra.mxu0 %v565
  %695 = vmatprep.subr.mxu0 %v569
  %696 = vmatpush1.msra.mxu0 %v568
  %697 = vmatprep.subr.mxu0 %v572
  %698 = vmatpush1.msra.mxu0 %v571
  %699 = vmatprep.subr.mxu0 %v575
  %700 = vmatpush1.msra.mxu0 %v574
  %701 = vmatprep.subr.mxu0 %v578
  %702 = vmatpush1.msra.mxu0 %v577
  %703 = vmatprep.subr.mxu0 %v581
  %704 = vmatpush1.msra.mxu0 %v580
  %705 = vmatprep.subr.mxu0 %v584
  %706 = vmatpush1.msra.mxu0 %v583
  %707 = vmatprep.subr.mxu0 %v587
  %708 = vmatpush1.msra.mxu0 %v586
  %709 = vmatprep.subr.mxu0 %v590
  %710 = vmatpush1.msra.mxu0 %v589
  %711 = vmatprep.subr.mxu0 %v593
  %712 = vmatpush1.msra.mxu0 %v592
  %713 = vmatprep.subr.mxu0 %v596
  %714 = vmatpush1.msra.mxu0 %v595
  %715 = vmatprep.subr.mxu0 %v599
  %716 = vmatpush1.msra.mxu0 %v598
  %717 = vmatprep.subr.mxu0 %v602
  %718 = vmatpush1.msra.mxu0 %v601
  %719 = vmatprep.subr.mxu0 %v605
  %720 = vmatpush1.msra.mxu0 %v604
  %721 = vmatprep.subr.mxu0 %v608
  %722 = vmatpush1.msra.mxu0 %v607
  %723 = vmatprep.subr.mxu0 %v611
  %724 = vmatpush1.msra.mxu0 %v610
  %725 = vmatprep.subr.mxu0 %v614
  %726 = vmatpush1.msra.mxu0 %v613
  %727 = vmatprep.subr.mxu0 %v617
  %728 = vmatpush1.msra.mxu0 %v616
  %729 = vmatprep.subr.mxu0 %v620
  %730 = vmatpush1.msra.mxu0 %v619
  %731 = vmatprep.mubr.f32.mxu0 %v454
  %732 = vmatmul.mubr.f32.gmra.mrb[0].mxu0 %v452
  %v733 = vpop.f32.mrb[0].mxu0
  %v734 = vadd.f32 %v651, %v733
  %v735 = vpop.f32.mrb[0].mxu0
  %v736 = vadd.f32 %v655, %v735
  %737 = vdwg.mxu0
  %738 = vmatprep.subr.mxu0 %v623
  %739 = vmatpush1.msra.mxu0 %v622
  %740 = vmatprep.subr.mxu0 %v626
  %741 = vmatpush1.msra.mxu0 %v625
  %742 = vmatprep.subr.mxu0 %v629
  %743 = vmatpush1.msra.mxu0 %v628
  %744 = vmatprep.subr.mxu0 %v632
  %745 = vmatpush1.msra.mxu0 %v631
  %746 = vmatprep.subr.mxu0 %v635
  %747 = vmatpush1.msra.mxu0 %v634
  %748 = vmatprep.subr.mxu0 %v638
  %749 = vmatpush1.msra.mxu0 %v637
  %750 = vmatprep.subr.mxu0 %v641
  %751 = vmatpush1.msra.mxu0 %v640
  %752 = vmatprep.subr.mxu0 %v644
  %753 = vmatpush1.msra.mxu0 %v643
  %754 = vmatprep.subr.mxu0 0.0
  %755 = vmatpush1.msra.mxu0 0.0
  %756 = vmatprep.subr.mxu0 0.0
  %757 = vmatpush1.msra.mxu0 0.0
  %758 = vmatprep.subr.mxu0 0.0
  %759 = vmatpush1.msra.mxu0 0.0
  %760 = vmatprep.subr.mxu0 0.0
  %761 = vmatpush1.msra.mxu0 0.0
  %762 = vmatprep.subr.mxu0 0.0
  %763 = vmatpush1.msra.mxu0 0.0
  %764 = vmatprep.subr.mxu0 0.0
  %765 = vmatpush1.msra.mxu0 0.0
  %766 = vmatprep.subr.mxu0 0.0
  %767 = vmatpush1.msra.mxu0 0.0
  %768 = vmatprep.subr.mxu0 0.0
  %769 = vmatpush1.msra.mxu0 0.0
  %770 = vmatprep.subr.mxu0 0.0
  %771 = vmatpush1.msra.mxu0 0.0
  %772 = vmatprep.subr.mxu0 0.0
  %773 = vmatpush1.msra.mxu0 0.0
  %774 = vmatprep.subr.mxu0 0.0
  %775 = vmatpush1.msra.mxu0 0.0
  %776 = vmatprep.subr.mxu0 0.0
  %777 = vmatpush1.msra.mxu0 0.0
  %778 = vmatprep.subr.mxu0 0.0
  %779 = vmatpush1.msra.mxu0 0.0
  %780 = vmatprep.subr.mxu0 0.0
  %781 = vmatpush1.msra.mxu0 0.0
  %782 = vmatprep.subr.mxu0 0.0
  %783 = vmatpush1.msra.mxu0 0.0
  %784 = vmatprep.subr.mxu0 0.0
  %785 = vmatpush1.msra.mxu0 0.0
  %786 = vmatprep.subr.mxu0 0.0
  %787 = vmatpush1.msra.mxu0 0.0
  %788 = vmatprep.subr.mxu0 0.0
  %789 = vmatpush1.msra.mxu0 0.0
  %790 = vmatprep.subr.mxu0 0.0
  %791 = vmatpush1.msra.mxu0 0.0
  %792 = vmatprep.subr.mxu0 0.0
  %793 = vmatpush1.msra.mxu0 0.0
  %794 = vmatprep.subr.mxu0 0.0
  %795 = vmatpush1.msra.mxu0 0.0
  %796 = vmatprep.subr.mxu0 0.0
  %797 = vmatpush1.msra.mxu0 0.0
  %798 = vmatprep.subr.mxu0 0.0
  %799 = vmatpush1.msra.mxu0 0.0
  %800 = vmatprep.subr.mxu0 0.0
  %801 = vmatpush1.msra.mxu0 0.0
  %802 = vmatprep.mubr.f32.mxu0 0.0
  %803 = vmatmul.mubr.f32.gmra.mrb[0].mxu0 %v665
  %v804 = vpop.f32.mrb[0].mxu0
  %v805 = vadd.f32 %v734, %v804
  %v806 = vpop.f32.mrb[0].mxu0
  %v807 = vadd.f32 %v736, %v806
  %808 = vdwg.mxu0
  %809 = vmatprep.subr.mxu0 0.0
  %810 = vmatpush1.msra.mxu0 %v528
  %811 = vmatprep.subr.mxu0 0.0
  %812 = vmatpush1.msra.mxu0 %v531
  %813 = vmatprep.subr.mxu0 0.0
  %814 = vmatpush1.msra.mxu0 %v534
  %815 = vmatprep.subr.mxu0 0.0
  %816 = vmatpush1.msra.mxu0 %v537
  %817 = vmatprep.subr.mxu0 0.0
  %818 = vmatpush1.msra.mxu0 %v540
  %819 = vmatprep.subr.mxu0 0.0
  %820 = vmatpush1.msra.mxu0 %v543
  %821 = vmatprep.subr.mxu0 0.0
  %822 = vmatpush1.msra.mxu0 %v546
  %823 = vmatprep.subr.mxu0 0.0
  %824 = vmatpush1.msra.mxu0 %v549
  %825 = vmatprep.subr.mxu0 0.0
  %826 = vmatpush1.msra.mxu0 %v552
  %827 = vmatprep.subr.mxu0 0.0
  %828 = vmatpush1.msra.mxu0 %v555
  %829 = vmatprep.subr.mxu0 0.0
  %830 = vmatpush1.msra.mxu0 %v558
  %831 = vmatprep.subr.mxu0 0.0
  %832 = vmatpush1.msra.mxu0 %v561
  %833 = vmatprep.subr.mxu0 0.0
  %834 = vmatpush1.msra.mxu0 %v564
  %835 = vmatprep.subr.mxu0 0.0
  %836 = vmatpush1.msra.mxu0 %v567
  %837 = vmatprep.subr.mxu0 0.0
  %838 = vmatpush1.msra.mxu0 %v570
  %839 = vmatprep.subr.mxu0 0.0
  %840 = vmatpush1.msra.mxu0 %v573
  %841 = vmatprep.subr.mxu0 0.0
  %842 = vmatpush1.msra.mxu0 %v576
  %843 = vmatprep.subr.mxu0 0.0
  %844 = vmatpush1.msra.mxu0 %v579
  %845 = vmatprep.subr.mxu0 0.0
  %846 = vmatpush1.msra.mxu0 %v582
  %847 = vmatprep.subr.mxu0 0.0
  %848 = vmatpush1.msra.mxu0 %v585
  %849 = vmatprep.subr.mxu0 0.0
  %850 = vmatpush1.msra.mxu0 %v588
  %851 = vmatprep.subr.mxu0 0.0
  %852 = vmatpush1.msra.mxu0 %v591
  %853 = vmatprep.subr.mxu0 0.0
  %854 = vmatpush1.msra.mxu0 %v594
  %855 = vmatprep.subr.mxu0 0.0
  %856 = vmatpush1.msra.mxu0 %v597
  %857 = vmatprep.subr.mxu0 0.0
  %858 = vmatpush1.msra.mxu0 %v600
  %859 = vmatprep.subr.mxu0 0.0
  %860 = vmatpush1.msra.mxu0 %v603
  %861 = vmatprep.subr.mxu0 0.0
  %862 = vmatpush1.msra.mxu0 %v606
  %863 = vmatprep.subr.mxu0 0.0
  %864 = vmatpush1.msra.mxu0 %v609
  %865 = vmatprep.subr.mxu0 0.0
  %866 = vmatpush1.msra.mxu0 %v612
  %867 = vmatprep.subr.mxu0 0.0
  %868 = vmatpush1.msra.mxu0 %v615
  %869 = vmatprep.subr.mxu0 0.0
  %870 = vmatpush1.msra.mxu0 %v618
  %871 = vmatprep.subr.mxu0 0.0
  %872 = vmatpush1.msra.mxu0 %v621
  %873 = vmatprep.mubr.f32.mxu0 %v454
  %874 = vmatmul.mubr.f32.gmra.mrb[0].mxu0 %v452
  %v875 = vpop.f32.mrb[0].mxu0
  %v876 = vadd.f32 %v659, %v875
  %v877 = vpop.f32.mrb[0].mxu0
  %878 = vdwg.mxu0
  %879 = vmatprep.subr.mxu0 0.0
  %880 = vmatpush1.msra.mxu0 %v624
  %881 = vmatprep.subr.mxu0 0.0
  %882 = vmatpush1.msra.mxu0 %v627
  %883 = vmatprep.subr.mxu0 0.0
  %884 = vmatpush1.msra.mxu0 %v630
  %885 = vmatprep.subr.mxu0 0.0
  %886 = vmatpush1.msra.mxu0 %v633
  %887 = vmatprep.subr.mxu0 0.0
  %888 = vmatpush1.msra.mxu0 %v636
  %889 = vmatprep.subr.mxu0 0.0
  %890 = vmatpush1.msra.mxu0 %v639
  %891 = vmatprep.subr.mxu0 0.0
  %892 = vmatpush1.msra.mxu0 %v642
  %893 = vmatprep.subr.mxu0 0.0
  %894 = vmatpush1.msra.mxu0 %v645
  %895 = vmatprep.subr.mxu0 0.0
  %896 = vmatpush1.msra.mxu0 0.0
  %897 = vmatprep.subr.mxu0 0.0
  %898 = vmatpush1.msra.mxu0 0.0
  %899 = vmatprep.subr.mxu0 0.0
  %900 = vmatpush1.msra.mxu0 0.0
  %901 = vmatprep.subr.mxu0 0.0
  %902 = vmatpush1.msra.mxu0 0.0
  %903 = vmatprep.subr.mxu0 0.0
  %904 = vmatpush1.msra.mxu0 0.0
  %905 = vmatprep.subr.mxu0 0.0
  %906 = vmatpush1.msra.mxu0 0.0
  %907 = vmatprep.subr.mxu0 0.0
  %908 = vmatpush1.msra.mxu0 0.0
  %909 = vmatprep.subr.mxu0 0.0
  %910 = vmatpush1.msra.mxu0 0.0
  %911 = vmatprep.subr.mxu0 0.0
  %912 = vmatpush1.msra.mxu0 0.0
  %913 = vmatprep.subr.mxu0 0.0
  %914 = vmatpush1.msra.mxu0 0.0
  %915 = vmatprep.subr.mxu0 0.0
  %916 = vmatpush1.msra.mxu0 0.0
  %917 = vmatprep.subr.mxu0 0.0
  %918 = vmatpush1.msra.mxu0 0.0
  %919 = vmatprep.subr.mxu0 0.0
  %920 = vmatpush1.msra.mxu0 0.0
  %921 = vmatprep.subr.mxu0 0.0
  %922 = vmatpush1.msra.mxu0 0.0
  %923 = vmatprep.subr.mxu0 0.0
  %924 = vmatpush1.msra.mxu0 0.0
  %925 = vmatprep.subr.mxu0 0.0
  %926 = vmatpush1.msra.mxu0 0.0
  %927 = vmatprep.subr.mxu0 0.0
  %928 = vmatpush1.msra.mxu0 0.0
  %929 = vmatprep.subr.mxu0 0.0
  %930 = vmatpush1.msra.mxu0 0.0
  %931 = vmatprep.subr.mxu0 0.0
  %932 = vmatpush1.msra.mxu0 0.0
  %933 = vmatprep.subr.mxu0 0.0
  %934 = vmatpush1.msra.mxu0 0.0
  %935 = vmatprep.subr.mxu0 0.0
  %936 = vmatpush1.msra.mxu0 0.0
  %937 = vmatprep.subr.mxu0 0.0
  %938 = vmatpush1.msra.mxu0 0.0
  %939 = vmatprep.subr.mxu0 0.0
  %940 = vmatpush1.msra.mxu0 0.0
  %941 = vmatprep.subr.mxu0 0.0
  %942 = vmatpush1.msra.mxu0 0.0
  %943 = vmatprep.mubr.f32.mxu0 0.0
  %944 = vmatmul.mubr.f32.gmra.mrb[0].mxu0 %v665
  %v945 = vpop.f32.mrb[0].mxu0
  %v946 = vadd.f32 %v876, %v945
  %v947 = vpop.f32.mrb[0].mxu0
  %948 = vdwg.mxu0
  %949 = vst [vmem:[%s9] sm:$0x1f] %v805
  %950 = vst [vmem:[%s9 + $0x8] sm:$0x1f] %v807
  %vm951 = vcmask 520192
  %952 = vst.msk [vmem:[%s9 + $0x10] sm:$0x1f] %vm951, %v946
  %v953 = vld [vmem:[%s6] sm:$0x7]
  %v954 = vld [vmem:[#allocation2] sm:$0x1]
  %956 = vset.pattern.permute.xlu0 0
  %957 = vperm.xlu0 %956, %v954
  %v958 = vpop.permute.xlu0 %957
  %v960 = vlaneseq
  %v961 = vshrl.u32 %v960, 7
  %v962 = vsub.s32 0, %v961
  %v963 = vrot.slane %v958, %v962
  %v965 = vlaneseq
  %v966 = vshrl.u32 %v965, 7
  %v967 = vsub.s32 0, %v966
  %v968 = vrot.slane %v953, %v967
  %v969 = vlaneseq
  %v970 = vshrl.u32 %v969, 7
  %v971 = vsub.s32 1, %v970
  %v972 = vrot.slane %v953, %v971
  %v973 = vlaneseq
  %v974 = vshrl.u32 %v973, 7
  %v975 = vsub.s32 2, %v974
  %v976 = vrot.slane %v953, %v975
  %v979 = vsel %vm663, %v976, 0
  %v982 = vsel %vm663, %v946, 0
  %984 = vmatprep.subr.mxu0 %v807
  %985 = vmatpush1.xpose.msra.mxu0 %v805
  %986 = vmatprep.subr.mxu0 0.0
  %987 = vmatpush1.xpose.msra.mxu0 0.0
  %988 = vmatprep.subr.mxu0 0.0
  %989 = vmatpush1.xpose.msra.mxu0 0.0
  %990 = vmatprep.subr.mxu0 0.0
  %991 = vmatpush1.xpose.msra.mxu0 0.0
  %992 = vmatprep.subr.mxu0 0.0
  %993 = vmatpush1.xpose.msra.mxu0 0.0
  %994 = vmatprep.subr.mxu0 0.0
  %995 = vmatpush1.xpose.msra.mxu0 0.0
  %996 = vmatprep.subr.mxu0 0.0
  %997 = vmatpush1.xpose.msra.mxu0 0.0
  %998 = vmatprep.subr.mxu0 0.0
  %999 = vmatpush1.xpose.msra.mxu0 0.0
  %1000 = vmatprep.subr.mxu0 0.0
  %1001 = vmatpush1.xpose.msra.mxu0 0.0
  %1002 = vmatprep.subr.mxu0 0.0
  %1003 = vmatpush1.xpose.msra.mxu0 0.0
  %1004 = vmatprep.subr.mxu0 0.0
  %1005 = vmatpush1.xpose.msra.mxu0 0.0
  %1006 = vmatprep.subr.mxu0 0.0
  %1007 = vmatpush1.xpose.msra.mxu0 0.0
  %1008 = vmatprep.subr.mxu0 0.0
  %1009 = vmatpush1.xpose.msra.mxu0 0.0
  %1010 = vmatprep.subr.mxu0 0.0
  %1011 = vmatpush1.xpose.msra.mxu0 0.0
  %1012 = vmatprep.subr.mxu0 0.0
  %1013 = vmatpush1.xpose.msra.mxu0 0.0
  %1014 = vmatprep.subr.mxu0 0.0
  %1015 = vmatpush1.xpose.msra.mxu0 0.0
  %1016 = vmatprep.subr.mxu0 0.0
  %1017 = vmatpush1.xpose.msra.mxu0 0.0
  %1018 = vmatprep.subr.mxu0 0.0
  %1019 = vmatpush1.xpose.msra.mxu0 0.0
  %1020 = vmatprep.subr.mxu0 0.0
  %1021 = vmatpush1.xpose.msra.mxu0 0.0
  %1022 = vmatprep.subr.mxu0 0.0
  %1023 = vmatpush1.xpose.msra.mxu0 0.0
  %1024 = vmatprep.subr.mxu0 0.0
  %1025 = vmatpush1.xpose.msra.mxu0 0.0
  %1026 = vmatprep.subr.mxu0 0.0
  %1027 = vmatpush1.xpose.msra.mxu0 0.0
  %1028 = vmatprep.subr.mxu0 0.0
  %1029 = vmatpush1.xpose.msra.mxu0 0.0
  %1030 = vmatprep.subr.mxu0 0.0
  %1031 = vmatpush1.xpose.msra.mxu0 0.0
  %1032 = vmatprep.subr.mxu0 0.0
  %1033 = vmatpush1.xpose.msra.mxu0 0.0
  %1034 = vmatprep.subr.mxu0 0.0
  %1035 = vmatpush1.xpose.msra.mxu0 0.0
  %1036 = vmatprep.subr.mxu0 0.0
  %1037 = vmatpush1.xpose.msra.mxu0 0.0
  %1038 = vmatprep.subr.mxu0 0.0
  %1039 = vmatpush1.xpose.msra.mxu0 0.0
  %1040 = vmatprep.subr.mxu0 0.0
  %1041 = vmatpush1.xpose.msra.mxu0 0.0
  %1042 = vmatprep.subr.mxu0 0.0
  %1043 = vmatpush1.xpose.msra.mxu0 0.0
  %1044 = vmatprep.subr.mxu0 0.0
  %1045 = vmatpush1.xpose.msra.mxu0 0.0
  %1046 = vmatprep.subr.mxu0 0.0
  %1047 = vmatpush1.xpose.msra.mxu0 0.0
  %1048 = vmatprep.mubr.f32.mxu0 %v972
  %1049 = vmatmul.mubr.f32.gmra.mrb[0].mxu0 %v968
  %v1050 = vpop.f32.mrb[0].mxu0
  %v1051 = vadd.f32 %v963, %v1050
  %v1052 = vpop.f32.mrb[0].mxu0
  %1053 = vdwg.mxu0
  %1054 = vmatprep.subr.mxu0 0.0
  %1055 = vmatpush1.xpose.msra.mxu0 %v982
  %1056 = vmatprep.subr.mxu0 0.0
  %1057 = vmatpush1.xpose.msra.mxu0 0.0
  %1058 = vmatprep.subr.mxu0 0.0
  %1059 = vmatpush1.xpose.msra.mxu0 0.0
  %1060 = vmatprep.subr.mxu0 0.0
  %1061 = vmatpush1.xpose.msra.mxu0 0.0
  %1062 = vmatprep.subr.mxu0 0.0
  %1063 = vmatpush1.xpose.msra.mxu0 0.0
  %1064 = vmatprep.subr.mxu0 0.0
  %1065 = vmatpush1.xpose.msra.mxu0 0.0
  %1066 = vmatprep.subr.mxu0 0.0
  %1067 = vmatpush1.xpose.msra.mxu0 0.0
  %1068 = vmatprep.subr.mxu0 0.0
  %1069 = vmatpush1.xpose.msra.mxu0 0.0
  %1070 = vmatprep.subr.mxu0 0.0
  %1071 = vmatpush1.xpose.msra.mxu0 0.0
  %1072 = vmatprep.subr.mxu0 0.0
  %1073 = vmatpush1.xpose.msra.mxu0 0.0
  %1074 = vmatprep.subr.mxu0 0.0
  %1075 = vmatpush1.xpose.msra.mxu0 0.0
  %1076 = vmatprep.subr.mxu0 0.0
  %1077 = vmatpush1.xpose.msra.mxu0 0.0
  %1078 = vmatprep.subr.mxu0 0.0
  %1079 = vmatpush1.xpose.msra.mxu0 0.0
  %1080 = vmatprep.subr.mxu0 0.0
  %1081 = vmatpush1.xpose.msra.mxu0 0.0
  %1082 = vmatprep.subr.mxu0 0.0
  %1083 = vmatpush1.xpose.msra.mxu0 0.0
  %1084 = vmatprep.subr.mxu0 0.0
  %1085 = vmatpush1.xpose.msra.mxu0 0.0
  %1086 = vmatprep.subr.mxu0 0.0
  %1087 = vmatpush1.xpose.msra.mxu0 0.0
  %1088 = vmatprep.subr.mxu0 0.0
  %1089 = vmatpush1.xpose.msra.mxu0 0.0
  %1090 = vmatprep.subr.mxu0 0.0
  %1091 = vmatpush1.xpose.msra.mxu0 0.0
  %1092 = vmatprep.subr.mxu0 0.0
  %1093 = vmatpush1.xpose.msra.mxu0 0.0
  %1094 = vmatprep.subr.mxu0 0.0
  %1095 = vmatpush1.xpose.msra.mxu0 0.0
  %1096 = vmatprep.subr.mxu0 0.0
  %1097 = vmatpush1.xpose.msra.mxu0 0.0
  %1098 = vmatprep.subr.mxu0 0.0
  %1099 = vmatpush1.xpose.msra.mxu0 0.0
  %1100 = vmatprep.subr.mxu0 0.0
  %1101 = vmatpush1.xpose.msra.mxu0 0.0
  %1102 = vmatprep.subr.mxu0 0.0
  %1103 = vmatpush1.xpose.msra.mxu0 0.0
  %1104 = vmatprep.subr.mxu0 0.0
  %1105 = vmatpush1.xpose.msra.mxu0 0.0
  %1106 = vmatprep.subr.mxu0 0.0
  %1107 = vmatpush1.xpose.msra.mxu0 0.0
  %1108 = vmatprep.subr.mxu0 0.0
  %1109 = vmatpush1.xpose.msra.mxu0 0.0
  %1110 = vmatprep.subr.mxu0 0.0
  %1111 = vmatpush1.xpose.msra.mxu0 0.0
  %1112 = vmatprep.subr.mxu0 0.0
  %1113 = vmatpush1.xpose.msra.mxu0 0.0
  %1114 = vmatprep.subr.mxu0 0.0
  %1115 = vmatpush1.xpose.msra.mxu0 0.0
  %1116 = vmatprep.subr.mxu0 0.0
  %1117 = vmatpush1.xpose.msra.mxu0 0.0
  %1118 = vmatprep.mubr.f32.mxu0 0.0
  %1119 = vmatmul.mubr.f32.gmra.mrb[0].mxu0 %v979
  %v1120 = vpop.f32.mrb[0].mxu0
  %v1121 = vadd.f32 %v1051, %v1120
  %v1122 = vpop.f32.mrb[0].mxu0
  %1123 = vdwg.mxu0
  %v1124 = vxor.u32 %v1121, 2147483648
  %v1125 = vmul.f32 %v1124, 1.442695
  %v1126 = vpow.pop %v1125
  %v1127 = vadd.f32 %v1126, 1.0
  %v1128 = vrcp.pop %v1127
  %v1129 = vmul.f32 1.0, %v1128
  %vm1130 = vcmask 32768
  %1131 = vst.msk [vmem:[%s10] sm:$0x1] %vm1130, %v1129
  // Predicated region
  $region34: #{_lambda_.14} parent=0 // pred_check
    _
  $region35: #{_lambda_.14} parent=0 // pred_check_branch
    %1133 = sbr.rel (0) target = $region37
  $region36: #{_lambda_.14} parent=0 // pred_region
    _
  $region37: #{_lambda_.14} parent=0 // pred_fallthru
    _
  // Predicated region
  $region38: #{_lambda_.14} parent=0 // pred_check
    _
  $region39: #{_lambda_.14} parent=0 // pred_check_branch
    %1135 = sbr.rel (0) target = $region41
  $region40: #{_lambda_.14} parent=0 // pred_region
    _
  $region41: #{_lambda_.14} parent=0 // pred_fallthru
    _
  // Predicated region
  $region42: #{_lambda_.14} parent=0 // pred_check
    _
  $region43: #{_lambda_.14} parent=0 // pred_check_branch
    %1137 = sbr.rel (0) target = $region45
  $region44: #{_lambda_.14} parent=0 // pred_region
    _
  $region45: #{_lambda_.14} parent=0 // pred_fallthru
    _
  // Predicated region
  $region46: #{_lambda_.14} parent=0 // pred_check
    _
  $region47: #{_lambda_.14} parent=0 // pred_check_branch
    %1139 = sbr.rel (0) target = $region49
  $region48: #{_lambda_.14} parent=0 // pred_region
    _
  $region49: #{_lambda_.14} parent=0 // pred_fallthru
    _
  // Predicated region
  $region50: #{_lambda_.14} parent=0 // pred_check
    _
  $region51: #{_lambda_.14} parent=0 // pred_check_branch
    %1141 = sbr.rel (0) target = $region53
  $region52: #{_lambda_.14} parent=0 // pred_region
    _
  $region53: #{_lambda_.14} parent=0 // pred_fallthru
    _
  // Predicated region
  $region54: #{_lambda_.14} parent=0 // pred_check
    _
  $region55: #{_lambda_.14} parent=0 // pred_check_branch
    %1143 = sbr.rel (0) target = $region57
  $region56: #{_lambda_.14} parent=0 // pred_region
    _
  $region57: #{_lambda_.14} parent=0 // pred_fallthru
    _

// kernel: _lambda_.16
$region0: #{_lambda_.16}
  #allocation0 [shape = 'u32[]', space=smem, size = 0x4, offset = 0x4, fixed_abs, tag = 'smem constant byte address 0x4 - core index']
  #allocation1 [shape = 'u32[144,128]{1,0:T(1,128)}', space=vmem, size = 0x12000, scoped, tag = 'internal scratch']
  %s0 = inlined_call_operand.vmem [shape: f32[5,5], index: 0, kind: input, shape index: {}]
  %s1 = inlined_call_operand.vmem [shape: f32[2,320], index: 1, kind: input, shape index: {}]
  %s2 = inlined_call_operand.vmem [shape: s32[2,1], index: 2, kind: input, shape index: {}]
  %s3 = inlined_call_operand.vmem [shape: f32[320,320], index: 3, kind: input, shape index: {}]
  %s4 = inlined_call_operand.vmem [shape: f32[1,320], index: 4, kind: input, shape index: {}]
  %s5 = inlined_call_operand.vmem [shape: f32[5,320], index: 5, kind: input, shape index: {}]
  %s6 = inlined_call_operand.vmem [shape: f32[5,320], index: 6, kind: output, shape index: {}]
  %s7 = sld [smem:[#allocation0]]
  $region34: #{_lambda_.16} parent=0
    _
  %s9 = ssub.s32 1, %s7
  %s10 = scalar_select 0, %s9, %s7
  // Predicated region
  $region2: #{_lambda_.16} parent=0 // pred_check
    _
  $region3: #{_lambda_.16} parent=0 // pred_check_branch
    %12 = sbr.rel (0) target = $region5
  $region4: #{_lambda_.16} parent=0 // pred_region
    _
  $region5: #{_lambda_.16} parent=0 // pred_fallthru
    _
  // Predicated region
  $region6: #{_lambda_.16} parent=0 // pred_check
    _
  $region7: #{_lambda_.16} parent=0 // pred_check_branch
    %14 = sbr.rel (0) target = $region9
  $region8: #{_lambda_.16} parent=0 // pred_region
    _
  $region9: #{_lambda_.16} parent=0 // pred_fallthru
    _
  // Predicated region
  $region10: #{_lambda_.16} parent=0 // pred_check
    _
  $region11: #{_lambda_.16} parent=0 // pred_check_branch
    %16 = sbr.rel (0) target = $region13
  $region12: #{_lambda_.16} parent=0 // pred_region
    _
  $region13: #{_lambda_.16} parent=0 // pred_fallthru
    _
  // Predicated region
  $region14: #{_lambda_.16} parent=0 // pred_check
    _
  $region15: #{_lambda_.16} parent=0 // pred_check_branch
    %18 = sbr.rel (0) target = $region17
  $region16: #{_lambda_.16} parent=0 // pred_region
    _
  $region17: #{_lambda_.16} parent=0 // pred_fallthru
    _
  // Predicated region
  $region18: #{_lambda_.16} parent=0 // pred_check
    _
  $region19: #{_lambda_.16} parent=0 // pred_check_branch
    %20 = sbr.rel (0) target = $region21
  $region20: #{_lambda_.16} parent=0 // pred_region
    _
  $region21: #{_lambda_.16} parent=0 // pred_fallthru
    _
  // Predicated region
  $region22: #{_lambda_.16} parent=0 // pred_check
    _
  $region23: #{_lambda_.16} parent=0 // pred_check_branch
    %22 = sbr.rel (0) target = $region25
  $region24: #{_lambda_.16} parent=0 // pred_region
    _
  $region25: #{_lambda_.16} parent=0 // pred_fallthru
    _
  %v23 = vld [vmem:[%s2] sm:$0x3]
  %v24 = vlaneseq
  %v25 = vand.u32 %v24, 127
  %26 = vset.pattern.permute.xlu0 0
  %27 = vperm.xlu0 %26, %v23
  %v28 = vpop.permute.xlu0 %27
  %vm29 = vcmp.eq.s32.totalorder %v25, %v28
  %v30 = vsel %vm29, 1, 0
  %v31 = vcvt.s32.f32 %v30
  %v32 = vld [vmem:[%s1] sm:$0x3f]
  %33 = vxpose.xlu0.b32.start [1/16] %v31, 128
  %34 = vxpose.xlu0.b32.cont [2/16] 0.0, 128
  %35 = vxpose.xlu0.b32.cont [3/16] 0.0, 128
  %36 = vxpose.xlu0.b32.cont [4/16] 0.0, 128
  %37 = vxpose.xlu0.b32.cont [5/16] 0.0, 128
  %38 = vxpose.xlu0.b32.cont [6/16] 0.0, 128
  %39 = vxpose.xlu0.b32.cont [7/16] 0.0, 128
  %40 = vxpose.xlu0.b32.cont [8/16] 0.0, 128
  %41 = vxpose.xlu0.b32.cont [9/16] 0.0, 128
  %42 = vxpose.xlu0.b32.cont [10/16] 0.0, 128
  %43 = vxpose.xlu0.b32.cont [11/16] 0.0, 128
  %44 = vxpose.xlu0.b32.cont [12/16] 0.0, 128
  %45 = vxpose.xlu0.b32.cont [13/16] 0.0, 128
  %46 = vxpose.xlu0.b32.cont [14/16] 0.0, 128
  %47 = vxpose.xlu0.b32.cont [15/16] 0.0, 128
  %48 = vxpose.xlu0.b32.end [16/16] 0.0, 128
  %v49 = vpop.trf.xlu0
  %v50 = vpop.trf.xlu0
  %v51 = vpop.trf.xlu0
  %v52 = vpop.trf.xlu0
  %v53 = vpop.trf.xlu0
  %v54 = vpop.trf.xlu0
  %v55 = vpop.trf.xlu0
  %v56 = vpop.trf.xlu0
  %v57 = vpop.trf.xlu0
  %v58 = vpop.trf.xlu0
  %v59 = vpop.trf.xlu0
  %v60 = vpop.trf.xlu0
  %v61 = vpop.trf.xlu0
  %v62 = vpop.trf.xlu0
  %v63 = vpop.trf.xlu0
  %v64 = vpop.trf.xlu0
  %v66 = vcombine.high %v32, %v32
  %v68 = vunpack.c.l.s4 1983009808
  %v69 = vunpack.c.0.s8 %v68
  %v70 = vlaneseq
  %v71 = vshrl.u32 %v70, 7
  %v72 = vsub.s32 %v69, %v71
  %v73 = vrot.slane %v32, %v72
  %v75 = vunpack.c.l.s4 1983009808
  %v76 = vunpack.c.0.s8 %v75
  %v77 = vlaneseq
  %v78 = vshrl.u32 %v77, 7
  %v79 = vsub.s32 %v76, %v78
  %v80 = vrot.slane %v66, %v79
  %v81 = vcombine.high %v73, %v73
  %vm82 = vcmask 15360
  %v84 = vsel %vm82, %v49, 0
  %vm86 = vcmask 1041408
  %v87 = vsel %vm86, %v73, 0
  %v89 = vsel %vm86, %v81, 0
  %v91 = vsel %vm86, %v80, 0
  %93 = vmatprep.subr.mxu0 %v89
  %94 = vmatpush1.msra.mxu0 %v87
  %95 = vmatprep.subr.mxu0 0.0
  %96 = vmatpush1.msra.mxu0 0.0
  %97 = vmatprep.subr.mxu0 0.0
  %98 = vmatpush1.msra.mxu0 0.0
  %99 = vmatprep.subr.mxu0 0.0
  %100 = vmatpush1.msra.mxu0 0.0
  %101 = vmatprep.subr.mxu0 0.0
  %102 = vmatpush1.msra.mxu0 0.0
  %103 = vmatprep.subr.mxu0 0.0
  %104 = vmatpush1.msra.mxu0 0.0
  %105 = vmatprep.subr.mxu0 0.0
  %106 = vmatpush1.msra.mxu0 0.0
  %107 = vmatprep.subr.mxu0 0.0
  %108 = vmatpush1.msra.mxu0 0.0
  %109 = vmatprep.subr.mxu0 0.0
  %110 = vmatpush1.msra.mxu0 0.0
  %111 = vmatprep.subr.mxu0 0.0
  %112 = vmatpush1.msra.mxu0 0.0
  %113 = vmatprep.subr.mxu0 0.0
  %114 = vmatpush1.msra.mxu0 0.0
  %115 = vmatprep.subr.mxu0 0.0
  %116 = vmatpush1.msra.mxu0 0.0
  %117 = vmatprep.subr.mxu0 0.0
  %118 = vmatpush1.msra.mxu0 0.0
  %119 = vmatprep.subr.mxu0 0.0
  %120 = vmatpush1.msra.mxu0 0.0
  %121 = vmatprep.subr.mxu0 0.0
  %122 = vmatpush1.msra.mxu0 0.0
  %123 = vmatprep.subr.mxu0 0.0
  %124 = vmatpush1.msra.mxu0 0.0
  %125 = vmatprep.subr.mxu0 0.0
  %126 = vmatpush1.msra.mxu0 0.0
  %127 = vmatprep.subr.mxu0 0.0
  %128 = vmatpush1.msra.mxu0 0.0
  %129 = vmatprep.subr.mxu0 0.0
  %130 = vmatpush1.msra.mxu0 0.0
  %131 = vmatprep.subr.mxu0 0.0
  %132 = vmatpush1.msra.mxu0 0.0
  %133 = vmatprep.subr.mxu0 0.0
  %134 = vmatpush1.msra.mxu0 0.0
  %135 = vmatprep.subr.mxu0 0.0
  %136 = vmatpush1.msra.mxu0 0.0
  %137 = vmatprep.subr.mxu0 0.0
  %138 = vmatpush1.msra.mxu0 0.0
  %139 = vmatprep.subr.mxu0 0.0
  %140 = vmatpush1.msra.mxu0 0.0
  %141 = vmatprep.subr.mxu0 0.0
  %142 = vmatpush1.msra.mxu0 0.0
  %143 = vmatprep.subr.mxu0 0.0
  %144 = vmatpush1.msra.mxu0 0.0
  %145 = vmatprep.subr.mxu0 0.0
  %146 = vmatpush1.msra.mxu0 0.0
  %147 = vmatprep.subr.mxu0 0.0
  %148 = vmatpush1.msra.mxu0 0.0
  %149 = vmatprep.subr.mxu0 0.0
  %150 = vmatpush1.msra.mxu0 0.0
  %151 = vmatprep.subr.mxu0 0.0
  %152 = vmatpush1.msra.mxu0 0.0
  %153 = vmatprep.subr.mxu0 0.0
  %154 = vmatpush1.msra.mxu0 0.0
  %155 = vmatprep.subr.mxu0 0.0
  %156 = vmatpush1.msra.mxu0 0.0
  %157 = vmatprep.mubr.f32.mxu0 0.0
  %158 = vmatmul.mubr.f32.gmra.mrb[0].mxu0 %v84
  %v159 = vpop.f32.mrb[0].mxu0
  %v160 = vadd.f32 0.0, %v159
  %v161 = vpop.f32.mrb[0].mxu0
  %v162 = vadd.f32 0.0, %v161
  %163 = vdwg.mxu0
  %164 = vmatprep.subr.mxu0 0.0
  %165 = vmatpush1.msra.mxu0 %v91
  %166 = vmatprep.subr.mxu0 0.0
  %167 = vmatpush1.msra.mxu0 0.0
  %168 = vmatprep.subr.mxu0 0.0
  %169 = vmatpush1.msra.mxu0 0.0
  %170 = vmatprep.subr.mxu0 0.0
  %171 = vmatpush1.msra.mxu0 0.0
  %172 = vmatprep.subr.mxu0 0.0
  %173 = vmatpush1.msra.mxu0 0.0
  %174 = vmatprep.subr.mxu0 0.0
  %175 = vmatpush1.msra.mxu0 0.0
  %176 = vmatprep.subr.mxu0 0.0
  %177 = vmatpush1.msra.mxu0 0.0
  %178 = vmatprep.subr.mxu0 0.0
  %179 = vmatpush1.msra.mxu0 0.0
  %180 = vmatprep.subr.mxu0 0.0
  %181 = vmatpush1.msra.mxu0 0.0
  %182 = vmatprep.subr.mxu0 0.0
  %183 = vmatpush1.msra.mxu0 0.0
  %184 = vmatprep.subr.mxu0 0.0
  %185 = vmatpush1.msra.mxu0 0.0
  %186 = vmatprep.subr.mxu0 0.0
  %187 = vmatpush1.msra.mxu0 0.0
  %188 = vmatprep.subr.mxu0 0.0
  %189 = vmatpush1.msra.mxu0 0.0
  %190 = vmatprep.subr.mxu0 0.0
  %191 = vmatpush1.msra.mxu0 0.0
  %192 = vmatprep.subr.mxu0 0.0
  %193 = vmatpush1.msra.mxu0 0.0
  %194 = vmatprep.subr.mxu0 0.0
  %195 = vmatpush1.msra.mxu0 0.0
  %196 = vmatprep.subr.mxu0 0.0
  %197 = vmatpush1.msra.mxu0 0.0
  %198 = vmatprep.subr.mxu0 0.0
  %199 = vmatpush1.msra.mxu0 0.0
  %200 = vmatprep.subr.mxu0 0.0
  %201 = vmatpush1.msra.mxu0 0.0
  %202 = vmatprep.subr.mxu0 0.0
  %203 = vmatpush1.msra.mxu0 0.0
  %204 = vmatprep.subr.mxu0 0.0
  %205 = vmatpush1.msra.mxu0 0.0
  %206 = vmatprep.subr.mxu0 0.0
  %207 = vmatpush1.msra.mxu0 0.0
  %208 = vmatprep.subr.mxu0 0.0
  %209 = vmatpush1.msra.mxu0 0.0
  %210 = vmatprep.subr.mxu0 0.0
  %211 = vmatpush1.msra.mxu0 0.0
  %212 = vmatprep.subr.mxu0 0.0
  %213 = vmatpush1.msra.mxu0 0.0
  %214 = vmatprep.subr.mxu0 0.0
  %215 = vmatpush1.msra.mxu0 0.0
  %216 = vmatprep.subr.mxu0 0.0
  %217 = vmatpush1.msra.mxu0 0.0
  %218 = vmatprep.subr.mxu0 0.0
  %219 = vmatpush1.msra.mxu0 0.0
  %220 = vmatprep.subr.mxu0 0.0
  %221 = vmatpush1.msra.mxu0 0.0
  %222 = vmatprep.subr.mxu0 0.0
  %223 = vmatpush1.msra.mxu0 0.0
  %224 = vmatprep.subr.mxu0 0.0
  %225 = vmatpush1.msra.mxu0 0.0
  %226 = vmatprep.subr.mxu0 0.0
  %227 = vmatpush1.msra.mxu0 0.0
  %228 = vmatprep.mubr.f32.mxu0 0.0
  %229 = vmatmul.mubr.f32.gmra.mrb[0].mxu0 %v84
  %v230 = vpop.f32.mrb[0].mxu0
  %v231 = vadd.f32 0.0, %v230
  %v232 = vpop.f32.mrb[0].mxu0
  %233 = vdwg.mxu0
  %v234 = vld [vmem:[%s0] sm:$0x1f]
  %vm235 = vcmask 39936
  %v237 = vsel %vm235, %v234, 0
  %vm239 = vcmask 1044480
  %v241 = vsel %vm239, %v160, 0
  %v244 = vsel %vm239, %v162, 0
  %v247 = vsel %vm239, %v231, 0
  %249 = vmatprep.subr.mxu0 %v244
  %250 = vmatpush1.msra.mxu0 %v241
  %251 = vmatprep.subr.mxu0 0.0
  %252 = vmatpush1.msra.mxu0 0.0
  %253 = vmatprep.subr.mxu0 0.0
  %254 = vmatpush1.msra.mxu0 0.0
  %255 = vmatprep.subr.mxu0 0.0
  %256 = vmatpush1.msra.mxu0 0.0
  %257 = vmatprep.subr.mxu0 0.0
  %258 = vmatpush1.msra.mxu0 0.0
  %259 = vmatprep.subr.mxu0 0.0
  %260 = vmatpush1.msra.mxu0 0.0
  %261 = vmatprep.subr.mxu0 0.0
  %262 = vmatpush1.msra.mxu0 0.0
  %263 = vmatprep.subr.mxu0 0.0
  %264 = vmatpush1.msra.mxu0 0.0
  %265 = vmatprep.subr.mxu0 0.0
  %266 = vmatpush1.msra.mxu0 0.0
  %267 = vmatprep.subr.mxu0 0.0
  %268 = vmatpush1.msra.mxu0 0.0
  %269 = vmatprep.subr.mxu0 0.0
  %270 = vmatpush1.msra.mxu0 0.0
  %271 = vmatprep.subr.mxu0 0.0
  %272 = vmatpush1.msra.mxu0 0.0
  %273 = vmatprep.subr.mxu0 0.0
  %274 = vmatpush1.msra.mxu0 0.0
  %275 = vmatprep.subr.mxu0 0.0
  %276 = vmatpush1.msra.mxu0 0.0
  %277 = vmatprep.subr.mxu0 0.0
  %278 = vmatpush1.msra.mxu0 0.0
  %279 = vmatprep.subr.mxu0 0.0
  %280 = vmatpush1.msra.mxu0 0.0
  %281 = vmatprep.subr.mxu0 0.0
  %282 = vmatpush1.msra.mxu0 0.0
  %283 = vmatprep.subr.mxu0 0.0
  %284 = vmatpush1.msra.mxu0 0.0
  %285 = vmatprep.subr.mxu0 0.0
  %286 = vmatpush1.msra.mxu0 0.0
  %287 = vmatprep.subr.mxu0 0.0
  %288 = vmatpush1.msra.mxu0 0.0
  %289 = vmatprep.subr.mxu0 0.0
  %290 = vmatpush1.msra.mxu0 0.0
  %291 = vmatprep.subr.mxu0 0.0
  %292 = vmatpush1.msra.mxu0 0.0
  %293 = vmatprep.subr.mxu0 0.0
  %294 = vmatpush1.msra.mxu0 0.0
  %295 = vmatprep.subr.mxu0 0.0
  %296 = vmatpush1.msra.mxu0 0.0
  %297 = vmatprep.subr.mxu0 0.0
  %298 = vmatpush1.msra.mxu0 0.0
  %299 = vmatprep.subr.mxu0 0.0
  %300 = vmatpush1.msra.mxu0 0.0
  %301 = vmatprep.subr.mxu0 0.0
  %302 = vmatpush1.msra.mxu0 0.0
  %303 = vmatprep.subr.mxu0 0.0
  %304 = vmatpush1.msra.mxu0 0.0
  %305 = vmatprep.subr.mxu0 0.0
  %306 = vmatpush1.msra.mxu0 0.0
  %307 = vmatprep.subr.mxu0 0.0
  %308 = vmatpush1.msra.mxu0 0.0
  %309 = vmatprep.subr.mxu0 0.0
  %310 = vmatpush1.msra.mxu0 0.0
  %311 = vmatprep.subr.mxu0 0.0
  %312 = vmatpush1.msra.mxu0 0.0
  %313 = vmatprep.mubr.f32.mxu0 0.0
  %314 = vmatmul.mubr.f32.gmra.mrb[0].mxu0 %v237
  %v315 = vpop.f32.mrb[0].mxu0
  %v316 = vadd.f32 0.0, %v315
  %v317 = vpop.f32.mrb[0].mxu0
  %v318 = vadd.f32 0.0, %v317
  %319 = vdwg.mxu0
  %320 = vmatprep.subr.mxu0 0.0
  %321 = vmatpush1.msra.mxu0 %v247
  %322 = vmatprep.subr.mxu0 0.0
  %323 = vmatpush1.msra.mxu0 0.0
  %324 = vmatprep.subr.mxu0 0.0
  %325 = vmatpush1.msra.mxu0 0.0
  %326 = vmatprep.subr.mxu0 0.0
  %327 = vmatpush1.msra.mxu0 0.0
  %328 = vmatprep.subr.mxu0 0.0
  %329 = vmatpush1.msra.mxu0 0.0
  %330 = vmatprep.subr.mxu0 0.0
  %331 = vmatpush1.msra.mxu0 0.0
  %332 = vmatprep.subr.mxu0 0.0
  %333 = vmatpush1.msra.mxu0 0.0
  %334 = vmatprep.subr.mxu0 0.0
  %335 = vmatpush1.msra.mxu0 0.0
  %336 = vmatprep.subr.mxu0 0.0
  %337 = vmatpush1.msra.mxu0 0.0
  %338 = vmatprep.subr.mxu0 0.0
  %339 = vmatpush1.msra.mxu0 0.0
  %340 = vmatprep.subr.mxu0 0.0
  %341 = vmatpush1.msra.mxu0 0.0
  %342 = vmatprep.subr.mxu0 0.0
  %343 = vmatpush1.msra.mxu0 0.0
  %344 = vmatprep.subr.mxu0 0.0
  %345 = vmatpush1.msra.mxu0 0.0
  %346 = vmatprep.subr.mxu0 0.0
  %347 = vmatpush1.msra.mxu0 0.0
  %348 = vmatprep.subr.mxu0 0.0
  %349 = vmatpush1.msra.mxu0 0.0
  %350 = vmatprep.subr.mxu0 0.0
  %351 = vmatpush1.msra.mxu0 0.0
  %352 = vmatprep.subr.mxu0 0.0
  %353 = vmatpush1.msra.mxu0 0.0
  %354 = vmatprep.subr.mxu0 0.0
  %355 = vmatpush1.msra.mxu0 0.0
  %356 = vmatprep.subr.mxu0 0.0
  %357 = vmatpush1.msra.mxu0 0.0
  %358 = vmatprep.subr.mxu0 0.0
  %359 = vmatpush1.msra.mxu0 0.0
  %360 = vmatprep.subr.mxu0 0.0
  %361 = vmatpush1.msra.mxu0 0.0
  %362 = vmatprep.subr.mxu0 0.0
  %363 = vmatpush1.msra.mxu0 0.0
  %364 = vmatprep.subr.mxu0 0.0
  %365 = vmatpush1.msra.mxu0 0.0
  %366 = vmatprep.subr.mxu0 0.0
  %367 = vmatpush1.msra.mxu0 0.0
  %368 = vmatprep.subr.mxu0 0.0
  %369 = vmatpush1.msra.mxu0 0.0
  %370 = vmatprep.subr.mxu0 0.0
  %371 = vmatpush1.msra.mxu0 0.0
  %372 = vmatprep.subr.mxu0 0.0
  %373 = vmatpush1.msra.mxu0 0.0
  %374 = vmatprep.subr.mxu0 0.0
  %375 = vmatpush1.msra.mxu0 0.0
  %376 = vmatprep.subr.mxu0 0.0
  %377 = vmatpush1.msra.mxu0 0.0
  %378 = vmatprep.subr.mxu0 0.0
  %379 = vmatpush1.msra.mxu0 0.0
  %380 = vmatprep.subr.mxu0 0.0
  %381 = vmatpush1.msra.mxu0 0.0
  %382 = vmatprep.subr.mxu0 0.0
  %383 = vmatpush1.msra.mxu0 0.0
  %384 = vmatprep.mubr.f32.mxu0 0.0
  %385 = vmatmul.mubr.f32.gmra.mrb[0].mxu0 %v237
  %v386 = vpop.f32.mrb[0].mxu0
  %v387 = vadd.f32 0.0, %v386
  %v388 = vpop.f32.mrb[0].mxu0
  %389 = vdwg.mxu0
  %v390 = vld [vmem:[%s3] sm:$0xff]
  %v391 = vld [vmem:[%s3 + $0x8] sm:$0xff]
  %v392 = vld [vmem:[%s3 + $0x10] sm:$0xff]
  %v393 = vld [vmem:[%s3 + $0x18] sm:$0xff]
  %v394 = vld [vmem:[%s3 + $0x20] sm:$0xff]
  %v395 = vld [vmem:[%s3 + $0x28] sm:$0xff]
  %v396 = vld [vmem:[%s3 + $0x30] sm:$0xff]
  %v397 = vld [vmem:[%s3 + $0x38] sm:$0xff]
  %v398 = vld [vmem:[%s3 + $0x40] sm:$0xff]
  %v399 = vld [vmem:[%s3 + $0x48] sm:$0xff]
  %v400 = vld [vmem:[%s3 + $0x50] sm:$0xff]
  %v401 = vld [vmem:[%s3 + $0x58] sm:$0xff]
  %v402 = vld [vmem:[%s3 + $0x60] sm:$0xff]
  %v403 = vld [vmem:[%s3 + $0x68] sm:$0xff]
  %v404 = vld [vmem:[%s3 + $0x70] sm:$0xff]
  %v405 = vld [vmem:[%s3 + $0x78] sm:$0xff]
  %v406 = vld [vmem:[%s3 + $0x80] sm:$0xff]
  %v407 = vld [vmem:[%s3 + $0x88] sm:$0xff]
  %v408 = vld [vmem:[%s3 + $0x90] sm:$0xff]
  %v409 = vld [vmem:[%s3 + $0x98] sm:$0xff]
  %v410 = vld [vmem:[%s3 + $0xa0] sm:$0xff]
  %v411 = vld [vmem:[%s3 + $0xa8] sm:$0xff]
  %v412 = vld [vmem:[%s3 + $0xb0] sm:$0xff]
  %v413 = vld [vmem:[%s3 + $0xb8] sm:$0xff]
  %v414 = vld [vmem:[%s3 + $0xc0] sm:$0xff]
  %v415 = vld [vmem:[%s3 + $0xc8] sm:$0xff]
  %v416 = vld [vmem:[%s3 + $0xd0] sm:$0xff]
  %v417 = vld [vmem:[%s3 + $0xd8] sm:$0xff]
  %v418 = vld [vmem:[%s3 + $0xe0] sm:$0xff]
  %v419 = vld [vmem:[%s3 + $0xe8] sm:$0xff]
  %v420 = vld [vmem:[%s3 + $0xf0] sm:$0xff]
  %v421 = vld [vmem:[%s3 + $0xf8] sm:$0xff]
  %v422 = vld [vmem:[%s3 + $0x100] sm:$0xff]
  %v423 = vld [vmem:[%s3 + $0x108] sm:$0xff]
  %v424 = vld [vmem:[%s3 + $0x110] sm:$0xff]
  %v425 = vld [vmem:[%s3 + $0x118] sm:$0xff]
  %v426 = vld [vmem:[%s3 + $0x120] sm:$0xff]
  %v427 = vld [vmem:[%s3 + $0x128] sm:$0xff]
  %v428 = vld [vmem:[%s3 + $0x130] sm:$0xff]
  %v429 = vld [vmem:[%s3 + $0x138] sm:$0xff]
  %v430 = vld [vmem:[%s3 + $0x140] sm:$0xff]
  %v431 = vld [vmem:[%s3 + $0x148] sm:$0xff]
  %v432 = vld [vmem:[%s3 + $0x150] sm:$0xff]
  %v433 = vld [vmem:[%s3 + $0x158] sm:$0xff]
  %v434 = vld [vmem:[%s3 + $0x160] sm:$0xff]
  %v435 = vld [vmem:[%s3 + $0x168] sm:$0xff]
  %v436 = vld [vmem:[%s3 + $0x170] sm:$0xff]
  %v437 = vld [vmem:[%s3 + $0x178] sm:$0xff]
  %v438 = vld [vmem:[%s3 + $0x180] sm:$0xff]
  %v439 = vld [vmem:[%s3 + $0x188] sm:$0xff]
  %v440 = vld [vmem:[%s3 + $0x190] sm:$0xff]
  %v441 = vld [vmem:[%s3 + $0x198] sm:$0xff]
  %v442 = vld [vmem:[%s3 + $0x1a0] sm:$0xff]
  %v443 = vld [vmem:[%s3 + $0x1a8] sm:$0xff]
  %v444 = vld [vmem:[%s3 + $0x1b0] sm:$0xff]
  %v445 = vld [vmem:[%s3 + $0x1b8] sm:$0xff]
  %v446 = vld [vmem:[%s3 + $0x1c0] sm:$0xff]
  %v447 = vld [vmem:[%s3 + $0x1c8] sm:$0xff]
  %v448 = vld [vmem:[%s3 + $0x1d0] sm:$0xff]
  %v449 = vld [vmem:[%s3 + $0x1d8] sm:$0xff]
  %v450 = vld [vmem:[%s3 + $0x1e0] sm:$0xff]
  %v451 = vld [vmem:[%s3 + $0x1e8] sm:$0xff]
  %v452 = vld [vmem:[%s3 + $0x1f0] sm:$0xff]
  %v453 = vld [vmem:[%s3 + $0x1f8] sm:$0xff]
  %v454 = vld [vmem:[%s3 + $0x200] sm:$0xff]
  %v455 = vld [vmem:[%s3 + $0x208] sm:$0xff]
  %v456 = vld [vmem:[%s3 + $0x210] sm:$0xff]
  %v457 = vld [vmem:[%s3 + $0x218] sm:$0xff]
  %v458 = vld [vmem:[%s3 + $0x220] sm:$0xff]
  %v459 = vld [vmem:[%s3 + $0x228] sm:$0xff]
  %v460 = vld [vmem:[%s3 + $0x230] sm:$0xff]
  %v461 = vld [vmem:[%s3 + $0x238] sm:$0xff]
  %v462 = vld [vmem:[%s3 + $0x240] sm:$0xff]
  %v463 = vld [vmem:[%s3 + $0x248] sm:$0xff]
  %v464 = vld [vmem:[%s3 + $0x250] sm:$0xff]
  %v465 = vld [vmem:[%s3 + $0x258] sm:$0xff]
  %v466 = vld [vmem:[%s3 + $0x260] sm:$0xff]
  %v467 = vld [vmem:[%s3 + $0x268] sm:$0xff]
  %v468 = vld [vmem:[%s3 + $0x270] sm:$0xff]
  %v469 = vld [vmem:[%s3 + $0x278] sm:$0xff]
  %v470 = vld [vmem:[%s3 + $0x280] sm:$0xff]
  %v471 = vld [vmem:[%s3 + $0x288] sm:$0xff]
  %v472 = vld [vmem:[%s3 + $0x290] sm:$0xff]
  %v473 = vld [vmem:[%s3 + $0x298] sm:$0xff]
  %v474 = vld [vmem:[%s3 + $0x2a0] sm:$0xff]
  %v475 = vld [vmem:[%s3 + $0x2a8] sm:$0xff]
  %v476 = vld [vmem:[%s3 + $0x2b0] sm:$0xff]
  %v477 = vld [vmem:[%s3 + $0x2b8] sm:$0xff]
  %v478 = vld [vmem:[%s3 + $0x2c0] sm:$0xff]
  %v479 = vld [vmem:[%s3 + $0x2c8] sm:$0xff]
  %v480 = vld [vmem:[%s3 + $0x2d0] sm:$0xff]
  %v481 = vld [vmem:[%s3 + $0x2d8] sm:$0xff]
  %v482 = vld [vmem:[%s3 + $0x2e0] sm:$0xff]
  %v483 = vld [vmem:[%s3 + $0x2e8] sm:$0xff]
  %v484 = vld [vmem:[%s3 + $0x2f0] sm:$0xff]
  %v485 = vld [vmem:[%s3 + $0x2f8] sm:$0xff]
  %v486 = vld [vmem:[%s3 + $0x300] sm:$0xff]
  %v487 = vld [vmem:[%s3 + $0x308] sm:$0xff]
  %v488 = vld [vmem:[%s3 + $0x310] sm:$0xff]
  %v489 = vld [vmem:[%s3 + $0x318] sm:$0xff]
  %v490 = vld [vmem:[%s3 + $0x320] sm:$0xff]
  %v491 = vld [vmem:[%s3 + $0x328] sm:$0xff]
  %v492 = vld [vmem:[%s3 + $0x330] sm:$0xff]
  %v493 = vld [vmem:[%s3 + $0x338] sm:$0xff]
  %v494 = vld [vmem:[%s3 + $0x340] sm:$0xff]
  %v495 = vld [vmem:[%s3 + $0x348] sm:$0xff]
  %v496 = vld [vmem:[%s3 + $0x350] sm:$0xff]
  %v497 = vld [vmem:[%s3 + $0x358] sm:$0xff]
  %v498 = vld [vmem:[%s3 + $0x360] sm:$0xff]
  %v499 = vld [vmem:[%s3 + $0x368] sm:$0xff]
  %v500 = vld [vmem:[%s3 + $0x370] sm:$0xff]
  %v501 = vld [vmem:[%s3 + $0x378] sm:$0xff]
  %v502 = vld [vmem:[%s3 + $0x380] sm:$0xff]
  %v503 = vld [vmem:[%s3 + $0x388] sm:$0xff]
  %v504 = vld [vmem:[%s3 + $0x390] sm:$0xff]
  %v505 = vld [vmem:[%s3 + $0x398] sm:$0xff]
  %v506 = vld [vmem:[%s3 + $0x3a0] sm:$0xff]
  %v507 = vld [vmem:[%s3 + $0x3a8] sm:$0xff]
  %v508 = vld [vmem:[%s3 + $0x3b0] sm:$0xff]
  %v509 = vld [vmem:[%s3 + $0x3b8] sm:$0xff]
  %v510 = vld [vmem:[%s4] sm:$0x7]
  %v512 = vlaneseq
  %v513 = vshrl.u32 %v512, 7
  %v514 = vsub.s32 0, %v513
  %v515 = vrot.slane %v510, %v514
  %v516 = vlaneseq
  %v517 = vshrl.u32 %v516, 7
  %v518 = vsub.s32 1, %v517
  %v519 = vrot.slane %v510, %v518
  %v520 = vlaneseq
  %v521 = vshrl.u32 %v520, 7
  %v522 = vsub.s32 2, %v521
  %v523 = vrot.slane %v510, %v522
  %vm527 = vcmask 523264
  %v529 = vsel %vm527, %v387, 0
  %531 = vmatprep.subr.mxu0 %v391
  %532 = vmatpush1.msra.mxu0 %v390
  %533 = vmatprep.subr.mxu0 %v394
  %534 = vmatpush1.msra.mxu0 %v393
  %535 = vmatprep.subr.mxu0 %v397
  %536 = vmatpush1.msra.mxu0 %v396
  %537 = vmatprep.subr.mxu0 %v400
  %538 = vmatpush1.msra.mxu0 %v399
  %539 = vmatprep.subr.mxu0 %v403
  %540 = vmatpush1.msra.mxu0 %v402
  %541 = vmatprep.subr.mxu0 %v406
  %542 = vmatpush1.msra.mxu0 %v405
  %543 = vmatprep.subr.mxu0 %v409
  %544 = vmatpush1.msra.mxu0 %v408
  %545 = vmatprep.subr.mxu0 %v412
  %546 = vmatpush1.msra.mxu0 %v411
  %547 = vmatprep.subr.mxu0 %v415
  %548 = vmatpush1.msra.mxu0 %v414
  %549 = vmatprep.subr.mxu0 %v418
  %550 = vmatpush1.msra.mxu0 %v417
  %551 = vmatprep.subr.mxu0 %v421
  %552 = vmatpush1.msra.mxu0 %v420
  %553 = vmatprep.subr.mxu0 %v424
  %554 = vmatpush1.msra.mxu0 %v423
  %555 = vmatprep.subr.mxu0 %v427
  %556 = vmatpush1.msra.mxu0 %v426
  %557 = vmatprep.subr.mxu0 %v430
  %558 = vmatpush1.msra.mxu0 %v429
  %559 = vmatprep.subr.mxu0 %v433
  %560 = vmatpush1.msra.mxu0 %v432
  %561 = vmatprep.subr.mxu0 %v436
  %562 = vmatpush1.msra.mxu0 %v435
  %563 = vmatprep.subr.mxu0 %v439
  %564 = vmatpush1.msra.mxu0 %v438
  %565 = vmatprep.subr.mxu0 %v442
  %566 = vmatpush1.msra.mxu0 %v441
  %567 = vmatprep.subr.mxu0 %v445
  %568 = vmatpush1.msra.mxu0 %v444
  %569 = vmatprep.subr.mxu0 %v448
  %570 = vmatpush1.msra.mxu0 %v447
  %571 = vmatprep.subr.mxu0 %v451
  %572 = vmatpush1.msra.mxu0 %v450
  %573 = vmatprep.subr.mxu0 %v454
  %574 = vmatpush1.msra.mxu0 %v453
  %575 = vmatprep.subr.mxu0 %v457
  %576 = vmatpush1.msra.mxu0 %v456
  %577 = vmatprep.subr.mxu0 %v460
  %578 = vmatpush1.msra.mxu0 %v459
  %579 = vmatprep.subr.mxu0 %v463
  %580 = vmatpush1.msra.mxu0 %v462
  %581 = vmatprep.subr.mxu0 %v466
  %582 = vmatpush1.msra.mxu0 %v465
  %583 = vmatprep.subr.mxu0 %v469
  %584 = vmatpush1.msra.mxu0 %v468
  %585 = vmatprep.subr.mxu0 %v472
  %586 = vmatpush1.msra.mxu0 %v471
  %587 = vmatprep.subr.mxu0 %v475
  %588 = vmatpush1.msra.mxu0 %v474
  %589 = vmatprep.subr.mxu0 %v478
  %590 = vmatpush1.msra.mxu0 %v477
  %591 = vmatprep.subr.mxu0 %v481
  %592 = vmatpush1.msra.mxu0 %v480
  %593 = vmatprep.subr.mxu0 %v484
  %594 = vmatpush1.msra.mxu0 %v483
  %595 = vmatprep.mubr.f32.mxu0 %v318
  %596 = vmatmul.mubr.f32.gmra.mrb[0].mxu0 %v316
  %v597 = vpop.f32.mrb[0].mxu0
  %v598 = vadd.f32 %v515, %v597
  %v599 = vpop.f32.mrb[0].mxu0
  %v600 = vadd.f32 %v519, %v599
  %601 = vdwg.mxu0
  %602 = vmatprep.subr.mxu0 %v487
  %603 = vmatpush1.msra.mxu0 %v486
  %604 = vmatprep.subr.mxu0 %v490
  %605 = vmatpush1.msra.mxu0 %v489
  %606 = vmatprep.subr.mxu0 %v493
  %607 = vmatpush1.msra.mxu0 %v492
  %608 = vmatprep.subr.mxu0 %v496
  %609 = vmatpush1.msra.mxu0 %v495
  %610 = vmatprep.subr.mxu0 %v499
  %611 = vmatpush1.msra.mxu0 %v498
  %612 = vmatprep.subr.mxu0 %v502
  %613 = vmatpush1.msra.mxu0 %v501
  %614 = vmatprep.subr.mxu0 %v505
  %615 = vmatpush1.msra.mxu0 %v504
  %616 = vmatprep.subr.mxu0 %v508
  %617 = vmatpush1.msra.mxu0 %v507
  %618 = vmatprep.subr.mxu0 0.0
  %619 = vmatpush1.msra.mxu0 0.0
  %620 = vmatprep.subr.mxu0 0.0
  %621 = vmatpush1.msra.mxu0 0.0
  %622 = vmatprep.subr.mxu0 0.0
  %623 = vmatpush1.msra.mxu0 0.0
  %624 = vmatprep.subr.mxu0 0.0
  %625 = vmatpush1.msra.mxu0 0.0
  %626 = vmatprep.subr.mxu0 0.0
  %627 = vmatpush1.msra.mxu0 0.0
  %628 = vmatprep.subr.mxu0 0.0
  %629 = vmatpush1.msra.mxu0 0.0
  %630 = vmatprep.subr.mxu0 0.0
  %631 = vmatpush1.msra.mxu0 0.0
  %632 = vmatprep.subr.mxu0 0.0
  %633 = vmatpush1.msra.mxu0 0.0
  %634 = vmatprep.subr.mxu0 0.0
  %635 = vmatpush1.msra.mxu0 0.0
  %636 = vmatprep.subr.mxu0 0.0
  %637 = vmatpush1.msra.mxu0 0.0
  %638 = vmatprep.subr.mxu0 0.0
  %639 = vmatpush1.msra.mxu0 0.0
  %640 = vmatprep.subr.mxu0 0.0
  %641 = vmatpush1.msra.mxu0 0.0
  %642 = vmatprep.subr.mxu0 0.0
  %643 = vmatpush1.msra.mxu0 0.0
  %644 = vmatprep.subr.mxu0 0.0
  %645 = vmatpush1.msra.mxu0 0.0
  %646 = vmatprep.subr.mxu0 0.0
  %647 = vmatpush1.msra.mxu0 0.0
  %648 = vmatprep.subr.mxu0 0.0
  %649 = vmatpush1.msra.mxu0 0.0
  %650 = vmatprep.subr.mxu0 0.0
  %651 = vmatpush1.msra.mxu0 0.0
  %652 = vmatprep.subr.mxu0 0.0
  %653 = vmatpush1.msra.mxu0 0.0
  %654 = vmatprep.subr.mxu0 0.0
  %655 = vmatpush1.msra.mxu0 0.0
  %656 = vmatprep.subr.mxu0 0.0
  %657 = vmatpush1.msra.mxu0 0.0
  %658 = vmatprep.subr.mxu0 0.0
  %659 = vmatpush1.msra.mxu0 0.0
  %660 = vmatprep.subr.mxu0 0.0
  %661 = vmatpush1.msra.mxu0 0.0
  %662 = vmatprep.subr.mxu0 0.0
  %663 = vmatpush1.msra.mxu0 0.0
  %664 = vmatprep.subr.mxu0 0.0
  %665 = vmatpush1.msra.mxu0 0.0
  %666 = vmatprep.mubr.f32.mxu0 0.0
  %667 = vmatmul.mubr.f32.gmra.mrb[0].mxu0 %v529
  %v668 = vpop.f32.mrb[0].mxu0
  %v669 = vadd.f32 %v598, %v668
  %v670 = vpop.f32.mrb[0].mxu0
  %v671 = vadd.f32 %v600, %v670
  %672 = vdwg.mxu0
  %673 = vmatprep.subr.mxu0 0.0
  %674 = vmatpush1.msra.mxu0 %v392
  %675 = vmatprep.subr.mxu0 0.0
  %676 = vmatpush1.msra.mxu0 %v395
  %677 = vmatprep.subr.mxu0 0.0
  %678 = vmatpush1.msra.mxu0 %v398
  %679 = vmatprep.subr.mxu0 0.0
  %680 = vmatpush1.msra.mxu0 %v401
  %681 = vmatprep.subr.mxu0 0.0
  %682 = vmatpush1.msra.mxu0 %v404
  %683 = vmatprep.subr.mxu0 0.0
  %684 = vmatpush1.msra.mxu0 %v407
  %685 = vmatprep.subr.mxu0 0.0
  %686 = vmatpush1.msra.mxu0 %v410
  %687 = vmatprep.subr.mxu0 0.0
  %688 = vmatpush1.msra.mxu0 %v413
  %689 = vmatprep.subr.mxu0 0.0
  %690 = vmatpush1.msra.mxu0 %v416
  %691 = vmatprep.subr.mxu0 0.0
  %692 = vmatpush1.msra.mxu0 %v419
  %693 = vmatprep.subr.mxu0 0.0
  %694 = vmatpush1.msra.mxu0 %v422
  %695 = vmatprep.subr.mxu0 0.0
  %696 = vmatpush1.msra.mxu0 %v425
  %697 = vmatprep.subr.mxu0 0.0
  %698 = vmatpush1.msra.mxu0 %v428
  %699 = vmatprep.subr.mxu0 0.0
  %700 = vmatpush1.msra.mxu0 %v431
  %701 = vmatprep.subr.mxu0 0.0
  %702 = vmatpush1.msra.mxu0 %v434
  %703 = vmatprep.subr.mxu0 0.0
  %704 = vmatpush1.msra.mxu0 %v437
  %705 = vmatprep.subr.mxu0 0.0
  %706 = vmatpush1.msra.mxu0 %v440
  %707 = vmatprep.subr.mxu0 0.0
  %708 = vmatpush1.msra.mxu0 %v443
  %709 = vmatprep.subr.mxu0 0.0
  %710 = vmatpush1.msra.mxu0 %v446
  %711 = vmatprep.subr.mxu0 0.0
  %712 = vmatpush1.msra.mxu0 %v449
  %713 = vmatprep.subr.mxu0 0.0
  %714 = vmatpush1.msra.mxu0 %v452
  %715 = vmatprep.subr.mxu0 0.0
  %716 = vmatpush1.msra.mxu0 %v455
  %717 = vmatprep.subr.mxu0 0.0
  %718 = vmatpush1.msra.mxu0 %v458
  %719 = vmatprep.subr.mxu0 0.0
  %720 = vmatpush1.msra.mxu0 %v461
  %721 = vmatprep.subr.mxu0 0.0
  %722 = vmatpush1.msra.mxu0 %v464
  %723 = vmatprep.subr.mxu0 0.0
  %724 = vmatpush1.msra.mxu0 %v467
  %725 = vmatprep.subr.mxu0 0.0
  %726 = vmatpush1.msra.mxu0 %v470
  %727 = vmatprep.subr.mxu0 0.0
  %728 = vmatpush1.msra.mxu0 %v473
  %729 = vmatprep.subr.mxu0 0.0
  %730 = vmatpush1.msra.mxu0 %v476
  %731 = vmatprep.subr.mxu0 0.0
  %732 = vmatpush1.msra.mxu0 %v479
  %733 = vmatprep.subr.mxu0 0.0
  %734 = vmatpush1.msra.mxu0 %v482
  %735 = vmatprep.subr.mxu0 0.0
  %736 = vmatpush1.msra.mxu0 %v485
  %737 = vmatprep.mubr.f32.mxu0 %v318
  %738 = vmatmul.mubr.f32.gmra.mrb[0].mxu0 %v316
  %v739 = vpop.f32.mrb[0].mxu0
  %v740 = vadd.f32 %v523, %v739
  %v741 = vpop.f32.mrb[0].mxu0
  %742 = vdwg.mxu0
  %743 = vmatprep.subr.mxu0 0.0
  %744 = vmatpush1.msra.mxu0 %v488
  %745 = vmatprep.subr.mxu0 0.0
  %746 = vmatpush1.msra.mxu0 %v491
  %747 = vmatprep.subr.mxu0 0.0
  %748 = vmatpush1.msra.mxu0 %v494
  %749 = vmatprep.subr.mxu0 0.0
  %750 = vmatpush1.msra.mxu0 %v497
  %751 = vmatprep.subr.mxu0 0.0
  %752 = vmatpush1.msra.mxu0 %v500
  %753 = vmatprep.subr.mxu0 0.0
  %754 = vmatpush1.msra.mxu0 %v503
  %755 = vmatprep.subr.mxu0 0.0
  %756 = vmatpush1.msra.mxu0 %v506
  %757 = vmatprep.subr.mxu0 0.0
  %758 = vmatpush1.msra.mxu0 %v509
  %759 = vmatprep.subr.mxu0 0.0
  %760 = vmatpush1.msra.mxu0 0.0
  %761 = vmatprep.subr.mxu0 0.0
  %762 = vmatpush1.msra.mxu0 0.0
  %763 = vmatprep.subr.mxu0 0.0
  %764 = vmatpush1.msra.mxu0 0.0
  %765 = vmatprep.subr.mxu0 0.0
  %766 = vmatpush1.msra.mxu0 0.0
  %767 = vmatprep.subr.mxu0 0.0
  %768 = vmatpush1.msra.mxu0 0.0
  %769 = vmatprep.subr.mxu0 0.0
  %770 = vmatpush1.msra.mxu0 0.0
  %771 = vmatprep.subr.mxu0 0.0
  %772 = vmatpush1.msra.mxu0 0.0
  %773 = vmatprep.subr.mxu0 0.0
  %774 = vmatpush1.msra.mxu0 0.0
  %775 = vmatprep.subr.mxu0 0.0
  %776 = vmatpush1.msra.mxu0 0.0
  %777 = vmatprep.subr.mxu0 0.0
  %778 = vmatpush1.msra.mxu0 0.0
  %779 = vmatprep.subr.mxu0 0.0
  %780 = vmatpush1.msra.mxu0 0.0
  %781 = vmatprep.subr.mxu0 0.0
  %782 = vmatpush1.msra.mxu0 0.0
  %783 = vmatprep.subr.mxu0 0.0
  %784 = vmatpush1.msra.mxu0 0.0
  %785 = vmatprep.subr.mxu0 0.0
  %786 = vmatpush1.msra.mxu0 0.0
  %787 = vmatprep.subr.mxu0 0.0
  %788 = vmatpush1.msra.mxu0 0.0
  %789 = vmatprep.subr.mxu0 0.0
  %790 = vmatpush1.msra.mxu0 0.0
  %791 = vmatprep.subr.mxu0 0.0
  %792 = vmatpush1.msra.mxu0 0.0
  %793 = vmatprep.subr.mxu0 0.0
  %794 = vmatpush1.msra.mxu0 0.0
  %795 = vmatprep.subr.mxu0 0.0
  %796 = vmatpush1.msra.mxu0 0.0
  %797 = vmatprep.subr.mxu0 0.0
  %798 = vmatpush1.msra.mxu0 0.0
  %799 = vmatprep.subr.mxu0 0.0
  %800 = vmatpush1.msra.mxu0 0.0
  %801 = vmatprep.subr.mxu0 0.0
  %802 = vmatpush1.msra.mxu0 0.0
  %803 = vmatprep.subr.mxu0 0.0
  %804 = vmatpush1.msra.mxu0 0.0
  %805 = vmatprep.subr.mxu0 0.0
  %806 = vmatpush1.msra.mxu0 0.0
  %807 = vmatprep.mubr.f32.mxu0 0.0
  %808 = vmatmul.mubr.f32.gmra.mrb[0].mxu0 %v529
  %v809 = vpop.f32.mrb[0].mxu0
  %v810 = vadd.f32 %v740, %v809
  %v811 = vpop.f32.mrb[0].mxu0
  %812 = vdwg.mxu0
  %v813 = vld [vmem:[%s5] sm:$0x1f]
  %v814 = vld [vmem:[%s5 + $0x8] sm:$0x1f]
  %v815 = vld [vmem:[%s5 + $0x10] sm:$0x1f]
  %v816 = vadd.f32 %v669, %v813
  %v817 = vadd.f32 %v671, %v814
  %v818 = vadd.f32 %v810, %v815
  %819 = vst [vmem:[%s6] sm:$0x1f] %v816
  %820 = vst [vmem:[%s6 + $0x8] sm:$0x1f] %v817
  %vm821 = vcmask 520192
  %822 = vst.msk [vmem:[%s6 + $0x10] sm:$0x1f] %vm821, %v818
  // Predicated region
  $region26: #{_lambda_.16} parent=0 // pred_check
    _
  $region27: #{_lambda_.16} parent=0 // pred_check_branch
    %824 = sbr.rel (0) target = $region29
  $region28: #{_lambda_.16} parent=0 // pred_region
    _
  $region29: #{_lambda_.16} parent=0 // pred_fallthru
    _
  // Predicated region
  $region30: #{_lambda_.16} parent=0 // pred_check
    _
  $region31: #{_lambda_.16} parent=0 // pred_check_branch
    %826 = sbr.rel (0) target = $region33
  $region32: #{_lambda_.16} parent=0 // pred_region
    _
  $region33: #{_lambda_.16} parent=0 // pred_fallthru
    _

// kernel: _lambda_.17
$region0: #{_lambda_.17}
  #allocation0 [shape = 'u32[]', space=smem, size = 0x4, offset = 0x4, fixed_abs, tag = 'smem constant byte address 0x4 - core index']
  #allocation1 [shape = 'u32[144,128]{1,0:T(1,128)}', space=vmem, size = 0x12000, scoped, tag = 'internal scratch']
  %s0 = inlined_call_operand.vmem [shape: f32[9,9], index: 0, kind: input, shape index: {}]
  %s1 = inlined_call_operand.vmem [shape: f32[5,320], index: 1, kind: input, shape index: {}]
  %s2 = inlined_call_operand.vmem [shape: s32[5,1], index: 2, kind: input, shape index: {}]
  %s3 = inlined_call_operand.vmem [shape: f32[320,320], index: 3, kind: input, shape index: {}]
  %s4 = inlined_call_operand.vmem [shape: f32[1,320], index: 4, kind: input, shape index: {}]
  %s5 = inlined_call_operand.vmem [shape: f32[9,320], index: 5, kind: input, shape index: {}]
  %s6 = inlined_call_operand.vmem [shape: f32[9,320], index: 6, kind: output, shape index: {}]
  %s7 = sld [smem:[#allocation0]]
  $region34: #{_lambda_.17} parent=0
    _
  %s9 = ssub.s32 1, %s7
  %s10 = scalar_select 0, %s9, %s7
  // Predicated region
  $region2: #{_lambda_.17} parent=0 // pred_check
    _
  $region3: #{_lambda_.17} parent=0 // pred_check_branch
    %12 = sbr.rel (0) target = $region5
  $region4: #{_lambda_.17} parent=0 // pred_region
    _
  $region5: #{_lambda_.17} parent=0 // pred_fallthru
    _
  // Predicated region
  $region6: #{_lambda_.17} parent=0 // pred_check
    _
  $region7: #{_lambda_.17} parent=0 // pred_check_branch
    %14 = sbr.rel (0) target = $region9
  $region8: #{_lambda_.17} parent=0 // pred_region
    _
  $region9: #{_lambda_.17} parent=0 // pred_fallthru
    _
  // Predicated region
  $region10: #{_lambda_.17} parent=0 // pred_check
    _
  $region11: #{_lambda_.17} parent=0 // pred_check_branch
    %16 = sbr.rel (0) target = $region13
  $region12: #{_lambda_.17} parent=0 // pred_region
    _
  $region13: #{_lambda_.17} parent=0 // pred_fallthru
    _
  // Predicated region
  $region14: #{_lambda_.17} parent=0 // pred_check
    _
  $region15: #{_lambda_.17} parent=0 // pred_check_branch
    %18 = sbr.rel (0) target = $region17
  $region16: #{_lambda_.17} parent=0 // pred_region
    _
  $region17: #{_lambda_.17} parent=0 // pred_fallthru
    _
  // Predicated region
  $region18: #{_lambda_.17} parent=0 // pred_check
    _
  $region19: #{_lambda_.17} parent=0 // pred_check_branch
    %20 = sbr.rel (0) target = $region21
  $region20: #{_lambda_.17} parent=0 // pred_region
    _
  $region21: #{_lambda_.17} parent=0 // pred_fallthru
    _
  // Predicated region
  $region22: #{_lambda_.17} parent=0 // pred_check
    _
  $region23: #{_lambda_.17} parent=0 // pred_check_branch
    %22 = sbr.rel (0) target = $region25
  $region24: #{_lambda_.17} parent=0 // pred_region
    _
  $region25: #{_lambda_.17} parent=0 // pred_fallthru
    _
  %v23 = vld [vmem:[%s2] sm:$0x1f]
  %v24 = vlaneseq
  %v25 = vand.u32 %v24, 127
  %26 = vset.pattern.permute.xlu0 0
  %27 = vperm.xlu0 %26, %v23
  %v28 = vpop.permute.xlu0 %27
  %vm29 = vcmp.eq.s32.totalorder %v25, %v28
  %v30 = vsel %vm29, 1, 0
  %v31 = vcvt.s32.f32 %v30
  %v32 = vld [vmem:[%s1] sm:$0x1f]
  %v33 = vld [vmem:[%s1 + $0x8] sm:$0x1f]
  %v34 = vld [vmem:[%s1 + $0x10] sm:$0x1f]
  %35 = vxpose.xlu0.b32.start [1/16] %v31, 128
  %36 = vxpose.xlu0.b32.cont [2/16] 0.0, 128
  %37 = vxpose.xlu0.b32.cont [3/16] 0.0, 128
  %38 = vxpose.xlu0.b32.cont [4/16] 0.0, 128
  %39 = vxpose.xlu0.b32.cont [5/16] 0.0, 128
  %40 = vxpose.xlu0.b32.cont [6/16] 0.0, 128
  %41 = vxpose.xlu0.b32.cont [7/16] 0.0, 128
  %42 = vxpose.xlu0.b32.cont [8/16] 0.0, 128
  %43 = vxpose.xlu0.b32.cont [9/16] 0.0, 128
  %44 = vxpose.xlu0.b32.cont [10/16] 0.0, 128
  %45 = vxpose.xlu0.b32.cont [11/16] 0.0, 128
  %46 = vxpose.xlu0.b32.cont [12/16] 0.0, 128
  %47 = vxpose.xlu0.b32.cont [13/16] 0.0, 128
  %48 = vxpose.xlu0.b32.cont [14/16] 0.0, 128
  %49 = vxpose.xlu0.b32.cont [15/16] 0.0, 128
  %50 = vxpose.xlu0.b32.end [16/16] 0.0, 128
  %v51 = vpop.trf.xlu0
  %v52 = vpop.trf.xlu0
  %v53 = vpop.trf.xlu0
  %v54 = vpop.trf.xlu0
  %v55 = vpop.trf.xlu0
  %v56 = vpop.trf.xlu0
  %v57 = vpop.trf.xlu0
  %v58 = vpop.trf.xlu0
  %v59 = vpop.trf.xlu0
  %v60 = vpop.trf.xlu0
  %v61 = vpop.trf.xlu0
  %v62 = vpop.trf.xlu0
  %v63 = vpop.trf.xlu0
  %v64 = vpop.trf.xlu0
  %v65 = vpop.trf.xlu0
  %v66 = vpop.trf.xlu0
  %vm67 = vcmask 39936
  %v69 = vsel %vm67, %v51, 0
  %v72 = vsel %vm67, %v52, 0
  %vm74 = vcmask 1044480
  %v76 = vsel %vm74, %v32, 0
  %v79 = vsel %vm74, %v33, 0
  %v82 = vsel %vm74, %v34, 0
  %84 = vmatprep.subr.mxu0 %v79
  %85 = vmatpush1.msra.mxu0 %v76
  %86 = vmatprep.subr.mxu0 0.0
  %87 = vmatpush1.msra.mxu0 0.0
  %88 = vmatprep.subr.mxu0 0.0
  %89 = vmatpush1.msra.mxu0 0.0
  %90 = vmatprep.subr.mxu0 0.0
  %91 = vmatpush1.msra.mxu0 0.0
  %92 = vmatprep.subr.mxu0 0.0
  %93 = vmatpush1.msra.mxu0 0.0
  %94 = vmatprep.subr.mxu0 0.0
  %95 = vmatpush1.msra.mxu0 0.0
  %96 = vmatprep.subr.mxu0 0.0
  %97 = vmatpush1.msra.mxu0 0.0
  %98 = vmatprep.subr.mxu0 0.0
  %99 = vmatpush1.msra.mxu0 0.0
  %100 = vmatprep.subr.mxu0 0.0
  %101 = vmatpush1.msra.mxu0 0.0
  %102 = vmatprep.subr.mxu0 0.0
  %103 = vmatpush1.msra.mxu0 0.0
  %104 = vmatprep.subr.mxu0 0.0
  %105 = vmatpush1.msra.mxu0 0.0
  %106 = vmatprep.subr.mxu0 0.0
  %107 = vmatpush1.msra.mxu0 0.0
  %108 = vmatprep.subr.mxu0 0.0
  %109 = vmatpush1.msra.mxu0 0.0
  %110 = vmatprep.subr.mxu0 0.0
  %111 = vmatpush1.msra.mxu0 0.0
  %112 = vmatprep.subr.mxu0 0.0
  %113 = vmatpush1.msra.mxu0 0.0
  %114 = vmatprep.subr.mxu0 0.0
  %115 = vmatpush1.msra.mxu0 0.0
  %116 = vmatprep.subr.mxu0 0.0
  %117 = vmatpush1.msra.mxu0 0.0
  %118 = vmatprep.subr.mxu0 0.0
  %119 = vmatpush1.msra.mxu0 0.0
  %120 = vmatprep.subr.mxu0 0.0
  %121 = vmatpush1.msra.mxu0 0.0
  %122 = vmatprep.subr.mxu0 0.0
  %123 = vmatpush1.msra.mxu0 0.0
  %124 = vmatprep.subr.mxu0 0.0
  %125 = vmatpush1.msra.mxu0 0.0
  %126 = vmatprep.subr.mxu0 0.0
  %127 = vmatpush1.msra.mxu0 0.0
  %128 = vmatprep.subr.mxu0 0.0
  %129 = vmatpush1.msra.mxu0 0.0
  %130 = vmatprep.subr.mxu0 0.0
  %131 = vmatpush1.msra.mxu0 0.0
  %132 = vmatprep.subr.mxu0 0.0
  %133 = vmatpush1.msra.mxu0 0.0
  %134 = vmatprep.subr.mxu0 0.0
  %135 = vmatpush1.msra.mxu0 0.0
  %136 = vmatprep.subr.mxu0 0.0
  %137 = vmatpush1.msra.mxu0 0.0
  %138 = vmatprep.subr.mxu0 0.0
  %139 = vmatpush1.msra.mxu0 0.0
  %140 = vmatprep.subr.mxu0 0.0
  %141 = vmatpush1.msra.mxu0 0.0
  %142 = vmatprep.subr.mxu0 0.0
  %143 = vmatpush1.msra.mxu0 0.0
  %144 = vmatprep.subr.mxu0 0.0
  %145 = vmatpush1.msra.mxu0 0.0
  %146 = vmatprep.subr.mxu0 0.0
  %147 = vmatpush1.msra.mxu0 0.0
  %148 = vmatprep.mubr.f32.mxu0 0.0
  %149 = vmatmul.mubr.f32.gmra.mrb[0].mxu0 %v69
  %v150 = vpop.f32.mrb[0].mxu0
  %v151 = vadd.f32 0.0, %v150
  %v152 = vpop.f32.mrb[0].mxu0
  %v153 = vadd.f32 0.0, %v152
  %154 = vmatprep.mubr.f32.mxu0 0.0
  %155 = vmatmul.mubr.f32.gmra.mrb[0].mxu0 %v72
  %v156 = vpop.f32.mrb[0].mxu0
  %v157 = vadd.f32 0.0, %v156
  %v158 = vpop.f32.mrb[0].mxu0
  %v159 = vadd.f32 0.0, %v158
  %160 = vdwg.mxu0
  %161 = vmatprep.subr.mxu0 0.0
  %162 = vmatpush1.msra.mxu0 %v82
  %163 = vmatprep.subr.mxu0 0.0
  %164 = vmatpush1.msra.mxu0 0.0
  %165 = vmatprep.subr.mxu0 0.0
  %166 = vmatpush1.msra.mxu0 0.0
  %167 = vmatprep.subr.mxu0 0.0
  %168 = vmatpush1.msra.mxu0 0.0
  %169 = vmatprep.subr.mxu0 0.0
  %170 = vmatpush1.msra.mxu0 0.0
  %171 = vmatprep.subr.mxu0 0.0
  %172 = vmatpush1.msra.mxu0 0.0
  %173 = vmatprep.subr.mxu0 0.0
  %174 = vmatpush1.msra.mxu0 0.0
  %175 = vmatprep.subr.mxu0 0.0
  %176 = vmatpush1.msra.mxu0 0.0
  %177 = vmatprep.subr.mxu0 0.0
  %178 = vmatpush1.msra.mxu0 0.0
  %179 = vmatprep.subr.mxu0 0.0
  %180 = vmatpush1.msra.mxu0 0.0
  %181 = vmatprep.subr.mxu0 0.0
  %182 = vmatpush1.msra.mxu0 0.0
  %183 = vmatprep.subr.mxu0 0.0
  %184 = vmatpush1.msra.mxu0 0.0
  %185 = vmatprep.subr.mxu0 0.0
  %186 = vmatpush1.msra.mxu0 0.0
  %187 = vmatprep.subr.mxu0 0.0
  %188 = vmatpush1.msra.mxu0 0.0
  %189 = vmatprep.subr.mxu0 0.0
  %190 = vmatpush1.msra.mxu0 0.0
  %191 = vmatprep.subr.mxu0 0.0
  %192 = vmatpush1.msra.mxu0 0.0
  %193 = vmatprep.subr.mxu0 0.0
  %194 = vmatpush1.msra.mxu0 0.0
  %195 = vmatprep.subr.mxu0 0.0
  %196 = vmatpush1.msra.mxu0 0.0
  %197 = vmatprep.subr.mxu0 0.0
  %198 = vmatpush1.msra.mxu0 0.0
  %199 = vmatprep.subr.mxu0 0.0
  %200 = vmatpush1.msra.mxu0 0.0
  %201 = vmatprep.subr.mxu0 0.0
  %202 = vmatpush1.msra.mxu0 0.0
  %203 = vmatprep.subr.mxu0 0.0
  %204 = vmatpush1.msra.mxu0 0.0
  %205 = vmatprep.subr.mxu0 0.0
  %206 = vmatpush1.msra.mxu0 0.0
  %207 = vmatprep.subr.mxu0 0.0
  %208 = vmatpush1.msra.mxu0 0.0
  %209 = vmatprep.subr.mxu0 0.0
  %210 = vmatpush1.msra.mxu0 0.0
  %211 = vmatprep.subr.mxu0 0.0
  %212 = vmatpush1.msra.mxu0 0.0
  %213 = vmatprep.subr.mxu0 0.0
  %214 = vmatpush1.msra.mxu0 0.0
  %215 = vmatprep.subr.mxu0 0.0
  %216 = vmatpush1.msra.mxu0 0.0
  %217 = vmatprep.subr.mxu0 0.0
  %218 = vmatpush1.msra.mxu0 0.0
  %219 = vmatprep.subr.mxu0 0.0
  %220 = vmatpush1.msra.mxu0 0.0
  %221 = vmatprep.subr.mxu0 0.0
  %222 = vmatpush1.msra.mxu0 0.0
  %223 = vmatprep.subr.mxu0 0.0
  %224 = vmatpush1.msra.mxu0 0.0
  %225 = vmatprep.mubr.f32.mxu0 0.0
  %226 = vmatmul.mubr.f32.gmra.mrb[0].mxu0 %v69
  %v227 = vpop.f32.mrb[0].mxu0
  %v228 = vadd.f32 0.0, %v227
  %v229 = vpop.f32.mrb[0].mxu0
  %230 = vmatprep.mubr.f32.mxu0 0.0
  %231 = vmatmul.mubr.f32.gmra.mrb[0].mxu0 %v72
  %v232 = vpop.f32.mrb[0].mxu0
  %v233 = vadd.f32 0.0, %v232
  %v234 = vpop.f32.mrb[0].mxu0
  %235 = vdwg.mxu0
  %v236 = vld [vmem:[%s0] sm:$0xff]
  %v237 = vld [vmem:[%s0 + $0x8] sm:$0x1]
  %vm238 = vcmask 72704
  %v240 = vsel %vm238, %v236, 0
  %v243 = vsel %vm238, %v237, 0
  %vm245 = vcmask 1040384
  %v247 = vsel %vm245, %v157, 0
  %v250 = vsel %vm245, %v159, 0
  %v253 = vsel %vm245, %v233, 0
  %255 = vmatprep.subr.mxu0 %v153
  %256 = vmatpush1.msra.mxu0 %v151
  %257 = vmatprep.subr.mxu0 %v250
  %258 = vmatpush1.msra.mxu0 %v247
  %259 = vmatprep.subr.mxu0 0.0
  %260 = vmatpush1.msra.mxu0 0.0
  %261 = vmatprep.subr.mxu0 0.0
  %262 = vmatpush1.msra.mxu0 0.0
  %263 = vmatprep.subr.mxu0 0.0
  %264 = vmatpush1.msra.mxu0 0.0
  %265 = vmatprep.subr.mxu0 0.0
  %266 = vmatpush1.msra.mxu0 0.0
  %267 = vmatprep.subr.mxu0 0.0
  %268 = vmatpush1.msra.mxu0 0.0
  %269 = vmatprep.subr.mxu0 0.0
  %270 = vmatpush1.msra.mxu0 0.0
  %271 = vmatprep.subr.mxu0 0.0
  %272 = vmatpush1.msra.mxu0 0.0
  %273 = vmatprep.subr.mxu0 0.0
  %274 = vmatpush1.msra.mxu0 0.0
  %275 = vmatprep.subr.mxu0 0.0
  %276 = vmatpush1.msra.mxu0 0.0
  %277 = vmatprep.subr.mxu0 0.0
  %278 = vmatpush1.msra.mxu0 0.0
  %279 = vmatprep.subr.mxu0 0.0
  %280 = vmatpush1.msra.mxu0 0.0
  %281 = vmatprep.subr.mxu0 0.0
  %282 = vmatpush1.msra.mxu0 0.0
  %283 = vmatprep.subr.mxu0 0.0
  %284 = vmatpush1.msra.mxu0 0.0
  %285 = vmatprep.subr.mxu0 0.0
  %286 = vmatpush1.msra.mxu0 0.0
  %287 = vmatprep.subr.mxu0 0.0
  %288 = vmatpush1.msra.mxu0 0.0
  %289 = vmatprep.subr.mxu0 0.0
  %290 = vmatpush1.msra.mxu0 0.0
  %291 = vmatprep.subr.mxu0 0.0
  %292 = vmatpush1.msra.mxu0 0.0
  %293 = vmatprep.subr.mxu0 0.0
  %294 = vmatpush1.msra.mxu0 0.0
  %295 = vmatprep.subr.mxu0 0.0
  %296 = vmatpush1.msra.mxu0 0.0
  %297 = vmatprep.subr.mxu0 0.0
  %298 = vmatpush1.msra.mxu0 0.0
  %299 = vmatprep.subr.mxu0 0.0
  %300 = vmatpush1.msra.mxu0 0.0
  %301 = vmatprep.subr.mxu0 0.0
  %302 = vmatpush1.msra.mxu0 0.0
  %303 = vmatprep.subr.mxu0 0.0
  %304 = vmatpush1.msra.mxu0 0.0
  %305 = vmatprep.subr.mxu0 0.0
  %306 = vmatpush1.msra.mxu0 0.0
  %307 = vmatprep.subr.mxu0 0.0
  %308 = vmatpush1.msra.mxu0 0.0
  %309 = vmatprep.subr.mxu0 0.0
  %310 = vmatpush1.msra.mxu0 0.0
  %311 = vmatprep.subr.mxu0 0.0
  %312 = vmatpush1.msra.mxu0 0.0
  %313 = vmatprep.subr.mxu0 0.0
  %314 = vmatpush1.msra.mxu0 0.0
  %315 = vmatprep.subr.mxu0 0.0
  %316 = vmatpush1.msra.mxu0 0.0
  %317 = vmatprep.subr.mxu0 0.0
  %318 = vmatpush1.msra.mxu0 0.0
  %319 = vmatprep.mubr.f32.mxu0 0.0
  %320 = vmatmul.mubr.f32.gmra.mrb[0].mxu0 %v240
  %v321 = vpop.f32.mrb[0].mxu0
  %v322 = vadd.f32 0.0, %v321
  %v323 = vpop.f32.mrb[0].mxu0
  %v324 = vadd.f32 0.0, %v323
  %325 = vmatprep.mubr.f32.mxu0 0.0
  %326 = vmatmul.mubr.f32.gmra.mrb[0].mxu0 %v243
  %v327 = vpop.f32.mrb[0].mxu0
  %v328 = vadd.f32 0.0, %v327
  %v329 = vpop.f32.mrb[0].mxu0
  %v330 = vadd.f32 0.0, %v329
  %331 = vdwg.mxu0
  %332 = vmatprep.subr.mxu0 0.0
  %333 = vmatpush1.msra.mxu0 %v228
  %334 = vmatprep.subr.mxu0 0.0
  %335 = vmatpush1.msra.mxu0 %v253
  %336 = vmatprep.subr.mxu0 0.0
  %337 = vmatpush1.msra.mxu0 0.0
  %338 = vmatprep.subr.mxu0 0.0
  %339 = vmatpush1.msra.mxu0 0.0
  %340 = vmatprep.subr.mxu0 0.0
  %341 = vmatpush1.msra.mxu0 0.0
  %342 = vmatprep.subr.mxu0 0.0
  %343 = vmatpush1.msra.mxu0 0.0
  %344 = vmatprep.subr.mxu0 0.0
  %345 = vmatpush1.msra.mxu0 0.0
  %346 = vmatprep.subr.mxu0 0.0
  %347 = vmatpush1.msra.mxu0 0.0
  %348 = vmatprep.subr.mxu0 0.0
  %349 = vmatpush1.msra.mxu0 0.0
  %350 = vmatprep.subr.mxu0 0.0
  %351 = vmatpush1.msra.mxu0 0.0
  %352 = vmatprep.subr.mxu0 0.0
  %353 = vmatpush1.msra.mxu0 0.0
  %354 = vmatprep.subr.mxu0 0.0
  %355 = vmatpush1.msra.mxu0 0.0
  %356 = vmatprep.subr.mxu0 0.0
  %357 = vmatpush1.msra.mxu0 0.0
  %358 = vmatprep.subr.mxu0 0.0
  %359 = vmatpush1.msra.mxu0 0.0
  %360 = vmatprep.subr.mxu0 0.0
  %361 = vmatpush1.msra.mxu0 0.0
  %362 = vmatprep.subr.mxu0 0.0
  %363 = vmatpush1.msra.mxu0 0.0
  %364 = vmatprep.subr.mxu0 0.0
  %365 = vmatpush1.msra.mxu0 0.0
  %366 = vmatprep.subr.mxu0 0.0
  %367 = vmatpush1.msra.mxu0 0.0
  %368 = vmatprep.subr.mxu0 0.0
  %369 = vmatpush1.msra.mxu0 0.0
  %370 = vmatprep.subr.mxu0 0.0
  %371 = vmatpush1.msra.mxu0 0.0
  %372 = vmatprep.subr.mxu0 0.0
  %373 = vmatpush1.msra.mxu0 0.0
  %374 = vmatprep.subr.mxu0 0.0
  %375 = vmatpush1.msra.mxu0 0.0
  %376 = vmatprep.subr.mxu0 0.0
  %377 = vmatpush1.msra.mxu0 0.0
  %378 = vmatprep.subr.mxu0 0.0
  %379 = vmatpush1.msra.mxu0 0.0
  %380 = vmatprep.subr.mxu0 0.0
  %381 = vmatpush1.msra.mxu0 0.0
  %382 = vmatprep.subr.mxu0 0.0
  %383 = vmatpush1.msra.mxu0 0.0
  %384 = vmatprep.subr.mxu0 0.0
  %385 = vmatpush1.msra.mxu0 0.0
  %386 = vmatprep.subr.mxu0 0.0
  %387 = vmatpush1.msra.mxu0 0.0
  %388 = vmatprep.subr.mxu0 0.0
  %389 = vmatpush1.msra.mxu0 0.0
  %390 = vmatprep.subr.mxu0 0.0
  %391 = vmatpush1.msra.mxu0 0.0
  %392 = vmatprep.subr.mxu0 0.0
  %393 = vmatpush1.msra.mxu0 0.0
  %394 = vmatprep.subr.mxu0 0.0
  %395 = vmatpush1.msra.mxu0 0.0
  %396 = vmatprep.mubr.f32.mxu0 0.0
  %397 = vmatmul.mubr.f32.gmra.mrb[0].mxu0 %v240
  %v398 = vpop.f32.mrb[0].mxu0
  %v399 = vadd.f32 0.0, %v398
  %v400 = vpop.f32.mrb[0].mxu0
  %401 = vmatprep.mubr.f32.mxu0 0.0
  %402 = vmatmul.mubr.f32.gmra.mrb[0].mxu0 %v243
  %v403 = vpop.f32.mrb[0].mxu0
  %v404 = vadd.f32 0.0, %v403
  %v405 = vpop.f32.mrb[0].mxu0
  %406 = vdwg.mxu0
  %v407 = vld [vmem:[%s3] sm:$0xff]
  %v408 = vld [vmem:[%s3 + $0x8] sm:$0xff]
  %v409 = vld [vmem:[%s3 + $0x10] sm:$0xff]
  %v410 = vld [vmem:[%s3 + $0x18] sm:$0xff]
  %v411 = vld [vmem:[%s3 + $0x20] sm:$0xff]
  %v412 = vld [vmem:[%s3 + $0x28] sm:$0xff]
  %v413 = vld [vmem:[%s3 + $0x30] sm:$0xff]
  %v414 = vld [vmem:[%s3 + $0x38] sm:$0xff]
  %v415 = vld [vmem:[%s3 + $0x40] sm:$0xff]
  %v416 = vld [vmem:[%s3 + $0x48] sm:$0xff]
  %v417 = vld [vmem:[%s3 + $0x50] sm:$0xff]
  %v418 = vld [vmem:[%s3 + $0x58] sm:$0xff]
  %v419 = vld [vmem:[%s3 + $0x60] sm:$0xff]
  %v420 = vld [vmem:[%s3 + $0x68] sm:$0xff]
  %v421 = vld [vmem:[%s3 + $0x70] sm:$0xff]
  %v422 = vld [vmem:[%s3 + $0x78] sm:$0xff]
  %v423 = vld [vmem:[%s3 + $0x80] sm:$0xff]
  %v424 = vld [vmem:[%s3 + $0x88] sm:$0xff]
  %v425 = vld [vmem:[%s3 + $0x90] sm:$0xff]
  %v426 = vld [vmem:[%s3 + $0x98] sm:$0xff]
  %v427 = vld [vmem:[%s3 + $0xa0] sm:$0xff]
  %v428 = vld [vmem:[%s3 + $0xa8] sm:$0xff]
  %v429 = vld [vmem:[%s3 + $0xb0] sm:$0xff]
  %v430 = vld [vmem:[%s3 + $0xb8] sm:$0xff]
  %v431 = vld [vmem:[%s3 + $0xc0] sm:$0xff]
  %v432 = vld [vmem:[%s3 + $0xc8] sm:$0xff]
  %v433 = vld [vmem:[%s3 + $0xd0] sm:$0xff]
  %v434 = vld [vmem:[%s3 + $0xd8] sm:$0xff]
  %v435 = vld [vmem:[%s3 + $0xe0] sm:$0xff]
  %v436 = vld [vmem:[%s3 + $0xe8] sm:$0xff]
  %v437 = vld [vmem:[%s3 + $0xf0] sm:$0xff]
  %v438 = vld [vmem:[%s3 + $0xf8] sm:$0xff]
  %v439 = vld [vmem:[%s3 + $0x100] sm:$0xff]
  %v440 = vld [vmem:[%s3 + $0x108] sm:$0xff]
  %v441 = vld [vmem:[%s3 + $0x110] sm:$0xff]
  %v442 = vld [vmem:[%s3 + $0x118] sm:$0xff]
  %v443 = vld [vmem:[%s3 + $0x120] sm:$0xff]
  %v444 = vld [vmem:[%s3 + $0x128] sm:$0xff]
  %v445 = vld [vmem:[%s3 + $0x130] sm:$0xff]
  %v446 = vld [vmem:[%s3 + $0x138] sm:$0xff]
  %v447 = vld [vmem:[%s3 + $0x140] sm:$0xff]
  %v448 = vld [vmem:[%s3 + $0x148] sm:$0xff]
  %v449 = vld [vmem:[%s3 + $0x150] sm:$0xff]
  %v450 = vld [vmem:[%s3 + $0x158] sm:$0xff]
  %v451 = vld [vmem:[%s3 + $0x160] sm:$0xff]
  %v452 = vld [vmem:[%s3 + $0x168] sm:$0xff]
  %v453 = vld [vmem:[%s3 + $0x170] sm:$0xff]
  %v454 = vld [vmem:[%s3 + $0x178] sm:$0xff]
  %v455 = vld [vmem:[%s3 + $0x180] sm:$0xff]
  %v456 = vld [vmem:[%s3 + $0x188] sm:$0xff]
  %v457 = vld [vmem:[%s3 + $0x190] sm:$0xff]
  %v458 = vld [vmem:[%s3 + $0x198] sm:$0xff]
  %v459 = vld [vmem:[%s3 + $0x1a0] sm:$0xff]
  %v460 = vld [vmem:[%s3 + $0x1a8] sm:$0xff]
  %v461 = vld [vmem:[%s3 + $0x1b0] sm:$0xff]
  %v462 = vld [vmem:[%s3 + $0x1b8] sm:$0xff]
  %v463 = vld [vmem:[%s3 + $0x1c0] sm:$0xff]
  %v464 = vld [vmem:[%s3 + $0x1c8] sm:$0xff]
  %v465 = vld [vmem:[%s3 + $0x1d0] sm:$0xff]
  %v466 = vld [vmem:[%s3 + $0x1d8] sm:$0xff]
  %v467 = vld [vmem:[%s3 + $0x1e0] sm:$0xff]
  %v468 = vld [vmem:[%s3 + $0x1e8] sm:$0xff]
  %v469 = vld [vmem:[%s3 + $0x1f0] sm:$0xff]
  %v470 = vld [vmem:[%s3 + $0x1f8] sm:$0xff]
  %v471 = vld [vmem:[%s3 + $0x200] sm:$0xff]
  %v472 = vld [vmem:[%s3 + $0x208] sm:$0xff]
  %v473 = vld [vmem:[%s3 + $0x210] sm:$0xff]
  %v474 = vld [vmem:[%s3 + $0x218] sm:$0xff]
  %v475 = vld [vmem:[%s3 + $0x220] sm:$0xff]
  %v476 = vld [vmem:[%s3 + $0x228] sm:$0xff]
  %v477 = vld [vmem:[%s3 + $0x230] sm:$0xff]
  %v478 = vld [vmem:[%s3 + $0x238] sm:$0xff]
  %v479 = vld [vmem:[%s3 + $0x240] sm:$0xff]
  %v480 = vld [vmem:[%s3 + $0x248] sm:$0xff]
  %v481 = vld [vmem:[%s3 + $0x250] sm:$0xff]
  %v482 = vld [vmem:[%s3 + $0x258] sm:$0xff]
  %v483 = vld [vmem:[%s3 + $0x260] sm:$0xff]
  %v484 = vld [vmem:[%s3 + $0x268] sm:$0xff]
  %v485 = vld [vmem:[%s3 + $0x270] sm:$0xff]
  %v486 = vld [vmem:[%s3 + $0x278] sm:$0xff]
  %v487 = vld [vmem:[%s3 + $0x280] sm:$0xff]
  %v488 = vld [vmem:[%s3 + $0x288] sm:$0xff]
  %v489 = vld [vmem:[%s3 + $0x290] sm:$0xff]
  %v490 = vld [vmem:[%s3 + $0x298] sm:$0xff]
  %v491 = vld [vmem:[%s3 + $0x2a0] sm:$0xff]
  %v492 = vld [vmem:[%s3 + $0x2a8] sm:$0xff]
  %v493 = vld [vmem:[%s3 + $0x2b0] sm:$0xff]
  %v494 = vld [vmem:[%s3 + $0x2b8] sm:$0xff]
  %v495 = vld [vmem:[%s3 + $0x2c0] sm:$0xff]
  %v496 = vld [vmem:[%s3 + $0x2c8] sm:$0xff]
  %v497 = vld [vmem:[%s3 + $0x2d0] sm:$0xff]
  %v498 = vld [vmem:[%s3 + $0x2d8] sm:$0xff]
  %v499 = vld [vmem:[%s3 + $0x2e0] sm:$0xff]
  %v500 = vld [vmem:[%s3 + $0x2e8] sm:$0xff]
  %v501 = vld [vmem:[%s3 + $0x2f0] sm:$0xff]
  %v502 = vld [vmem:[%s3 + $0x2f8] sm:$0xff]
  %v503 = vld [vmem:[%s3 + $0x300] sm:$0xff]
  %v504 = vld [vmem:[%s3 + $0x308] sm:$0xff]
  %v505 = vld [vmem:[%s3 + $0x310] sm:$0xff]
  %v506 = vld [vmem:[%s3 + $0x318] sm:$0xff]
  %v507 = vld [vmem:[%s3 + $0x320] sm:$0xff]
  %v508 = vld [vmem:[%s3 + $0x328] sm:$0xff]
  %v509 = vld [vmem:[%s3 + $0x330] sm:$0xff]
  %v510 = vld [vmem:[%s3 + $0x338] sm:$0xff]
  %v511 = vld [vmem:[%s3 + $0x340] sm:$0xff]
  %v512 = vld [vmem:[%s3 + $0x348] sm:$0xff]
  %v513 = vld [vmem:[%s3 + $0x350] sm:$0xff]
  %v514 = vld [vmem:[%s3 + $0x358] sm:$0xff]
  %v515 = vld [vmem:[%s3 + $0x360] sm:$0xff]
  %v516 = vld [vmem:[%s3 + $0x368] sm:$0xff]
  %v517 = vld [vmem:[%s3 + $0x370] sm:$0xff]
  %v518 = vld [vmem:[%s3 + $0x378] sm:$0xff]
  %v519 = vld [vmem:[%s3 + $0x380] sm:$0xff]
  %v520 = vld [vmem:[%s3 + $0x388] sm:$0xff]
  %v521 = vld [vmem:[%s3 + $0x390] sm:$0xff]
  %v522 = vld [vmem:[%s3 + $0x398] sm:$0xff]
  %v523 = vld [vmem:[%s3 + $0x3a0] sm:$0xff]
  %v524 = vld [vmem:[%s3 + $0x3a8] sm:$0xff]
  %v525 = vld [vmem:[%s3 + $0x3b0] sm:$0xff]
  %v526 = vld [vmem:[%s3 + $0x3b8] sm:$0xff]
  %v527 = vld [vmem:[%s4] sm:$0x7]
  %v529 = vlaneseq
  %v530 = vshrl.u32 %v529, 7
  %v531 = vsub.s32 0, %v530
  %v532 = vrot.slane %v527, %v531
  %v533 = vlaneseq
  %v534 = vshrl.u32 %v533, 7
  %v535 = vsub.s32 1, %v534
  %v536 = vrot.slane %v527, %v535
  %v537 = vlaneseq
  %v538 = vshrl.u32 %v537, 7
  %v539 = vsub.s32 2, %v538
  %v540 = vrot.slane %v527, %v539
  %vm544 = vcmask 523264
  %v546 = vsel %vm544, %v399, 0
  %v549 = vsel %vm544, %v404, 0
  %551 = vmatprep.subr.mxu0 %v408
  %552 = vmatpush1.msra.mxu0 %v407
  %553 = vmatprep.subr.mxu0 %v411
  %554 = vmatpush1.msra.mxu0 %v410
  %555 = vmatprep.subr.mxu0 %v414
  %556 = vmatpush1.msra.mxu0 %v413
  %557 = vmatprep.subr.mxu0 %v417
  %558 = vmatpush1.msra.mxu0 %v416
  %559 = vmatprep.subr.mxu0 %v420
  %560 = vmatpush1.msra.mxu0 %v419
  %561 = vmatprep.subr.mxu0 %v423
  %562 = vmatpush1.msra.mxu0 %v422
  %563 = vmatprep.subr.mxu0 %v426
  %564 = vmatpush1.msra.mxu0 %v425
  %565 = vmatprep.subr.mxu0 %v429
  %566 = vmatpush1.msra.mxu0 %v428
  %567 = vmatprep.subr.mxu0 %v432
  %568 = vmatpush1.msra.mxu0 %v431
  %569 = vmatprep.subr.mxu0 %v435
  %570 = vmatpush1.msra.mxu0 %v434
  %571 = vmatprep.subr.mxu0 %v438
  %572 = vmatpush1.msra.mxu0 %v437
  %573 = vmatprep.subr.mxu0 %v441
  %574 = vmatpush1.msra.mxu0 %v440
  %575 = vmatprep.subr.mxu0 %v444
  %576 = vmatpush1.msra.mxu0 %v443
  %577 = vmatprep.subr.mxu0 %v447
  %578 = vmatpush1.msra.mxu0 %v446
  %579 = vmatprep.subr.mxu0 %v450
  %580 = vmatpush1.msra.mxu0 %v449
  %581 = vmatprep.subr.mxu0 %v453
  %582 = vmatpush1.msra.mxu0 %v452
  %583 = vmatprep.subr.mxu0 %v456
  %584 = vmatpush1.msra.mxu0 %v455
  %585 = vmatprep.subr.mxu0 %v459
  %586 = vmatpush1.msra.mxu0 %v458
  %587 = vmatprep.subr.mxu0 %v462
  %588 = vmatpush1.msra.mxu0 %v461
  %589 = vmatprep.subr.mxu0 %v465
  %590 = vmatpush1.msra.mxu0 %v464
  %591 = vmatprep.subr.mxu0 %v468
  %592 = vmatpush1.msra.mxu0 %v467
  %593 = vmatprep.subr.mxu0 %v471
  %594 = vmatpush1.msra.mxu0 %v470
  %595 = vmatprep.subr.mxu0 %v474
  %596 = vmatpush1.msra.mxu0 %v473
  %597 = vmatprep.subr.mxu0 %v477
  %598 = vmatpush1.msra.mxu0 %v476
  %599 = vmatprep.subr.mxu0 %v480
  %600 = vmatpush1.msra.mxu0 %v479
  %601 = vmatprep.subr.mxu0 %v483
  %602 = vmatpush1.msra.mxu0 %v482
  %603 = vmatprep.subr.mxu0 %v486
  %604 = vmatpush1.msra.mxu0 %v485
  %605 = vmatprep.subr.mxu0 %v489
  %606 = vmatpush1.msra.mxu0 %v488
  %607 = vmatprep.subr.mxu0 %v492
  %608 = vmatpush1.msra.mxu0 %v491
  %609 = vmatprep.subr.mxu0 %v495
  %610 = vmatpush1.msra.mxu0 %v494
  %611 = vmatprep.subr.mxu0 %v498
  %612 = vmatpush1.msra.mxu0 %v497
  %613 = vmatprep.subr.mxu0 %v501
  %614 = vmatpush1.msra.mxu0 %v500
  %615 = vmatprep.mubr.f32.mxu0 %v324
  %616 = vmatmul.mubr.f32.gmra.mrb[0].mxu0 %v322
  %v617 = vpop.f32.mrb[0].mxu0
  %v618 = vadd.f32 %v532, %v617
  %v619 = vpop.f32.mrb[0].mxu0
  %v620 = vadd.f32 %v536, %v619
  %621 = vmatprep.mubr.f32.mxu0 %v330
  %622 = vmatmul.mubr.f32.gmra.mrb[0].mxu0 %v328
  %v623 = vpop.f32.mrb[0].mxu0
  %v624 = vadd.f32 %v532, %v623
  %v625 = vpop.f32.mrb[0].mxu0
  %v626 = vadd.f32 %v536, %v625
  %627 = vdwg.mxu0
  %628 = vmatprep.subr.mxu0 %v504
  %629 = vmatpush1.msra.mxu0 %v503
  %630 = vmatprep.subr.mxu0 %v507
  %631 = vmatpush1.msra.mxu0 %v506
  %632 = vmatprep.subr.mxu0 %v510
  %633 = vmatpush1.msra.mxu0 %v509
  %634 = vmatprep.subr.mxu0 %v513
  %635 = vmatpush1.msra.mxu0 %v512
  %636 = vmatprep.subr.mxu0 %v516
  %637 = vmatpush1.msra.mxu0 %v515
  %638 = vmatprep.subr.mxu0 %v519
  %639 = vmatpush1.msra.mxu0 %v518
  %640 = vmatprep.subr.mxu0 %v522
  %641 = vmatpush1.msra.mxu0 %v521
  %642 = vmatprep.subr.mxu0 %v525
  %643 = vmatpush1.msra.mxu0 %v524
  %644 = vmatprep.subr.mxu0 0.0
  %645 = vmatpush1.msra.mxu0 0.0
  %646 = vmatprep.subr.mxu0 0.0
  %647 = vmatpush1.msra.mxu0 0.0
  %648 = vmatprep.subr.mxu0 0.0
  %649 = vmatpush1.msra.mxu0 0.0
  %650 = vmatprep.subr.mxu0 0.0
  %651 = vmatpush1.msra.mxu0 0.0
  %652 = vmatprep.subr.mxu0 0.0
  %653 = vmatpush1.msra.mxu0 0.0
  %654 = vmatprep.subr.mxu0 0.0
  %655 = vmatpush1.msra.mxu0 0.0
  %656 = vmatprep.subr.mxu0 0.0
  %657 = vmatpush1.msra.mxu0 0.0
  %658 = vmatprep.subr.mxu0 0.0
  %659 = vmatpush1.msra.mxu0 0.0
  %660 = vmatprep.subr.mxu0 0.0
  %661 = vmatpush1.msra.mxu0 0.0
  %662 = vmatprep.subr.mxu0 0.0
  %663 = vmatpush1.msra.mxu0 0.0
  %664 = vmatprep.subr.mxu0 0.0
  %665 = vmatpush1.msra.mxu0 0.0
  %666 = vmatprep.subr.mxu0 0.0
  %667 = vmatpush1.msra.mxu0 0.0
  %668 = vmatprep.subr.mxu0 0.0
  %669 = vmatpush1.msra.mxu0 0.0
  %670 = vmatprep.subr.mxu0 0.0
  %671 = vmatpush1.msra.mxu0 0.0
  %672 = vmatprep.subr.mxu0 0.0
  %673 = vmatpush1.msra.mxu0 0.0
  %674 = vmatprep.subr.mxu0 0.0
  %675 = vmatpush1.msra.mxu0 0.0
  %676 = vmatprep.subr.mxu0 0.0
  %677 = vmatpush1.msra.mxu0 0.0
  %678 = vmatprep.subr.mxu0 0.0
  %679 = vmatpush1.msra.mxu0 0.0
  %680 = vmatprep.subr.mxu0 0.0
  %681 = vmatpush1.msra.mxu0 0.0
  %682 = vmatprep.subr.mxu0 0.0
  %683 = vmatpush1.msra.mxu0 0.0
  %684 = vmatprep.subr.mxu0 0.0
  %685 = vmatpush1.msra.mxu0 0.0
  %686 = vmatprep.subr.mxu0 0.0
  %687 = vmatpush1.msra.mxu0 0.0
  %688 = vmatprep.subr.mxu0 0.0
  %689 = vmatpush1.msra.mxu0 0.0
  %690 = vmatprep.subr.mxu0 0.0
  %691 = vmatpush1.msra.mxu0 0.0
  %692 = vmatprep.mubr.f32.mxu0 0.0
  %693 = vmatmul.mubr.f32.gmra.mrb[0].mxu0 %v546
  %v694 = vpop.f32.mrb[0].mxu0
  %v695 = vadd.f32 %v618, %v694
  %v696 = vpop.f32.mrb[0].mxu0
  %v697 = vadd.f32 %v620, %v696
  %698 = vmatprep.mubr.f32.mxu0 0.0
  %699 = vmatmul.mubr.f32.gmra.mrb[0].mxu0 %v549
  %v700 = vpop.f32.mrb[0].mxu0
  %v701 = vadd.f32 %v624, %v700
  %v702 = vpop.f32.mrb[0].mxu0
  %v703 = vadd.f32 %v626, %v702
  %704 = vdwg.mxu0
  %705 = vmatprep.subr.mxu0 0.0
  %706 = vmatpush1.msra.mxu0 %v409
  %707 = vmatprep.subr.mxu0 0.0
  %708 = vmatpush1.msra.mxu0 %v412
  %709 = vmatprep.subr.mxu0 0.0
  %710 = vmatpush1.msra.mxu0 %v415
  %711 = vmatprep.subr.mxu0 0.0
  %712 = vmatpush1.msra.mxu0 %v418
  %713 = vmatprep.subr.mxu0 0.0
  %714 = vmatpush1.msra.mxu0 %v421
  %715 = vmatprep.subr.mxu0 0.0
  %716 = vmatpush1.msra.mxu0 %v424
  %717 = vmatprep.subr.mxu0 0.0
  %718 = vmatpush1.msra.mxu0 %v427
  %719 = vmatprep.subr.mxu0 0.0
  %720 = vmatpush1.msra.mxu0 %v430
  %721 = vmatprep.subr.mxu0 0.0
  %722 = vmatpush1.msra.mxu0 %v433
  %723 = vmatprep.subr.mxu0 0.0
  %724 = vmatpush1.msra.mxu0 %v436
  %725 = vmatprep.subr.mxu0 0.0
  %726 = vmatpush1.msra.mxu0 %v439
  %727 = vmatprep.subr.mxu0 0.0
  %728 = vmatpush1.msra.mxu0 %v442
  %729 = vmatprep.subr.mxu0 0.0
  %730 = vmatpush1.msra.mxu0 %v445
  %731 = vmatprep.subr.mxu0 0.0
  %732 = vmatpush1.msra.mxu0 %v448
  %733 = vmatprep.subr.mxu0 0.0
  %734 = vmatpush1.msra.mxu0 %v451
  %735 = vmatprep.subr.mxu0 0.0
  %736 = vmatpush1.msra.mxu0 %v454
  %737 = vmatprep.subr.mxu0 0.0
  %738 = vmatpush1.msra.mxu0 %v457
  %739 = vmatprep.subr.mxu0 0.0
  %740 = vmatpush1.msra.mxu0 %v460
  %741 = vmatprep.subr.mxu0 0.0
  %742 = vmatpush1.msra.mxu0 %v463
  %743 = vmatprep.subr.mxu0 0.0
  %744 = vmatpush1.msra.mxu0 %v466
  %745 = vmatprep.subr.mxu0 0.0
  %746 = vmatpush1.msra.mxu0 %v469
  %747 = vmatprep.subr.mxu0 0.0
  %748 = vmatpush1.msra.mxu0 %v472
  %749 = vmatprep.subr.mxu0 0.0
  %750 = vmatpush1.msra.mxu0 %v475
  %751 = vmatprep.subr.mxu0 0.0
  %752 = vmatpush1.msra.mxu0 %v478
  %753 = vmatprep.subr.mxu0 0.0
  %754 = vmatpush1.msra.mxu0 %v481
  %755 = vmatprep.subr.mxu0 0.0
  %756 = vmatpush1.msra.mxu0 %v484
  %757 = vmatprep.subr.mxu0 0.0
  %758 = vmatpush1.msra.mxu0 %v487
  %759 = vmatprep.subr.mxu0 0.0
  %760 = vmatpush1.msra.mxu0 %v490
  %761 = vmatprep.subr.mxu0 0.0
  %762 = vmatpush1.msra.mxu0 %v493
  %763 = vmatprep.subr.mxu0 0.0
  %764 = vmatpush1.msra.mxu0 %v496
  %765 = vmatprep.subr.mxu0 0.0
  %766 = vmatpush1.msra.mxu0 %v499
  %767 = vmatprep.subr.mxu0 0.0
  %768 = vmatpush1.msra.mxu0 %v502
  %769 = vmatprep.mubr.f32.mxu0 %v324
  %770 = vmatmul.mubr.f32.gmra.mrb[0].mxu0 %v322
  %v771 = vpop.f32.mrb[0].mxu0
  %v772 = vadd.f32 %v540, %v771
  %v773 = vpop.f32.mrb[0].mxu0
  %774 = vmatprep.mubr.f32.mxu0 %v330
  %775 = vmatmul.mubr.f32.gmra.mrb[0].mxu0 %v328
  %v776 = vpop.f32.mrb[0].mxu0
  %v777 = vadd.f32 %v540, %v776
  %v778 = vpop.f32.mrb[0].mxu0
  %779 = vdwg.mxu0
  %780 = vmatprep.subr.mxu0 0.0
  %781 = vmatpush1.msra.mxu0 %v505
  %782 = vmatprep.subr.mxu0 0.0
  %783 = vmatpush1.msra.mxu0 %v508
  %784 = vmatprep.subr.mxu0 0.0
  %785 = vmatpush1.msra.mxu0 %v511
  %786 = vmatprep.subr.mxu0 0.0
  %787 = vmatpush1.msra.mxu0 %v514
  %788 = vmatprep.subr.mxu0 0.0
  %789 = vmatpush1.msra.mxu0 %v517
  %790 = vmatprep.subr.mxu0 0.0
  %791 = vmatpush1.msra.mxu0 %v520
  %792 = vmatprep.subr.mxu0 0.0
  %793 = vmatpush1.msra.mxu0 %v523
  %794 = vmatprep.subr.mxu0 0.0
  %795 = vmatpush1.msra.mxu0 %v526
  %796 = vmatprep.subr.mxu0 0.0
  %797 = vmatpush1.msra.mxu0 0.0
  %798 = vmatprep.subr.mxu0 0.0
  %799 = vmatpush1.msra.mxu0 0.0
  %800 = vmatprep.subr.mxu0 0.0
  %801 = vmatpush1.msra.mxu0 0.0
  %802 = vmatprep.subr.mxu0 0.0
  %803 = vmatpush1.msra.mxu0 0.0
  %804 = vmatprep.subr.mxu0 0.0
  %805 = vmatpush1.msra.mxu0 0.0
  %806 = vmatprep.subr.mxu0 0.0
  %807 = vmatpush1.msra.mxu0 0.0
  %808 = vmatprep.subr.mxu0 0.0
  %809 = vmatpush1.msra.mxu0 0.0
  %810 = vmatprep.subr.mxu0 0.0
  %811 = vmatpush1.msra.mxu0 0.0
  %812 = vmatprep.subr.mxu0 0.0
  %813 = vmatpush1.msra.mxu0 0.0
  %814 = vmatprep.subr.mxu0 0.0
  %815 = vmatpush1.msra.mxu0 0.0
  %816 = vmatprep.subr.mxu0 0.0
  %817 = vmatpush1.msra.mxu0 0.0
  %818 = vmatprep.subr.mxu0 0.0
  %819 = vmatpush1.msra.mxu0 0.0
  %820 = vmatprep.subr.mxu0 0.0
  %821 = vmatpush1.msra.mxu0 0.0
  %822 = vmatprep.subr.mxu0 0.0
  %823 = vmatpush1.msra.mxu0 0.0
  %824 = vmatprep.subr.mxu0 0.0
  %825 = vmatpush1.msra.mxu0 0.0
  %826 = vmatprep.subr.mxu0 0.0
  %827 = vmatpush1.msra.mxu0 0.0
  %828 = vmatprep.subr.mxu0 0.0
  %829 = vmatpush1.msra.mxu0 0.0
  %830 = vmatprep.subr.mxu0 0.0
  %831 = vmatpush1.msra.mxu0 0.0
  %832 = vmatprep.subr.mxu0 0.0
  %833 = vmatpush1.msra.mxu0 0.0
  %834 = vmatprep.subr.mxu0 0.0
  %835 = vmatpush1.msra.mxu0 0.0
  %836 = vmatprep.subr.mxu0 0.0
  %837 = vmatpush1.msra.mxu0 0.0
  %838 = vmatprep.subr.mxu0 0.0
  %839 = vmatpush1.msra.mxu0 0.0
  %840 = vmatprep.subr.mxu0 0.0
  %841 = vmatpush1.msra.mxu0 0.0
  %842 = vmatprep.subr.mxu0 0.0
  %843 = vmatpush1.msra.mxu0 0.0
  %844 = vmatprep.mubr.f32.mxu0 0.0
  %845 = vmatmul.mubr.f32.gmra.mrb[0].mxu0 %v546
  %v846 = vpop.f32.mrb[0].mxu0
  %v847 = vadd.f32 %v772, %v846
  %v848 = vpop.f32.mrb[0].mxu0
  %849 = vmatprep.mubr.f32.mxu0 0.0
  %850 = vmatmul.mubr.f32.gmra.mrb[0].mxu0 %v549
  %v851 = vpop.f32.mrb[0].mxu0
  %v852 = vadd.f32 %v777, %v851
  %v853 = vpop.f32.mrb[0].mxu0
  %854 = vdwg.mxu0
  %v855 = vld [vmem:[%s5] sm:$0xff]
  %v856 = vld [vmem:[%s5 + $0x8] sm:$0xff]
  %v857 = vld [vmem:[%s5 + $0x10] sm:$0xff]
  %v858 = vld [vmem:[%s5 + $0x18] sm:$0x1]
  %v859 = vld [vmem:[%s5 + $0x20] sm:$0x1]
  %v860 = vld [vmem:[%s5 + $0x28] sm:$0x1]
  %v861 = vadd.f32 %v695, %v855
  %v862 = vadd.f32 %v697, %v856
  %v863 = vadd.f32 %v847, %v857
  %v864 = vadd.f32 %v701, %v858
  %v865 = vadd.f32 %v703, %v859
  %v866 = vadd.f32 %v852, %v860
  %867 = vst [vmem:[%s6] sm:$0xff] %v861
  %868 = vst [vmem:[%s6 + $0x8] sm:$0xff] %v862
  %869 = vst.msk [vmem:[%s6 + $0x10] sm:$0xff] %vm544, %v863
  %870 = vst [vmem:[%s6 + $0x18] sm:$0x1] %v864
  %871 = vst [vmem:[%s6 + $0x20] sm:$0x1] %v865
  %vm872 = vcmask 516096
  %873 = vst.msk [vmem:[%s6 + $0x28] sm:$0x1] %vm872, %v866
  // Predicated region
  $region26: #{_lambda_.17} parent=0 // pred_check
    _
  $region27: #{_lambda_.17} parent=0 // pred_check_branch
    %875 = sbr.rel (0) target = $region29
  $region28: #{_lambda_.17} parent=0 // pred_region
    _
  $region29: #{_lambda_.17} parent=0 // pred_fallthru
    _
  // Predicated region
  $region30: #{_lambda_.17} parent=0 // pred_check
    _
  $region31: #{_lambda_.17} parent=0 // pred_check_branch
    %877 = sbr.rel (0) target = $region33
  $region32: #{_lambda_.17} parent=0 // pred_region
    _
  $region33: #{_lambda_.17} parent=0 // pred_fallthru
    _

// kernel: _lambda_.15
$region0: #{_lambda_.15}
  #allocation0 [shape = 'u32[]', space=smem, size = 0x4, offset = 0x4, fixed_abs, tag = 'smem constant byte address 0x4 - core index']
  #allocation1 [shape = 'u32[144,128]{1,0:T(1,128)}', space=vmem, size = 0x12000, scoped, tag = 'internal scratch']
  %s0 = inlined_call_operand.vmem [shape: f32[5,5], index: 0, kind: input, shape index: {}]
  %s1 = inlined_call_operand.vmem [shape: f32[5,320], index: 1, kind: input, shape index: {}]
  %s2 = inlined_call_operand.vmem [shape: s32[2,1], index: 2, kind: input, shape index: {}]
  %s3 = inlined_call_operand.vmem [shape: f32[2,1], index: 3, kind: input, shape index: {}]
  %s4 = inlined_call_operand.vmem [shape: f32[320,320], index: 4, kind: input, shape index: {}]
  %s5 = inlined_call_operand.vmem [shape: f32[1,320], index: 5, kind: input, shape index: {}]
  %s6 = inlined_call_operand.vmem [shape: f32[2,320], index: 6, kind: output, shape index: {}]
  %s7 = sld [smem:[#allocation0]]
  $region34: #{_lambda_.15} parent=0
    _
  %s9 = ssub.s32 1, %s7
  %s10 = scalar_select 0, %s9, %s7
  // Predicated region
  $region2: #{_lambda_.15} parent=0 // pred_check
    _
  $region3: #{_lambda_.15} parent=0 // pred_check_branch
    %12 = sbr.rel (0) target = $region5
  $region4: #{_lambda_.15} parent=0 // pred_region
    _
  $region5: #{_lambda_.15} parent=0 // pred_fallthru
    _
  // Predicated region
  $region6: #{_lambda_.15} parent=0 // pred_check
    _
  $region7: #{_lambda_.15} parent=0 // pred_check_branch
    %14 = sbr.rel (0) target = $region9
  $region8: #{_lambda_.15} parent=0 // pred_region
    _
  $region9: #{_lambda_.15} parent=0 // pred_fallthru
    _
  // Predicated region
  $region10: #{_lambda_.15} parent=0 // pred_check
    _
  $region11: #{_lambda_.15} parent=0 // pred_check_branch
    %16 = sbr.rel (0) target = $region13
  $region12: #{_lambda_.15} parent=0 // pred_region
    _
  $region13: #{_lambda_.15} parent=0 // pred_fallthru
    _
  // Predicated region
  $region14: #{_lambda_.15} parent=0 // pred_check
    _
  $region15: #{_lambda_.15} parent=0 // pred_check_branch
    %18 = sbr.rel (0) target = $region17
  $region16: #{_lambda_.15} parent=0 // pred_region
    _
  $region17: #{_lambda_.15} parent=0 // pred_fallthru
    _
  // Predicated region
  $region18: #{_lambda_.15} parent=0 // pred_check
    _
  $region19: #{_lambda_.15} parent=0 // pred_check_branch
    %20 = sbr.rel (0) target = $region21
  $region20: #{_lambda_.15} parent=0 // pred_region
    _
  $region21: #{_lambda_.15} parent=0 // pred_fallthru
    _
  // Predicated region
  $region22: #{_lambda_.15} parent=0 // pred_check
    _
  $region23: #{_lambda_.15} parent=0 // pred_check_branch
    %22 = sbr.rel (0) target = $region25
  $region24: #{_lambda_.15} parent=0 // pred_region
    _
  $region25: #{_lambda_.15} parent=0 // pred_fallthru
    _
  %v23 = vld [vmem:[%s2] sm:$0x3]
  %v24 = vlaneseq
  %v25 = vand.u32 %v24, 127
  %26 = vset.pattern.permute.xlu0 0
  %27 = vperm.xlu0 %26, %v23
  %v28 = vpop.permute.xlu0 %27
  %vm29 = vcmp.eq.s32.totalorder %v25, %v28
  %v30 = vsel %vm29, 1, 0
  %v31 = vcvt.s32.f32 %v30
  %v32 = vld [vmem:[%s1] sm:$0x1f]
  %v33 = vld [vmem:[%s1 + $0x8] sm:$0x1f]
  %v34 = vld [vmem:[%s1 + $0x10] sm:$0x1f]
  %vm35 = vcmask 39936
  %v37 = vsel %vm35, %v31, 0
  %vm39 = vcmask 1044480
  %v41 = vsel %vm39, %v32, 0
  %v44 = vsel %vm39, %v33, 0
  %v47 = vsel %vm39, %v34, 0
  %49 = vmatprep.subr.mxu0 %v44
  %50 = vmatpush1.msra.mxu0 %v41
  %51 = vmatprep.subr.mxu0 0.0
  %52 = vmatpush1.msra.mxu0 0.0
  %53 = vmatprep.subr.mxu0 0.0
  %54 = vmatpush1.msra.mxu0 0.0
  %55 = vmatprep.subr.mxu0 0.0
  %56 = vmatpush1.msra.mxu0 0.0
  %57 = vmatprep.subr.mxu0 0.0
  %58 = vmatpush1.msra.mxu0 0.0
  %59 = vmatprep.subr.mxu0 0.0
  %60 = vmatpush1.msra.mxu0 0.0
  %61 = vmatprep.subr.mxu0 0.0
  %62 = vmatpush1.msra.mxu0 0.0
  %63 = vmatprep.subr.mxu0 0.0
  %64 = vmatpush1.msra.mxu0 0.0
  %65 = vmatprep.subr.mxu0 0.0
  %66 = vmatpush1.msra.mxu0 0.0
  %67 = vmatprep.subr.mxu0 0.0
  %68 = vmatpush1.msra.mxu0 0.0
  %69 = vmatprep.subr.mxu0 0.0
  %70 = vmatpush1.msra.mxu0 0.0
  %71 = vmatprep.subr.mxu0 0.0
  %72 = vmatpush1.msra.mxu0 0.0
  %73 = vmatprep.subr.mxu0 0.0
  %74 = vmatpush1.msra.mxu0 0.0
  %75 = vmatprep.subr.mxu0 0.0
  %76 = vmatpush1.msra.mxu0 0.0
  %77 = vmatprep.subr.mxu0 0.0
  %78 = vmatpush1.msra.mxu0 0.0
  %79 = vmatprep.subr.mxu0 0.0
  %80 = vmatpush1.msra.mxu0 0.0
  %81 = vmatprep.subr.mxu0 0.0
  %82 = vmatpush1.msra.mxu0 0.0
  %83 = vmatprep.subr.mxu0 0.0
  %84 = vmatpush1.msra.mxu0 0.0
  %85 = vmatprep.subr.mxu0 0.0
  %86 = vmatpush1.msra.mxu0 0.0
  %87 = vmatprep.subr.mxu0 0.0
  %88 = vmatpush1.msra.mxu0 0.0
  %89 = vmatprep.subr.mxu0 0.0
  %90 = vmatpush1.msra.mxu0 0.0
  %91 = vmatprep.subr.mxu0 0.0
  %92 = vmatpush1.msra.mxu0 0.0
  %93 = vmatprep.subr.mxu0 0.0
  %94 = vmatpush1.msra.mxu0 0.0
  %95 = vmatprep.subr.mxu0 0.0
  %96 = vmatpush1.msra.mxu0 0.0
  %97 = vmatprep.subr.mxu0 0.0
  %98 = vmatpush1.msra.mxu0 0.0
  %99 = vmatprep.subr.mxu0 0.0
  %100 = vmatpush1.msra.mxu0 0.0
  %101 = vmatprep.subr.mxu0 0.0
  %102 = vmatpush1.msra.mxu0 0.0
  %103 = vmatprep.subr.mxu0 0.0
  %104 = vmatpush1.msra.mxu0 0.0
  %105 = vmatprep.subr.mxu0 0.0
  %106 = vmatpush1.msra.mxu0 0.0
  %107 = vmatprep.subr.mxu0 0.0
  %108 = vmatpush1.msra.mxu0 0.0
  %109 = vmatprep.subr.mxu0 0.0
  %110 = vmatpush1.msra.mxu0 0.0
  %111 = vmatprep.subr.mxu0 0.0
  %112 = vmatpush1.msra.mxu0 0.0
  %113 = vmatprep.mubr.f32.mxu0 0.0
  %114 = vmatmul.mubr.f32.gmra.mrb[0].mxu0 %v37
  %v115 = vpop.f32.mrb[0].mxu0
  %v116 = vadd.f32 0.0, %v115
  %v117 = vpop.f32.mrb[0].mxu0
  %v118 = vadd.f32 0.0, %v117
  %119 = vdwg.mxu0
  %120 = vmatprep.subr.mxu0 0.0
  %121 = vmatpush1.msra.mxu0 %v47
  %122 = vmatprep.subr.mxu0 0.0
  %123 = vmatpush1.msra.mxu0 0.0
  %124 = vmatprep.subr.mxu0 0.0
  %125 = vmatpush1.msra.mxu0 0.0
  %126 = vmatprep.subr.mxu0 0.0
  %127 = vmatpush1.msra.mxu0 0.0
  %128 = vmatprep.subr.mxu0 0.0
  %129 = vmatpush1.msra.mxu0 0.0
  %130 = vmatprep.subr.mxu0 0.0
  %131 = vmatpush1.msra.mxu0 0.0
  %132 = vmatprep.subr.mxu0 0.0
  %133 = vmatpush1.msra.mxu0 0.0
  %134 = vmatprep.subr.mxu0 0.0
  %135 = vmatpush1.msra.mxu0 0.0
  %136 = vmatprep.subr.mxu0 0.0
  %137 = vmatpush1.msra.mxu0 0.0
  %138 = vmatprep.subr.mxu0 0.0
  %139 = vmatpush1.msra.mxu0 0.0
  %140 = vmatprep.subr.mxu0 0.0
  %141 = vmatpush1.msra.mxu0 0.0
  %142 = vmatprep.subr.mxu0 0.0
  %143 = vmatpush1.msra.mxu0 0.0
  %144 = vmatprep.subr.mxu0 0.0
  %145 = vmatpush1.msra.mxu0 0.0
  %146 = vmatprep.subr.mxu0 0.0
  %147 = vmatpush1.msra.mxu0 0.0
  %148 = vmatprep.subr.mxu0 0.0
  %149 = vmatpush1.msra.mxu0 0.0
  %150 = vmatprep.subr.mxu0 0.0
  %151 = vmatpush1.msra.mxu0 0.0
  %152 = vmatprep.subr.mxu0 0.0
  %153 = vmatpush1.msra.mxu0 0.0
  %154 = vmatprep.subr.mxu0 0.0
  %155 = vmatpush1.msra.mxu0 0.0
  %156 = vmatprep.subr.mxu0 0.0
  %157 = vmatpush1.msra.mxu0 0.0
  %158 = vmatprep.subr.mxu0 0.0
  %159 = vmatpush1.msra.mxu0 0.0
  %160 = vmatprep.subr.mxu0 0.0
  %161 = vmatpush1.msra.mxu0 0.0
  %162 = vmatprep.subr.mxu0 0.0
  %163 = vmatpush1.msra.mxu0 0.0
  %164 = vmatprep.subr.mxu0 0.0
  %165 = vmatpush1.msra.mxu0 0.0
  %166 = vmatprep.subr.mxu0 0.0
  %167 = vmatpush1.msra.mxu0 0.0
  %168 = vmatprep.subr.mxu0 0.0
  %169 = vmatpush1.msra.mxu0 0.0
  %170 = vmatprep.subr.mxu0 0.0
  %171 = vmatpush1.msra.mxu0 0.0
  %172 = vmatprep.subr.mxu0 0.0
  %173 = vmatpush1.msra.mxu0 0.0
  %174 = vmatprep.subr.mxu0 0.0
  %175 = vmatpush1.msra.mxu0 0.0
  %176 = vmatprep.subr.mxu0 0.0
  %177 = vmatpush1.msra.mxu0 0.0
  %178 = vmatprep.subr.mxu0 0.0
  %179 = vmatpush1.msra.mxu0 0.0
  %180 = vmatprep.subr.mxu0 0.0
  %181 = vmatpush1.msra.mxu0 0.0
  %182 = vmatprep.subr.mxu0 0.0
  %183 = vmatpush1.msra.mxu0 0.0
  %184 = vmatprep.mubr.f32.mxu0 0.0
  %185 = vmatmul.mubr.f32.gmra.mrb[0].mxu0 %v37
  %v186 = vpop.f32.mrb[0].mxu0
  %v187 = vadd.f32 0.0, %v186
  %v188 = vpop.f32.mrb[0].mxu0
  %189 = vdwg.mxu0
  %v190 = vld [vmem:[%s3] sm:$0x3]
  %192 = vset.pattern.permute.xlu0 0
  %193 = vperm.xlu0 %192, %v190
  %v194 = vpop.permute.xlu0 %193
  %v196 = vmul.f32 %v116, %v194
  %v197 = vmul.f32 %v118, %v194
  %v198 = vmul.f32 %v187, %v194
  %v199 = vld [vmem:[%s0] sm:$0x1f]
  %v201 = vsel %vm35, %v199, 0
  %203 = vmatprep.subr.mxu0 0.0
  %204 = vmatpush1.xpose.msra.mxu0 %v37
  %205 = vmatprep.subr.mxu0 0.0
  %206 = vmatpush1.xpose.msra.mxu0 0.0
  %207 = vmatprep.subr.mxu0 0.0
  %208 = vmatpush1.xpose.msra.mxu0 0.0
  %209 = vmatprep.subr.mxu0 0.0
  %210 = vmatpush1.xpose.msra.mxu0 0.0
  %211 = vmatprep.subr.mxu0 0.0
  %212 = vmatpush1.xpose.msra.mxu0 0.0
  %213 = vmatprep.subr.mxu0 0.0
  %214 = vmatpush1.xpose.msra.mxu0 0.0
  %215 = vmatprep.subr.mxu0 0.0
  %216 = vmatpush1.xpose.msra.mxu0 0.0
  %217 = vmatprep.subr.mxu0 0.0
  %218 = vmatpush1.xpose.msra.mxu0 0.0
  %219 = vmatprep.subr.mxu0 0.0
  %220 = vmatpush1.xpose.msra.mxu0 0.0
  %221 = vmatprep.subr.mxu0 0.0
  %222 = vmatpush1.xpose.msra.mxu0 0.0
  %223 = vmatprep.subr.mxu0 0.0
  %224 = vmatpush1.xpose.msra.mxu0 0.0
  %225 = vmatprep.subr.mxu0 0.0
  %226 = vmatpush1.xpose.msra.mxu0 0.0
  %227 = vmatprep.subr.mxu0 0.0
  %228 = vmatpush1.xpose.msra.mxu0 0.0
  %229 = vmatprep.subr.mxu0 0.0
  %230 = vmatpush1.xpose.msra.mxu0 0.0
  %231 = vmatprep.subr.mxu0 0.0
  %232 = vmatpush1.xpose.msra.mxu0 0.0
  %233 = vmatprep.subr.mxu0 0.0
  %234 = vmatpush1.xpose.msra.mxu0 0.0
  %235 = vmatprep.subr.mxu0 0.0
  %236 = vmatpush1.xpose.msra.mxu0 0.0
  %237 = vmatprep.subr.mxu0 0.0
  %238 = vmatpush1.xpose.msra.mxu0 0.0
  %239 = vmatprep.subr.mxu0 0.0
  %240 = vmatpush1.xpose.msra.mxu0 0.0
  %241 = vmatprep.subr.mxu0 0.0
  %242 = vmatpush1.xpose.msra.mxu0 0.0
  %243 = vmatprep.subr.mxu0 0.0
  %244 = vmatpush1.xpose.msra.mxu0 0.0
  %245 = vmatprep.subr.mxu0 0.0
  %246 = vmatpush1.xpose.msra.mxu0 0.0
  %247 = vmatprep.subr.mxu0 0.0
  %248 = vmatpush1.xpose.msra.mxu0 0.0
  %249 = vmatprep.subr.mxu0 0.0
  %250 = vmatpush1.xpose.msra.mxu0 0.0
  %251 = vmatprep.subr.mxu0 0.0
  %252 = vmatpush1.xpose.msra.mxu0 0.0
  %253 = vmatprep.subr.mxu0 0.0
  %254 = vmatpush1.xpose.msra.mxu0 0.0
  %255 = vmatprep.subr.mxu0 0.0
  %256 = vmatpush1.xpose.msra.mxu0 0.0
  %257 = vmatprep.subr.mxu0 0.0
  %258 = vmatpush1.xpose.msra.mxu0 0.0
  %259 = vmatprep.subr.mxu0 0.0
  %260 = vmatpush1.xpose.msra.mxu0 0.0
  %261 = vmatprep.subr.mxu0 0.0
  %262 = vmatpush1.xpose.msra.mxu0 0.0
  %263 = vmatprep.subr.mxu0 0.0
  %264 = vmatpush1.xpose.msra.mxu0 0.0
  %265 = vmatprep.subr.mxu0 0.0
  %266 = vmatpush1.xpose.msra.mxu0 0.0
  %267 = vmatprep.mubr.f32.mxu0 0.0
  %268 = vmatmul.mubr.f32.gmra.mrb[0].mxu0 %v201
  %v269 = vpop.f32.mrb[0].mxu0
  %v270 = vadd.f32 0.0, %v269
  %v271 = vpop.f32.mrb[0].mxu0
  %272 = vdwg.mxu0
  %v274 = vsel %vm39, %v270, 0
  %276 = vmatprep.subr.mxu0 0.0
  %277 = vmatpush1.msra.mxu0 %v274
  %278 = vmatprep.subr.mxu0 0.0
  %279 = vmatpush1.msra.mxu0 0.0
  %280 = vmatprep.subr.mxu0 0.0
  %281 = vmatpush1.msra.mxu0 0.0
  %282 = vmatprep.subr.mxu0 0.0
  %283 = vmatpush1.msra.mxu0 0.0
  %284 = vmatprep.subr.mxu0 0.0
  %285 = vmatpush1.msra.mxu0 0.0
  %286 = vmatprep.subr.mxu0 0.0
  %287 = vmatpush1.msra.mxu0 0.0
  %288 = vmatprep.subr.mxu0 0.0
  %289 = vmatpush1.msra.mxu0 0.0
  %290 = vmatprep.subr.mxu0 0.0
  %291 = vmatpush1.msra.mxu0 0.0
  %292 = vmatprep.subr.mxu0 0.0
  %293 = vmatpush1.msra.mxu0 0.0
  %294 = vmatprep.subr.mxu0 0.0
  %295 = vmatpush1.msra.mxu0 0.0
  %296 = vmatprep.subr.mxu0 0.0
  %297 = vmatpush1.msra.mxu0 0.0
  %298 = vmatprep.subr.mxu0 0.0
  %299 = vmatpush1.msra.mxu0 0.0
  %300 = vmatprep.subr.mxu0 0.0
  %301 = vmatpush1.msra.mxu0 0.0
  %302 = vmatprep.subr.mxu0 0.0
  %303 = vmatpush1.msra.mxu0 0.0
  %304 = vmatprep.subr.mxu0 0.0
  %305 = vmatpush1.msra.mxu0 0.0
  %306 = vmatprep.subr.mxu0 0.0
  %307 = vmatpush1.msra.mxu0 0.0
  %308 = vmatprep.subr.mxu0 0.0
  %309 = vmatpush1.msra.mxu0 0.0
  %310 = vmatprep.subr.mxu0 0.0
  %311 = vmatpush1.msra.mxu0 0.0
  %312 = vmatprep.subr.mxu0 0.0
  %313 = vmatpush1.msra.mxu0 0.0
  %314 = vmatprep.subr.mxu0 0.0
  %315 = vmatpush1.msra.mxu0 0.0
  %316 = vmatprep.subr.mxu0 0.0
  %317 = vmatpush1.msra.mxu0 0.0
  %318 = vmatprep.subr.mxu0 0.0
  %319 = vmatpush1.msra.mxu0 0.0
  %320 = vmatprep.subr.mxu0 0.0
  %321 = vmatpush1.msra.mxu0 0.0
  %322 = vmatprep.subr.mxu0 0.0
  %323 = vmatpush1.msra.mxu0 0.0
  %324 = vmatprep.subr.mxu0 0.0
  %325 = vmatpush1.msra.mxu0 0.0
  %326 = vmatprep.subr.mxu0 0.0
  %327 = vmatpush1.msra.mxu0 0.0
  %328 = vmatprep.subr.mxu0 0.0
  %329 = vmatpush1.msra.mxu0 0.0
  %330 = vmatprep.subr.mxu0 0.0
  %331 = vmatpush1.msra.mxu0 0.0
  %332 = vmatprep.subr.mxu0 0.0
  %333 = vmatpush1.msra.mxu0 0.0
  %334 = vmatprep.subr.mxu0 0.0
  %335 = vmatpush1.msra.mxu0 0.0
  %336 = vmatprep.subr.mxu0 0.0
  %337 = vmatpush1.msra.mxu0 0.0
  %338 = vmatprep.subr.mxu0 0.0
  %339 = vmatpush1.msra.mxu0 0.0
  %340 = vmatprep.mubr.f32.mxu0 0.0
  %341 = vmatmul.mubr.f32.gmra.mrb[0].mxu0 %v37
  %v342 = vpop.f32.mrb[0].mxu0
  %v343 = vadd.f32 0.0, %v342
  %v344 = vpop.f32.mrb[0].mxu0
  %345 = vdwg.mxu0
  %vm346 = vcmask 15360
  %v348 = vsel %vm346, %v343, 0
  %vm350 = vcmask 1041408
  %v352 = vsel %vm350, %v196, 0
  %v355 = vsel %vm350, %v197, 0
  %v358 = vsel %vm350, %v198, 0
  %360 = vmatprep.subr.mxu0 %v355
  %361 = vmatpush1.msra.mxu0 %v352
  %362 = vmatprep.subr.mxu0 0.0
  %363 = vmatpush1.msra.mxu0 0.0
  %364 = vmatprep.subr.mxu0 0.0
  %365 = vmatpush1.msra.mxu0 0.0
  %366 = vmatprep.subr.mxu0 0.0
  %367 = vmatpush1.msra.mxu0 0.0
  %368 = vmatprep.subr.mxu0 0.0
  %369 = vmatpush1.msra.mxu0 0.0
  %370 = vmatprep.subr.mxu0 0.0
  %371 = vmatpush1.msra.mxu0 0.0
  %372 = vmatprep.subr.mxu0 0.0
  %373 = vmatpush1.msra.mxu0 0.0
  %374 = vmatprep.subr.mxu0 0.0
  %375 = vmatpush1.msra.mxu0 0.0
  %376 = vmatprep.subr.mxu0 0.0
  %377 = vmatpush1.msra.mxu0 0.0
  %378 = vmatprep.subr.mxu0 0.0
  %379 = vmatpush1.msra.mxu0 0.0
  %380 = vmatprep.subr.mxu0 0.0
  %381 = vmatpush1.msra.mxu0 0.0
  %382 = vmatprep.subr.mxu0 0.0
  %383 = vmatpush1.msra.mxu0 0.0
  %384 = vmatprep.subr.mxu0 0.0
  %385 = vmatpush1.msra.mxu0 0.0
  %386 = vmatprep.subr.mxu0 0.0
  %387 = vmatpush1.msra.mxu0 0.0
  %388 = vmatprep.subr.mxu0 0.0
  %389 = vmatpush1.msra.mxu0 0.0
  %390 = vmatprep.subr.mxu0 0.0
  %391 = vmatpush1.msra.mxu0 0.0
  %392 = vmatprep.subr.mxu0 0.0
  %393 = vmatpush1.msra.mxu0 0.0
  %394 = vmatprep.subr.mxu0 0.0
  %395 = vmatpush1.msra.mxu0 0.0
  %396 = vmatprep.subr.mxu0 0.0
  %397 = vmatpush1.msra.mxu0 0.0
  %398 = vmatprep.subr.mxu0 0.0
  %399 = vmatpush1.msra.mxu0 0.0
  %400 = vmatprep.subr.mxu0 0.0
  %401 = vmatpush1.msra.mxu0 0.0
  %402 = vmatprep.subr.mxu0 0.0
  %403 = vmatpush1.msra.mxu0 0.0
  %404 = vmatprep.subr.mxu0 0.0
  %405 = vmatpush1.msra.mxu0 0.0
  %406 = vmatprep.subr.mxu0 0.0
  %407 = vmatpush1.msra.mxu0 0.0
  %408 = vmatprep.subr.mxu0 0.0
  %409 = vmatpush1.msra.mxu0 0.0
  %410 = vmatprep.subr.mxu0 0.0
  %411 = vmatpush1.msra.mxu0 0.0
  %412 = vmatprep.subr.mxu0 0.0
  %413 = vmatpush1.msra.mxu0 0.0
  %414 = vmatprep.subr.mxu0 0.0
  %415 = vmatpush1.msra.mxu0 0.0
  %416 = vmatprep.subr.mxu0 0.0
  %417 = vmatpush1.msra.mxu0 0.0
  %418 = vmatprep.subr.mxu0 0.0
  %419 = vmatpush1.msra.mxu0 0.0
  %420 = vmatprep.subr.mxu0 0.0
  %421 = vmatpush1.msra.mxu0 0.0
  %422 = vmatprep.subr.mxu0 0.0
  %423 = vmatpush1.msra.mxu0 0.0
  %424 = vmatprep.mubr.f32.mxu0 0.0
  %425 = vmatmul.mubr.f32.gmra.mrb[0].mxu0 %v348
  %v426 = vpop.f32.mrb[0].mxu0
  %v427 = vadd.f32 0.0, %v426
  %v428 = vpop.f32.mrb[0].mxu0
  %v429 = vadd.f32 0.0, %v428
  %430 = vdwg.mxu0
  %431 = vmatprep.subr.mxu0 0.0
  %432 = vmatpush1.msra.mxu0 %v358
  %433 = vmatprep.subr.mxu0 0.0
  %434 = vmatpush1.msra.mxu0 0.0
  %435 = vmatprep.subr.mxu0 0.0
  %436 = vmatpush1.msra.mxu0 0.0
  %437 = vmatprep.subr.mxu0 0.0
  %438 = vmatpush1.msra.mxu0 0.0
  %439 = vmatprep.subr.mxu0 0.0
  %440 = vmatpush1.msra.mxu0 0.0
  %441 = vmatprep.subr.mxu0 0.0
  %442 = vmatpush1.msra.mxu0 0.0
  %443 = vmatprep.subr.mxu0 0.0
  %444 = vmatpush1.msra.mxu0 0.0
  %445 = vmatprep.subr.mxu0 0.0
  %446 = vmatpush1.msra.mxu0 0.0
  %447 = vmatprep.subr.mxu0 0.0
  %448 = vmatpush1.msra.mxu0 0.0
  %449 = vmatprep.subr.mxu0 0.0
  %450 = vmatpush1.msra.mxu0 0.0
  %451 = vmatprep.subr.mxu0 0.0
  %452 = vmatpush1.msra.mxu0 0.0
  %453 = vmatprep.subr.mxu0 0.0
  %454 = vmatpush1.msra.mxu0 0.0
  %455 = vmatprep.subr.mxu0 0.0
  %456 = vmatpush1.msra.mxu0 0.0
  %457 = vmatprep.subr.mxu0 0.0
  %458 = vmatpush1.msra.mxu0 0.0
  %459 = vmatprep.subr.mxu0 0.0
  %460 = vmatpush1.msra.mxu0 0.0
  %461 = vmatprep.subr.mxu0 0.0
  %462 = vmatpush1.msra.mxu0 0.0
  %463 = vmatprep.subr.mxu0 0.0
  %464 = vmatpush1.msra.mxu0 0.0
  %465 = vmatprep.subr.mxu0 0.0
  %466 = vmatpush1.msra.mxu0 0.0
  %467 = vmatprep.subr.mxu0 0.0
  %468 = vmatpush1.msra.mxu0 0.0
  %469 = vmatprep.subr.mxu0 0.0
  %470 = vmatpush1.msra.mxu0 0.0
  %471 = vmatprep.subr.mxu0 0.0
  %472 = vmatpush1.msra.mxu0 0.0
  %473 = vmatprep.subr.mxu0 0.0
  %474 = vmatpush1.msra.mxu0 0.0
  %475 = vmatprep.subr.mxu0 0.0
  %476 = vmatpush1.msra.mxu0 0.0
  %477 = vmatprep.subr.mxu0 0.0
  %478 = vmatpush1.msra.mxu0 0.0
  %479 = vmatprep.subr.mxu0 0.0
  %480 = vmatpush1.msra.mxu0 0.0
  %481 = vmatprep.subr.mxu0 0.0
  %482 = vmatpush1.msra.mxu0 0.0
  %483 = vmatprep.subr.mxu0 0.0
  %484 = vmatpush1.msra.mxu0 0.0
  %485 = vmatprep.subr.mxu0 0.0
  %486 = vmatpush1.msra.mxu0 0.0
  %487 = vmatprep.subr.mxu0 0.0
  %488 = vmatpush1.msra.mxu0 0.0
  %489 = vmatprep.subr.mxu0 0.0
  %490 = vmatpush1.msra.mxu0 0.0
  %491 = vmatprep.subr.mxu0 0.0
  %492 = vmatpush1.msra.mxu0 0.0
  %493 = vmatprep.subr.mxu0 0.0
  %494 = vmatpush1.msra.mxu0 0.0
  %495 = vmatprep.mubr.f32.mxu0 0.0
  %496 = vmatmul.mubr.f32.gmra.mrb[0].mxu0 %v348
  %v497 = vpop.f32.mrb[0].mxu0
  %v498 = vadd.f32 0.0, %v497
  %v499 = vpop.f32.mrb[0].mxu0
  %500 = vdwg.mxu0
  %v501 = vld [vmem:[%s4] sm:$0xff]
  %v502 = vld [vmem:[%s4 + $0x8] sm:$0xff]
  %v503 = vld [vmem:[%s4 + $0x10] sm:$0xff]
  %v504 = vld [vmem:[%s4 + $0x18] sm:$0xff]
  %v505 = vld [vmem:[%s4 + $0x20] sm:$0xff]
  %v506 = vld [vmem:[%s4 + $0x28] sm:$0xff]
  %v507 = vld [vmem:[%s4 + $0x30] sm:$0xff]
  %v508 = vld [vmem:[%s4 + $0x38] sm:$0xff]
  %v509 = vld [vmem:[%s4 + $0x40] sm:$0xff]
  %v510 = vld [vmem:[%s4 + $0x48] sm:$0xff]
  %v511 = vld [vmem:[%s4 + $0x50] sm:$0xff]
  %v512 = vld [vmem:[%s4 + $0x58] sm:$0xff]
  %v513 = vld [vmem:[%s4 + $0x60] sm:$0xff]
  %v514 = vld [vmem:[%s4 + $0x68] sm:$0xff]
  %v515 = vld [vmem:[%s4 + $0x70] sm:$0xff]
  %v516 = vld [vmem:[%s4 + $0x78] sm:$0xff]
  %v517 = vld [vmem:[%s4 + $0x80] sm:$0xff]
  %v518 = vld [vmem:[%s4 + $0x88] sm:$0xff]
  %v519 = vld [vmem:[%s4 + $0x90] sm:$0xff]
  %v520 = vld [vmem:[%s4 + $0x98] sm:$0xff]
  %v521 = vld [vmem:[%s4 + $0xa0] sm:$0xff]
  %v522 = vld [vmem:[%s4 + $0xa8] sm:$0xff]
  %v523 = vld [vmem:[%s4 + $0xb0] sm:$0xff]
  %v524 = vld [vmem:[%s4 + $0xb8] sm:$0xff]
  %v525 = vld [vmem:[%s4 + $0xc0] sm:$0xff]
  %v526 = vld [vmem:[%s4 + $0xc8] sm:$0xff]
  %v527 = vld [vmem:[%s4 + $0xd0] sm:$0xff]
  %v528 = vld [vmem:[%s4 + $0xd8] sm:$0xff]
  %v529 = vld [vmem:[%s4 + $0xe0] sm:$0xff]
  %v530 = vld [vmem:[%s4 + $0xe8] sm:$0xff]
  %v531 = vld [vmem:[%s4 + $0xf0] sm:$0xff]
  %v532 = vld [vmem:[%s4 + $0xf8] sm:$0xff]
  %v533 = vld [vmem:[%s4 + $0x100] sm:$0xff]
  %v534 = vld [vmem:[%s4 + $0x108] sm:$0xff]
  %v535 = vld [vmem:[%s4 + $0x110] sm:$0xff]
  %v536 = vld [vmem:[%s4 + $0x118] sm:$0xff]
  %v537 = vld [vmem:[%s4 + $0x120] sm:$0xff]
  %v538 = vld [vmem:[%s4 + $0x128] sm:$0xff]
  %v539 = vld [vmem:[%s4 + $0x130] sm:$0xff]
  %v540 = vld [vmem:[%s4 + $0x138] sm:$0xff]
  %v541 = vld [vmem:[%s4 + $0x140] sm:$0xff]
  %v542 = vld [vmem:[%s4 + $0x148] sm:$0xff]
  %v543 = vld [vmem:[%s4 + $0x150] sm:$0xff]
  %v544 = vld [vmem:[%s4 + $0x158] sm:$0xff]
  %v545 = vld [vmem:[%s4 + $0x160] sm:$0xff]
  %v546 = vld [vmem:[%s4 + $0x168] sm:$0xff]
  %v547 = vld [vmem:[%s4 + $0x170] sm:$0xff]
  %v548 = vld [vmem:[%s4 + $0x178] sm:$0xff]
  %v549 = vld [vmem:[%s4 + $0x180] sm:$0xff]
  %v550 = vld [vmem:[%s4 + $0x188] sm:$0xff]
  %v551 = vld [vmem:[%s4 + $0x190] sm:$0xff]
  %v552 = vld [vmem:[%s4 + $0x198] sm:$0xff]
  %v553 = vld [vmem:[%s4 + $0x1a0] sm:$0xff]
  %v554 = vld [vmem:[%s4 + $0x1a8] sm:$0xff]
  %v555 = vld [vmem:[%s4 + $0x1b0] sm:$0xff]
  %v556 = vld [vmem:[%s4 + $0x1b8] sm:$0xff]
  %v557 = vld [vmem:[%s4 + $0x1c0] sm:$0xff]
  %v558 = vld [vmem:[%s4 + $0x1c8] sm:$0xff]
  %v559 = vld [vmem:[%s4 + $0x1d0] sm:$0xff]
  %v560 = vld [vmem:[%s4 + $0x1d8] sm:$0xff]
  %v561 = vld [vmem:[%s4 + $0x1e0] sm:$0xff]
  %v562 = vld [vmem:[%s4 + $0x1e8] sm:$0xff]
  %v563 = vld [vmem:[%s4 + $0x1f0] sm:$0xff]
  %v564 = vld [vmem:[%s4 + $0x1f8] sm:$0xff]
  %v565 = vld [vmem:[%s4 + $0x200] sm:$0xff]
  %v566 = vld [vmem:[%s4 + $0x208] sm:$0xff]
  %v567 = vld [vmem:[%s4 + $0x210] sm:$0xff]
  %v568 = vld [vmem:[%s4 + $0x218] sm:$0xff]
  %v569 = vld [vmem:[%s4 + $0x220] sm:$0xff]
  %v570 = vld [vmem:[%s4 + $0x228] sm:$0xff]
  %v571 = vld [vmem:[%s4 + $0x230] sm:$0xff]
  %v572 = vld [vmem:[%s4 + $0x238] sm:$0xff]
  %v573 = vld [vmem:[%s4 + $0x240] sm:$0xff]
  %v574 = vld [vmem:[%s4 + $0x248] sm:$0xff]
  %v575 = vld [vmem:[%s4 + $0x250] sm:$0xff]
  %v576 = vld [vmem:[%s4 + $0x258] sm:$0xff]
  %v577 = vld [vmem:[%s4 + $0x260] sm:$0xff]
  %v578 = vld [vmem:[%s4 + $0x268] sm:$0xff]
  %v579 = vld [vmem:[%s4 + $0x270] sm:$0xff]
  %v580 = vld [vmem:[%s4 + $0x278] sm:$0xff]
  %v581 = vld [vmem:[%s4 + $0x280] sm:$0xff]
  %v582 = vld [vmem:[%s4 + $0x288] sm:$0xff]
  %v583 = vld [vmem:[%s4 + $0x290] sm:$0xff]
  %v584 = vld [vmem:[%s4 + $0x298] sm:$0xff]
  %v585 = vld [vmem:[%s4 + $0x2a0] sm:$0xff]
  %v586 = vld [vmem:[%s4 + $0x2a8] sm:$0xff]
  %v587 = vld [vmem:[%s4 + $0x2b0] sm:$0xff]
  %v588 = vld [vmem:[%s4 + $0x2b8] sm:$0xff]
  %v589 = vld [vmem:[%s4 + $0x2c0] sm:$0xff]
  %v590 = vld [vmem:[%s4 + $0x2c8] sm:$0xff]
  %v591 = vld [vmem:[%s4 + $0x2d0] sm:$0xff]
  %v592 = vld [vmem:[%s4 + $0x2d8] sm:$0xff]
  %v593 = vld [vmem:[%s4 + $0x2e0] sm:$0xff]
  %v594 = vld [vmem:[%s4 + $0x2e8] sm:$0xff]
  %v595 = vld [vmem:[%s4 + $0x2f0] sm:$0xff]
  %v596 = vld [vmem:[%s4 + $0x2f8] sm:$0xff]
  %v597 = vld [vmem:[%s4 + $0x300] sm:$0xff]
  %v598 = vld [vmem:[%s4 + $0x308] sm:$0xff]
  %v599 = vld [vmem:[%s4 + $0x310] sm:$0xff]
  %v600 = vld [vmem:[%s4 + $0x318] sm:$0xff]
  %v601 = vld [vmem:[%s4 + $0x320] sm:$0xff]
  %v602 = vld [vmem:[%s4 + $0x328] sm:$0xff]
  %v603 = vld [vmem:[%s4 + $0x330] sm:$0xff]
  %v604 = vld [vmem:[%s4 + $0x338] sm:$0xff]
  %v605 = vld [vmem:[%s4 + $0x340] sm:$0xff]
  %v606 = vld [vmem:[%s4 + $0x348] sm:$0xff]
  %v607 = vld [vmem:[%s4 + $0x350] sm:$0xff]
  %v608 = vld [vmem:[%s4 + $0x358] sm:$0xff]
  %v609 = vld [vmem:[%s4 + $0x360] sm:$0xff]
  %v610 = vld [vmem:[%s4 + $0x368] sm:$0xff]
  %v611 = vld [vmem:[%s4 + $0x370] sm:$0xff]
  %v612 = vld [vmem:[%s4 + $0x378] sm:$0xff]
  %v613 = vld [vmem:[%s4 + $0x380] sm:$0xff]
  %v614 = vld [vmem:[%s4 + $0x388] sm:$0xff]
  %v615 = vld [vmem:[%s4 + $0x390] sm:$0xff]
  %v616 = vld [vmem:[%s4 + $0x398] sm:$0xff]
  %v617 = vld [vmem:[%s4 + $0x3a0] sm:$0xff]
  %v618 = vld [vmem:[%s4 + $0x3a8] sm:$0xff]
  %v619 = vld [vmem:[%s4 + $0x3b0] sm:$0xff]
  %v620 = vld [vmem:[%s4 + $0x3b8] sm:$0xff]
  %v621 = vld [vmem:[%s5] sm:$0x7]
  %v623 = vlaneseq
  %v624 = vshrl.u32 %v623, 7
  %v625 = vsub.s32 0, %v624
  %v626 = vrot.slane %v621, %v625
  %v627 = vlaneseq
  %v628 = vshrl.u32 %v627, 7
  %v629 = vsub.s32 1, %v628
  %v630 = vrot.slane %v621, %v629
  %v631 = vlaneseq
  %v632 = vshrl.u32 %v631, 7
  %v633 = vsub.s32 2, %v632
  %v634 = vrot.slane %v621, %v633
  %vm638 = vcmask 523264
  %v640 = vsel %vm638, %v498, 0
  %642 = vmatprep.subr.mxu0 %v502
  %643 = vmatpush1.msra.mxu0 %v501
  %644 = vmatprep.subr.mxu0 %v505
  %645 = vmatpush1.msra.mxu0 %v504
  %646 = vmatprep.subr.mxu0 %v508
  %647 = vmatpush1.msra.mxu0 %v507
  %648 = vmatprep.subr.mxu0 %v511
  %649 = vmatpush1.msra.mxu0 %v510
  %650 = vmatprep.subr.mxu0 %v514
  %651 = vmatpush1.msra.mxu0 %v513
  %652 = vmatprep.subr.mxu0 %v517
  %653 = vmatpush1.msra.mxu0 %v516
  %654 = vmatprep.subr.mxu0 %v520
  %655 = vmatpush1.msra.mxu0 %v519
  %656 = vmatprep.subr.mxu0 %v523
  %657 = vmatpush1.msra.mxu0 %v522
  %658 = vmatprep.subr.mxu0 %v526
  %659 = vmatpush1.msra.mxu0 %v525
  %660 = vmatprep.subr.mxu0 %v529
  %661 = vmatpush1.msra.mxu0 %v528
  %662 = vmatprep.subr.mxu0 %v532
  %663 = vmatpush1.msra.mxu0 %v531
  %664 = vmatprep.subr.mxu0 %v535
  %665 = vmatpush1.msra.mxu0 %v534
  %666 = vmatprep.subr.mxu0 %v538
  %667 = vmatpush1.msra.mxu0 %v537
  %668 = vmatprep.subr.mxu0 %v541
  %669 = vmatpush1.msra.mxu0 %v540
  %670 = vmatprep.subr.mxu0 %v544
  %671 = vmatpush1.msra.mxu0 %v543
  %672 = vmatprep.subr.mxu0 %v547
  %673 = vmatpush1.msra.mxu0 %v546
  %674 = vmatprep.subr.mxu0 %v550
  %675 = vmatpush1.msra.mxu0 %v549
  %676 = vmatprep.subr.mxu0 %v553
  %677 = vmatpush1.msra.mxu0 %v552
  %678 = vmatprep.subr.mxu0 %v556
  %679 = vmatpush1.msra.mxu0 %v555
  %680 = vmatprep.subr.mxu0 %v559
  %681 = vmatpush1.msra.mxu0 %v558
  %682 = vmatprep.subr.mxu0 %v562
  %683 = vmatpush1.msra.mxu0 %v561
  %684 = vmatprep.subr.mxu0 %v565
  %685 = vmatpush1.msra.mxu0 %v564
  %686 = vmatprep.subr.mxu0 %v568
  %687 = vmatpush1.msra.mxu0 %v567
  %688 = vmatprep.subr.mxu0 %v571
  %689 = vmatpush1.msra.mxu0 %v570
  %690 = vmatprep.subr.mxu0 %v574
  %691 = vmatpush1.msra.mxu0 %v573
  %692 = vmatprep.subr.mxu0 %v577
  %693 = vmatpush1.msra.mxu0 %v576
  %694 = vmatprep.subr.mxu0 %v580
  %695 = vmatpush1.msra.mxu0 %v579
  %696 = vmatprep.subr.mxu0 %v583
  %697 = vmatpush1.msra.mxu0 %v582
  %698 = vmatprep.subr.mxu0 %v586
  %699 = vmatpush1.msra.mxu0 %v585
  %700 = vmatprep.subr.mxu0 %v589
  %701 = vmatpush1.msra.mxu0 %v588
  %702 = vmatprep.subr.mxu0 %v592
  %703 = vmatpush1.msra.mxu0 %v591
  %704 = vmatprep.subr.mxu0 %v595
  %705 = vmatpush1.msra.mxu0 %v594
  %706 = vmatprep.mubr.f32.mxu0 %v429
  %707 = vmatmul.mubr.f32.gmra.mrb[0].mxu0 %v427
  %v708 = vpop.f32.mrb[0].mxu0
  %v709 = vadd.f32 %v626, %v708
  %v710 = vpop.f32.mrb[0].mxu0
  %v711 = vadd.f32 %v630, %v710
  %712 = vdwg.mxu0
  %713 = vmatprep.subr.mxu0 %v598
  %714 = vmatpush1.msra.mxu0 %v597
  %715 = vmatprep.subr.mxu0 %v601
  %716 = vmatpush1.msra.mxu0 %v600
  %717 = vmatprep.subr.mxu0 %v604
  %718 = vmatpush1.msra.mxu0 %v603
  %719 = vmatprep.subr.mxu0 %v607
  %720 = vmatpush1.msra.mxu0 %v606
  %721 = vmatprep.subr.mxu0 %v610
  %722 = vmatpush1.msra.mxu0 %v609
  %723 = vmatprep.subr.mxu0 %v613
  %724 = vmatpush1.msra.mxu0 %v612
  %725 = vmatprep.subr.mxu0 %v616
  %726 = vmatpush1.msra.mxu0 %v615
  %727 = vmatprep.subr.mxu0 %v619
  %728 = vmatpush1.msra.mxu0 %v618
  %729 = vmatprep.subr.mxu0 0.0
  %730 = vmatpush1.msra.mxu0 0.0
  %731 = vmatprep.subr.mxu0 0.0
  %732 = vmatpush1.msra.mxu0 0.0
  %733 = vmatprep.subr.mxu0 0.0
  %734 = vmatpush1.msra.mxu0 0.0
  %735 = vmatprep.subr.mxu0 0.0
  %736 = vmatpush1.msra.mxu0 0.0
  %737 = vmatprep.subr.mxu0 0.0
  %738 = vmatpush1.msra.mxu0 0.0
  %739 = vmatprep.subr.mxu0 0.0
  %740 = vmatpush1.msra.mxu0 0.0
  %741 = vmatprep.subr.mxu0 0.0
  %742 = vmatpush1.msra.mxu0 0.0
  %743 = vmatprep.subr.mxu0 0.0
  %744 = vmatpush1.msra.mxu0 0.0
  %745 = vmatprep.subr.mxu0 0.0
  %746 = vmatpush1.msra.mxu0 0.0
  %747 = vmatprep.subr.mxu0 0.0
  %748 = vmatpush1.msra.mxu0 0.0
  %749 = vmatprep.subr.mxu0 0.0
  %750 = vmatpush1.msra.mxu0 0.0
  %751 = vmatprep.subr.mxu0 0.0
  %752 = vmatpush1.msra.mxu0 0.0
  %753 = vmatprep.subr.mxu0 0.0
  %754 = vmatpush1.msra.mxu0 0.0
  %755 = vmatprep.subr.mxu0 0.0
  %756 = vmatpush1.msra.mxu0 0.0
  %757 = vmatprep.subr.mxu0 0.0
  %758 = vmatpush1.msra.mxu0 0.0
  %759 = vmatprep.subr.mxu0 0.0
  %760 = vmatpush1.msra.mxu0 0.0
  %761 = vmatprep.subr.mxu0 0.0
  %762 = vmatpush1.msra.mxu0 0.0
  %763 = vmatprep.subr.mxu0 0.0
  %764 = vmatpush1.msra.mxu0 0.0
  %765 = vmatprep.subr.mxu0 0.0
  %766 = vmatpush1.msra.mxu0 0.0
  %767 = vmatprep.subr.mxu0 0.0
  %768 = vmatpush1.msra.mxu0 0.0
  %769 = vmatprep.subr.mxu0 0.0
  %770 = vmatpush1.msra.mxu0 0.0
  %771 = vmatprep.subr.mxu0 0.0
  %772 = vmatpush1.msra.mxu0 0.0
  %773 = vmatprep.subr.mxu0 0.0
  %774 = vmatpush1.msra.mxu0 0.0
  %775 = vmatprep.subr.mxu0 0.0
  %776 = vmatpush1.msra.mxu0 0.0
  %777 = vmatprep.mubr.f32.mxu0 0.0
  %778 = vmatmul.mubr.f32.gmra.mrb[0].mxu0 %v640
  %v779 = vpop.f32.mrb[0].mxu0
  %v780 = vadd.f32 %v709, %v779
  %v781 = vpop.f32.mrb[0].mxu0
  %v782 = vadd.f32 %v711, %v781
  %783 = vdwg.mxu0
  %784 = vmatprep.subr.mxu0 0.0
  %785 = vmatpush1.msra.mxu0 %v503
  %786 = vmatprep.subr.mxu0 0.0
  %787 = vmatpush1.msra.mxu0 %v506
  %788 = vmatprep.subr.mxu0 0.0
  %789 = vmatpush1.msra.mxu0 %v509
  %790 = vmatprep.subr.mxu0 0.0
  %791 = vmatpush1.msra.mxu0 %v512
  %792 = vmatprep.subr.mxu0 0.0
  %793 = vmatpush1.msra.mxu0 %v515
  %794 = vmatprep.subr.mxu0 0.0
  %795 = vmatpush1.msra.mxu0 %v518
  %796 = vmatprep.subr.mxu0 0.0
  %797 = vmatpush1.msra.mxu0 %v521
  %798 = vmatprep.subr.mxu0 0.0
  %799 = vmatpush1.msra.mxu0 %v524
  %800 = vmatprep.subr.mxu0 0.0
  %801 = vmatpush1.msra.mxu0 %v527
  %802 = vmatprep.subr.mxu0 0.0
  %803 = vmatpush1.msra.mxu0 %v530
  %804 = vmatprep.subr.mxu0 0.0
  %805 = vmatpush1.msra.mxu0 %v533
  %806 = vmatprep.subr.mxu0 0.0
  %807 = vmatpush1.msra.mxu0 %v536
  %808 = vmatprep.subr.mxu0 0.0
  %809 = vmatpush1.msra.mxu0 %v539
  %810 = vmatprep.subr.mxu0 0.0
  %811 = vmatpush1.msra.mxu0 %v542
  %812 = vmatprep.subr.mxu0 0.0
  %813 = vmatpush1.msra.mxu0 %v545
  %814 = vmatprep.subr.mxu0 0.0
  %815 = vmatpush1.msra.mxu0 %v548
  %816 = vmatprep.subr.mxu0 0.0
  %817 = vmatpush1.msra.mxu0 %v551
  %818 = vmatprep.subr.mxu0 0.0
  %819 = vmatpush1.msra.mxu0 %v554
  %820 = vmatprep.subr.mxu0 0.0
  %821 = vmatpush1.msra.mxu0 %v557
  %822 = vmatprep.subr.mxu0 0.0
  %823 = vmatpush1.msra.mxu0 %v560
  %824 = vmatprep.subr.mxu0 0.0
  %825 = vmatpush1.msra.mxu0 %v563
  %826 = vmatprep.subr.mxu0 0.0
  %827 = vmatpush1.msra.mxu0 %v566
  %828 = vmatprep.subr.mxu0 0.0
  %829 = vmatpush1.msra.mxu0 %v569
  %830 = vmatprep.subr.mxu0 0.0
  %831 = vmatpush1.msra.mxu0 %v572
  %832 = vmatprep.subr.mxu0 0.0
  %833 = vmatpush1.msra.mxu0 %v575
  %834 = vmatprep.subr.mxu0 0.0
  %835 = vmatpush1.msra.mxu0 %v578
  %836 = vmatprep.subr.mxu0 0.0
  %837 = vmatpush1.msra.mxu0 %v581
  %838 = vmatprep.subr.mxu0 0.0
  %839 = vmatpush1.msra.mxu0 %v584
  %840 = vmatprep.subr.mxu0 0.0
  %841 = vmatpush1.msra.mxu0 %v587
  %842 = vmatprep.subr.mxu0 0.0
  %843 = vmatpush1.msra.mxu0 %v590
  %844 = vmatprep.subr.mxu0 0.0
  %845 = vmatpush1.msra.mxu0 %v593
  %846 = vmatprep.subr.mxu0 0.0
  %847 = vmatpush1.msra.mxu0 %v596
  %848 = vmatprep.mubr.f32.mxu0 %v429
  %849 = vmatmul.mubr.f32.gmra.mrb[0].mxu0 %v427
  %v850 = vpop.f32.mrb[0].mxu0
  %v851 = vadd.f32 %v634, %v850
  %v852 = vpop.f32.mrb[0].mxu0
  %853 = vdwg.mxu0
  %854 = vmatprep.subr.mxu0 0.0
  %855 = vmatpush1.msra.mxu0 %v599
  %856 = vmatprep.subr.mxu0 0.0
  %857 = vmatpush1.msra.mxu0 %v602
  %858 = vmatprep.subr.mxu0 0.0
  %859 = vmatpush1.msra.mxu0 %v605
  %860 = vmatprep.subr.mxu0 0.0
  %861 = vmatpush1.msra.mxu0 %v608
  %862 = vmatprep.subr.mxu0 0.0
  %863 = vmatpush1.msra.mxu0 %v611
  %864 = vmatprep.subr.mxu0 0.0
  %865 = vmatpush1.msra.mxu0 %v614
  %866 = vmatprep.subr.mxu0 0.0
  %867 = vmatpush1.msra.mxu0 %v617
  %868 = vmatprep.subr.mxu0 0.0
  %869 = vmatpush1.msra.mxu0 %v620
  %870 = vmatprep.subr.mxu0 0.0
  %871 = vmatpush1.msra.mxu0 0.0
  %872 = vmatprep.subr.mxu0 0.0
  %873 = vmatpush1.msra.mxu0 0.0
  %874 = vmatprep.subr.mxu0 0.0
  %875 = vmatpush1.msra.mxu0 0.0
  %876 = vmatprep.subr.mxu0 0.0
  %877 = vmatpush1.msra.mxu0 0.0
  %878 = vmatprep.subr.mxu0 0.0
  %879 = vmatpush1.msra.mxu0 0.0
  %880 = vmatprep.subr.mxu0 0.0
  %881 = vmatpush1.msra.mxu0 0.0
  %882 = vmatprep.subr.mxu0 0.0
  %883 = vmatpush1.msra.mxu0 0.0
  %884 = vmatprep.subr.mxu0 0.0
  %885 = vmatpush1.msra.mxu0 0.0
  %886 = vmatprep.subr.mxu0 0.0
  %887 = vmatpush1.msra.mxu0 0.0
  %888 = vmatprep.subr.mxu0 0.0
  %889 = vmatpush1.msra.mxu0 0.0
  %890 = vmatprep.subr.mxu0 0.0
  %891 = vmatpush1.msra.mxu0 0.0
  %892 = vmatprep.subr.mxu0 0.0
  %893 = vmatpush1.msra.mxu0 0.0
  %894 = vmatprep.subr.mxu0 0.0
  %895 = vmatpush1.msra.mxu0 0.0
  %896 = vmatprep.subr.mxu0 0.0
  %897 = vmatpush1.msra.mxu0 0.0
  %898 = vmatprep.subr.mxu0 0.0
  %899 = vmatpush1.msra.mxu0 0.0
  %900 = vmatprep.subr.mxu0 0.0
  %901 = vmatpush1.msra.mxu0 0.0
  %902 = vmatprep.subr.mxu0 0.0
  %903 = vmatpush1.msra.mxu0 0.0
  %904 = vmatprep.subr.mxu0 0.0
  %905 = vmatpush1.msra.mxu0 0.0
  %906 = vmatprep.subr.mxu0 0.0
  %907 = vmatpush1.msra.mxu0 0.0
  %908 = vmatprep.subr.mxu0 0.0
  %909 = vmatpush1.msra.mxu0 0.0
  %910 = vmatprep.subr.mxu0 0.0
  %911 = vmatpush1.msra.mxu0 0.0
  %912 = vmatprep.subr.mxu0 0.0
  %913 = vmatpush1.msra.mxu0 0.0
  %914 = vmatprep.subr.mxu0 0.0
  %915 = vmatpush1.msra.mxu0 0.0
  %916 = vmatprep.subr.mxu0 0.0
  %917 = vmatpush1.msra.mxu0 0.0
  %918 = vmatprep.mubr.f32.mxu0 0.0
  %919 = vmatmul.mubr.f32.gmra.mrb[0].mxu0 %v640
  %v920 = vpop.f32.mrb[0].mxu0
  %v921 = vadd.f32 %v851, %v920
  %v922 = vpop.f32.mrb[0].mxu0
  %923 = vdwg.mxu0
  %v927 = vcombine.low %v780, %v782
  %v929 = vunpack.c.l.s4 1983009808
  %v930 = vunpack.c.0.s8 %v929
  %v931 = vlaneseq
  %v932 = vshrl.u32 %v931, 7
  %v933 = vsub.s32 %v930, %v932
  %v934 = vrot.slane %v927, %v933
  %v936 = vunpack.c.l.s4 1983009808
  %v937 = vunpack.c.0.s8 %v936
  %v938 = vlaneseq
  %v939 = vshrl.u32 %v938, 7
  %v940 = vsub.s32 %v937, %v939
  %v941 = vrot.slane %v921, %v940
  %v942 = vcombine.low %v934, %v941
  %vm944 = vcmask 1043458
  %vm945 = vmor %vm944, %vm350
  %vm946 = vcmask 521220
  %vm947 = vmor %vm946, %vm945
  %948 = vst.msk [vmem:[%s6] sm:$0x3f] %vm947, %v942
  // Predicated region
  $region26: #{_lambda_.15} parent=0 // pred_check
    _
  $region27: #{_lambda_.15} parent=0 // pred_check_branch
    %950 = sbr.rel (0) target = $region29
  $region28: #{_lambda_.15} parent=0 // pred_region
    _
  $region29: #{_lambda_.15} parent=0 // pred_fallthru
    _
  // Predicated region
  $region30: #{_lambda_.15} parent=0 // pred_check
    _
  $region31: #{_lambda_.15} parent=0 // pred_check_branch
    %952 = sbr.rel (0) target = $region33
  $region32: #{_lambda_.15} parent=0 // pred_region
    _
  $region33: #{_lambda_.15} parent=0 // pred_fallthru
    _

// kernel: _lambda_.18
$region0: #{_lambda_.18}
  #allocation0 [shape = 'u32[]', space=smem, size = 0x4, offset = 0x4, fixed_abs, tag = 'smem constant byte address 0x4 - core index']
  #allocation1 [shape = 'u32[144,128]{1,0:T(1,128)}', space=vmem, size = 0x12000, scoped, tag = 'internal scratch']
  %s0 = inlined_call_operand.vmem [shape: f32[14,14], index: 0, kind: input, shape index: {}]
  %s1 = inlined_call_operand.vmem [shape: f32[9,320], index: 1, kind: input, shape index: {}]
  %s2 = inlined_call_operand.vmem [shape: s32[9,1], index: 2, kind: input, shape index: {}]
  %s3 = inlined_call_operand.vmem [shape: f32[320,320], index: 3, kind: input, shape index: {}]
  %s4 = inlined_call_operand.vmem [shape: f32[1,320], index: 4, kind: input, shape index: {}]
  %s5 = inlined_call_operand.vmem [shape: f32[14,320], index: 5, kind: input, shape index: {}]
  %s6 = inlined_call_operand.vmem [shape: f32[14,320], index: 6, kind: output, shape index: {}]
  %s7 = sld [smem:[#allocation0]]
  $region34: #{_lambda_.18} parent=0
    _
  %s9 = ssub.s32 1, %s7
  %s10 = scalar_select 0, %s9, %s7
  // Predicated region
  $region2: #{_lambda_.18} parent=0 // pred_check
    _
  $region3: #{_lambda_.18} parent=0 // pred_check_branch
    %12 = sbr.rel (0) target = $region5
  $region4: #{_lambda_.18} parent=0 // pred_region
    _
  $region5: #{_lambda_.18} parent=0 // pred_fallthru
    _
  // Predicated region
  $region6: #{_lambda_.18} parent=0 // pred_check
    _
  $region7: #{_lambda_.18} parent=0 // pred_check_branch
    %14 = sbr.rel (0) target = $region9
  $region8: #{_lambda_.18} parent=0 // pred_region
    _
  $region9: #{_lambda_.18} parent=0 // pred_fallthru
    _
  // Predicated region
  $region10: #{_lambda_.18} parent=0 // pred_check
    _
  $region11: #{_lambda_.18} parent=0 // pred_check_branch
    %16 = sbr.rel (0) target = $region13
  $region12: #{_lambda_.18} parent=0 // pred_region
    _
  $region13: #{_lambda_.18} parent=0 // pred_fallthru
    _
  // Predicated region
  $region14: #{_lambda_.18} parent=0 // pred_check
    _
  $region15: #{_lambda_.18} parent=0 // pred_check_branch
    %18 = sbr.rel (0) target = $region17
  $region16: #{_lambda_.18} parent=0 // pred_region
    _
  $region17: #{_lambda_.18} parent=0 // pred_fallthru
    _
  // Predicated region
  $region18: #{_lambda_.18} parent=0 // pred_check
    _
  $region19: #{_lambda_.18} parent=0 // pred_check_branch
    %20 = sbr.rel (0) target = $region21
  $region20: #{_lambda_.18} parent=0 // pred_region
    _
  $region21: #{_lambda_.18} parent=0 // pred_fallthru
    _
  // Predicated region
  $region22: #{_lambda_.18} parent=0 // pred_check
    _
  $region23: #{_lambda_.18} parent=0 // pred_check_branch
    %22 = sbr.rel (0) target = $region25
  $region24: #{_lambda_.18} parent=0 // pred_region
    _
  $region25: #{_lambda_.18} parent=0 // pred_fallthru
    _
  %v23 = vld [vmem:[%s2] sm:$0xff]
  %v24 = vld [vmem:[%s2 + $0x8] sm:$0x1]
  %v25 = vlaneseq
  %v26 = vand.u32 %v25, 127
  %27 = vset.pattern.permute.xlu0 0
  %28 = vperm.xlu0 %27, %v23
  %v29 = vpop.permute.xlu0 %28
  %30 = vset.pattern.permute.xlu0 0
  %31 = vperm.xlu0 %30, %v24
  %v32 = vpop.permute.xlu0 %31
  %vm33 = vcmp.eq.s32.totalorder %v26, %v29
  %vm34 = vcmp.eq.s32.totalorder %v26, %v32
  %v35 = vsel %vm33, 1, 0
  %v36 = vsel %vm34, 1, 0
  %v37 = vcvt.s32.f32 %v35
  %v38 = vcvt.s32.f32 %v36
  %v39 = vld [vmem:[%s1] sm:$0xff]
  %v40 = vld [vmem:[%s1 + $0x8] sm:$0xff]
  %v41 = vld [vmem:[%s1 + $0x10] sm:$0xff]
  %v42 = vld [vmem:[%s1 + $0x18] sm:$0x1]
  %v43 = vld [vmem:[%s1 + $0x20] sm:$0x1]
  %v44 = vld [vmem:[%s1 + $0x28] sm:$0x1]
  %45 = vxpose.xlu0.b32.start [1/16] %v37, 128
  %46 = vxpose.xlu0.b32.cont [2/16] %v38, 128
  %47 = vxpose.xlu0.b32.cont [3/16] 0.0, 128
  %48 = vxpose.xlu0.b32.cont [4/16] 0.0, 128
  %49 = vxpose.xlu0.b32.cont [5/16] 0.0, 128
  %50 = vxpose.xlu0.b32.cont [6/16] 0.0, 128
  %51 = vxpose.xlu0.b32.cont [7/16] 0.0, 128
  %52 = vxpose.xlu0.b32.cont [8/16] 0.0, 128
  %53 = vxpose.xlu0.b32.cont [9/16] 0.0, 128
  %54 = vxpose.xlu0.b32.cont [10/16] 0.0, 128
  %55 = vxpose.xlu0.b32.cont [11/16] 0.0, 128
  %56 = vxpose.xlu0.b32.cont [12/16] 0.0, 128
  %57 = vxpose.xlu0.b32.cont [13/16] 0.0, 128
  %58 = vxpose.xlu0.b32.cont [14/16] 0.0, 128
  %59 = vxpose.xlu0.b32.cont [15/16] 0.0, 128
  %60 = vxpose.xlu0.b32.end [16/16] 0.0, 128
  %v61 = vpop.trf.xlu0
  %v62 = vpop.trf.xlu0
  %v63 = vpop.trf.xlu0
  %v64 = vpop.trf.xlu0
  %v65 = vpop.trf.xlu0
  %v66 = vpop.trf.xlu0
  %v67 = vpop.trf.xlu0
  %v68 = vpop.trf.xlu0
  %v69 = vpop.trf.xlu0
  %v70 = vpop.trf.xlu0
  %v71 = vpop.trf.xlu0
  %v72 = vpop.trf.xlu0
  %v73 = vpop.trf.xlu0
  %v74 = vpop.trf.xlu0
  %v75 = vpop.trf.xlu0
  %v76 = vpop.trf.xlu0
  %vm77 = vcmask 72704
  %v79 = vsel %vm77, %v61, 0
  %v82 = vsel %vm77, %v62, 0
  %vm84 = vcmask 1040384
  %v86 = vsel %vm84, %v42, 0
  %v89 = vsel %vm84, %v43, 0
  %v92 = vsel %vm84, %v44, 0
  %94 = vmatprep.subr.mxu0 %v40
  %95 = vmatpush1.msra.mxu0 %v39
  %96 = vmatprep.subr.mxu0 %v89
  %97 = vmatpush1.msra.mxu0 %v86
  %98 = vmatprep.subr.mxu0 0.0
  %99 = vmatpush1.msra.mxu0 0.0
  %100 = vmatprep.subr.mxu0 0.0
  %101 = vmatpush1.msra.mxu0 0.0
  %102 = vmatprep.subr.mxu0 0.0
  %103 = vmatpush1.msra.mxu0 0.0
  %104 = vmatprep.subr.mxu0 0.0
  %105 = vmatpush1.msra.mxu0 0.0
  %106 = vmatprep.subr.mxu0 0.0
  %107 = vmatpush1.msra.mxu0 0.0
  %108 = vmatprep.subr.mxu0 0.0
  %109 = vmatpush1.msra.mxu0 0.0
  %110 = vmatprep.subr.mxu0 0.0
  %111 = vmatpush1.msra.mxu0 0.0
  %112 = vmatprep.subr.mxu0 0.0
  %113 = vmatpush1.msra.mxu0 0.0
  %114 = vmatprep.subr.mxu0 0.0
  %115 = vmatpush1.msra.mxu0 0.0
  %116 = vmatprep.subr.mxu0 0.0
  %117 = vmatpush1.msra.mxu0 0.0
  %118 = vmatprep.subr.mxu0 0.0
  %119 = vmatpush1.msra.mxu0 0.0
  %120 = vmatprep.subr.mxu0 0.0
  %121 = vmatpush1.msra.mxu0 0.0
  %122 = vmatprep.subr.mxu0 0.0
  %123 = vmatpush1.msra.mxu0 0.0
  %124 = vmatprep.subr.mxu0 0.0
  %125 = vmatpush1.msra.mxu0 0.0
  %126 = vmatprep.subr.mxu0 0.0
  %127 = vmatpush1.msra.mxu0 0.0
  %128 = vmatprep.subr.mxu0 0.0
  %129 = vmatpush1.msra.mxu0 0.0
  %130 = vmatprep.subr.mxu0 0.0
  %131 = vmatpush1.msra.mxu0 0.0
  %132 = vmatprep.subr.mxu0 0.0
  %133 = vmatpush1.msra.mxu0 0.0
  %134 = vmatprep.subr.mxu0 0.0
  %135 = vmatpush1.msra.mxu0 0.0
  %136 = vmatprep.subr.mxu0 0.0
  %137 = vmatpush1.msra.mxu0 0.0
  %138 = vmatprep.subr.mxu0 0.0
  %139 = vmatpush1.msra.mxu0 0.0
  %140 = vmatprep.subr.mxu0 0.0
  %141 = vmatpush1.msra.mxu0 0.0
  %142 = vmatprep.subr.mxu0 0.0
  %143 = vmatpush1.msra.mxu0 0.0
  %144 = vmatprep.subr.mxu0 0.0
  %145 = vmatpush1.msra.mxu0 0.0
  %146 = vmatprep.subr.mxu0 0.0
  %147 = vmatpush1.msra.mxu0 0.0
  %148 = vmatprep.subr.mxu0 0.0
  %149 = vmatpush1.msra.mxu0 0.0
  %150 = vmatprep.subr.mxu0 0.0
  %151 = vmatpush1.msra.mxu0 0.0
  %152 = vmatprep.subr.mxu0 0.0
  %153 = vmatpush1.msra.mxu0 0.0
  %154 = vmatprep.subr.mxu0 0.0
  %155 = vmatpush1.msra.mxu0 0.0
  %156 = vmatprep.subr.mxu0 0.0
  %157 = vmatpush1.msra.mxu0 0.0
  %158 = vmatprep.mubr.f32.mxu0 0.0
  %159 = vmatmul.mubr.f32.gmra.mrb[0].mxu0 %v79
  %v160 = vpop.f32.mrb[0].mxu0
  %v161 = vadd.f32 0.0, %v160
  %v162 = vpop.f32.mrb[0].mxu0
  %v163 = vadd.f32 0.0, %v162
  %164 = vmatprep.mubr.f32.mxu0 0.0
  %165 = vmatmul.mubr.f32.gmra.mrb[0].mxu0 %v82
  %v166 = vpop.f32.mrb[0].mxu0
  %v167 = vadd.f32 0.0, %v166
  %v168 = vpop.f32.mrb[0].mxu0
  %v169 = vadd.f32 0.0, %v168
  %170 = vdwg.mxu0
  %171 = vmatprep.subr.mxu0 0.0
  %172 = vmatpush1.msra.mxu0 %v41
  %173 = vmatprep.subr.mxu0 0.0
  %174 = vmatpush1.msra.mxu0 %v92
  %175 = vmatprep.subr.mxu0 0.0
  %176 = vmatpush1.msra.mxu0 0.0
  %177 = vmatprep.subr.mxu0 0.0
  %178 = vmatpush1.msra.mxu0 0.0
  %179 = vmatprep.subr.mxu0 0.0
  %180 = vmatpush1.msra.mxu0 0.0
  %181 = vmatprep.subr.mxu0 0.0
  %182 = vmatpush1.msra.mxu0 0.0
  %183 = vmatprep.subr.mxu0 0.0
  %184 = vmatpush1.msra.mxu0 0.0
  %185 = vmatprep.subr.mxu0 0.0
  %186 = vmatpush1.msra.mxu0 0.0
  %187 = vmatprep.subr.mxu0 0.0
  %188 = vmatpush1.msra.mxu0 0.0
  %189 = vmatprep.subr.mxu0 0.0
  %190 = vmatpush1.msra.mxu0 0.0
  %191 = vmatprep.subr.mxu0 0.0
  %192 = vmatpush1.msra.mxu0 0.0
  %193 = vmatprep.subr.mxu0 0.0
  %194 = vmatpush1.msra.mxu0 0.0
  %195 = vmatprep.subr.mxu0 0.0
  %196 = vmatpush1.msra.mxu0 0.0
  %197 = vmatprep.subr.mxu0 0.0
  %198 = vmatpush1.msra.mxu0 0.0
  %199 = vmatprep.subr.mxu0 0.0
  %200 = vmatpush1.msra.mxu0 0.0
  %201 = vmatprep.subr.mxu0 0.0
  %202 = vmatpush1.msra.mxu0 0.0
  %203 = vmatprep.subr.mxu0 0.0
  %204 = vmatpush1.msra.mxu0 0.0
  %205 = vmatprep.subr.mxu0 0.0
  %206 = vmatpush1.msra.mxu0 0.0
  %207 = vmatprep.subr.mxu0 0.0
  %208 = vmatpush1.msra.mxu0 0.0
  %209 = vmatprep.subr.mxu0 0.0
  %210 = vmatpush1.msra.mxu0 0.0
  %211 = vmatprep.subr.mxu0 0.0
  %212 = vmatpush1.msra.mxu0 0.0
  %213 = vmatprep.subr.mxu0 0.0
  %214 = vmatpush1.msra.mxu0 0.0
  %215 = vmatprep.subr.mxu0 0.0
  %216 = vmatpush1.msra.mxu0 0.0
  %217 = vmatprep.subr.mxu0 0.0
  %218 = vmatpush1.msra.mxu0 0.0
  %219 = vmatprep.subr.mxu0 0.0
  %220 = vmatpush1.msra.mxu0 0.0
  %221 = vmatprep.subr.mxu0 0.0
  %222 = vmatpush1.msra.mxu0 0.0
  %223 = vmatprep.subr.mxu0 0.0
  %224 = vmatpush1.msra.mxu0 0.0
  %225 = vmatprep.subr.mxu0 0.0
  %226 = vmatpush1.msra.mxu0 0.0
  %227 = vmatprep.subr.mxu0 0.0
  %228 = vmatpush1.msra.mxu0 0.0
  %229 = vmatprep.subr.mxu0 0.0
  %230 = vmatpush1.msra.mxu0 0.0
  %231 = vmatprep.subr.mxu0 0.0
  %232 = vmatpush1.msra.mxu0 0.0
  %233 = vmatprep.subr.mxu0 0.0
  %234 = vmatpush1.msra.mxu0 0.0
  %235 = vmatprep.mubr.f32.mxu0 0.0
  %236 = vmatmul.mubr.f32.gmra.mrb[0].mxu0 %v79
  %v237 = vpop.f32.mrb[0].mxu0
  %v238 = vadd.f32 0.0, %v237
  %v239 = vpop.f32.mrb[0].mxu0
  %240 = vmatprep.mubr.f32.mxu0 0.0
  %241 = vmatmul.mubr.f32.gmra.mrb[0].mxu0 %v82
  %v242 = vpop.f32.mrb[0].mxu0
  %v243 = vadd.f32 0.0, %v242
  %v244 = vpop.f32.mrb[0].mxu0
  %245 = vdwg.mxu0
  %v246 = vld [vmem:[%s0] sm:$0xff]
  %v247 = vld [vmem:[%s0 + $0x8] sm:$0x3f]
  %vm248 = vcmask 113664
  %v250 = vsel %vm248, %v246, 0
  %v253 = vsel %vm248, %v247, 0
  %vm255 = vcmask 1045504
  %v257 = vsel %vm255, %v167, 0
  %v260 = vsel %vm255, %v169, 0
  %v263 = vsel %vm255, %v243, 0
  %265 = vmatprep.subr.mxu0 %v163
  %266 = vmatpush1.msra.mxu0 %v161
  %267 = vmatprep.subr.mxu0 %v260
  %268 = vmatpush1.msra.mxu0 %v257
  %269 = vmatprep.subr.mxu0 0.0
  %270 = vmatpush1.msra.mxu0 0.0
  %271 = vmatprep.subr.mxu0 0.0
  %272 = vmatpush1.msra.mxu0 0.0
  %273 = vmatprep.subr.mxu0 0.0
  %274 = vmatpush1.msra.mxu0 0.0
  %275 = vmatprep.subr.mxu0 0.0
  %276 = vmatpush1.msra.mxu0 0.0
  %277 = vmatprep.subr.mxu0 0.0
  %278 = vmatpush1.msra.mxu0 0.0
  %279 = vmatprep.subr.mxu0 0.0
  %280 = vmatpush1.msra.mxu0 0.0
  %281 = vmatprep.subr.mxu0 0.0
  %282 = vmatpush1.msra.mxu0 0.0
  %283 = vmatprep.subr.mxu0 0.0
  %284 = vmatpush1.msra.mxu0 0.0
  %285 = vmatprep.subr.mxu0 0.0
  %286 = vmatpush1.msra.mxu0 0.0
  %287 = vmatprep.subr.mxu0 0.0
  %288 = vmatpush1.msra.mxu0 0.0
  %289 = vmatprep.subr.mxu0 0.0
  %290 = vmatpush1.msra.mxu0 0.0
  %291 = vmatprep.subr.mxu0 0.0
  %292 = vmatpush1.msra.mxu0 0.0
  %293 = vmatprep.subr.mxu0 0.0
  %294 = vmatpush1.msra.mxu0 0.0
  %295 = vmatprep.subr.mxu0 0.0
  %296 = vmatpush1.msra.mxu0 0.0
  %297 = vmatprep.subr.mxu0 0.0
  %298 = vmatpush1.msra.mxu0 0.0
  %299 = vmatprep.subr.mxu0 0.0
  %300 = vmatpush1.msra.mxu0 0.0
  %301 = vmatprep.subr.mxu0 0.0
  %302 = vmatpush1.msra.mxu0 0.0
  %303 = vmatprep.subr.mxu0 0.0
  %304 = vmatpush1.msra.mxu0 0.0
  %305 = vmatprep.subr.mxu0 0.0
  %306 = vmatpush1.msra.mxu0 0.0
  %307 = vmatprep.subr.mxu0 0.0
  %308 = vmatpush1.msra.mxu0 0.0
  %309 = vmatprep.subr.mxu0 0.0
  %310 = vmatpush1.msra.mxu0 0.0
  %311 = vmatprep.subr.mxu0 0.0
  %312 = vmatpush1.msra.mxu0 0.0
  %313 = vmatprep.subr.mxu0 0.0
  %314 = vmatpush1.msra.mxu0 0.0
  %315 = vmatprep.subr.mxu0 0.0
  %316 = vmatpush1.msra.mxu0 0.0
  %317 = vmatprep.subr.mxu0 0.0
  %318 = vmatpush1.msra.mxu0 0.0
  %319 = vmatprep.subr.mxu0 0.0
  %320 = vmatpush1.msra.mxu0 0.0
  %321 = vmatprep.subr.mxu0 0.0
  %322 = vmatpush1.msra.mxu0 0.0
  %323 = vmatprep.subr.mxu0 0.0
  %324 = vmatpush1.msra.mxu0 0.0
  %325 = vmatprep.subr.mxu0 0.0
  %326 = vmatpush1.msra.mxu0 0.0
  %327 = vmatprep.subr.mxu0 0.0
  %328 = vmatpush1.msra.mxu0 0.0
  %329 = vmatprep.mubr.f32.mxu0 0.0
  %330 = vmatmul.mubr.f32.gmra.mrb[0].mxu0 %v250
  %v331 = vpop.f32.mrb[0].mxu0
  %v332 = vadd.f32 0.0, %v331
  %v333 = vpop.f32.mrb[0].mxu0
  %v334 = vadd.f32 0.0, %v333
  %335 = vmatprep.mubr.f32.mxu0 0.0
  %336 = vmatmul.mubr.f32.gmra.mrb[0].mxu0 %v253
  %v337 = vpop.f32.mrb[0].mxu0
  %v338 = vadd.f32 0.0, %v337
  %v339 = vpop.f32.mrb[0].mxu0
  %v340 = vadd.f32 0.0, %v339
  %341 = vdwg.mxu0
  %342 = vmatprep.subr.mxu0 0.0
  %343 = vmatpush1.msra.mxu0 %v238
  %344 = vmatprep.subr.mxu0 0.0
  %345 = vmatpush1.msra.mxu0 %v263
  %346 = vmatprep.subr.mxu0 0.0
  %347 = vmatpush1.msra.mxu0 0.0
  %348 = vmatprep.subr.mxu0 0.0
  %349 = vmatpush1.msra.mxu0 0.0
  %350 = vmatprep.subr.mxu0 0.0
  %351 = vmatpush1.msra.mxu0 0.0
  %352 = vmatprep.subr.mxu0 0.0
  %353 = vmatpush1.msra.mxu0 0.0
  %354 = vmatprep.subr.mxu0 0.0
  %355 = vmatpush1.msra.mxu0 0.0
  %356 = vmatprep.subr.mxu0 0.0
  %357 = vmatpush1.msra.mxu0 0.0
  %358 = vmatprep.subr.mxu0 0.0
  %359 = vmatpush1.msra.mxu0 0.0
  %360 = vmatprep.subr.mxu0 0.0
  %361 = vmatpush1.msra.mxu0 0.0
  %362 = vmatprep.subr.mxu0 0.0
  %363 = vmatpush1.msra.mxu0 0.0
  %364 = vmatprep.subr.mxu0 0.0
  %365 = vmatpush1.msra.mxu0 0.0
  %366 = vmatprep.subr.mxu0 0.0
  %367 = vmatpush1.msra.mxu0 0.0
  %368 = vmatprep.subr.mxu0 0.0
  %369 = vmatpush1.msra.mxu0 0.0
  %370 = vmatprep.subr.mxu0 0.0
  %371 = vmatpush1.msra.mxu0 0.0
  %372 = vmatprep.subr.mxu0 0.0
  %373 = vmatpush1.msra.mxu0 0.0
  %374 = vmatprep.subr.mxu0 0.0
  %375 = vmatpush1.msra.mxu0 0.0
  %376 = vmatprep.subr.mxu0 0.0
  %377 = vmatpush1.msra.mxu0 0.0
  %378 = vmatprep.subr.mxu0 0.0
  %379 = vmatpush1.msra.mxu0 0.0
  %380 = vmatprep.subr.mxu0 0.0
  %381 = vmatpush1.msra.mxu0 0.0
  %382 = vmatprep.subr.mxu0 0.0
  %383 = vmatpush1.msra.mxu0 0.0
  %384 = vmatprep.subr.mxu0 0.0
  %385 = vmatpush1.msra.mxu0 0.0
  %386 = vmatprep.subr.mxu0 0.0
  %387 = vmatpush1.msra.mxu0 0.0
  %388 = vmatprep.subr.mxu0 0.0
  %389 = vmatpush1.msra.mxu0 0.0
  %390 = vmatprep.subr.mxu0 0.0
  %391 = vmatpush1.msra.mxu0 0.0
  %392 = vmatprep.subr.mxu0 0.0
  %393 = vmatpush1.msra.mxu0 0.0
  %394 = vmatprep.subr.mxu0 0.0
  %395 = vmatpush1.msra.mxu0 0.0
  %396 = vmatprep.subr.mxu0 0.0
  %397 = vmatpush1.msra.mxu0 0.0
  %398 = vmatprep.subr.mxu0 0.0
  %399 = vmatpush1.msra.mxu0 0.0
  %400 = vmatprep.subr.mxu0 0.0
  %401 = vmatpush1.msra.mxu0 0.0
  %402 = vmatprep.subr.mxu0 0.0
  %403 = vmatpush1.msra.mxu0 0.0
  %404 = vmatprep.subr.mxu0 0.0
  %405 = vmatpush1.msra.mxu0 0.0
  %406 = vmatprep.mubr.f32.mxu0 0.0
  %407 = vmatmul.mubr.f32.gmra.mrb[0].mxu0 %v250
  %v408 = vpop.f32.mrb[0].mxu0
  %v409 = vadd.f32 0.0, %v408
  %v410 = vpop.f32.mrb[0].mxu0
  %411 = vmatprep.mubr.f32.mxu0 0.0
  %412 = vmatmul.mubr.f32.gmra.mrb[0].mxu0 %v253
  %v413 = vpop.f32.mrb[0].mxu0
  %v414 = vadd.f32 0.0, %v413
  %v415 = vpop.f32.mrb[0].mxu0
  %416 = vdwg.mxu0
  %v417 = vld [vmem:[%s3] sm:$0xff]
  %v418 = vld [vmem:[%s3 + $0x8] sm:$0xff]
  %v419 = vld [vmem:[%s3 + $0x10] sm:$0xff]
  %v420 = vld [vmem:[%s3 + $0x18] sm:$0xff]
  %v421 = vld [vmem:[%s3 + $0x20] sm:$0xff]
  %v422 = vld [vmem:[%s3 + $0x28] sm:$0xff]
  %v423 = vld [vmem:[%s3 + $0x30] sm:$0xff]
  %v424 = vld [vmem:[%s3 + $0x38] sm:$0xff]
  %v425 = vld [vmem:[%s3 + $0x40] sm:$0xff]
  %v426 = vld [vmem:[%s3 + $0x48] sm:$0xff]
  %v427 = vld [vmem:[%s3 + $0x50] sm:$0xff]
  %v428 = vld [vmem:[%s3 + $0x58] sm:$0xff]
  %v429 = vld [vmem:[%s3 + $0x60] sm:$0xff]
  %v430 = vld [vmem:[%s3 + $0x68] sm:$0xff]
  %v431 = vld [vmem:[%s3 + $0x70] sm:$0xff]
  %v432 = vld [vmem:[%s3 + $0x78] sm:$0xff]
  %v433 = vld [vmem:[%s3 + $0x80] sm:$0xff]
  %v434 = vld [vmem:[%s3 + $0x88] sm:$0xff]
  %v435 = vld [vmem:[%s3 + $0x90] sm:$0xff]
  %v436 = vld [vmem:[%s3 + $0x98] sm:$0xff]
  %v437 = vld [vmem:[%s3 + $0xa0] sm:$0xff]
  %v438 = vld [vmem:[%s3 + $0xa8] sm:$0xff]
  %v439 = vld [vmem:[%s3 + $0xb0] sm:$0xff]
  %v440 = vld [vmem:[%s3 + $0xb8] sm:$0xff]
  %v441 = vld [vmem:[%s3 + $0xc0] sm:$0xff]
  %v442 = vld [vmem:[%s3 + $0xc8] sm:$0xff]
  %v443 = vld [vmem:[%s3 + $0xd0] sm:$0xff]
  %v444 = vld [vmem:[%s3 + $0xd8] sm:$0xff]
  %v445 = vld [vmem:[%s3 + $0xe0] sm:$0xff]
  %v446 = vld [vmem:[%s3 + $0xe8] sm:$0xff]
  %v447 = vld [vmem:[%s3 + $0xf0] sm:$0xff]
  %v448 = vld [vmem:[%s3 + $0xf8] sm:$0xff]
  %v449 = vld [vmem:[%s3 + $0x100] sm:$0xff]
  %v450 = vld [vmem:[%s3 + $0x108] sm:$0xff]
  %v451 = vld [vmem:[%s3 + $0x110] sm:$0xff]
  %v452 = vld [vmem:[%s3 + $0x118] sm:$0xff]
  %v453 = vld [vmem:[%s3 + $0x120] sm:$0xff]
  %v454 = vld [vmem:[%s3 + $0x128] sm:$0xff]
  %v455 = vld [vmem:[%s3 + $0x130] sm:$0xff]
  %v456 = vld [vmem:[%s3 + $0x138] sm:$0xff]
  %v457 = vld [vmem:[%s3 + $0x140] sm:$0xff]
  %v458 = vld [vmem:[%s3 + $0x148] sm:$0xff]
  %v459 = vld [vmem:[%s3 + $0x150] sm:$0xff]
  %v460 = vld [vmem:[%s3 + $0x158] sm:$0xff]
  %v461 = vld [vmem:[%s3 + $0x160] sm:$0xff]
  %v462 = vld [vmem:[%s3 + $0x168] sm:$0xff]
  %v463 = vld [vmem:[%s3 + $0x170] sm:$0xff]
  %v464 = vld [vmem:[%s3 + $0x178] sm:$0xff]
  %v465 = vld [vmem:[%s3 + $0x180] sm:$0xff]
  %v466 = vld [vmem:[%s3 + $0x188] sm:$0xff]
  %v467 = vld [vmem:[%s3 + $0x190] sm:$0xff]
  %v468 = vld [vmem:[%s3 + $0x198] sm:$0xff]
  %v469 = vld [vmem:[%s3 + $0x1a0] sm:$0xff]
  %v470 = vld [vmem:[%s3 + $0x1a8] sm:$0xff]
  %v471 = vld [vmem:[%s3 + $0x1b0] sm:$0xff]
  %v472 = vld [vmem:[%s3 + $0x1b8] sm:$0xff]
  %v473 = vld [vmem:[%s3 + $0x1c0] sm:$0xff]
  %v474 = vld [vmem:[%s3 + $0x1c8] sm:$0xff]
  %v475 = vld [vmem:[%s3 + $0x1d0] sm:$0xff]
  %v476 = vld [vmem:[%s3 + $0x1d8] sm:$0xff]
  %v477 = vld [vmem:[%s3 + $0x1e0] sm:$0xff]
  %v478 = vld [vmem:[%s3 + $0x1e8] sm:$0xff]
  %v479 = vld [vmem:[%s3 + $0x1f0] sm:$0xff]
  %v480 = vld [vmem:[%s3 + $0x1f8] sm:$0xff]
  %v481 = vld [vmem:[%s3 + $0x200] sm:$0xff]
  %v482 = vld [vmem:[%s3 + $0x208] sm:$0xff]
  %v483 = vld [vmem:[%s3 + $0x210] sm:$0xff]
  %v484 = vld [vmem:[%s3 + $0x218] sm:$0xff]
  %v485 = vld [vmem:[%s3 + $0x220] sm:$0xff]
  %v486 = vld [vmem:[%s3 + $0x228] sm:$0xff]
  %v487 = vld [vmem:[%s3 + $0x230] sm:$0xff]
  %v488 = vld [vmem:[%s3 + $0x238] sm:$0xff]
  %v489 = vld [vmem:[%s3 + $0x240] sm:$0xff]
  %v490 = vld [vmem:[%s3 + $0x248] sm:$0xff]
  %v491 = vld [vmem:[%s3 + $0x250] sm:$0xff]
  %v492 = vld [vmem:[%s3 + $0x258] sm:$0xff]
  %v493 = vld [vmem:[%s3 + $0x260] sm:$0xff]
  %v494 = vld [vmem:[%s3 + $0x268] sm:$0xff]
  %v495 = vld [vmem:[%s3 + $0x270] sm:$0xff]
  %v496 = vld [vmem:[%s3 + $0x278] sm:$0xff]
  %v497 = vld [vmem:[%s3 + $0x280] sm:$0xff]
  %v498 = vld [vmem:[%s3 + $0x288] sm:$0xff]
  %v499 = vld [vmem:[%s3 + $0x290] sm:$0xff]
  %v500 = vld [vmem:[%s3 + $0x298] sm:$0xff]
  %v501 = vld [vmem:[%s3 + $0x2a0] sm:$0xff]
  %v502 = vld [vmem:[%s3 + $0x2a8] sm:$0xff]
  %v503 = vld [vmem:[%s3 + $0x2b0] sm:$0xff]
  %v504 = vld [vmem:[%s3 + $0x2b8] sm:$0xff]
  %v505 = vld [vmem:[%s3 + $0x2c0] sm:$0xff]
  %v506 = vld [vmem:[%s3 + $0x2c8] sm:$0xff]
  %v507 = vld [vmem:[%s3 + $0x2d0] sm:$0xff]
  %v508 = vld [vmem:[%s3 + $0x2d8] sm:$0xff]
  %v509 = vld [vmem:[%s3 + $0x2e0] sm:$0xff]
  %v510 = vld [vmem:[%s3 + $0x2e8] sm:$0xff]
  %v511 = vld [vmem:[%s3 + $0x2f0] sm:$0xff]
  %v512 = vld [vmem:[%s3 + $0x2f8] sm:$0xff]
  %v513 = vld [vmem:[%s3 + $0x300] sm:$0xff]
  %v514 = vld [vmem:[%s3 + $0x308] sm:$0xff]
  %v515 = vld [vmem:[%s3 + $0x310] sm:$0xff]
  %v516 = vld [vmem:[%s3 + $0x318] sm:$0xff]
  %v517 = vld [vmem:[%s3 + $0x320] sm:$0xff]
  %v518 = vld [vmem:[%s3 + $0x328] sm:$0xff]
  %v519 = vld [vmem:[%s3 + $0x330] sm:$0xff]
  %v520 = vld [vmem:[%s3 + $0x338] sm:$0xff]
  %v521 = vld [vmem:[%s3 + $0x340] sm:$0xff]
  %v522 = vld [vmem:[%s3 + $0x348] sm:$0xff]
  %v523 = vld [vmem:[%s3 + $0x350] sm:$0xff]
  %v524 = vld [vmem:[%s3 + $0x358] sm:$0xff]
  %v525 = vld [vmem:[%s3 + $0x360] sm:$0xff]
  %v526 = vld [vmem:[%s3 + $0x368] sm:$0xff]
  %v527 = vld [vmem:[%s3 + $0x370] sm:$0xff]
  %v528 = vld [vmem:[%s3 + $0x378] sm:$0xff]
  %v529 = vld [vmem:[%s3 + $0x380] sm:$0xff]
  %v530 = vld [vmem:[%s3 + $0x388] sm:$0xff]
  %v531 = vld [vmem:[%s3 + $0x390] sm:$0xff]
  %v532 = vld [vmem:[%s3 + $0x398] sm:$0xff]
  %v533 = vld [vmem:[%s3 + $0x3a0] sm:$0xff]
  %v534 = vld [vmem:[%s3 + $0x3a8] sm:$0xff]
  %v535 = vld [vmem:[%s3 + $0x3b0] sm:$0xff]
  %v536 = vld [vmem:[%s3 + $0x3b8] sm:$0xff]
  %v537 = vld [vmem:[%s4] sm:$0x7]
  %v539 = vlaneseq
  %v540 = vshrl.u32 %v539, 7
  %v541 = vsub.s32 0, %v540
  %v542 = vrot.slane %v537, %v541
  %v543 = vlaneseq
  %v544 = vshrl.u32 %v543, 7
  %v545 = vsub.s32 1, %v544
  %v546 = vrot.slane %v537, %v545
  %v547 = vlaneseq
  %v548 = vshrl.u32 %v547, 7
  %v549 = vsub.s32 2, %v548
  %v550 = vrot.slane %v537, %v549
  %vm554 = vcmask 523264
  %v556 = vsel %vm554, %v409, 0
  %v559 = vsel %vm554, %v414, 0
  %561 = vmatprep.subr.mxu0 %v418
  %562 = vmatpush1.msra.mxu0 %v417
  %563 = vmatprep.subr.mxu0 %v421
  %564 = vmatpush1.msra.mxu0 %v420
  %565 = vmatprep.subr.mxu0 %v424
  %566 = vmatpush1.msra.mxu0 %v423
  %567 = vmatprep.subr.mxu0 %v427
  %568 = vmatpush1.msra.mxu0 %v426
  %569 = vmatprep.subr.mxu0 %v430
  %570 = vmatpush1.msra.mxu0 %v429
  %571 = vmatprep.subr.mxu0 %v433
  %572 = vmatpush1.msra.mxu0 %v432
  %573 = vmatprep.subr.mxu0 %v436
  %574 = vmatpush1.msra.mxu0 %v435
  %575 = vmatprep.subr.mxu0 %v439
  %576 = vmatpush1.msra.mxu0 %v438
  %577 = vmatprep.subr.mxu0 %v442
  %578 = vmatpush1.msra.mxu0 %v441
  %579 = vmatprep.subr.mxu0 %v445
  %580 = vmatpush1.msra.mxu0 %v444
  %581 = vmatprep.subr.mxu0 %v448
  %582 = vmatpush1.msra.mxu0 %v447
  %583 = vmatprep.subr.mxu0 %v451
  %584 = vmatpush1.msra.mxu0 %v450
  %585 = vmatprep.subr.mxu0 %v454
  %586 = vmatpush1.msra.mxu0 %v453
  %587 = vmatprep.subr.mxu0 %v457
  %588 = vmatpush1.msra.mxu0 %v456
  %589 = vmatprep.subr.mxu0 %v460
  %590 = vmatpush1.msra.mxu0 %v459
  %591 = vmatprep.subr.mxu0 %v463
  %592 = vmatpush1.msra.mxu0 %v462
  %593 = vmatprep.subr.mxu0 %v466
  %594 = vmatpush1.msra.mxu0 %v465
  %595 = vmatprep.subr.mxu0 %v469
  %596 = vmatpush1.msra.mxu0 %v468
  %597 = vmatprep.subr.mxu0 %v472
  %598 = vmatpush1.msra.mxu0 %v471
  %599 = vmatprep.subr.mxu0 %v475
  %600 = vmatpush1.msra.mxu0 %v474
  %601 = vmatprep.subr.mxu0 %v478
  %602 = vmatpush1.msra.mxu0 %v477
  %603 = vmatprep.subr.mxu0 %v481
  %604 = vmatpush1.msra.mxu0 %v480
  %605 = vmatprep.subr.mxu0 %v484
  %606 = vmatpush1.msra.mxu0 %v483
  %607 = vmatprep.subr.mxu0 %v487
  %608 = vmatpush1.msra.mxu0 %v486
  %609 = vmatprep.subr.mxu0 %v490
  %610 = vmatpush1.msra.mxu0 %v489
  %611 = vmatprep.subr.mxu0 %v493
  %612 = vmatpush1.msra.mxu0 %v492
  %613 = vmatprep.subr.mxu0 %v496
  %614 = vmatpush1.msra.mxu0 %v495
  %615 = vmatprep.subr.mxu0 %v499
  %616 = vmatpush1.msra.mxu0 %v498
  %617 = vmatprep.subr.mxu0 %v502
  %618 = vmatpush1.msra.mxu0 %v501
  %619 = vmatprep.subr.mxu0 %v505
  %620 = vmatpush1.msra.mxu0 %v504
  %621 = vmatprep.subr.mxu0 %v508
  %622 = vmatpush1.msra.mxu0 %v507
  %623 = vmatprep.subr.mxu0 %v511
  %624 = vmatpush1.msra.mxu0 %v510
  %625 = vmatprep.mubr.f32.mxu0 %v334
  %626 = vmatmul.mubr.f32.gmra.mrb[0].mxu0 %v332
  %v627 = vpop.f32.mrb[0].mxu0
  %v628 = vadd.f32 %v542, %v627
  %v629 = vpop.f32.mrb[0].mxu0
  %v630 = vadd.f32 %v546, %v629
  %631 = vmatprep.mubr.f32.mxu0 %v340
  %632 = vmatmul.mubr.f32.gmra.mrb[0].mxu0 %v338
  %v633 = vpop.f32.mrb[0].mxu0
  %v634 = vadd.f32 %v542, %v633
  %v635 = vpop.f32.mrb[0].mxu0
  %v636 = vadd.f32 %v546, %v635
  %637 = vdwg.mxu0
  %638 = vmatprep.subr.mxu0 %v514
  %639 = vmatpush1.msra.mxu0 %v513
  %640 = vmatprep.subr.mxu0 %v517
  %641 = vmatpush1.msra.mxu0 %v516
  %642 = vmatprep.subr.mxu0 %v520
  %643 = vmatpush1.msra.mxu0 %v519
  %644 = vmatprep.subr.mxu0 %v523
  %645 = vmatpush1.msra.mxu0 %v522
  %646 = vmatprep.subr.mxu0 %v526
  %647 = vmatpush1.msra.mxu0 %v525
  %648 = vmatprep.subr.mxu0 %v529
  %649 = vmatpush1.msra.mxu0 %v528
  %650 = vmatprep.subr.mxu0 %v532
  %651 = vmatpush1.msra.mxu0 %v531
  %652 = vmatprep.subr.mxu0 %v535
  %653 = vmatpush1.msra.mxu0 %v534
  %654 = vmatprep.subr.mxu0 0.0
  %655 = vmatpush1.msra.mxu0 0.0
  %656 = vmatprep.subr.mxu0 0.0
  %657 = vmatpush1.msra.mxu0 0.0
  %658 = vmatprep.subr.mxu0 0.0
  %659 = vmatpush1.msra.mxu0 0.0
  %660 = vmatprep.subr.mxu0 0.0
  %661 = vmatpush1.msra.mxu0 0.0
  %662 = vmatprep.subr.mxu0 0.0
  %663 = vmatpush1.msra.mxu0 0.0
  %664 = vmatprep.subr.mxu0 0.0
  %665 = vmatpush1.msra.mxu0 0.0
  %666 = vmatprep.subr.mxu0 0.0
  %667 = vmatpush1.msra.mxu0 0.0
  %668 = vmatprep.subr.mxu0 0.0
  %669 = vmatpush1.msra.mxu0 0.0
  %670 = vmatprep.subr.mxu0 0.0
  %671 = vmatpush1.msra.mxu0 0.0
  %672 = vmatprep.subr.mxu0 0.0
  %673 = vmatpush1.msra.mxu0 0.0
  %674 = vmatprep.subr.mxu0 0.0
  %675 = vmatpush1.msra.mxu0 0.0
  %676 = vmatprep.subr.mxu0 0.0
  %677 = vmatpush1.msra.mxu0 0.0
  %678 = vmatprep.subr.mxu0 0.0
  %679 = vmatpush1.msra.mxu0 0.0
  %680 = vmatprep.subr.mxu0 0.0
  %681 = vmatpush1.msra.mxu0 0.0
  %682 = vmatprep.subr.mxu0 0.0
  %683 = vmatpush1.msra.mxu0 0.0
  %684 = vmatprep.subr.mxu0 0.0
  %685 = vmatpush1.msra.mxu0 0.0
  %686 = vmatprep.subr.mxu0 0.0
  %687 = vmatpush1.msra.mxu0 0.0
  %688 = vmatprep.subr.mxu0 0.0
  %689 = vmatpush1.msra.mxu0 0.0
  %690 = vmatprep.subr.mxu0 0.0
  %691 = vmatpush1.msra.mxu0 0.0
  %692 = vmatprep.subr.mxu0 0.0
  %693 = vmatpush1.msra.mxu0 0.0
  %694 = vmatprep.subr.mxu0 0.0
  %695 = vmatpush1.msra.mxu0 0.0
  %696 = vmatprep.subr.mxu0 0.0
  %697 = vmatpush1.msra.mxu0 0.0
  %698 = vmatprep.subr.mxu0 0.0
  %699 = vmatpush1.msra.mxu0 0.0
  %700 = vmatprep.subr.mxu0 0.0
  %701 = vmatpush1.msra.mxu0 0.0
  %702 = vmatprep.mubr.f32.mxu0 0.0
  %703 = vmatmul.mubr.f32.gmra.mrb[0].mxu0 %v556
  %v704 = vpop.f32.mrb[0].mxu0
  %v705 = vadd.f32 %v628, %v704
  %v706 = vpop.f32.mrb[0].mxu0
  %v707 = vadd.f32 %v630, %v706
  %708 = vmatprep.mubr.f32.mxu0 0.0
  %709 = vmatmul.mubr.f32.gmra.mrb[0].mxu0 %v559
  %v710 = vpop.f32.mrb[0].mxu0
  %v711 = vadd.f32 %v634, %v710
  %v712 = vpop.f32.mrb[0].mxu0
  %v713 = vadd.f32 %v636, %v712
  %714 = vdwg.mxu0
  %715 = vmatprep.subr.mxu0 0.0
  %716 = vmatpush1.msra.mxu0 %v419
  %717 = vmatprep.subr.mxu0 0.0
  %718 = vmatpush1.msra.mxu0 %v422
  %719 = vmatprep.subr.mxu0 0.0
  %720 = vmatpush1.msra.mxu0 %v425
  %721 = vmatprep.subr.mxu0 0.0
  %722 = vmatpush1.msra.mxu0 %v428
  %723 = vmatprep.subr.mxu0 0.0
  %724 = vmatpush1.msra.mxu0 %v431
  %725 = vmatprep.subr.mxu0 0.0
  %726 = vmatpush1.msra.mxu0 %v434
  %727 = vmatprep.subr.mxu0 0.0
  %728 = vmatpush1.msra.mxu0 %v437
  %729 = vmatprep.subr.mxu0 0.0
  %730 = vmatpush1.msra.mxu0 %v440
  %731 = vmatprep.subr.mxu0 0.0
  %732 = vmatpush1.msra.mxu0 %v443
  %733 = vmatprep.subr.mxu0 0.0
  %734 = vmatpush1.msra.mxu0 %v446
  %735 = vmatprep.subr.mxu0 0.0
  %736 = vmatpush1.msra.mxu0 %v449
  %737 = vmatprep.subr.mxu0 0.0
  %738 = vmatpush1.msra.mxu0 %v452
  %739 = vmatprep.subr.mxu0 0.0
  %740 = vmatpush1.msra.mxu0 %v455
  %741 = vmatprep.subr.mxu0 0.0
  %742 = vmatpush1.msra.mxu0 %v458
  %743 = vmatprep.subr.mxu0 0.0
  %744 = vmatpush1.msra.mxu0 %v461
  %745 = vmatprep.subr.mxu0 0.0
  %746 = vmatpush1.msra.mxu0 %v464
  %747 = vmatprep.subr.mxu0 0.0
  %748 = vmatpush1.msra.mxu0 %v467
  %749 = vmatprep.subr.mxu0 0.0
  %750 = vmatpush1.msra.mxu0 %v470
  %751 = vmatprep.subr.mxu0 0.0
  %752 = vmatpush1.msra.mxu0 %v473
  %753 = vmatprep.subr.mxu0 0.0
  %754 = vmatpush1.msra.mxu0 %v476
  %755 = vmatprep.subr.mxu0 0.0
  %756 = vmatpush1.msra.mxu0 %v479
  %757 = vmatprep.subr.mxu0 0.0
  %758 = vmatpush1.msra.mxu0 %v482
  %759 = vmatprep.subr.mxu0 0.0
  %760 = vmatpush1.msra.mxu0 %v485
  %761 = vmatprep.subr.mxu0 0.0
  %762 = vmatpush1.msra.mxu0 %v488
  %763 = vmatprep.subr.mxu0 0.0
  %764 = vmatpush1.msra.mxu0 %v491
  %765 = vmatprep.subr.mxu0 0.0
  %766 = vmatpush1.msra.mxu0 %v494
  %767 = vmatprep.subr.mxu0 0.0
  %768 = vmatpush1.msra.mxu0 %v497
  %769 = vmatprep.subr.mxu0 0.0
  %770 = vmatpush1.msra.mxu0 %v500
  %771 = vmatprep.subr.mxu0 0.0
  %772 = vmatpush1.msra.mxu0 %v503
  %773 = vmatprep.subr.mxu0 0.0
  %774 = vmatpush1.msra.mxu0 %v506
  %775 = vmatprep.subr.mxu0 0.0
  %776 = vmatpush1.msra.mxu0 %v509
  %777 = vmatprep.subr.mxu0 0.0
  %778 = vmatpush1.msra.mxu0 %v512
  %779 = vmatprep.mubr.f32.mxu0 %v334
  %780 = vmatmul.mubr.f32.gmra.mrb[0].mxu0 %v332
  %v781 = vpop.f32.mrb[0].mxu0
  %v782 = vadd.f32 %v550, %v781
  %v783 = vpop.f32.mrb[0].mxu0
  %784 = vmatprep.mubr.f32.mxu0 %v340
  %785 = vmatmul.mubr.f32.gmra.mrb[0].mxu0 %v338
  %v786 = vpop.f32.mrb[0].mxu0
  %v787 = vadd.f32 %v550, %v786
  %v788 = vpop.f32.mrb[0].mxu0
  %789 = vdwg.mxu0
  %790 = vmatprep.subr.mxu0 0.0
  %791 = vmatpush1.msra.mxu0 %v515
  %792 = vmatprep.subr.mxu0 0.0
  %793 = vmatpush1.msra.mxu0 %v518
  %794 = vmatprep.subr.mxu0 0.0
  %795 = vmatpush1.msra.mxu0 %v521
  %796 = vmatprep.subr.mxu0 0.0
  %797 = vmatpush1.msra.mxu0 %v524
  %798 = vmatprep.subr.mxu0 0.0
  %799 = vmatpush1.msra.mxu0 %v527
  %800 = vmatprep.subr.mxu0 0.0
  %801 = vmatpush1.msra.mxu0 %v530
  %802 = vmatprep.subr.mxu0 0.0
  %803 = vmatpush1.msra.mxu0 %v533
  %804 = vmatprep.subr.mxu0 0.0
  %805 = vmatpush1.msra.mxu0 %v536
  %806 = vmatprep.subr.mxu0 0.0
  %807 = vmatpush1.msra.mxu0 0.0
  %808 = vmatprep.subr.mxu0 0.0
  %809 = vmatpush1.msra.mxu0 0.0
  %810 = vmatprep.subr.mxu0 0.0
  %811 = vmatpush1.msra.mxu0 0.0
  %812 = vmatprep.subr.mxu0 0.0
  %813 = vmatpush1.msra.mxu0 0.0
  %814 = vmatprep.subr.mxu0 0.0
  %815 = vmatpush1.msra.mxu0 0.0
  %816 = vmatprep.subr.mxu0 0.0
  %817 = vmatpush1.msra.mxu0 0.0
  %818 = vmatprep.subr.mxu0 0.0
  %819 = vmatpush1.msra.mxu0 0.0
  %820 = vmatprep.subr.mxu0 0.0
  %821 = vmatpush1.msra.mxu0 0.0
  %822 = vmatprep.subr.mxu0 0.0
  %823 = vmatpush1.msra.mxu0 0.0
  %824 = vmatprep.subr.mxu0 0.0
  %825 = vmatpush1.msra.mxu0 0.0
  %826 = vmatprep.subr.mxu0 0.0
  %827 = vmatpush1.msra.mxu0 0.0
  %828 = vmatprep.subr.mxu0 0.0
  %829 = vmatpush1.msra.mxu0 0.0
  %830 = vmatprep.subr.mxu0 0.0
  %831 = vmatpush1.msra.mxu0 0.0
  %832 = vmatprep.subr.mxu0 0.0
  %833 = vmatpush1.msra.mxu0 0.0
  %834 = vmatprep.subr.mxu0 0.0
  %835 = vmatpush1.msra.mxu0 0.0
  %836 = vmatprep.subr.mxu0 0.0
  %837 = vmatpush1.msra.mxu0 0.0
  %838 = vmatprep.subr.mxu0 0.0
  %839 = vmatpush1.msra.mxu0 0.0
  %840 = vmatprep.subr.mxu0 0.0
  %841 = vmatpush1.msra.mxu0 0.0
  %842 = vmatprep.subr.mxu0 0.0
  %843 = vmatpush1.msra.mxu0 0.0
  %844 = vmatprep.subr.mxu0 0.0
  %845 = vmatpush1.msra.mxu0 0.0
  %846 = vmatprep.subr.mxu0 0.0
  %847 = vmatpush1.msra.mxu0 0.0
  %848 = vmatprep.subr.mxu0 0.0
  %849 = vmatpush1.msra.mxu0 0.0
  %850 = vmatprep.subr.mxu0 0.0
  %851 = vmatpush1.msra.mxu0 0.0
  %852 = vmatprep.subr.mxu0 0.0
  %853 = vmatpush1.msra.mxu0 0.0
  %854 = vmatprep.mubr.f32.mxu0 0.0
  %855 = vmatmul.mubr.f32.gmra.mrb[0].mxu0 %v556
  %v856 = vpop.f32.mrb[0].mxu0
  %v857 = vadd.f32 %v782, %v856
  %v858 = vpop.f32.mrb[0].mxu0
  %859 = vmatprep.mubr.f32.mxu0 0.0
  %860 = vmatmul.mubr.f32.gmra.mrb[0].mxu0 %v559
  %v861 = vpop.f32.mrb[0].mxu0
  %v862 = vadd.f32 %v787, %v861
  %v863 = vpop.f32.mrb[0].mxu0
  %864 = vdwg.mxu0
  %v865 = vld [vmem:[%s5] sm:$0xff]
  %v866 = vld [vmem:[%s5 + $0x8] sm:$0xff]
  %v867 = vld [vmem:[%s5 + $0x10] sm:$0xff]
  %v868 = vld [vmem:[%s5 + $0x18] sm:$0x3f]
  %v869 = vld [vmem:[%s5 + $0x20] sm:$0x3f]
  %v870 = vld [vmem:[%s5 + $0x28] sm:$0x3f]
  %v871 = vadd.f32 %v705, %v865
  %v872 = vadd.f32 %v707, %v866
  %v873 = vadd.f32 %v857, %v867
  %v874 = vadd.f32 %v711, %v868
  %v875 = vadd.f32 %v713, %v869
  %v876 = vadd.f32 %v862, %v870
  %877 = vst [vmem:[%s6] sm:$0xff] %v871
  %878 = vst [vmem:[%s6 + $0x8] sm:$0xff] %v872
  %879 = vst.msk [vmem:[%s6 + $0x10] sm:$0xff] %vm554, %v873
  %880 = vst [vmem:[%s6 + $0x18] sm:$0x3f] %v874
  %881 = vst [vmem:[%s6 + $0x20] sm:$0x3f] %v875
  %vm882 = vcmask 521216
  %883 = vst.msk [vmem:[%s6 + $0x28] sm:$0x3f] %vm882, %v876
  // Predicated region
  $region26: #{_lambda_.18} parent=0 // pred_check
    _
  $region27: #{_lambda_.18} parent=0 // pred_check_branch
    %885 = sbr.rel (0) target = $region29
  $region28: #{_lambda_.18} parent=0 // pred_region
    _
  $region29: #{_lambda_.18} parent=0 // pred_fallthru
    _
  // Predicated region
  $region30: #{_lambda_.18} parent=0 // pred_check
    _
  $region31: #{_lambda_.18} parent=0 // pred_check_branch
    %887 = sbr.rel (0) target = $region33
  $region32: #{_lambda_.18} parent=0 // pred_region
    _
  $region33: #{_lambda_.18} parent=0 // pred_fallthru
    _

// kernel: _lambda_.19
$region0: #{_lambda_.19}
  #allocation0 [shape = 'u32[]', space=smem, size = 0x4, offset = 0x4, fixed_abs, tag = 'smem constant byte address 0x4 - core index']
  #allocation1 [shape = 'u32[144,128]{1,0:T(1,128)}', space=vmem, size = 0x12000, scoped, tag = 'internal scratch']
  %s0 = inlined_call_operand.hbm [shape: f32[16,16], index: 0, kind: input, shape index: {}]
  %s1 = inlined_call_operand.vmem [shape: f32[14,320], index: 1, kind: input, shape index: {}]
  %s2 = inlined_call_operand.vmem [shape: s32[14,1], index: 2, kind: input, shape index: {}]
  %s3 = inlined_call_operand.vmem [shape: f32[320,320], index: 3, kind: input, shape index: {}]
  %s4 = inlined_call_operand.vmem [shape: f32[1,320], index: 4, kind: input, shape index: {}]
  %s5 = inlined_call_operand.vmem [shape: f32[16,320], index: 5, kind: input, shape index: {}]
  %s6 = inlined_call_operand.vmem [shape: f32[16,320], index: 6, kind: output, shape index: {}]
  %s7 = sld [smem:[#allocation0]]
  $region38: #{_lambda_.19} parent=0
    _
  %s9 = ssub.s32 1, %s7
  %s10 = scalar_select 0, %s9, %s7
  $region1: #{_lambda_.19} parent=0
    #allocation2 [shape = 'u8[8192]{0}', space=vmem, size = 0x2000, scoped, tag = 'input window, operand 0, single buffered']
    #allocation3 [shape = 's32[1]{0}', space=sflag, size = 0x4, scoped, tag = 'scoped memory for _lambda_.19']
    %11 = vsyncpa [#allocation3], 0
    // Predicated region
    $region2: #{_lambda_.19} parent=1 // pred_check
      _
    $region3: #{_lambda_.19} parent=1 // pred_check_branch
      %13 = sbr.rel (0) target = $region5
    $region4: #{_lambda_.19} parent=1 // pred_region
      %s15 = ssub.s32 256, 256
      %16 = vsyncadd [#allocation3], %s15
      %s17 = sshll.u32 [#allocation2], 4
      %s18 = int_to_ptr.vmem [resolvable:$true] %s17
      %23 = dma.hbm_to_vmem [thread:$0]  %s0, 256, %s18, [#allocation3], 128, 128, 8
    $region5: #{_lambda_.19} parent=1 // pred_fallthru
      _
    // Predicated region
    $region6: #{_lambda_.19} parent=1 // pred_check
      _
    $region7: #{_lambda_.19} parent=1 // pred_check_branch
      %25 = sbr.rel (0) target = $region9
    $region8: #{_lambda_.19} parent=1 // pred_region
      _
    $region9: #{_lambda_.19} parent=1 // pred_fallthru
      _
    // Predicated region
    $region10: #{_lambda_.19} parent=1 // pred_check
      _
    $region11: #{_lambda_.19} parent=1 // pred_check_branch
      %27 = sbr.rel (0) target = $region13
    $region12: #{_lambda_.19} parent=1 // pred_region
      _
    $region13: #{_lambda_.19} parent=1 // pred_fallthru
      _
    // Predicated region
    $region14: #{_lambda_.19} parent=1 // pred_check
      _
    $region15: #{_lambda_.19} parent=1 // pred_check_branch
      %29 = sbr.rel (0) target = $region17
    $region16: #{_lambda_.19} parent=1 // pred_region
      _
    $region17: #{_lambda_.19} parent=1 // pred_fallthru
      _
    // Predicated region
    $region18: #{_lambda_.19} parent=1 // pred_check
      _
    $region19: #{_lambda_.19} parent=1 // pred_check_branch
      %31 = sbr.rel (0) target = $region21
    $region20: #{_lambda_.19} parent=1 // pred_region
      _
    $region21: #{_lambda_.19} parent=1 // pred_fallthru
      _
    // Predicated region
    $region22: #{_lambda_.19} parent=1 // pred_check
      _
    $region23: #{_lambda_.19} parent=1 // pred_check_branch
      %33 = sbr.rel (0) target = $region25
    $region24: #{_lambda_.19} parent=1 // pred_region
      _
    $region25: #{_lambda_.19} parent=1 // pred_fallthru
      _
    // Predicated region
    $region26: #{_lambda_.19} parent=1 // pred_check
      _
    $region27: #{_lambda_.19} parent=1 // pred_check_branch
      %35 = sbr.rel (0) target = $region29
    $region28: #{_lambda_.19} parent=1 // pred_region
      %36 = dma.done [#allocation3], 256
    $region29: #{_lambda_.19} parent=1 // pred_fallthru
      _
    %v37 = vld [vmem:[%s2] sm:$0xff]
    %v38 = vld [vmem:[%s2 + $0x8] sm:$0x3f]
    %v39 = vlaneseq
    %v40 = vand.u32 %v39, 127
    %41 = vset.pattern.permute.xlu0 0
    %42 = vperm.xlu0 %41, %v37
    %v43 = vpop.permute.xlu0 %42
    %44 = vset.pattern.permute.xlu0 0
    %45 = vperm.xlu0 %44, %v38
    %v46 = vpop.permute.xlu0 %45
    %vm47 = vcmp.eq.s32.totalorder %v40, %v43
    %vm48 = vcmp.eq.s32.totalorder %v40, %v46
    %v49 = vsel %vm47, 1, 0
    %v50 = vsel %vm48, 1, 0
    %v51 = vcvt.s32.f32 %v49
    %v52 = vcvt.s32.f32 %v50
    %v53 = vld [vmem:[%s1] sm:$0xff]
    %v54 = vld [vmem:[%s1 + $0x8] sm:$0xff]
    %v55 = vld [vmem:[%s1 + $0x10] sm:$0xff]
    %v56 = vld [vmem:[%s1 + $0x18] sm:$0x3f]
    %v57 = vld [vmem:[%s1 + $0x20] sm:$0x3f]
    %v58 = vld [vmem:[%s1 + $0x28] sm:$0x3f]
    %59 = vxpose.xlu0.b32.start [1/16] %v51, 128
    %60 = vxpose.xlu0.b32.cont [2/16] %v52, 128
    %61 = vxpose.xlu0.b32.cont [3/16] 0.0, 128
    %62 = vxpose.xlu0.b32.cont [4/16] 0.0, 128
    %63 = vxpose.xlu0.b32.cont [5/16] 0.0, 128
    %64 = vxpose.xlu0.b32.cont [6/16] 0.0, 128
    %65 = vxpose.xlu0.b32.cont [7/16] 0.0, 128
    %66 = vxpose.xlu0.b32.cont [8/16] 0.0, 128
    %67 = vxpose.xlu0.b32.cont [9/16] 0.0, 128
    %68 = vxpose.xlu0.b32.cont [10/16] 0.0, 128
    %69 = vxpose.xlu0.b32.cont [11/16] 0.0, 128
    %70 = vxpose.xlu0.b32.cont [12/16] 0.0, 128
    %71 = vxpose.xlu0.b32.cont [13/16] 0.0, 128
    %72 = vxpose.xlu0.b32.cont [14/16] 0.0, 128
    %73 = vxpose.xlu0.b32.cont [15/16] 0.0, 128
    %74 = vxpose.xlu0.b32.end [16/16] 0.0, 128
    %v75 = vpop.trf.xlu0
    %v76 = vpop.trf.xlu0
    %v77 = vpop.trf.xlu0
    %v78 = vpop.trf.xlu0
    %v79 = vpop.trf.xlu0
    %v80 = vpop.trf.xlu0
    %v81 = vpop.trf.xlu0
    %v82 = vpop.trf.xlu0
    %v83 = vpop.trf.xlu0
    %v84 = vpop.trf.xlu0
    %v85 = vpop.trf.xlu0
    %v86 = vpop.trf.xlu0
    %v87 = vpop.trf.xlu0
    %v88 = vpop.trf.xlu0
    %v89 = vpop.trf.xlu0
    %v90 = vpop.trf.xlu0
    %vm91 = vcmask 113664
    %v93 = vsel %vm91, %v75, 0
    %v96 = vsel %vm91, %v76, 0
    %vm98 = vcmask 1045504
    %v100 = vsel %vm98, %v56, 0
    %v103 = vsel %vm98, %v57, 0
    %v106 = vsel %vm98, %v58, 0
    %108 = vmatprep.subr.mxu0 %v54
    %109 = vmatpush1.msra.mxu0 %v53
    %110 = vmatprep.subr.mxu0 %v103
    %111 = vmatpush1.msra.mxu0 %v100
    %112 = vmatprep.subr.mxu0 0.0
    %113 = vmatpush1.msra.mxu0 0.0
    %114 = vmatprep.subr.mxu0 0.0
    %115 = vmatpush1.msra.mxu0 0.0
    %116 = vmatprep.subr.mxu0 0.0
    %117 = vmatpush1.msra.mxu0 0.0
    %118 = vmatprep.subr.mxu0 0.0
    %119 = vmatpush1.msra.mxu0 0.0
    %120 = vmatprep.subr.mxu0 0.0
    %121 = vmatpush1.msra.mxu0 0.0
    %122 = vmatprep.subr.mxu0 0.0
    %123 = vmatpush1.msra.mxu0 0.0
    %124 = vmatprep.subr.mxu0 0.0
    %125 = vmatpush1.msra.mxu0 0.0
    %126 = vmatprep.subr.mxu0 0.0
    %127 = vmatpush1.msra.mxu0 0.0
    %128 = vmatprep.subr.mxu0 0.0
    %129 = vmatpush1.msra.mxu0 0.0
    %130 = vmatprep.subr.mxu0 0.0
    %131 = vmatpush1.msra.mxu0 0.0
    %132 = vmatprep.subr.mxu0 0.0
    %133 = vmatpush1.msra.mxu0 0.0
    %134 = vmatprep.subr.mxu0 0.0
    %135 = vmatpush1.msra.mxu0 0.0
    %136 = vmatprep.subr.mxu0 0.0
    %137 = vmatpush1.msra.mxu0 0.0
    %138 = vmatprep.subr.mxu0 0.0
    %139 = vmatpush1.msra.mxu0 0.0
    %140 = vmatprep.subr.mxu0 0.0
    %141 = vmatpush1.msra.mxu0 0.0
    %142 = vmatprep.subr.mxu0 0.0
    %143 = vmatpush1.msra.mxu0 0.0
    %144 = vmatprep.subr.mxu0 0.0
    %145 = vmatpush1.msra.mxu0 0.0
    %146 = vmatprep.subr.mxu0 0.0
    %147 = vmatpush1.msra.mxu0 0.0
    %148 = vmatprep.subr.mxu0 0.0
    %149 = vmatpush1.msra.mxu0 0.0
    %150 = vmatprep.subr.mxu0 0.0
    %151 = vmatpush1.msra.mxu0 0.0
    %152 = vmatprep.subr.mxu0 0.0
    %153 = vmatpush1.msra.mxu0 0.0
    %154 = vmatprep.subr.mxu0 0.0
    %155 = vmatpush1.msra.mxu0 0.0
    %156 = vmatprep.subr.mxu0 0.0
    %157 = vmatpush1.msra.mxu0 0.0
    %158 = vmatprep.subr.mxu0 0.0
    %159 = vmatpush1.msra.mxu0 0.0
    %160 = vmatprep.subr.mxu0 0.0
    %161 = vmatpush1.msra.mxu0 0.0
    %162 = vmatprep.subr.mxu0 0.0
    %163 = vmatpush1.msra.mxu0 0.0
    %164 = vmatprep.subr.mxu0 0.0
    %165 = vmatpush1.msra.mxu0 0.0
    %166 = vmatprep.subr.mxu0 0.0
    %167 = vmatpush1.msra.mxu0 0.0
    %168 = vmatprep.subr.mxu0 0.0
    %169 = vmatpush1.msra.mxu0 0.0
    %170 = vmatprep.subr.mxu0 0.0
    %171 = vmatpush1.msra.mxu0 0.0
    %172 = vmatprep.mubr.f32.mxu0 0.0
    %173 = vmatmul.mubr.f32.gmra.mrb[0].mxu0 %v93
    %v174 = vpop.f32.mrb[0].mxu0
    %v175 = vadd.f32 0.0, %v174
    %v176 = vpop.f32.mrb[0].mxu0
    %v177 = vadd.f32 0.0, %v176
    %178 = vmatprep.mubr.f32.mxu0 0.0
    %179 = vmatmul.mubr.f32.gmra.mrb[0].mxu0 %v96
    %v180 = vpop.f32.mrb[0].mxu0
    %v181 = vadd.f32 0.0, %v180
    %v182 = vpop.f32.mrb[0].mxu0
    %v183 = vadd.f32 0.0, %v182
    %184 = vdwg.mxu0
    %185 = vmatprep.subr.mxu0 0.0
    %186 = vmatpush1.msra.mxu0 %v55
    %187 = vmatprep.subr.mxu0 0.0
    %188 = vmatpush1.msra.mxu0 %v106
    %189 = vmatprep.subr.mxu0 0.0
    %190 = vmatpush1.msra.mxu0 0.0
    %191 = vmatprep.subr.mxu0 0.0
    %192 = vmatpush1.msra.mxu0 0.0
    %193 = vmatprep.subr.mxu0 0.0
    %194 = vmatpush1.msra.mxu0 0.0
    %195 = vmatprep.subr.mxu0 0.0
    %196 = vmatpush1.msra.mxu0 0.0
    %197 = vmatprep.subr.mxu0 0.0
    %198 = vmatpush1.msra.mxu0 0.0
    %199 = vmatprep.subr.mxu0 0.0
    %200 = vmatpush1.msra.mxu0 0.0
    %201 = vmatprep.subr.mxu0 0.0
    %202 = vmatpush1.msra.mxu0 0.0
    %203 = vmatprep.subr.mxu0 0.0
    %204 = vmatpush1.msra.mxu0 0.0
    %205 = vmatprep.subr.mxu0 0.0
    %206 = vmatpush1.msra.mxu0 0.0
    %207 = vmatprep.subr.mxu0 0.0
    %208 = vmatpush1.msra.mxu0 0.0
    %209 = vmatprep.subr.mxu0 0.0
    %210 = vmatpush1.msra.mxu0 0.0
    %211 = vmatprep.subr.mxu0 0.0
    %212 = vmatpush1.msra.mxu0 0.0
    %213 = vmatprep.subr.mxu0 0.0
    %214 = vmatpush1.msra.mxu0 0.0
    %215 = vmatprep.subr.mxu0 0.0
    %216 = vmatpush1.msra.mxu0 0.0
    %217 = vmatprep.subr.mxu0 0.0
    %218 = vmatpush1.msra.mxu0 0.0
    %219 = vmatprep.subr.mxu0 0.0
    %220 = vmatpush1.msra.mxu0 0.0
    %221 = vmatprep.subr.mxu0 0.0
    %222 = vmatpush1.msra.mxu0 0.0
    %223 = vmatprep.subr.mxu0 0.0
    %224 = vmatpush1.msra.mxu0 0.0
    %225 = vmatprep.subr.mxu0 0.0
    %226 = vmatpush1.msra.mxu0 0.0
    %227 = vmatprep.subr.mxu0 0.0
    %228 = vmatpush1.msra.mxu0 0.0
    %229 = vmatprep.subr.mxu0 0.0
    %230 = vmatpush1.msra.mxu0 0.0
    %231 = vmatprep.subr.mxu0 0.0
    %232 = vmatpush1.msra.mxu0 0.0
    %233 = vmatprep.subr.mxu0 0.0
    %234 = vmatpush1.msra.mxu0 0.0
    %235 = vmatprep.subr.mxu0 0.0
    %236 = vmatpush1.msra.mxu0 0.0
    %237 = vmatprep.subr.mxu0 0.0
    %238 = vmatpush1.msra.mxu0 0.0
    %239 = vmatprep.subr.mxu0 0.0
    %240 = vmatpush1.msra.mxu0 0.0
    %241 = vmatprep.subr.mxu0 0.0
    %242 = vmatpush1.msra.mxu0 0.0
    %243 = vmatprep.subr.mxu0 0.0
    %244 = vmatpush1.msra.mxu0 0.0
    %245 = vmatprep.subr.mxu0 0.0
    %246 = vmatpush1.msra.mxu0 0.0
    %247 = vmatprep.subr.mxu0 0.0
    %248 = vmatpush1.msra.mxu0 0.0
    %249 = vmatprep.mubr.f32.mxu0 0.0
    %250 = vmatmul.mubr.f32.gmra.mrb[0].mxu0 %v93
    %v251 = vpop.f32.mrb[0].mxu0
    %v252 = vadd.f32 0.0, %v251
    %v253 = vpop.f32.mrb[0].mxu0
    %254 = vmatprep.mubr.f32.mxu0 0.0
    %255 = vmatmul.mubr.f32.gmra.mrb[0].mxu0 %v96
    %v256 = vpop.f32.mrb[0].mxu0
    %v257 = vadd.f32 0.0, %v256
    %v258 = vpop.f32.mrb[0].mxu0
    %259 = vdwg.mxu0
    %v260 = vld [vmem:[#allocation2] sm:$0xff]
    %v261 = vld [vmem:[#allocation2 + $0x8] sm:$0xff]
    %vm262 = vcmask 130048
    %v264 = vsel %vm262, %v260, 0
    %v267 = vsel %vm262, %v261, 0
    %269 = vmatprep.subr.mxu0 %v177
    %270 = vmatpush1.msra.mxu0 %v175
    %271 = vmatprep.subr.mxu0 %v183
    %272 = vmatpush1.msra.mxu0 %v181
    %273 = vmatprep.subr.mxu0 0.0
    %274 = vmatpush1.msra.mxu0 0.0
    %275 = vmatprep.subr.mxu0 0.0
    %276 = vmatpush1.msra.mxu0 0.0
    %277 = vmatprep.subr.mxu0 0.0
    %278 = vmatpush1.msra.mxu0 0.0
    %279 = vmatprep.subr.mxu0 0.0
    %280 = vmatpush1.msra.mxu0 0.0
    %281 = vmatprep.subr.mxu0 0.0
    %282 = vmatpush1.msra.mxu0 0.0
    %283 = vmatprep.subr.mxu0 0.0
    %284 = vmatpush1.msra.mxu0 0.0
    %285 = vmatprep.subr.mxu0 0.0
    %286 = vmatpush1.msra.mxu0 0.0
    %287 = vmatprep.subr.mxu0 0.0
    %288 = vmatpush1.msra.mxu0 0.0
    %289 = vmatprep.subr.mxu0 0.0
    %290 = vmatpush1.msra.mxu0 0.0
    %291 = vmatprep.subr.mxu0 0.0
    %292 = vmatpush1.msra.mxu0 0.0
    %293 = vmatprep.subr.mxu0 0.0
    %294 = vmatpush1.msra.mxu0 0.0
    %295 = vmatprep.subr.mxu0 0.0
    %296 = vmatpush1.msra.mxu0 0.0
    %297 = vmatprep.subr.mxu0 0.0
    %298 = vmatpush1.msra.mxu0 0.0
    %299 = vmatprep.subr.mxu0 0.0
    %300 = vmatpush1.msra.mxu0 0.0
    %301 = vmatprep.subr.mxu0 0.0
    %302 = vmatpush1.msra.mxu0 0.0
    %303 = vmatprep.subr.mxu0 0.0
    %304 = vmatpush1.msra.mxu0 0.0
    %305 = vmatprep.subr.mxu0 0.0
    %306 = vmatpush1.msra.mxu0 0.0
    %307 = vmatprep.subr.mxu0 0.0
    %308 = vmatpush1.msra.mxu0 0.0
    %309 = vmatprep.subr.mxu0 0.0
    %310 = vmatpush1.msra.mxu0 0.0
    %311 = vmatprep.subr.mxu0 0.0
    %312 = vmatpush1.msra.mxu0 0.0
    %313 = vmatprep.subr.mxu0 0.0
    %314 = vmatpush1.msra.mxu0 0.0
    %315 = vmatprep.subr.mxu0 0.0
    %316 = vmatpush1.msra.mxu0 0.0
    %317 = vmatprep.subr.mxu0 0.0
    %318 = vmatpush1.msra.mxu0 0.0
    %319 = vmatprep.subr.mxu0 0.0
    %320 = vmatpush1.msra.mxu0 0.0
    %321 = vmatprep.subr.mxu0 0.0
    %322 = vmatpush1.msra.mxu0 0.0
    %323 = vmatprep.subr.mxu0 0.0
    %324 = vmatpush1.msra.mxu0 0.0
    %325 = vmatprep.subr.mxu0 0.0
    %326 = vmatpush1.msra.mxu0 0.0
    %327 = vmatprep.subr.mxu0 0.0
    %328 = vmatpush1.msra.mxu0 0.0
    %329 = vmatprep.subr.mxu0 0.0
    %330 = vmatpush1.msra.mxu0 0.0
    %331 = vmatprep.subr.mxu0 0.0
    %332 = vmatpush1.msra.mxu0 0.0
    %333 = vmatprep.mubr.f32.mxu0 0.0
    %334 = vmatmul.mubr.f32.gmra.mrb[0].mxu0 %v264
    %v335 = vpop.f32.mrb[0].mxu0
    %v336 = vadd.f32 0.0, %v335
    %v337 = vpop.f32.mrb[0].mxu0
    %v338 = vadd.f32 0.0, %v337
    %339 = vmatprep.mubr.f32.mxu0 0.0
    %340 = vmatmul.mubr.f32.gmra.mrb[0].mxu0 %v267
    %v341 = vpop.f32.mrb[0].mxu0
    %v342 = vadd.f32 0.0, %v341
    %v343 = vpop.f32.mrb[0].mxu0
    %v344 = vadd.f32 0.0, %v343
    %345 = vdwg.mxu0
    %346 = vmatprep.subr.mxu0 0.0
    %347 = vmatpush1.msra.mxu0 %v252
    %348 = vmatprep.subr.mxu0 0.0
    %349 = vmatpush1.msra.mxu0 %v257
    %350 = vmatprep.subr.mxu0 0.0
    %351 = vmatpush1.msra.mxu0 0.0
    %352 = vmatprep.subr.mxu0 0.0
    %353 = vmatpush1.msra.mxu0 0.0
    %354 = vmatprep.subr.mxu0 0.0
    %355 = vmatpush1.msra.mxu0 0.0
    %356 = vmatprep.subr.mxu0 0.0
    %357 = vmatpush1.msra.mxu0 0.0
    %358 = vmatprep.subr.mxu0 0.0
    %359 = vmatpush1.msra.mxu0 0.0
    %360 = vmatprep.subr.mxu0 0.0
    %361 = vmatpush1.msra.mxu0 0.0
    %362 = vmatprep.subr.mxu0 0.0
    %363 = vmatpush1.msra.mxu0 0.0
    %364 = vmatprep.subr.mxu0 0.0
    %365 = vmatpush1.msra.mxu0 0.0
    %366 = vmatprep.subr.mxu0 0.0
    %367 = vmatpush1.msra.mxu0 0.0
    %368 = vmatprep.subr.mxu0 0.0
    %369 = vmatpush1.msra.mxu0 0.0
    %370 = vmatprep.subr.mxu0 0.0
    %371 = vmatpush1.msra.mxu0 0.0
    %372 = vmatprep.subr.mxu0 0.0
    %373 = vmatpush1.msra.mxu0 0.0
    %374 = vmatprep.subr.mxu0 0.0
    %375 = vmatpush1.msra.mxu0 0.0
    %376 = vmatprep.subr.mxu0 0.0
    %377 = vmatpush1.msra.mxu0 0.0
    %378 = vmatprep.subr.mxu0 0.0
    %379 = vmatpush1.msra.mxu0 0.0
    %380 = vmatprep.subr.mxu0 0.0
    %381 = vmatpush1.msra.mxu0 0.0
    %382 = vmatprep.subr.mxu0 0.0
    %383 = vmatpush1.msra.mxu0 0.0
    %384 = vmatprep.subr.mxu0 0.0
    %385 = vmatpush1.msra.mxu0 0.0
    %386 = vmatprep.subr.mxu0 0.0
    %387 = vmatpush1.msra.mxu0 0.0
    %388 = vmatprep.subr.mxu0 0.0
    %389 = vmatpush1.msra.mxu0 0.0
    %390 = vmatprep.subr.mxu0 0.0
    %391 = vmatpush1.msra.mxu0 0.0
    %392 = vmatprep.subr.mxu0 0.0
    %393 = vmatpush1.msra.mxu0 0.0
    %394 = vmatprep.subr.mxu0 0.0
    %395 = vmatpush1.msra.mxu0 0.0
    %396 = vmatprep.subr.mxu0 0.0
    %397 = vmatpush1.msra.mxu0 0.0
    %398 = vmatprep.subr.mxu0 0.0
    %399 = vmatpush1.msra.mxu0 0.0
    %400 = vmatprep.subr.mxu0 0.0
    %401 = vmatpush1.msra.mxu0 0.0
    %402 = vmatprep.subr.mxu0 0.0
    %403 = vmatpush1.msra.mxu0 0.0
    %404 = vmatprep.subr.mxu0 0.0
    %405 = vmatpush1.msra.mxu0 0.0
    %406 = vmatprep.subr.mxu0 0.0
    %407 = vmatpush1.msra.mxu0 0.0
    %408 = vmatprep.subr.mxu0 0.0
    %409 = vmatpush1.msra.mxu0 0.0
    %410 = vmatprep.mubr.f32.mxu0 0.0
    %411 = vmatmul.mubr.f32.gmra.mrb[0].mxu0 %v264
    %v412 = vpop.f32.mrb[0].mxu0
    %v413 = vadd.f32 0.0, %v412
    %v414 = vpop.f32.mrb[0].mxu0
    %415 = vmatprep.mubr.f32.mxu0 0.0
    %416 = vmatmul.mubr.f32.gmra.mrb[0].mxu0 %v267
    %v417 = vpop.f32.mrb[0].mxu0
    %v418 = vadd.f32 0.0, %v417
    %v419 = vpop.f32.mrb[0].mxu0
    %420 = vdwg.mxu0
    %v421 = vld [vmem:[%s3] sm:$0xff]
    %v422 = vld [vmem:[%s3 + $0x8] sm:$0xff]
    %v423 = vld [vmem:[%s3 + $0x10] sm:$0xff]
    %v424 = vld [vmem:[%s3 + $0x18] sm:$0xff]
    %v425 = vld [vmem:[%s3 + $0x20] sm:$0xff]
    %v426 = vld [vmem:[%s3 + $0x28] sm:$0xff]
    %v427 = vld [vmem:[%s3 + $0x30] sm:$0xff]
    %v428 = vld [vmem:[%s3 + $0x38] sm:$0xff]
    %v429 = vld [vmem:[%s3 + $0x40] sm:$0xff]
    %v430 = vld [vmem:[%s3 + $0x48] sm:$0xff]
    %v431 = vld [vmem:[%s3 + $0x50] sm:$0xff]
    %v432 = vld [vmem:[%s3 + $0x58] sm:$0xff]
    %v433 = vld [vmem:[%s3 + $0x60] sm:$0xff]
    %v434 = vld [vmem:[%s3 + $0x68] sm:$0xff]
    %v435 = vld [vmem:[%s3 + $0x70] sm:$0xff]
    %v436 = vld [vmem:[%s3 + $0x78] sm:$0xff]
    %v437 = vld [vmem:[%s3 + $0x80] sm:$0xff]
    %v438 = vld [vmem:[%s3 + $0x88] sm:$0xff]
    %v439 = vld [vmem:[%s3 + $0x90] sm:$0xff]
    %v440 = vld [vmem:[%s3 + $0x98] sm:$0xff]
    %v441 = vld [vmem:[%s3 + $0xa0] sm:$0xff]
    %v442 = vld [vmem:[%s3 + $0xa8] sm:$0xff]
    %v443 = vld [vmem:[%s3 + $0xb0] sm:$0xff]
    %v444 = vld [vmem:[%s3 + $0xb8] sm:$0xff]
    %v445 = vld [vmem:[%s3 + $0xc0] sm:$0xff]
    %v446 = vld [vmem:[%s3 + $0xc8] sm:$0xff]
    %v447 = vld [vmem:[%s3 + $0xd0] sm:$0xff]
    %v448 = vld [vmem:[%s3 + $0xd8] sm:$0xff]
    %v449 = vld [vmem:[%s3 + $0xe0] sm:$0xff]
    %v450 = vld [vmem:[%s3 + $0xe8] sm:$0xff]
    %v451 = vld [vmem:[%s3 + $0xf0] sm:$0xff]
    %v452 = vld [vmem:[%s3 + $0xf8] sm:$0xff]
    %v453 = vld [vmem:[%s3 + $0x100] sm:$0xff]
    %v454 = vld [vmem:[%s3 + $0x108] sm:$0xff]
    %v455 = vld [vmem:[%s3 + $0x110] sm:$0xff]
    %v456 = vld [vmem:[%s3 + $0x118] sm:$0xff]
    %v457 = vld [vmem:[%s3 + $0x120] sm:$0xff]
    %v458 = vld [vmem:[%s3 + $0x128] sm:$0xff]
    %v459 = vld [vmem:[%s3 + $0x130] sm:$0xff]
    %v460 = vld [vmem:[%s3 + $0x138] sm:$0xff]
    %v461 = vld [vmem:[%s3 + $0x140] sm:$0xff]
    %v462 = vld [vmem:[%s3 + $0x148] sm:$0xff]
    %v463 = vld [vmem:[%s3 + $0x150] sm:$0xff]
    %v464 = vld [vmem:[%s3 + $0x158] sm:$0xff]
    %v465 = vld [vmem:[%s3 + $0x160] sm:$0xff]
    %v466 = vld [vmem:[%s3 + $0x168] sm:$0xff]
    %v467 = vld [vmem:[%s3 + $0x170] sm:$0xff]
    %v468 = vld [vmem:[%s3 + $0x178] sm:$0xff]
    %v469 = vld [vmem:[%s3 + $0x180] sm:$0xff]
    %v470 = vld [vmem:[%s3 + $0x188] sm:$0xff]
    %v471 = vld [vmem:[%s3 + $0x190] sm:$0xff]
    %v472 = vld [vmem:[%s3 + $0x198] sm:$0xff]
    %v473 = vld [vmem:[%s3 + $0x1a0] sm:$0xff]
    %v474 = vld [vmem:[%s3 + $0x1a8] sm:$0xff]
    %v475 = vld [vmem:[%s3 + $0x1b0] sm:$0xff]
    %v476 = vld [vmem:[%s3 + $0x1b8] sm:$0xff]
    %v477 = vld [vmem:[%s3 + $0x1c0] sm:$0xff]
    %v478 = vld [vmem:[%s3 + $0x1c8] sm:$0xff]
    %v479 = vld [vmem:[%s3 + $0x1d0] sm:$0xff]
    %v480 = vld [vmem:[%s3 + $0x1d8] sm:$0xff]
    %v481 = vld [vmem:[%s3 + $0x1e0] sm:$0xff]
    %v482 = vld [vmem:[%s3 + $0x1e8] sm:$0xff]
    %v483 = vld [vmem:[%s3 + $0x1f0] sm:$0xff]
    %v484 = vld [vmem:[%s3 + $0x1f8] sm:$0xff]
    %v485 = vld [vmem:[%s3 + $0x200] sm:$0xff]
    %v486 = vld [vmem:[%s3 + $0x208] sm:$0xff]
    %v487 = vld [vmem:[%s3 + $0x210] sm:$0xff]
    %v488 = vld [vmem:[%s3 + $0x218] sm:$0xff]
    %v489 = vld [vmem:[%s3 + $0x220] sm:$0xff]
    %v490 = vld [vmem:[%s3 + $0x228] sm:$0xff]
    %v491 = vld [vmem:[%s3 + $0x230] sm:$0xff]
    %v492 = vld [vmem:[%s3 + $0x238] sm:$0xff]
    %v493 = vld [vmem:[%s3 + $0x240] sm:$0xff]
    %v494 = vld [vmem:[%s3 + $0x248] sm:$0xff]
    %v495 = vld [vmem:[%s3 + $0x250] sm:$0xff]
    %v496 = vld [vmem:[%s3 + $0x258] sm:$0xff]
    %v497 = vld [vmem:[%s3 + $0x260] sm:$0xff]
    %v498 = vld [vmem:[%s3 + $0x268] sm:$0xff]
    %v499 = vld [vmem:[%s3 + $0x270] sm:$0xff]
    %v500 = vld [vmem:[%s3 + $0x278] sm:$0xff]
    %v501 = vld [vmem:[%s3 + $0x280] sm:$0xff]
    %v502 = vld [vmem:[%s3 + $0x288] sm:$0xff]
    %v503 = vld [vmem:[%s3 + $0x290] sm:$0xff]
    %v504 = vld [vmem:[%s3 + $0x298] sm:$0xff]
    %v505 = vld [vmem:[%s3 + $0x2a0] sm:$0xff]
    %v506 = vld [vmem:[%s3 + $0x2a8] sm:$0xff]
    %v507 = vld [vmem:[%s3 + $0x2b0] sm:$0xff]
    %v508 = vld [vmem:[%s3 + $0x2b8] sm:$0xff]
    %v509 = vld [vmem:[%s3 + $0x2c0] sm:$0xff]
    %v510 = vld [vmem:[%s3 + $0x2c8] sm:$0xff]
    %v511 = vld [vmem:[%s3 + $0x2d0] sm:$0xff]
    %v512 = vld [vmem:[%s3 + $0x2d8] sm:$0xff]
    %v513 = vld [vmem:[%s3 + $0x2e0] sm:$0xff]
    %v514 = vld [vmem:[%s3 + $0x2e8] sm:$0xff]
    %v515 = vld [vmem:[%s3 + $0x2f0] sm:$0xff]
    %v516 = vld [vmem:[%s3 + $0x2f8] sm:$0xff]
    %v517 = vld [vmem:[%s3 + $0x300] sm:$0xff]
    %v518 = vld [vmem:[%s3 + $0x308] sm:$0xff]
    %v519 = vld [vmem:[%s3 + $0x310] sm:$0xff]
    %v520 = vld [vmem:[%s3 + $0x318] sm:$0xff]
    %v521 = vld [vmem:[%s3 + $0x320] sm:$0xff]
    %v522 = vld [vmem:[%s3 + $0x328] sm:$0xff]
    %v523 = vld [vmem:[%s3 + $0x330] sm:$0xff]
    %v524 = vld [vmem:[%s3 + $0x338] sm:$0xff]
    %v525 = vld [vmem:[%s3 + $0x340] sm:$0xff]
    %v526 = vld [vmem:[%s3 + $0x348] sm:$0xff]
    %v527 = vld [vmem:[%s3 + $0x350] sm:$0xff]
    %v528 = vld [vmem:[%s3 + $0x358] sm:$0xff]
    %v529 = vld [vmem:[%s3 + $0x360] sm:$0xff]
    %v530 = vld [vmem:[%s3 + $0x368] sm:$0xff]
    %v531 = vld [vmem:[%s3 + $0x370] sm:$0xff]
    %v532 = vld [vmem:[%s3 + $0x378] sm:$0xff]
    %v533 = vld [vmem:[%s3 + $0x380] sm:$0xff]
    %v534 = vld [vmem:[%s3 + $0x388] sm:$0xff]
    %v535 = vld [vmem:[%s3 + $0x390] sm:$0xff]
    %v536 = vld [vmem:[%s3 + $0x398] sm:$0xff]
    %v537 = vld [vmem:[%s3 + $0x3a0] sm:$0xff]
    %v538 = vld [vmem:[%s3 + $0x3a8] sm:$0xff]
    %v539 = vld [vmem:[%s3 + $0x3b0] sm:$0xff]
    %v540 = vld [vmem:[%s3 + $0x3b8] sm:$0xff]
    %v541 = vld [vmem:[%s4] sm:$0x7]
    %v543 = vlaneseq
    %v544 = vshrl.u32 %v543, 7
    %v545 = vsub.s32 0, %v544
    %v546 = vrot.slane %v541, %v545
    %v547 = vlaneseq
    %v548 = vshrl.u32 %v547, 7
    %v549 = vsub.s32 1, %v548
    %v550 = vrot.slane %v541, %v549
    %v551 = vlaneseq
    %v552 = vshrl.u32 %v551, 7
    %v553 = vsub.s32 2, %v552
    %v554 = vrot.slane %v541, %v553
    %vm558 = vcmask 523264
    %v560 = vsel %vm558, %v413, 0
    %v563 = vsel %vm558, %v418, 0
    %565 = vmatprep.subr.mxu0 %v422
    %566 = vmatpush1.msra.mxu0 %v421
    %567 = vmatprep.subr.mxu0 %v425
    %568 = vmatpush1.msra.mxu0 %v424
    %569 = vmatprep.subr.mxu0 %v428
    %570 = vmatpush1.msra.mxu0 %v427
    %571 = vmatprep.subr.mxu0 %v431
    %572 = vmatpush1.msra.mxu0 %v430
    %573 = vmatprep.subr.mxu0 %v434
    %574 = vmatpush1.msra.mxu0 %v433
    %575 = vmatprep.subr.mxu0 %v437
    %576 = vmatpush1.msra.mxu0 %v436
    %577 = vmatprep.subr.mxu0 %v440
    %578 = vmatpush1.msra.mxu0 %v439
    %579 = vmatprep.subr.mxu0 %v443
    %580 = vmatpush1.msra.mxu0 %v442
    %581 = vmatprep.subr.mxu0 %v446
    %582 = vmatpush1.msra.mxu0 %v445
    %583 = vmatprep.subr.mxu0 %v449
    %584 = vmatpush1.msra.mxu0 %v448
    %585 = vmatprep.subr.mxu0 %v452
    %586 = vmatpush1.msra.mxu0 %v451
    %587 = vmatprep.subr.mxu0 %v455
    %588 = vmatpush1.msra.mxu0 %v454
    %589 = vmatprep.subr.mxu0 %v458
    %590 = vmatpush1.msra.mxu0 %v457
    %591 = vmatprep.subr.mxu0 %v461
    %592 = vmatpush1.msra.mxu0 %v460
    %593 = vmatprep.subr.mxu0 %v464
    %594 = vmatpush1.msra.mxu0 %v463
    %595 = vmatprep.subr.mxu0 %v467
    %596 = vmatpush1.msra.mxu0 %v466
    %597 = vmatprep.subr.mxu0 %v470
    %598 = vmatpush1.msra.mxu0 %v469
    %599 = vmatprep.subr.mxu0 %v473
    %600 = vmatpush1.msra.mxu0 %v472
    %601 = vmatprep.subr.mxu0 %v476
    %602 = vmatpush1.msra.mxu0 %v475
    %603 = vmatprep.subr.mxu0 %v479
    %604 = vmatpush1.msra.mxu0 %v478
    %605 = vmatprep.subr.mxu0 %v482
    %606 = vmatpush1.msra.mxu0 %v481
    %607 = vmatprep.subr.mxu0 %v485
    %608 = vmatpush1.msra.mxu0 %v484
    %609 = vmatprep.subr.mxu0 %v488
    %610 = vmatpush1.msra.mxu0 %v487
    %611 = vmatprep.subr.mxu0 %v491
    %612 = vmatpush1.msra.mxu0 %v490
    %613 = vmatprep.subr.mxu0 %v494
    %614 = vmatpush1.msra.mxu0 %v493
    %615 = vmatprep.subr.mxu0 %v497
    %616 = vmatpush1.msra.mxu0 %v496
    %617 = vmatprep.subr.mxu0 %v500
    %618 = vmatpush1.msra.mxu0 %v499
    %619 = vmatprep.subr.mxu0 %v503
    %620 = vmatpush1.msra.mxu0 %v502
    %621 = vmatprep.subr.mxu0 %v506
    %622 = vmatpush1.msra.mxu0 %v505
    %623 = vmatprep.subr.mxu0 %v509
    %624 = vmatpush1.msra.mxu0 %v508
    %625 = vmatprep.subr.mxu0 %v512
    %626 = vmatpush1.msra.mxu0 %v511
    %627 = vmatprep.subr.mxu0 %v515
    %628 = vmatpush1.msra.mxu0 %v514
    %629 = vmatprep.mubr.f32.mxu0 %v338
    %630 = vmatmul.mubr.f32.gmra.mrb[0].mxu0 %v336
    %v631 = vpop.f32.mrb[0].mxu0
    %v632 = vadd.f32 %v546, %v631
    %v633 = vpop.f32.mrb[0].mxu0
    %v634 = vadd.f32 %v550, %v633
    %635 = vmatprep.mubr.f32.mxu0 %v344
    %636 = vmatmul.mubr.f32.gmra.mrb[0].mxu0 %v342
    %v637 = vpop.f32.mrb[0].mxu0
    %v638 = vadd.f32 %v546, %v637
    %v639 = vpop.f32.mrb[0].mxu0
    %v640 = vadd.f32 %v550, %v639
    %641 = vdwg.mxu0
    %642 = vmatprep.subr.mxu0 %v518
    %643 = vmatpush1.msra.mxu0 %v517
    %644 = vmatprep.subr.mxu0 %v521
    %645 = vmatpush1.msra.mxu0 %v520
    %646 = vmatprep.subr.mxu0 %v524
    %647 = vmatpush1.msra.mxu0 %v523
    %648 = vmatprep.subr.mxu0 %v527
    %649 = vmatpush1.msra.mxu0 %v526
    %650 = vmatprep.subr.mxu0 %v530
    %651 = vmatpush1.msra.mxu0 %v529
    %652 = vmatprep.subr.mxu0 %v533
    %653 = vmatpush1.msra.mxu0 %v532
    %654 = vmatprep.subr.mxu0 %v536
    %655 = vmatpush1.msra.mxu0 %v535
    %656 = vmatprep.subr.mxu0 %v539
    %657 = vmatpush1.msra.mxu0 %v538
    %658 = vmatprep.subr.mxu0 0.0
    %659 = vmatpush1.msra.mxu0 0.0
    %660 = vmatprep.subr.mxu0 0.0
    %661 = vmatpush1.msra.mxu0 0.0
    %662 = vmatprep.subr.mxu0 0.0
    %663 = vmatpush1.msra.mxu0 0.0
    %664 = vmatprep.subr.mxu0 0.0
    %665 = vmatpush1.msra.mxu0 0.0
    %666 = vmatprep.subr.mxu0 0.0
    %667 = vmatpush1.msra.mxu0 0.0
    %668 = vmatprep.subr.mxu0 0.0
    %669 = vmatpush1.msra.mxu0 0.0
    %670 = vmatprep.subr.mxu0 0.0
    %671 = vmatpush1.msra.mxu0 0.0
    %672 = vmatprep.subr.mxu0 0.0
    %673 = vmatpush1.msra.mxu0 0.0
    %674 = vmatprep.subr.mxu0 0.0
    %675 = vmatpush1.msra.mxu0 0.0
    %676 = vmatprep.subr.mxu0 0.0
    %677 = vmatpush1.msra.mxu0 0.0
    %678 = vmatprep.subr.mxu0 0.0
    %679 = vmatpush1.msra.mxu0 0.0
    %680 = vmatprep.subr.mxu0 0.0
    %681 = vmatpush1.msra.mxu0 0.0
    %682 = vmatprep.subr.mxu0 0.0
    %683 = vmatpush1.msra.mxu0 0.0
    %684 = vmatprep.subr.mxu0 0.0
    %685 = vmatpush1.msra.mxu0 0.0
    %686 = vmatprep.subr.mxu0 0.0
    %687 = vmatpush1.msra.mxu0 0.0
    %688 = vmatprep.subr.mxu0 0.0
    %689 = vmatpush1.msra.mxu0 0.0
    %690 = vmatprep.subr.mxu0 0.0
    %691 = vmatpush1.msra.mxu0 0.0
    %692 = vmatprep.subr.mxu0 0.0
    %693 = vmatpush1.msra.mxu0 0.0
    %694 = vmatprep.subr.mxu0 0.0
    %695 = vmatpush1.msra.mxu0 0.0
    %696 = vmatprep.subr.mxu0 0.0
    %697 = vmatpush1.msra.mxu0 0.0
    %698 = vmatprep.subr.mxu0 0.0
    %699 = vmatpush1.msra.mxu0 0.0
    %700 = vmatprep.subr.mxu0 0.0
    %701 = vmatpush1.msra.mxu0 0.0
    %702 = vmatprep.subr.mxu0 0.0
    %703 = vmatpush1.msra.mxu0 0.0
    %704 = vmatprep.subr.mxu0 0.0
    %705 = vmatpush1.msra.mxu0 0.0
    %706 = vmatprep.mubr.f32.mxu0 0.0
    %707 = vmatmul.mubr.f32.gmra.mrb[0].mxu0 %v560
    %v708 = vpop.f32.mrb[0].mxu0
    %v709 = vadd.f32 %v632, %v708
    %v710 = vpop.f32.mrb[0].mxu0
    %v711 = vadd.f32 %v634, %v710
    %712 = vmatprep.mubr.f32.mxu0 0.0
    %713 = vmatmul.mubr.f32.gmra.mrb[0].mxu0 %v563
    %v714 = vpop.f32.mrb[0].mxu0
    %v715 = vadd.f32 %v638, %v714
    %v716 = vpop.f32.mrb[0].mxu0
    %v717 = vadd.f32 %v640, %v716
    %718 = vdwg.mxu0
    %719 = vmatprep.subr.mxu0 0.0
    %720 = vmatpush1.msra.mxu0 %v423
    %721 = vmatprep.subr.mxu0 0.0
    %722 = vmatpush1.msra.mxu0 %v426
    %723 = vmatprep.subr.mxu0 0.0
    %724 = vmatpush1.msra.mxu0 %v429
    %725 = vmatprep.subr.mxu0 0.0
    %726 = vmatpush1.msra.mxu0 %v432
    %727 = vmatprep.subr.mxu0 0.0
    %728 = vmatpush1.msra.mxu0 %v435
    %729 = vmatprep.subr.mxu0 0.0
    %730 = vmatpush1.msra.mxu0 %v438
    %731 = vmatprep.subr.mxu0 0.0
    %732 = vmatpush1.msra.mxu0 %v441
    %733 = vmatprep.subr.mxu0 0.0
    %734 = vmatpush1.msra.mxu0 %v444
    %735 = vmatprep.subr.mxu0 0.0
    %736 = vmatpush1.msra.mxu0 %v447
    %737 = vmatprep.subr.mxu0 0.0
    %738 = vmatpush1.msra.mxu0 %v450
    %739 = vmatprep.subr.mxu0 0.0
    %740 = vmatpush1.msra.mxu0 %v453
    %741 = vmatprep.subr.mxu0 0.0
    %742 = vmatpush1.msra.mxu0 %v456
    %743 = vmatprep.subr.mxu0 0.0
    %744 = vmatpush1.msra.mxu0 %v459
    %745 = vmatprep.subr.mxu0 0.0
    %746 = vmatpush1.msra.mxu0 %v462
    %747 = vmatprep.subr.mxu0 0.0
    %748 = vmatpush1.msra.mxu0 %v465
    %749 = vmatprep.subr.mxu0 0.0
    %750 = vmatpush1.msra.mxu0 %v468
    %751 = vmatprep.subr.mxu0 0.0
    %752 = vmatpush1.msra.mxu0 %v471
    %753 = vmatprep.subr.mxu0 0.0
    %754 = vmatpush1.msra.mxu0 %v474
    %755 = vmatprep.subr.mxu0 0.0
    %756 = vmatpush1.msra.mxu0 %v477
    %757 = vmatprep.subr.mxu0 0.0
    %758 = vmatpush1.msra.mxu0 %v480
    %759 = vmatprep.subr.mxu0 0.0
    %760 = vmatpush1.msra.mxu0 %v483
    %761 = vmatprep.subr.mxu0 0.0
    %762 = vmatpush1.msra.mxu0 %v486
    %763 = vmatprep.subr.mxu0 0.0
    %764 = vmatpush1.msra.mxu0 %v489
    %765 = vmatprep.subr.mxu0 0.0
    %766 = vmatpush1.msra.mxu0 %v492
    %767 = vmatprep.subr.mxu0 0.0
    %768 = vmatpush1.msra.mxu0 %v495
    %769 = vmatprep.subr.mxu0 0.0
    %770 = vmatpush1.msra.mxu0 %v498
    %771 = vmatprep.subr.mxu0 0.0
    %772 = vmatpush1.msra.mxu0 %v501
    %773 = vmatprep.subr.mxu0 0.0
    %774 = vmatpush1.msra.mxu0 %v504
    %775 = vmatprep.subr.mxu0 0.0
    %776 = vmatpush1.msra.mxu0 %v507
    %777 = vmatprep.subr.mxu0 0.0
    %778 = vmatpush1.msra.mxu0 %v510
    %779 = vmatprep.subr.mxu0 0.0
    %780 = vmatpush1.msra.mxu0 %v513
    %781 = vmatprep.subr.mxu0 0.0
    %782 = vmatpush1.msra.mxu0 %v516
    %783 = vmatprep.mubr.f32.mxu0 %v338
    %784 = vmatmul.mubr.f32.gmra.mrb[0].mxu0 %v336
    %v785 = vpop.f32.mrb[0].mxu0
    %v786 = vadd.f32 %v554, %v785
    %v787 = vpop.f32.mrb[0].mxu0
    %788 = vmatprep.mubr.f32.mxu0 %v344
    %789 = vmatmul.mubr.f32.gmra.mrb[0].mxu0 %v342
    %v790 = vpop.f32.mrb[0].mxu0
    %v791 = vadd.f32 %v554, %v790
    %v792 = vpop.f32.mrb[0].mxu0
    %793 = vdwg.mxu0
    %794 = vmatprep.subr.mxu0 0.0
    %795 = vmatpush1.msra.mxu0 %v519
    %796 = vmatprep.subr.mxu0 0.0
    %797 = vmatpush1.msra.mxu0 %v522
    %798 = vmatprep.subr.mxu0 0.0
    %799 = vmatpush1.msra.mxu0 %v525
    %800 = vmatprep.subr.mxu0 0.0
    %801 = vmatpush1.msra.mxu0 %v528
    %802 = vmatprep.subr.mxu0 0.0
    %803 = vmatpush1.msra.mxu0 %v531
    %804 = vmatprep.subr.mxu0 0.0
    %805 = vmatpush1.msra.mxu0 %v534
    %806 = vmatprep.subr.mxu0 0.0
    %807 = vmatpush1.msra.mxu0 %v537
    %808 = vmatprep.subr.mxu0 0.0
    %809 = vmatpush1.msra.mxu0 %v540
    %810 = vmatprep.subr.mxu0 0.0
    %811 = vmatpush1.msra.mxu0 0.0
    %812 = vmatprep.subr.mxu0 0.0
    %813 = vmatpush1.msra.mxu0 0.0
    %814 = vmatprep.subr.mxu0 0.0
    %815 = vmatpush1.msra.mxu0 0.0
    %816 = vmatprep.subr.mxu0 0.0
    %817 = vmatpush1.msra.mxu0 0.0
    %818 = vmatprep.subr.mxu0 0.0
    %819 = vmatpush1.msra.mxu0 0.0
    %820 = vmatprep.subr.mxu0 0.0
    %821 = vmatpush1.msra.mxu0 0.0
    %822 = vmatprep.subr.mxu0 0.0
    %823 = vmatpush1.msra.mxu0 0.0
    %824 = vmatprep.subr.mxu0 0.0
    %825 = vmatpush1.msra.mxu0 0.0
    %826 = vmatprep.subr.mxu0 0.0
    %827 = vmatpush1.msra.mxu0 0.0
    %828 = vmatprep.subr.mxu0 0.0
    %829 = vmatpush1.msra.mxu0 0.0
    %830 = vmatprep.subr.mxu0 0.0
    %831 = vmatpush1.msra.mxu0 0.0
    %832 = vmatprep.subr.mxu0 0.0
    %833 = vmatpush1.msra.mxu0 0.0
    %834 = vmatprep.subr.mxu0 0.0
    %835 = vmatpush1.msra.mxu0 0.0
    %836 = vmatprep.subr.mxu0 0.0
    %837 = vmatpush1.msra.mxu0 0.0
    %838 = vmatprep.subr.mxu0 0.0
    %839 = vmatpush1.msra.mxu0 0.0
    %840 = vmatprep.subr.mxu0 0.0
    %841 = vmatpush1.msra.mxu0 0.0
    %842 = vmatprep.subr.mxu0 0.0
    %843 = vmatpush1.msra.mxu0 0.0
    %844 = vmatprep.subr.mxu0 0.0
    %845 = vmatpush1.msra.mxu0 0.0
    %846 = vmatprep.subr.mxu0 0.0
    %847 = vmatpush1.msra.mxu0 0.0
    %848 = vmatprep.subr.mxu0 0.0
    %849 = vmatpush1.msra.mxu0 0.0
    %850 = vmatprep.subr.mxu0 0.0
    %851 = vmatpush1.msra.mxu0 0.0
    %852 = vmatprep.subr.mxu0 0.0
    %853 = vmatpush1.msra.mxu0 0.0
    %854 = vmatprep.subr.mxu0 0.0
    %855 = vmatpush1.msra.mxu0 0.0
    %856 = vmatprep.subr.mxu0 0.0
    %857 = vmatpush1.msra.mxu0 0.0
    %858 = vmatprep.mubr.f32.mxu0 0.0
    %859 = vmatmul.mubr.f32.gmra.mrb[0].mxu0 %v560
    %v860 = vpop.f32.mrb[0].mxu0
    %v861 = vadd.f32 %v786, %v860
    %v862 = vpop.f32.mrb[0].mxu0
    %863 = vmatprep.mubr.f32.mxu0 0.0
    %864 = vmatmul.mubr.f32.gmra.mrb[0].mxu0 %v563
    %v865 = vpop.f32.mrb[0].mxu0
    %v866 = vadd.f32 %v791, %v865
    %v867 = vpop.f32.mrb[0].mxu0
    %868 = vdwg.mxu0
    %v869 = vld [vmem:[%s5] sm:$0xff]
    %v870 = vld [vmem:[%s5 + $0x8] sm:$0xff]
    %v871 = vld [vmem:[%s5 + $0x10] sm:$0xff]
    %v872 = vld [vmem:[%s5 + $0x18] sm:$0xff]
    %v873 = vld [vmem:[%s5 + $0x20] sm:$0xff]
    %v874 = vld [vmem:[%s5 + $0x28] sm:$0xff]
    %v875 = vadd.f32 %v709, %v869
    %v876 = vadd.f32 %v711, %v870
    %v877 = vadd.f32 %v861, %v871
    %v878 = vadd.f32 %v715, %v872
    %v879 = vadd.f32 %v717, %v873
    %v880 = vadd.f32 %v866, %v874
    %881 = vst [vmem:[%s6] sm:$0xff] %v875
    %882 = vst [vmem:[%s6 + $0x8] sm:$0xff] %v876
    %883 = vst.msk [vmem:[%s6 + $0x10] sm:$0xff] %vm558, %v877
    %884 = vst [vmem:[%s6 + $0x18] sm:$0xff] %v878
    %885 = vst [vmem:[%s6 + $0x20] sm:$0xff] %v879
    %886 = vst.msk [vmem:[%s6 + $0x28] sm:$0xff] %vm558, %v880
    // Predicated region
    $region30: #{_lambda_.19} parent=1 // pred_check
      _
    $region31: #{_lambda_.19} parent=1 // pred_check_branch
      %888 = sbr.rel (0) target = $region33
    $region32: #{_lambda_.19} parent=1 // pred_region
      _
    $region33: #{_lambda_.19} parent=1 // pred_fallthru
      _
    // Predicated region
    $region34: #{_lambda_.19} parent=1 // pred_check
      _
    $region35: #{_lambda_.19} parent=1 // pred_check_branch
      %890 = sbr.rel (0) target = $region37
    $region36: #{_lambda_.19} parent=1 // pred_region
      _
    $region37: #{_lambda_.19} parent=1 // pred_fallthru
      _
    %891 = vsyncpa [#allocation3], 1

// kernel: _lambda_.20
$region0: #{_lambda_.20}
  #allocation0 [shape = 'u32[]', space=smem, size = 0x4, offset = 0x4, fixed_abs, tag = 'smem constant byte address 0x4 - core index']
  #allocation1 [shape = 'u32[144,128]{1,0:T(1,128)}', space=vmem, size = 0x12000, scoped, tag = 'internal scratch']
  %s0 = inlined_call_operand.hbm [shape: f32[16,16], index: 0, kind: input, shape index: {}]
  %s1 = inlined_call_operand.vmem [shape: f32[16,320], index: 1, kind: input, shape index: {}]
  %s2 = inlined_call_operand.vmem [shape: f32[16,320], index: 2, kind: input, shape index: {}]
  %s3 = inlined_call_operand.vmem [shape: f32[320,32], index: 3, kind: input, shape index: {}]
  %s4 = inlined_call_operand.vmem [shape: f32[320,32], index: 4, kind: input, shape index: {}]
  %s5 = inlined_call_operand.vmem [shape: f32[1,32], index: 5, kind: input, shape index: {}]
  %s6 = inlined_call_operand.vmem [shape: f32[16,32], index: 6, kind: output, shape index: {}]
  %s7 = sld [smem:[#allocation0]]
  $region38: #{_lambda_.20} parent=0
    _
  %s9 = ssub.s32 1, %s7
  %s10 = scalar_select 0, %s9, %s7
  $region1: #{_lambda_.20} parent=0
    #allocation2 [shape = 'u8[8192]{0}', space=vmem, size = 0x2000, scoped, tag = 'input window, operand 0, single buffered']
    #allocation3 [shape = 's32[1]{0}', space=sflag, size = 0x4, scoped, tag = 'scoped memory for _lambda_.20']
    %11 = vsyncpa [#allocation3], 0
    // Predicated region
    $region2: #{_lambda_.20} parent=1 // pred_check
      _
    $region3: #{_lambda_.20} parent=1 // pred_check_branch
      %13 = sbr.rel (0) target = $region5
    $region4: #{_lambda_.20} parent=1 // pred_region
      %s15 = ssub.s32 256, 256
      %16 = vsyncadd [#allocation3], %s15
      %s17 = sshll.u32 [#allocation2], 4
      %s18 = int_to_ptr.vmem [resolvable:$true] %s17
      %23 = dma.hbm_to_vmem [thread:$0]  %s0, 256, %s18, [#allocation3], 128, 128, 8
    $region5: #{_lambda_.20} parent=1 // pred_fallthru
      _
    // Predicated region
    $region6: #{_lambda_.20} parent=1 // pred_check
      _
    $region7: #{_lambda_.20} parent=1 // pred_check_branch
      %25 = sbr.rel (0) target = $region9
    $region8: #{_lambda_.20} parent=1 // pred_region
      _
    $region9: #{_lambda_.20} parent=1 // pred_fallthru
      _
    // Predicated region
    $region10: #{_lambda_.20} parent=1 // pred_check
      _
    $region11: #{_lambda_.20} parent=1 // pred_check_branch
      %27 = sbr.rel (0) target = $region13
    $region12: #{_lambda_.20} parent=1 // pred_region
      _
    $region13: #{_lambda_.20} parent=1 // pred_fallthru
      _
    // Predicated region
    $region14: #{_lambda_.20} parent=1 // pred_check
      _
    $region15: #{_lambda_.20} parent=1 // pred_check_branch
      %29 = sbr.rel (0) target = $region17
    $region16: #{_lambda_.20} parent=1 // pred_region
      _
    $region17: #{_lambda_.20} parent=1 // pred_fallthru
      _
    // Predicated region
    $region18: #{_lambda_.20} parent=1 // pred_check
      _
    $region19: #{_lambda_.20} parent=1 // pred_check_branch
      %31 = sbr.rel (0) target = $region21
    $region20: #{_lambda_.20} parent=1 // pred_region
      _
    $region21: #{_lambda_.20} parent=1 // pred_fallthru
      _
    // Predicated region
    $region22: #{_lambda_.20} parent=1 // pred_check
      _
    $region23: #{_lambda_.20} parent=1 // pred_check_branch
      %33 = sbr.rel (0) target = $region25
    $region24: #{_lambda_.20} parent=1 // pred_region
      _
    $region25: #{_lambda_.20} parent=1 // pred_fallthru
      _
    // Predicated region
    $region26: #{_lambda_.20} parent=1 // pred_check
      _
    $region27: #{_lambda_.20} parent=1 // pred_check_branch
      %35 = sbr.rel (0) target = $region29
    $region28: #{_lambda_.20} parent=1 // pred_region
      %36 = dma.done [#allocation3], 256
    $region29: #{_lambda_.20} parent=1 // pred_fallthru
      _
    %v37 = vld [vmem:[#allocation2] sm:$0xff]
    %v38 = vld [vmem:[#allocation2 + $0x8] sm:$0xff]
    %v39 = vld [vmem:[%s1] sm:$0xff]
    %v40 = vld [vmem:[%s1 + $0x8] sm:$0xff]
    %v41 = vld [vmem:[%s1 + $0x10] sm:$0xff]
    %v42 = vld [vmem:[%s1 + $0x18] sm:$0xff]
    %v43 = vld [vmem:[%s1 + $0x20] sm:$0xff]
    %v44 = vld [vmem:[%s1 + $0x28] sm:$0xff]
    %vm45 = vcmask 130048
    %v47 = vsel %vm45, %v37, 0
    %v50 = vsel %vm45, %v38, 0
    %52 = vmatprep.subr.mxu0 %v40
    %53 = vmatpush1.msra.mxu0 %v39
    %54 = vmatprep.subr.mxu0 %v43
    %55 = vmatpush1.msra.mxu0 %v42
    %56 = vmatprep.subr.mxu0 0.0
    %57 = vmatpush1.msra.mxu0 0.0
    %58 = vmatprep.subr.mxu0 0.0
    %59 = vmatpush1.msra.mxu0 0.0
    %60 = vmatprep.subr.mxu0 0.0
    %61 = vmatpush1.msra.mxu0 0.0
    %62 = vmatprep.subr.mxu0 0.0
    %63 = vmatpush1.msra.mxu0 0.0
    %64 = vmatprep.subr.mxu0 0.0
    %65 = vmatpush1.msra.mxu0 0.0
    %66 = vmatprep.subr.mxu0 0.0
    %67 = vmatpush1.msra.mxu0 0.0
    %68 = vmatprep.subr.mxu0 0.0
    %69 = vmatpush1.msra.mxu0 0.0
    %70 = vmatprep.subr.mxu0 0.0
    %71 = vmatpush1.msra.mxu0 0.0
    %72 = vmatprep.subr.mxu0 0.0
    %73 = vmatpush1.msra.mxu0 0.0
    %74 = vmatprep.subr.mxu0 0.0
    %75 = vmatpush1.msra.mxu0 0.0
    %76 = vmatprep.subr.mxu0 0.0
    %77 = vmatpush1.msra.mxu0 0.0
    %78 = vmatprep.subr.mxu0 0.0
    %79 = vmatpush1.msra.mxu0 0.0
    %80 = vmatprep.subr.mxu0 0.0
    %81 = vmatpush1.msra.mxu0 0.0
    %82 = vmatprep.subr.mxu0 0.0
    %83 = vmatpush1.msra.mxu0 0.0
    %84 = vmatprep.subr.mxu0 0.0
    %85 = vmatpush1.msra.mxu0 0.0
    %86 = vmatprep.subr.mxu0 0.0
    %87 = vmatpush1.msra.mxu0 0.0
    %88 = vmatprep.subr.mxu0 0.0
    %89 = vmatpush1.msra.mxu0 0.0
    %90 = vmatprep.subr.mxu0 0.0
    %91 = vmatpush1.msra.mxu0 0.0
    %92 = vmatprep.subr.mxu0 0.0
    %93 = vmatpush1.msra.mxu0 0.0
    %94 = vmatprep.subr.mxu0 0.0
    %95 = vmatpush1.msra.mxu0 0.0
    %96 = vmatprep.subr.mxu0 0.0
    %97 = vmatpush1.msra.mxu0 0.0
    %98 = vmatprep.subr.mxu0 0.0
    %99 = vmatpush1.msra.mxu0 0.0
    %100 = vmatprep.subr.mxu0 0.0
    %101 = vmatpush1.msra.mxu0 0.0
    %102 = vmatprep.subr.mxu0 0.0
    %103 = vmatpush1.msra.mxu0 0.0
    %104 = vmatprep.subr.mxu0 0.0
    %105 = vmatpush1.msra.mxu0 0.0
    %106 = vmatprep.subr.mxu0 0.0
    %107 = vmatpush1.msra.mxu0 0.0
    %108 = vmatprep.subr.mxu0 0.0
    %109 = vmatpush1.msra.mxu0 0.0
    %110 = vmatprep.subr.mxu0 0.0
    %111 = vmatpush1.msra.mxu0 0.0
    %112 = vmatprep.subr.mxu0 0.0
    %113 = vmatpush1.msra.mxu0 0.0
    %114 = vmatprep.subr.mxu0 0.0
    %115 = vmatpush1.msra.mxu0 0.0
    %116 = vmatprep.mubr.f32.mxu0 0.0
    %117 = vmatmul.mubr.f32.gmra.mrb[0].mxu0 %v47
    %v118 = vpop.f32.mrb[0].mxu0
    %v119 = vadd.f32 0.0, %v118
    %v120 = vpop.f32.mrb[0].mxu0
    %v121 = vadd.f32 0.0, %v120
    %122 = vmatprep.mubr.f32.mxu0 0.0
    %123 = vmatmul.mubr.f32.gmra.mrb[0].mxu0 %v50
    %v124 = vpop.f32.mrb[0].mxu0
    %v125 = vadd.f32 0.0, %v124
    %v126 = vpop.f32.mrb[0].mxu0
    %v127 = vadd.f32 0.0, %v126
    %128 = vdwg.mxu0
    %129 = vmatprep.subr.mxu0 0.0
    %130 = vmatpush1.msra.mxu0 %v41
    %131 = vmatprep.subr.mxu0 0.0
    %132 = vmatpush1.msra.mxu0 %v44
    %133 = vmatprep.subr.mxu0 0.0
    %134 = vmatpush1.msra.mxu0 0.0
    %135 = vmatprep.subr.mxu0 0.0
    %136 = vmatpush1.msra.mxu0 0.0
    %137 = vmatprep.subr.mxu0 0.0
    %138 = vmatpush1.msra.mxu0 0.0
    %139 = vmatprep.subr.mxu0 0.0
    %140 = vmatpush1.msra.mxu0 0.0
    %141 = vmatprep.subr.mxu0 0.0
    %142 = vmatpush1.msra.mxu0 0.0
    %143 = vmatprep.subr.mxu0 0.0
    %144 = vmatpush1.msra.mxu0 0.0
    %145 = vmatprep.subr.mxu0 0.0
    %146 = vmatpush1.msra.mxu0 0.0
    %147 = vmatprep.subr.mxu0 0.0
    %148 = vmatpush1.msra.mxu0 0.0
    %149 = vmatprep.subr.mxu0 0.0
    %150 = vmatpush1.msra.mxu0 0.0
    %151 = vmatprep.subr.mxu0 0.0
    %152 = vmatpush1.msra.mxu0 0.0
    %153 = vmatprep.subr.mxu0 0.0
    %154 = vmatpush1.msra.mxu0 0.0
    %155 = vmatprep.subr.mxu0 0.0
    %156 = vmatpush1.msra.mxu0 0.0
    %157 = vmatprep.subr.mxu0 0.0
    %158 = vmatpush1.msra.mxu0 0.0
    %159 = vmatprep.subr.mxu0 0.0
    %160 = vmatpush1.msra.mxu0 0.0
    %161 = vmatprep.subr.mxu0 0.0
    %162 = vmatpush1.msra.mxu0 0.0
    %163 = vmatprep.subr.mxu0 0.0
    %164 = vmatpush1.msra.mxu0 0.0
    %165 = vmatprep.subr.mxu0 0.0
    %166 = vmatpush1.msra.mxu0 0.0
    %167 = vmatprep.subr.mxu0 0.0
    %168 = vmatpush1.msra.mxu0 0.0
    %169 = vmatprep.subr.mxu0 0.0
    %170 = vmatpush1.msra.mxu0 0.0
    %171 = vmatprep.subr.mxu0 0.0
    %172 = vmatpush1.msra.mxu0 0.0
    %173 = vmatprep.subr.mxu0 0.0
    %174 = vmatpush1.msra.mxu0 0.0
    %175 = vmatprep.subr.mxu0 0.0
    %176 = vmatpush1.msra.mxu0 0.0
    %177 = vmatprep.subr.mxu0 0.0
    %178 = vmatpush1.msra.mxu0 0.0
    %179 = vmatprep.subr.mxu0 0.0
    %180 = vmatpush1.msra.mxu0 0.0
    %181 = vmatprep.subr.mxu0 0.0
    %182 = vmatpush1.msra.mxu0 0.0
    %183 = vmatprep.subr.mxu0 0.0
    %184 = vmatpush1.msra.mxu0 0.0
    %185 = vmatprep.subr.mxu0 0.0
    %186 = vmatpush1.msra.mxu0 0.0
    %187 = vmatprep.subr.mxu0 0.0
    %188 = vmatpush1.msra.mxu0 0.0
    %189 = vmatprep.subr.mxu0 0.0
    %190 = vmatpush1.msra.mxu0 0.0
    %191 = vmatprep.subr.mxu0 0.0
    %192 = vmatpush1.msra.mxu0 0.0
    %193 = vmatprep.mubr.f32.mxu0 0.0
    %194 = vmatmul.mubr.f32.gmra.mrb[0].mxu0 %v47
    %v195 = vpop.f32.mrb[0].mxu0
    %v196 = vadd.f32 0.0, %v195
    %v197 = vpop.f32.mrb[0].mxu0
    %198 = vmatprep.mubr.f32.mxu0 0.0
    %199 = vmatmul.mubr.f32.gmra.mrb[0].mxu0 %v50
    %v200 = vpop.f32.mrb[0].mxu0
    %v201 = vadd.f32 0.0, %v200
    %v202 = vpop.f32.mrb[0].mxu0
    %203 = vdwg.mxu0
    %v204 = vld [vmem:[%s2] sm:$0xff]
    %v205 = vld [vmem:[%s2 + $0x8] sm:$0xff]
    %v206 = vld [vmem:[%s2 + $0x10] sm:$0xff]
    %v207 = vld [vmem:[%s2 + $0x18] sm:$0xff]
    %v208 = vld [vmem:[%s2 + $0x20] sm:$0xff]
    %v209 = vld [vmem:[%s2 + $0x28] sm:$0xff]
    %210 = vmatprep.subr.mxu0 %v205
    %211 = vmatpush1.msra.mxu0 %v204
    %212 = vmatprep.subr.mxu0 %v208
    %213 = vmatpush1.msra.mxu0 %v207
    %214 = vmatprep.subr.mxu0 0.0
    %215 = vmatpush1.msra.mxu0 0.0
    %216 = vmatprep.subr.mxu0 0.0
    %217 = vmatpush1.msra.mxu0 0.0
    %218 = vmatprep.subr.mxu0 0.0
    %219 = vmatpush1.msra.mxu0 0.0
    %220 = vmatprep.subr.mxu0 0.0
    %221 = vmatpush1.msra.mxu0 0.0
    %222 = vmatprep.subr.mxu0 0.0
    %223 = vmatpush1.msra.mxu0 0.0
    %224 = vmatprep.subr.mxu0 0.0
    %225 = vmatpush1.msra.mxu0 0.0
    %226 = vmatprep.subr.mxu0 0.0
    %227 = vmatpush1.msra.mxu0 0.0
    %228 = vmatprep.subr.mxu0 0.0
    %229 = vmatpush1.msra.mxu0 0.0
    %230 = vmatprep.subr.mxu0 0.0
    %231 = vmatpush1.msra.mxu0 0.0
    %232 = vmatprep.subr.mxu0 0.0
    %233 = vmatpush1.msra.mxu0 0.0
    %234 = vmatprep.subr.mxu0 0.0
    %235 = vmatpush1.msra.mxu0 0.0
    %236 = vmatprep.subr.mxu0 0.0
    %237 = vmatpush1.msra.mxu0 0.0
    %238 = vmatprep.subr.mxu0 0.0
    %239 = vmatpush1.msra.mxu0 0.0
    %240 = vmatprep.subr.mxu0 0.0
    %241 = vmatpush1.msra.mxu0 0.0
    %242 = vmatprep.subr.mxu0 0.0
    %243 = vmatpush1.msra.mxu0 0.0
    %244 = vmatprep.subr.mxu0 0.0
    %245 = vmatpush1.msra.mxu0 0.0
    %246 = vmatprep.subr.mxu0 0.0
    %247 = vmatpush1.msra.mxu0 0.0
    %248 = vmatprep.subr.mxu0 0.0
    %249 = vmatpush1.msra.mxu0 0.0
    %250 = vmatprep.subr.mxu0 0.0
    %251 = vmatpush1.msra.mxu0 0.0
    %252 = vmatprep.subr.mxu0 0.0
    %253 = vmatpush1.msra.mxu0 0.0
    %254 = vmatprep.subr.mxu0 0.0
    %255 = vmatpush1.msra.mxu0 0.0
    %256 = vmatprep.subr.mxu0 0.0
    %257 = vmatpush1.msra.mxu0 0.0
    %258 = vmatprep.subr.mxu0 0.0
    %259 = vmatpush1.msra.mxu0 0.0
    %260 = vmatprep.subr.mxu0 0.0
    %261 = vmatpush1.msra.mxu0 0.0
    %262 = vmatprep.subr.mxu0 0.0
    %263 = vmatpush1.msra.mxu0 0.0
    %264 = vmatprep.subr.mxu0 0.0
    %265 = vmatpush1.msra.mxu0 0.0
    %266 = vmatprep.subr.mxu0 0.0
    %267 = vmatpush1.msra.mxu0 0.0
    %268 = vmatprep.subr.mxu0 0.0
    %269 = vmatpush1.msra.mxu0 0.0
    %270 = vmatprep.subr.mxu0 0.0
    %271 = vmatpush1.msra.mxu0 0.0
    %272 = vmatprep.subr.mxu0 0.0
    %273 = vmatpush1.msra.mxu0 0.0
    %274 = vmatprep.mubr.f32.mxu0 0.0
    %275 = vmatmul.mubr.f32.gmra.mrb[0].mxu0 %v47
    %v276 = vpop.f32.mrb[0].mxu0
    %v277 = vadd.f32 0.0, %v276
    %v278 = vpop.f32.mrb[0].mxu0
    %v279 = vadd.f32 0.0, %v278
    %280 = vmatprep.mubr.f32.mxu0 0.0
    %281 = vmatmul.mubr.f32.gmra.mrb[0].mxu0 %v50
    %v282 = vpop.f32.mrb[0].mxu0
    %v283 = vadd.f32 0.0, %v282
    %v284 = vpop.f32.mrb[0].mxu0
    %v285 = vadd.f32 0.0, %v284
    %286 = vdwg.mxu0
    %287 = vmatprep.subr.mxu0 0.0
    %288 = vmatpush1.msra.mxu0 %v206
    %289 = vmatprep.subr.mxu0 0.0
    %290 = vmatpush1.msra.mxu0 %v209
    %291 = vmatprep.subr.mxu0 0.0
    %292 = vmatpush1.msra.mxu0 0.0
    %293 = vmatprep.subr.mxu0 0.0
    %294 = vmatpush1.msra.mxu0 0.0
    %295 = vmatprep.subr.mxu0 0.0
    %296 = vmatpush1.msra.mxu0 0.0
    %297 = vmatprep.subr.mxu0 0.0
    %298 = vmatpush1.msra.mxu0 0.0
    %299 = vmatprep.subr.mxu0 0.0
    %300 = vmatpush1.msra.mxu0 0.0
    %301 = vmatprep.subr.mxu0 0.0
    %302 = vmatpush1.msra.mxu0 0.0
    %303 = vmatprep.subr.mxu0 0.0
    %304 = vmatpush1.msra.mxu0 0.0
    %305 = vmatprep.subr.mxu0 0.0
    %306 = vmatpush1.msra.mxu0 0.0
    %307 = vmatprep.subr.mxu0 0.0
    %308 = vmatpush1.msra.mxu0 0.0
    %309 = vmatprep.subr.mxu0 0.0
    %310 = vmatpush1.msra.mxu0 0.0
    %311 = vmatprep.subr.mxu0 0.0
    %312 = vmatpush1.msra.mxu0 0.0
    %313 = vmatprep.subr.mxu0 0.0
    %314 = vmatpush1.msra.mxu0 0.0
    %315 = vmatprep.subr.mxu0 0.0
    %316 = vmatpush1.msra.mxu0 0.0
    %317 = vmatprep.subr.mxu0 0.0
    %318 = vmatpush1.msra.mxu0 0.0
    %319 = vmatprep.subr.mxu0 0.0
    %320 = vmatpush1.msra.mxu0 0.0
    %321 = vmatprep.subr.mxu0 0.0
    %322 = vmatpush1.msra.mxu0 0.0
    %323 = vmatprep.subr.mxu0 0.0
    %324 = vmatpush1.msra.mxu0 0.0
    %325 = vmatprep.subr.mxu0 0.0
    %326 = vmatpush1.msra.mxu0 0.0
    %327 = vmatprep.subr.mxu0 0.0
    %328 = vmatpush1.msra.mxu0 0.0
    %329 = vmatprep.subr.mxu0 0.0
    %330 = vmatpush1.msra.mxu0 0.0
    %331 = vmatprep.subr.mxu0 0.0
    %332 = vmatpush1.msra.mxu0 0.0
    %333 = vmatprep.subr.mxu0 0.0
    %334 = vmatpush1.msra.mxu0 0.0
    %335 = vmatprep.subr.mxu0 0.0
    %336 = vmatpush1.msra.mxu0 0.0
    %337 = vmatprep.subr.mxu0 0.0
    %338 = vmatpush1.msra.mxu0 0.0
    %339 = vmatprep.subr.mxu0 0.0
    %340 = vmatpush1.msra.mxu0 0.0
    %341 = vmatprep.subr.mxu0 0.0
    %342 = vmatpush1.msra.mxu0 0.0
    %343 = vmatprep.subr.mxu0 0.0
    %344 = vmatpush1.msra.mxu0 0.0
    %345 = vmatprep.subr.mxu0 0.0
    %346 = vmatpush1.msra.mxu0 0.0
    %347 = vmatprep.subr.mxu0 0.0
    %348 = vmatpush1.msra.mxu0 0.0
    %349 = vmatprep.subr.mxu0 0.0
    %350 = vmatpush1.msra.mxu0 0.0
    %351 = vmatprep.mubr.f32.mxu0 0.0
    %352 = vmatmul.mubr.f32.gmra.mrb[0].mxu0 %v47
    %v353 = vpop.f32.mrb[0].mxu0
    %v354 = vadd.f32 0.0, %v353
    %v355 = vpop.f32.mrb[0].mxu0
    %356 = vmatprep.mubr.f32.mxu0 0.0
    %357 = vmatmul.mubr.f32.gmra.mrb[0].mxu0 %v50
    %v358 = vpop.f32.mrb[0].mxu0
    %v359 = vadd.f32 0.0, %v358
    %v360 = vpop.f32.mrb[0].mxu0
    %361 = vdwg.mxu0
    %v362 = vld [vmem:[%s3] sm:$0xff]
    %v363 = vld [vmem:[%s3 + $0x8] sm:$0xff]
    %v364 = vld [vmem:[%s3 + $0x10] sm:$0xff]
    %v365 = vld [vmem:[%s3 + $0x18] sm:$0xff]
    %v366 = vld [vmem:[%s3 + $0x20] sm:$0xff]
    %v367 = vld [vmem:[%s3 + $0x28] sm:$0xff]
    %v368 = vld [vmem:[%s3 + $0x30] sm:$0xff]
    %v369 = vld [vmem:[%s3 + $0x38] sm:$0xff]
    %v370 = vld [vmem:[%s3 + $0x40] sm:$0xff]
    %v371 = vld [vmem:[%s3 + $0x48] sm:$0xff]
    %v372 = vld [vmem:[%s3 + $0x50] sm:$0xff]
    %v373 = vld [vmem:[%s3 + $0x58] sm:$0xff]
    %v374 = vld [vmem:[%s3 + $0x60] sm:$0xff]
    %v375 = vld [vmem:[%s3 + $0x68] sm:$0xff]
    %v376 = vld [vmem:[%s3 + $0x70] sm:$0xff]
    %v377 = vld [vmem:[%s3 + $0x78] sm:$0xff]
    %v378 = vld [vmem:[%s3 + $0x80] sm:$0xff]
    %v379 = vld [vmem:[%s3 + $0x88] sm:$0xff]
    %v380 = vld [vmem:[%s3 + $0x90] sm:$0xff]
    %v381 = vld [vmem:[%s3 + $0x98] sm:$0xff]
    %v382 = vld [vmem:[%s3 + $0xa0] sm:$0xff]
    %v383 = vld [vmem:[%s3 + $0xa8] sm:$0xff]
    %v384 = vld [vmem:[%s3 + $0xb0] sm:$0xff]
    %v385 = vld [vmem:[%s3 + $0xb8] sm:$0xff]
    %v386 = vld [vmem:[%s3 + $0xc0] sm:$0xff]
    %v387 = vld [vmem:[%s3 + $0xc8] sm:$0xff]
    %v388 = vld [vmem:[%s3 + $0xd0] sm:$0xff]
    %v389 = vld [vmem:[%s3 + $0xd8] sm:$0xff]
    %v390 = vld [vmem:[%s3 + $0xe0] sm:$0xff]
    %v391 = vld [vmem:[%s3 + $0xe8] sm:$0xff]
    %v392 = vld [vmem:[%s3 + $0xf0] sm:$0xff]
    %v393 = vld [vmem:[%s3 + $0xf8] sm:$0xff]
    %v394 = vld [vmem:[%s3 + $0x100] sm:$0xff]
    %v395 = vld [vmem:[%s3 + $0x108] sm:$0xff]
    %v396 = vld [vmem:[%s3 + $0x110] sm:$0xff]
    %v397 = vld [vmem:[%s3 + $0x118] sm:$0xff]
    %v398 = vld [vmem:[%s3 + $0x120] sm:$0xff]
    %v399 = vld [vmem:[%s3 + $0x128] sm:$0xff]
    %v400 = vld [vmem:[%s3 + $0x130] sm:$0xff]
    %v401 = vld [vmem:[%s3 + $0x138] sm:$0xff]
    %v402 = vld [vmem:[%s4] sm:$0xff]
    %v403 = vld [vmem:[%s4 + $0x8] sm:$0xff]
    %v404 = vld [vmem:[%s4 + $0x10] sm:$0xff]
    %v405 = vld [vmem:[%s4 + $0x18] sm:$0xff]
    %v406 = vld [vmem:[%s4 + $0x20] sm:$0xff]
    %v407 = vld [vmem:[%s4 + $0x28] sm:$0xff]
    %v408 = vld [vmem:[%s4 + $0x30] sm:$0xff]
    %v409 = vld [vmem:[%s4 + $0x38] sm:$0xff]
    %v410 = vld [vmem:[%s4 + $0x40] sm:$0xff]
    %v411 = vld [vmem:[%s4 + $0x48] sm:$0xff]
    %v412 = vld [vmem:[%s4 + $0x50] sm:$0xff]
    %v413 = vld [vmem:[%s4 + $0x58] sm:$0xff]
    %v414 = vld [vmem:[%s4 + $0x60] sm:$0xff]
    %v415 = vld [vmem:[%s4 + $0x68] sm:$0xff]
    %v416 = vld [vmem:[%s4 + $0x70] sm:$0xff]
    %v417 = vld [vmem:[%s4 + $0x78] sm:$0xff]
    %v418 = vld [vmem:[%s4 + $0x80] sm:$0xff]
    %v419 = vld [vmem:[%s4 + $0x88] sm:$0xff]
    %v420 = vld [vmem:[%s4 + $0x90] sm:$0xff]
    %v421 = vld [vmem:[%s4 + $0x98] sm:$0xff]
    %v422 = vld [vmem:[%s4 + $0xa0] sm:$0xff]
    %v423 = vld [vmem:[%s4 + $0xa8] sm:$0xff]
    %v424 = vld [vmem:[%s4 + $0xb0] sm:$0xff]
    %v425 = vld [vmem:[%s4 + $0xb8] sm:$0xff]
    %v426 = vld [vmem:[%s4 + $0xc0] sm:$0xff]
    %v427 = vld [vmem:[%s4 + $0xc8] sm:$0xff]
    %v428 = vld [vmem:[%s4 + $0xd0] sm:$0xff]
    %v429 = vld [vmem:[%s4 + $0xd8] sm:$0xff]
    %v430 = vld [vmem:[%s4 + $0xe0] sm:$0xff]
    %v431 = vld [vmem:[%s4 + $0xe8] sm:$0xff]
    %v432 = vld [vmem:[%s4 + $0xf0] sm:$0xff]
    %v433 = vld [vmem:[%s4 + $0xf8] sm:$0xff]
    %v434 = vld [vmem:[%s4 + $0x100] sm:$0xff]
    %v435 = vld [vmem:[%s4 + $0x108] sm:$0xff]
    %v436 = vld [vmem:[%s4 + $0x110] sm:$0xff]
    %v437 = vld [vmem:[%s4 + $0x118] sm:$0xff]
    %v438 = vld [vmem:[%s4 + $0x120] sm:$0xff]
    %v439 = vld [vmem:[%s4 + $0x128] sm:$0xff]
    %v440 = vld [vmem:[%s4 + $0x130] sm:$0xff]
    %v441 = vld [vmem:[%s4 + $0x138] sm:$0xff]
    %vm442 = vcmask 523264
    %v444 = vsel %vm442, %v354, 0
    %v447 = vsel %vm442, %v359, 0
    %449 = vmatprep.subr.mxu0 0.0
    %450 = vmatpush1.msra.mxu0 %v402
    %451 = vmatprep.subr.mxu0 0.0
    %452 = vmatpush1.msra.mxu0 %v403
    %453 = vmatprep.subr.mxu0 0.0
    %454 = vmatpush1.msra.mxu0 %v404
    %455 = vmatprep.subr.mxu0 0.0
    %456 = vmatpush1.msra.mxu0 %v405
    %457 = vmatprep.subr.mxu0 0.0
    %458 = vmatpush1.msra.mxu0 %v406
    %459 = vmatprep.subr.mxu0 0.0
    %460 = vmatpush1.msra.mxu0 %v407
    %461 = vmatprep.subr.mxu0 0.0
    %462 = vmatpush1.msra.mxu0 %v408
    %463 = vmatprep.subr.mxu0 0.0
    %464 = vmatpush1.msra.mxu0 %v409
    %465 = vmatprep.subr.mxu0 0.0
    %466 = vmatpush1.msra.mxu0 %v410
    %467 = vmatprep.subr.mxu0 0.0
    %468 = vmatpush1.msra.mxu0 %v411
    %469 = vmatprep.subr.mxu0 0.0
    %470 = vmatpush1.msra.mxu0 %v412
    %471 = vmatprep.subr.mxu0 0.0
    %472 = vmatpush1.msra.mxu0 %v413
    %473 = vmatprep.subr.mxu0 0.0
    %474 = vmatpush1.msra.mxu0 %v414
    %475 = vmatprep.subr.mxu0 0.0
    %476 = vmatpush1.msra.mxu0 %v415
    %477 = vmatprep.subr.mxu0 0.0
    %478 = vmatpush1.msra.mxu0 %v416
    %479 = vmatprep.subr.mxu0 0.0
    %480 = vmatpush1.msra.mxu0 %v417
    %481 = vmatprep.subr.mxu0 0.0
    %482 = vmatpush1.msra.mxu0 %v418
    %483 = vmatprep.subr.mxu0 0.0
    %484 = vmatpush1.msra.mxu0 %v419
    %485 = vmatprep.subr.mxu0 0.0
    %486 = vmatpush1.msra.mxu0 %v420
    %487 = vmatprep.subr.mxu0 0.0
    %488 = vmatpush1.msra.mxu0 %v421
    %489 = vmatprep.subr.mxu0 0.0
    %490 = vmatpush1.msra.mxu0 %v422
    %491 = vmatprep.subr.mxu0 0.0
    %492 = vmatpush1.msra.mxu0 %v423
    %493 = vmatprep.subr.mxu0 0.0
    %494 = vmatpush1.msra.mxu0 %v424
    %495 = vmatprep.subr.mxu0 0.0
    %496 = vmatpush1.msra.mxu0 %v425
    %497 = vmatprep.subr.mxu0 0.0
    %498 = vmatpush1.msra.mxu0 %v426
    %499 = vmatprep.subr.mxu0 0.0
    %500 = vmatpush1.msra.mxu0 %v427
    %501 = vmatprep.subr.mxu0 0.0
    %502 = vmatpush1.msra.mxu0 %v428
    %503 = vmatprep.subr.mxu0 0.0
    %504 = vmatpush1.msra.mxu0 %v429
    %505 = vmatprep.subr.mxu0 0.0
    %506 = vmatpush1.msra.mxu0 %v430
    %507 = vmatprep.subr.mxu0 0.0
    %508 = vmatpush1.msra.mxu0 %v431
    %509 = vmatprep.subr.mxu0 0.0
    %510 = vmatpush1.msra.mxu0 %v432
    %511 = vmatprep.subr.mxu0 0.0
    %512 = vmatpush1.msra.mxu0 %v433
    %513 = vmatprep.mubr.f32.mxu0 %v279
    %514 = vmatmul.mubr.f32.gmra.mrb[0].mxu0 %v277
    %v515 = vpop.f32.mrb[0].mxu0
    %v516 = vadd.f32 0.0, %v515
    %v517 = vpop.f32.mrb[0].mxu0
    %518 = vmatprep.mubr.f32.mxu0 %v285
    %519 = vmatmul.mubr.f32.gmra.mrb[0].mxu0 %v283
    %v520 = vpop.f32.mrb[0].mxu0
    %v521 = vadd.f32 0.0, %v520
    %v522 = vpop.f32.mrb[0].mxu0
    %523 = vdwg.mxu0
    %524 = vmatprep.subr.mxu0 0.0
    %525 = vmatpush1.msra.mxu0 %v434
    %526 = vmatprep.subr.mxu0 0.0
    %527 = vmatpush1.msra.mxu0 %v435
    %528 = vmatprep.subr.mxu0 0.0
    %529 = vmatpush1.msra.mxu0 %v436
    %530 = vmatprep.subr.mxu0 0.0
    %531 = vmatpush1.msra.mxu0 %v437
    %532 = vmatprep.subr.mxu0 0.0
    %533 = vmatpush1.msra.mxu0 %v438
    %534 = vmatprep.subr.mxu0 0.0
    %535 = vmatpush1.msra.mxu0 %v439
    %536 = vmatprep.subr.mxu0 0.0
    %537 = vmatpush1.msra.mxu0 %v440
    %538 = vmatprep.subr.mxu0 0.0
    %539 = vmatpush1.msra.mxu0 %v441
    %540 = vmatprep.subr.mxu0 0.0
    %541 = vmatpush1.msra.mxu0 0.0
    %542 = vmatprep.subr.mxu0 0.0
    %543 = vmatpush1.msra.mxu0 0.0
    %544 = vmatprep.subr.mxu0 0.0
    %545 = vmatpush1.msra.mxu0 0.0
    %546 = vmatprep.subr.mxu0 0.0
    %547 = vmatpush1.msra.mxu0 0.0
    %548 = vmatprep.subr.mxu0 0.0
    %549 = vmatpush1.msra.mxu0 0.0
    %550 = vmatprep.subr.mxu0 0.0
    %551 = vmatpush1.msra.mxu0 0.0
    %552 = vmatprep.subr.mxu0 0.0
    %553 = vmatpush1.msra.mxu0 0.0
    %554 = vmatprep.subr.mxu0 0.0
    %555 = vmatpush1.msra.mxu0 0.0
    %556 = vmatprep.subr.mxu0 0.0
    %557 = vmatpush1.msra.mxu0 0.0
    %558 = vmatprep.subr.mxu0 0.0
    %559 = vmatpush1.msra.mxu0 0.0
    %560 = vmatprep.subr.mxu0 0.0
    %561 = vmatpush1.msra.mxu0 0.0
    %562 = vmatprep.subr.mxu0 0.0
    %563 = vmatpush1.msra.mxu0 0.0
    %564 = vmatprep.subr.mxu0 0.0
    %565 = vmatpush1.msra.mxu0 0.0
    %566 = vmatprep.subr.mxu0 0.0
    %567 = vmatpush1.msra.mxu0 0.0
    %568 = vmatprep.subr.mxu0 0.0
    %569 = vmatpush1.msra.mxu0 0.0
    %570 = vmatprep.subr.mxu0 0.0
    %571 = vmatpush1.msra.mxu0 0.0
    %572 = vmatprep.subr.mxu0 0.0
    %573 = vmatpush1.msra.mxu0 0.0
    %574 = vmatprep.subr.mxu0 0.0
    %575 = vmatpush1.msra.mxu0 0.0
    %576 = vmatprep.subr.mxu0 0.0
    %577 = vmatpush1.msra.mxu0 0.0
    %578 = vmatprep.subr.mxu0 0.0
    %579 = vmatpush1.msra.mxu0 0.0
    %580 = vmatprep.subr.mxu0 0.0
    %581 = vmatpush1.msra.mxu0 0.0
    %582 = vmatprep.subr.mxu0 0.0
    %583 = vmatpush1.msra.mxu0 0.0
    %584 = vmatprep.subr.mxu0 0.0
    %585 = vmatpush1.msra.mxu0 0.0
    %586 = vmatprep.subr.mxu0 0.0
    %587 = vmatpush1.msra.mxu0 0.0
    %588 = vmatprep.mubr.f32.mxu0 0.0
    %589 = vmatmul.mubr.f32.gmra.mrb[0].mxu0 %v444
    %v590 = vpop.f32.mrb[0].mxu0
    %v591 = vadd.f32 %v516, %v590
    %v592 = vpop.f32.mrb[0].mxu0
    %593 = vmatprep.mubr.f32.mxu0 0.0
    %594 = vmatmul.mubr.f32.gmra.mrb[0].mxu0 %v447
    %v595 = vpop.f32.mrb[0].mxu0
    %v596 = vadd.f32 %v521, %v595
    %v597 = vpop.f32.mrb[0].mxu0
    %598 = vdwg.mxu0
    %v600 = vsel %vm442, %v196, 0
    %v603 = vsel %vm442, %v201, 0
    %605 = vmatprep.subr.mxu0 0.0
    %606 = vmatpush1.msra.mxu0 %v362
    %607 = vmatprep.subr.mxu0 0.0
    %608 = vmatpush1.msra.mxu0 %v363
    %609 = vmatprep.subr.mxu0 0.0
    %610 = vmatpush1.msra.mxu0 %v364
    %611 = vmatprep.subr.mxu0 0.0
    %612 = vmatpush1.msra.mxu0 %v365
    %613 = vmatprep.subr.mxu0 0.0
    %614 = vmatpush1.msra.mxu0 %v366
    %615 = vmatprep.subr.mxu0 0.0
    %616 = vmatpush1.msra.mxu0 %v367
    %617 = vmatprep.subr.mxu0 0.0
    %618 = vmatpush1.msra.mxu0 %v368
    %619 = vmatprep.subr.mxu0 0.0
    %620 = vmatpush1.msra.mxu0 %v369
    %621 = vmatprep.subr.mxu0 0.0
    %622 = vmatpush1.msra.mxu0 %v370
    %623 = vmatprep.subr.mxu0 0.0
    %624 = vmatpush1.msra.mxu0 %v371
    %625 = vmatprep.subr.mxu0 0.0
    %626 = vmatpush1.msra.mxu0 %v372
    %627 = vmatprep.subr.mxu0 0.0
    %628 = vmatpush1.msra.mxu0 %v373
    %629 = vmatprep.subr.mxu0 0.0
    %630 = vmatpush1.msra.mxu0 %v374
    %631 = vmatprep.subr.mxu0 0.0
    %632 = vmatpush1.msra.mxu0 %v375
    %633 = vmatprep.subr.mxu0 0.0
    %634 = vmatpush1.msra.mxu0 %v376
    %635 = vmatprep.subr.mxu0 0.0
    %636 = vmatpush1.msra.mxu0 %v377
    %637 = vmatprep.subr.mxu0 0.0
    %638 = vmatpush1.msra.mxu0 %v378
    %639 = vmatprep.subr.mxu0 0.0
    %640 = vmatpush1.msra.mxu0 %v379
    %641 = vmatprep.subr.mxu0 0.0
    %642 = vmatpush1.msra.mxu0 %v380
    %643 = vmatprep.subr.mxu0 0.0
    %644 = vmatpush1.msra.mxu0 %v381
    %645 = vmatprep.subr.mxu0 0.0
    %646 = vmatpush1.msra.mxu0 %v382
    %647 = vmatprep.subr.mxu0 0.0
    %648 = vmatpush1.msra.mxu0 %v383
    %649 = vmatprep.subr.mxu0 0.0
    %650 = vmatpush1.msra.mxu0 %v384
    %651 = vmatprep.subr.mxu0 0.0
    %652 = vmatpush1.msra.mxu0 %v385
    %653 = vmatprep.subr.mxu0 0.0
    %654 = vmatpush1.msra.mxu0 %v386
    %655 = vmatprep.subr.mxu0 0.0
    %656 = vmatpush1.msra.mxu0 %v387
    %657 = vmatprep.subr.mxu0 0.0
    %658 = vmatpush1.msra.mxu0 %v388
    %659 = vmatprep.subr.mxu0 0.0
    %660 = vmatpush1.msra.mxu0 %v389
    %661 = vmatprep.subr.mxu0 0.0
    %662 = vmatpush1.msra.mxu0 %v390
    %663 = vmatprep.subr.mxu0 0.0
    %664 = vmatpush1.msra.mxu0 %v391
    %665 = vmatprep.subr.mxu0 0.0
    %666 = vmatpush1.msra.mxu0 %v392
    %667 = vmatprep.subr.mxu0 0.0
    %668 = vmatpush1.msra.mxu0 %v393
    %669 = vmatprep.mubr.f32.mxu0 %v121
    %670 = vmatmul.mubr.f32.gmra.mrb[0].mxu0 %v119
    %v671 = vpop.f32.mrb[0].mxu0
    %v672 = vadd.f32 %v591, %v671
    %v673 = vpop.f32.mrb[0].mxu0
    %674 = vmatprep.mubr.f32.mxu0 %v127
    %675 = vmatmul.mubr.f32.gmra.mrb[0].mxu0 %v125
    %v676 = vpop.f32.mrb[0].mxu0
    %v677 = vadd.f32 %v596, %v676
    %v678 = vpop.f32.mrb[0].mxu0
    %679 = vdwg.mxu0
    %680 = vmatprep.subr.mxu0 0.0
    %681 = vmatpush1.msra.mxu0 %v394
    %682 = vmatprep.subr.mxu0 0.0
    %683 = vmatpush1.msra.mxu0 %v395
    %684 = vmatprep.subr.mxu0 0.0
    %685 = vmatpush1.msra.mxu0 %v396
    %686 = vmatprep.subr.mxu0 0.0
    %687 = vmatpush1.msra.mxu0 %v397
    %688 = vmatprep.subr.mxu0 0.0
    %689 = vmatpush1.msra.mxu0 %v398
    %690 = vmatprep.subr.mxu0 0.0
    %691 = vmatpush1.msra.mxu0 %v399
    %692 = vmatprep.subr.mxu0 0.0
    %693 = vmatpush1.msra.mxu0 %v400
    %694 = vmatprep.subr.mxu0 0.0
    %695 = vmatpush1.msra.mxu0 %v401
    %696 = vmatprep.subr.mxu0 0.0
    %697 = vmatpush1.msra.mxu0 0.0
    %698 = vmatprep.subr.mxu0 0.0
    %699 = vmatpush1.msra.mxu0 0.0
    %700 = vmatprep.subr.mxu0 0.0
    %701 = vmatpush1.msra.mxu0 0.0
    %702 = vmatprep.subr.mxu0 0.0
    %703 = vmatpush1.msra.mxu0 0.0
    %704 = vmatprep.subr.mxu0 0.0
    %705 = vmatpush1.msra.mxu0 0.0
    %706 = vmatprep.subr.mxu0 0.0
    %707 = vmatpush1.msra.mxu0 0.0
    %708 = vmatprep.subr.mxu0 0.0
    %709 = vmatpush1.msra.mxu0 0.0
    %710 = vmatprep.subr.mxu0 0.0
    %711 = vmatpush1.msra.mxu0 0.0
    %712 = vmatprep.subr.mxu0 0.0
    %713 = vmatpush1.msra.mxu0 0.0
    %714 = vmatprep.subr.mxu0 0.0
    %715 = vmatpush1.msra.mxu0 0.0
    %716 = vmatprep.subr.mxu0 0.0
    %717 = vmatpush1.msra.mxu0 0.0
    %718 = vmatprep.subr.mxu0 0.0
    %719 = vmatpush1.msra.mxu0 0.0
    %720 = vmatprep.subr.mxu0 0.0
    %721 = vmatpush1.msra.mxu0 0.0
    %722 = vmatprep.subr.mxu0 0.0
    %723 = vmatpush1.msra.mxu0 0.0
    %724 = vmatprep.subr.mxu0 0.0
    %725 = vmatpush1.msra.mxu0 0.0
    %726 = vmatprep.subr.mxu0 0.0
    %727 = vmatpush1.msra.mxu0 0.0
    %728 = vmatprep.subr.mxu0 0.0
    %729 = vmatpush1.msra.mxu0 0.0
    %730 = vmatprep.subr.mxu0 0.0
    %731 = vmatpush1.msra.mxu0 0.0
    %732 = vmatprep.subr.mxu0 0.0
    %733 = vmatpush1.msra.mxu0 0.0
    %734 = vmatprep.subr.mxu0 0.0
    %735 = vmatpush1.msra.mxu0 0.0
    %736 = vmatprep.subr.mxu0 0.0
    %737 = vmatpush1.msra.mxu0 0.0
    %738 = vmatprep.subr.mxu0 0.0
    %739 = vmatpush1.msra.mxu0 0.0
    %740 = vmatprep.subr.mxu0 0.0
    %741 = vmatpush1.msra.mxu0 0.0
    %742 = vmatprep.subr.mxu0 0.0
    %743 = vmatpush1.msra.mxu0 0.0
    %744 = vmatprep.mubr.f32.mxu0 0.0
    %745 = vmatmul.mubr.f32.gmra.mrb[0].mxu0 %v600
    %v746 = vpop.f32.mrb[0].mxu0
    %v747 = vadd.f32 %v672, %v746
    %v748 = vpop.f32.mrb[0].mxu0
    %749 = vmatprep.mubr.f32.mxu0 0.0
    %750 = vmatmul.mubr.f32.gmra.mrb[0].mxu0 %v603
    %v751 = vpop.f32.mrb[0].mxu0
    %v752 = vadd.f32 %v677, %v751
    %v753 = vpop.f32.mrb[0].mxu0
    %754 = vdwg.mxu0
    %v755 = vld [vmem:[%s5] sm:$0x1]
    %v757 = vlaneseq
    %v758 = vshrl.u32 %v757, 7
    %v759 = vsub.s32 0, %v758
    %v760 = vrot.slane %v755, %v759
    %v762 = vadd.f32 %v747, %v760
    %v763 = vadd.f32 %v752, %v760
    %vm764 = vcmask 261120
    %765 = vst.msk [vmem:[%s6] sm:$0xff] %vm764, %v762
    %766 = vst.msk [vmem:[%s6 + $0x8] sm:$0xff] %vm764, %v763
    // Predicated region
    $region30: #{_lambda_.20} parent=1 // pred_check
      _
    $region31: #{_lambda_.20} parent=1 // pred_check_branch
      %768 = sbr.rel (0) target = $region33
    $region32: #{_lambda_.20} parent=1 // pred_region
      _
    $region33: #{_lambda_.20} parent=1 // pred_fallthru
      _
    // Predicated region
    $region34: #{_lambda_.20} parent=1 // pred_check
      _
    $region35: #{_lambda_.20} parent=1 // pred_check_branch
      %770 = sbr.rel (0) target = $region37
    $region36: #{_lambda_.20} parent=1 // pred_region
      _
    $region37: #{_lambda_.20} parent=1 // pred_fallthru
      _
    %771 = vsyncpa [#allocation3], 1

// kernel: _lambda_.21
$region0: #{_lambda_.21}
  #allocation0 [shape = 'u32[]', space=smem, size = 0x4, offset = 0x4, fixed_abs, tag = 'smem constant byte address 0x4 - core index']
  #allocation1 [shape = 'u32[144,128]{1,0:T(1,128)}', space=vmem, size = 0x12000, scoped, tag = 'internal scratch']
  %s0 = inlined_call_operand.vmem [shape: f32[32,16], index: 0, kind: input, shape index: {}]
  %s1 = inlined_call_operand.hbm [shape: f32[16,16], index: 1, kind: input, shape index: {}]
  %s2 = inlined_call_operand.vmem [shape: f32[16,32], index: 2, kind: input, shape index: {}]
  %s3 = inlined_call_operand.vmem [shape: f32[32,32], index: 3, kind: input, shape index: {}]
  %s4 = inlined_call_operand.vmem [shape: f32[32,32], index: 4, kind: input, shape index: {}]
  %s5 = inlined_call_operand.hbm [shape: f32[32,32], index: 5, kind: output, shape index: {0}]
  %s6 = inlined_call_operand.hbm [shape: f32[32,32], index: 6, kind: output, shape index: {1}]
  %7 = xla_tuple %s5, %s6
  %s8 = sld [smem:[#allocation0]]
  $region42: #{_lambda_.21} parent=0
    _
  %s10 = ssub.s32 1, %s8
  %s11 = scalar_select 0, %s10, %s8
  $region1: #{_lambda_.21} parent=0
    #allocation2 [shape = 'u8[8192]{0}', space=vmem, size = 0x2000, scoped, tag = 'input window, operand 1, single buffered']
    #allocation3 [shape = 's32[1]{0}', space=sflag, size = 0x4, scoped, tag = 'scoped memory for _lambda_.21']
    #allocation4 [shape = 's32[1]{0}', space=sflag, size = 0x4, scoped, tag = 'scoped memory for _lambda_.21']
    #allocation5 [shape = 'u8[16384]{0}', space=vmem, size = 0x4000, scoped, tag = 'output window, operand 0, single buffered']
    #allocation6 [shape = 'u8[16384]{0}', space=vmem, size = 0x4000, scoped, tag = 'output window, operand 1, single buffered']
    #allocation7 [shape = 's32[1]{0}', space=sflag, size = 0x4, scoped, tag = 'scoped memory for _lambda_.21']
    %12 = vsyncpa [#allocation3], 0
    %13 = vsyncpa [#allocation4], 0
    %14 = vsyncpa [#allocation7], 0
    // Predicated region
    $region2: #{_lambda_.21} parent=1 // pred_check
      _
    $region3: #{_lambda_.21} parent=1 // pred_check_branch
      %16 = sbr.rel (0) target = $region5
    $region4: #{_lambda_.21} parent=1 // pred_region
      _
    $region5: #{_lambda_.21} parent=1 // pred_fallthru
      _
    // Predicated region
    $region6: #{_lambda_.21} parent=1 // pred_check
      _
    $region7: #{_lambda_.21} parent=1 // pred_check_branch
      %18 = sbr.rel (0) target = $region9
    $region8: #{_lambda_.21} parent=1 // pred_region
      %s20 = ssub.s32 256, 256
      %21 = vsyncadd [#allocation3], %s20
      %s22 = sshll.u32 [#allocation2], 4
      %s23 = int_to_ptr.vmem [resolvable:$true] %s22
      %28 = dma.hbm_to_vmem [thread:$0]  %s1, 256, %s23, [#allocation3], 128, 128, 8
    $region9: #{_lambda_.21} parent=1 // pred_fallthru
      _
    // Predicated region
    $region10: #{_lambda_.21} parent=1 // pred_check
      _
    $region11: #{_lambda_.21} parent=1 // pred_check_branch
      %30 = sbr.rel (0) target = $region13
    $region12: #{_lambda_.21} parent=1 // pred_region
      _
    $region13: #{_lambda_.21} parent=1 // pred_fallthru
      _
    // Predicated region
    $region14: #{_lambda_.21} parent=1 // pred_check
      _
    $region15: #{_lambda_.21} parent=1 // pred_check_branch
      %32 = sbr.rel (0) target = $region17
    $region16: #{_lambda_.21} parent=1 // pred_region
      _
    $region17: #{_lambda_.21} parent=1 // pred_fallthru
      _
    // Predicated region
    $region18: #{_lambda_.21} parent=1 // pred_check
      _
    $region19: #{_lambda_.21} parent=1 // pred_check_branch
      %34 = sbr.rel (0) target = $region21
    $region20: #{_lambda_.21} parent=1 // pred_region
      _
    $region21: #{_lambda_.21} parent=1 // pred_fallthru
      _
    // Predicated region
    $region22: #{_lambda_.21} parent=1 // pred_check
      _
    $region23: #{_lambda_.21} parent=1 // pred_check_branch
      %36 = sbr.rel (0) target = $region25
    $region24: #{_lambda_.21} parent=1 // pred_region
      %37 = dma.done [#allocation3], 256
    $region25: #{_lambda_.21} parent=1 // pred_fallthru
      _
    %v38 = vld [vmem:[%s0] sm:$0xff]
    %v39 = vld [vmem:[%s0 + $0x8] sm:$0xff]
    %v40 = vld [vmem:[%s0 + $0x10] sm:$0xff]
    %v41 = vld [vmem:[%s0 + $0x18] sm:$0xff]
    %v42 = vld [vmem:[#allocation2] sm:$0xff]
    %v43 = vld [vmem:[#allocation2 + $0x8] sm:$0xff]
    %vm44 = vcmask 130048
    %v46 = vsel %vm44, %v38, 0
    %v49 = vsel %vm44, %v39, 0
    %v52 = vsel %vm44, %v40, 0
    %v55 = vsel %vm44, %v41, 0
    %v58 = vsel %vm44, %v42, 0
    %v61 = vsel %vm44, %v43, 0
    %63 = vmatprep.subr.mxu0 0.0
    %64 = vmatpush1.xpose.msra.mxu0 %v58
    %65 = vmatprep.subr.mxu0 0.0
    %66 = vmatpush1.xpose.msra.mxu0 %v61
    %67 = vmatprep.subr.mxu0 0.0
    %68 = vmatpush1.xpose.msra.mxu0 0.0
    %69 = vmatprep.subr.mxu0 0.0
    %70 = vmatpush1.xpose.msra.mxu0 0.0
    %71 = vmatprep.subr.mxu0 0.0
    %72 = vmatpush1.xpose.msra.mxu0 0.0
    %73 = vmatprep.subr.mxu0 0.0
    %74 = vmatpush1.xpose.msra.mxu0 0.0
    %75 = vmatprep.subr.mxu0 0.0
    %76 = vmatpush1.xpose.msra.mxu0 0.0
    %77 = vmatprep.subr.mxu0 0.0
    %78 = vmatpush1.xpose.msra.mxu0 0.0
    %79 = vmatprep.subr.mxu0 0.0
    %80 = vmatpush1.xpose.msra.mxu0 0.0
    %81 = vmatprep.subr.mxu0 0.0
    %82 = vmatpush1.xpose.msra.mxu0 0.0
    %83 = vmatprep.subr.mxu0 0.0
    %84 = vmatpush1.xpose.msra.mxu0 0.0
    %85 = vmatprep.subr.mxu0 0.0
    %86 = vmatpush1.xpose.msra.mxu0 0.0
    %87 = vmatprep.subr.mxu0 0.0
    %88 = vmatpush1.xpose.msra.mxu0 0.0
    %89 = vmatprep.subr.mxu0 0.0
    %90 = vmatpush1.xpose.msra.mxu0 0.0
    %91 = vmatprep.subr.mxu0 0.0
    %92 = vmatpush1.xpose.msra.mxu0 0.0
    %93 = vmatprep.subr.mxu0 0.0
    %94 = vmatpush1.xpose.msra.mxu0 0.0
    %95 = vmatprep.subr.mxu0 0.0
    %96 = vmatpush1.xpose.msra.mxu0 0.0
    %97 = vmatprep.subr.mxu0 0.0
    %98 = vmatpush1.xpose.msra.mxu0 0.0
    %99 = vmatprep.subr.mxu0 0.0
    %100 = vmatpush1.xpose.msra.mxu0 0.0
    %101 = vmatprep.subr.mxu0 0.0
    %102 = vmatpush1.xpose.msra.mxu0 0.0
    %103 = vmatprep.subr.mxu0 0.0
    %104 = vmatpush1.xpose.msra.mxu0 0.0
    %105 = vmatprep.subr.mxu0 0.0
    %106 = vmatpush1.xpose.msra.mxu0 0.0
    %107 = vmatprep.subr.mxu0 0.0
    %108 = vmatpush1.xpose.msra.mxu0 0.0
    %109 = vmatprep.subr.mxu0 0.0
    %110 = vmatpush1.xpose.msra.mxu0 0.0
    %111 = vmatprep.subr.mxu0 0.0
    %112 = vmatpush1.xpose.msra.mxu0 0.0
    %113 = vmatprep.subr.mxu0 0.0
    %114 = vmatpush1.xpose.msra.mxu0 0.0
    %115 = vmatprep.subr.mxu0 0.0
    %116 = vmatpush1.xpose.msra.mxu0 0.0
    %117 = vmatprep.subr.mxu0 0.0
    %118 = vmatpush1.xpose.msra.mxu0 0.0
    %119 = vmatprep.subr.mxu0 0.0
    %120 = vmatpush1.xpose.msra.mxu0 0.0
    %121 = vmatprep.subr.mxu0 0.0
    %122 = vmatpush1.xpose.msra.mxu0 0.0
    %123 = vmatprep.subr.mxu0 0.0
    %124 = vmatpush1.xpose.msra.mxu0 0.0
    %125 = vmatprep.subr.mxu0 0.0
    %126 = vmatpush1.xpose.msra.mxu0 0.0
    %127 = vmatprep.mubr.f32.mxu0 0.0
    %128 = vmatmul.mubr.f32.gmra.mrb[0].mxu0 %v46
    %v129 = vpop.f32.mrb[0].mxu0
    %v130 = vadd.f32 0.0, %v129
    %v131 = vpop.f32.mrb[0].mxu0
    %132 = vmatprep.mubr.f32.mxu0 0.0
    %133 = vmatmul.mubr.f32.gmra.mrb[0].mxu0 %v49
    %v134 = vpop.f32.mrb[0].mxu0
    %v135 = vadd.f32 0.0, %v134
    %v136 = vpop.f32.mrb[0].mxu0
    %137 = vmatprep.mubr.f32.mxu0 0.0
    %138 = vmatmul.mubr.f32.gmra.mrb[0].mxu0 %v52
    %v139 = vpop.f32.mrb[0].mxu0
    %v140 = vadd.f32 0.0, %v139
    %v141 = vpop.f32.mrb[0].mxu0
    %142 = vmatprep.mubr.f32.mxu0 0.0
    %143 = vmatmul.mubr.f32.gmra.mrb[0].mxu0 %v55
    %v144 = vpop.f32.mrb[0].mxu0
    %v145 = vadd.f32 0.0, %v144
    %v146 = vpop.f32.mrb[0].mxu0
    %147 = vdwg.mxu0
    %v148 = vld [vmem:[%s2] sm:$0xff]
    %v149 = vld [vmem:[%s2 + $0x8] sm:$0xff]
    %v151 = vsel %vm44, %v130, 0
    %v154 = vsel %vm44, %v135, 0
    %v157 = vsel %vm44, %v140, 0
    %v160 = vsel %vm44, %v145, 0
    %162 = vmatprep.subr.mxu0 0.0
    %163 = vmatpush1.msra.mxu0 %v148
    %164 = vmatprep.subr.mxu0 0.0
    %165 = vmatpush1.msra.mxu0 %v149
    %166 = vmatprep.subr.mxu0 0.0
    %167 = vmatpush1.msra.mxu0 0.0
    %168 = vmatprep.subr.mxu0 0.0
    %169 = vmatpush1.msra.mxu0 0.0
    %170 = vmatprep.subr.mxu0 0.0
    %171 = vmatpush1.msra.mxu0 0.0
    %172 = vmatprep.subr.mxu0 0.0
    %173 = vmatpush1.msra.mxu0 0.0
    %174 = vmatprep.subr.mxu0 0.0
    %175 = vmatpush1.msra.mxu0 0.0
    %176 = vmatprep.subr.mxu0 0.0
    %177 = vmatpush1.msra.mxu0 0.0
    %178 = vmatprep.subr.mxu0 0.0
    %179 = vmatpush1.msra.mxu0 0.0
    %180 = vmatprep.subr.mxu0 0.0
    %181 = vmatpush1.msra.mxu0 0.0
    %182 = vmatprep.subr.mxu0 0.0
    %183 = vmatpush1.msra.mxu0 0.0
    %184 = vmatprep.subr.mxu0 0.0
    %185 = vmatpush1.msra.mxu0 0.0
    %186 = vmatprep.subr.mxu0 0.0
    %187 = vmatpush1.msra.mxu0 0.0
    %188 = vmatprep.subr.mxu0 0.0
    %189 = vmatpush1.msra.mxu0 0.0
    %190 = vmatprep.subr.mxu0 0.0
    %191 = vmatpush1.msra.mxu0 0.0
    %192 = vmatprep.subr.mxu0 0.0
    %193 = vmatpush1.msra.mxu0 0.0
    %194 = vmatprep.subr.mxu0 0.0
    %195 = vmatpush1.msra.mxu0 0.0
    %196 = vmatprep.subr.mxu0 0.0
    %197 = vmatpush1.msra.mxu0 0.0
    %198 = vmatprep.subr.mxu0 0.0
    %199 = vmatpush1.msra.mxu0 0.0
    %200 = vmatprep.subr.mxu0 0.0
    %201 = vmatpush1.msra.mxu0 0.0
    %202 = vmatprep.subr.mxu0 0.0
    %203 = vmatpush1.msra.mxu0 0.0
    %204 = vmatprep.subr.mxu0 0.0
    %205 = vmatpush1.msra.mxu0 0.0
    %206 = vmatprep.subr.mxu0 0.0
    %207 = vmatpush1.msra.mxu0 0.0
    %208 = vmatprep.subr.mxu0 0.0
    %209 = vmatpush1.msra.mxu0 0.0
    %210 = vmatprep.subr.mxu0 0.0
    %211 = vmatpush1.msra.mxu0 0.0
    %212 = vmatprep.subr.mxu0 0.0
    %213 = vmatpush1.msra.mxu0 0.0
    %214 = vmatprep.subr.mxu0 0.0
    %215 = vmatpush1.msra.mxu0 0.0
    %216 = vmatprep.subr.mxu0 0.0
    %217 = vmatpush1.msra.mxu0 0.0
    %218 = vmatprep.subr.mxu0 0.0
    %219 = vmatpush1.msra.mxu0 0.0
    %220 = vmatprep.subr.mxu0 0.0
    %221 = vmatpush1.msra.mxu0 0.0
    %222 = vmatprep.subr.mxu0 0.0
    %223 = vmatpush1.msra.mxu0 0.0
    %224 = vmatprep.subr.mxu0 0.0
    %225 = vmatpush1.msra.mxu0 0.0
    %226 = vmatprep.mubr.f32.mxu0 0.0
    %227 = vmatmul.mubr.f32.gmra.mrb[0].mxu0 %v151
    %v228 = vpop.f32.mrb[0].mxu0
    %v229 = vadd.f32 0.0, %v228
    %v230 = vpop.f32.mrb[0].mxu0
    %231 = vmatprep.mubr.f32.mxu0 0.0
    %232 = vmatmul.mubr.f32.gmra.mrb[0].mxu0 %v154
    %v233 = vpop.f32.mrb[0].mxu0
    %v234 = vadd.f32 0.0, %v233
    %v235 = vpop.f32.mrb[0].mxu0
    %236 = vmatprep.mubr.f32.mxu0 0.0
    %237 = vmatmul.mubr.f32.gmra.mrb[0].mxu0 %v157
    %v238 = vpop.f32.mrb[0].mxu0
    %v239 = vadd.f32 0.0, %v238
    %v240 = vpop.f32.mrb[0].mxu0
    %241 = vmatprep.mubr.f32.mxu0 0.0
    %242 = vmatmul.mubr.f32.gmra.mrb[0].mxu0 %v160
    %v243 = vpop.f32.mrb[0].mxu0
    %v244 = vadd.f32 0.0, %v243
    %v245 = vpop.f32.mrb[0].mxu0
    %246 = vdwg.mxu0
    %v247 = vand.u32 2147483647, %v229
    %v248 = vand.u32 2147483647, %v234
    %v249 = vand.u32 2147483647, %v239
    %v250 = vand.u32 2147483647, %v244
    %v251 = vlaneseq
    %v252 = vshrl.u32 %v251, 7
    %v253 = vadd.s32 %v252, 8
    %v254 = vadd.s32 %v252, 16
    %v255 = vadd.s32 %v252, 24
    %v256 = vlaneseq
    %v257 = vand.u32 %v256, 127
    %vm258 = vcmp.eq.s32.totalorder %v252, %v257
    %vm259 = vcmp.eq.s32.totalorder %v253, %v257
    %vm260 = vcmp.eq.s32.totalorder %v254, %v257
    %vm261 = vcmp.eq.s32.totalorder %v255, %v257
    %v262 = vsel %vm258, 1.0, %v247
    %v263 = vsel %vm259, 1.0, %v248
    %v264 = vsel %vm260, 1.0, %v249
    %v265 = vsel %vm261, 1.0, %v250
    %vm266 = vcmask 261120
    %267 = vst.msk [vmem:[#allocation5] sm:$0xff] %vm266, %v262
    %268 = vst.msk [vmem:[#allocation5 + $0x8] sm:$0xff] %vm266, %v263
    %269 = vst.msk [vmem:[#allocation5 + $0x10] sm:$0xff] %vm266, %v264
    %270 = vst.msk [vmem:[#allocation5 + $0x18] sm:$0xff] %vm266, %v265
    %v272 = vsel %vm266, %v262, 0
    %v275 = vsel %vm266, %v263, 0
    %v278 = vsel %vm266, %v264, 0
    %v281 = vsel %vm266, %v265, 0
    %283 = vmatprep.subr.mxu0 0.0
    %284 = vmatpush1.xpose.msra.mxu0 %v272
    %285 = vmatprep.subr.mxu0 0.0
    %286 = vmatpush1.xpose.msra.mxu0 %v275
    %287 = vmatprep.subr.mxu0 0.0
    %288 = vmatpush1.xpose.msra.mxu0 %v278
    %289 = vmatprep.subr.mxu0 0.0
    %290 = vmatpush1.xpose.msra.mxu0 %v281
    %291 = vmatprep.subr.mxu0 0.0
    %292 = vmatpush1.xpose.msra.mxu0 0.0
    %293 = vmatprep.subr.mxu0 0.0
    %294 = vmatpush1.xpose.msra.mxu0 0.0
    %295 = vmatprep.subr.mxu0 0.0
    %296 = vmatpush1.xpose.msra.mxu0 0.0
    %297 = vmatprep.subr.mxu0 0.0
    %298 = vmatpush1.xpose.msra.mxu0 0.0
    %299 = vmatprep.subr.mxu0 0.0
    %300 = vmatpush1.xpose.msra.mxu0 0.0
    %301 = vmatprep.subr.mxu0 0.0
    %302 = vmatpush1.xpose.msra.mxu0 0.0
    %303 = vmatprep.subr.mxu0 0.0
    %304 = vmatpush1.xpose.msra.mxu0 0.0
    %305 = vmatprep.subr.mxu0 0.0
    %306 = vmatpush1.xpose.msra.mxu0 0.0
    %307 = vmatprep.subr.mxu0 0.0
    %308 = vmatpush1.xpose.msra.mxu0 0.0
    %309 = vmatprep.subr.mxu0 0.0
    %310 = vmatpush1.xpose.msra.mxu0 0.0
    %311 = vmatprep.subr.mxu0 0.0
    %312 = vmatpush1.xpose.msra.mxu0 0.0
    %313 = vmatprep.subr.mxu0 0.0
    %314 = vmatpush1.xpose.msra.mxu0 0.0
    %315 = vmatprep.subr.mxu0 0.0
    %316 = vmatpush1.xpose.msra.mxu0 0.0
    %317 = vmatprep.subr.mxu0 0.0
    %318 = vmatpush1.xpose.msra.mxu0 0.0
    %319 = vmatprep.subr.mxu0 0.0
    %320 = vmatpush1.xpose.msra.mxu0 0.0
    %321 = vmatprep.subr.mxu0 0.0
    %322 = vmatpush1.xpose.msra.mxu0 0.0
    %323 = vmatprep.subr.mxu0 0.0
    %324 = vmatpush1.xpose.msra.mxu0 0.0
    %325 = vmatprep.subr.mxu0 0.0
    %326 = vmatpush1.xpose.msra.mxu0 0.0
    %327 = vmatprep.subr.mxu0 0.0
    %328 = vmatpush1.xpose.msra.mxu0 0.0
    %329 = vmatprep.subr.mxu0 0.0
    %330 = vmatpush1.xpose.msra.mxu0 0.0
    %331 = vmatprep.subr.mxu0 0.0
    %332 = vmatpush1.xpose.msra.mxu0 0.0
    %333 = vmatprep.subr.mxu0 0.0
    %334 = vmatpush1.xpose.msra.mxu0 0.0
    %335 = vmatprep.subr.mxu0 0.0
    %336 = vmatpush1.xpose.msra.mxu0 0.0
    %337 = vmatprep.subr.mxu0 0.0
    %338 = vmatpush1.xpose.msra.mxu0 0.0
    %339 = vmatprep.subr.mxu0 0.0
    %340 = vmatpush1.xpose.msra.mxu0 0.0
    %341 = vmatprep.subr.mxu0 0.0
    %342 = vmatpush1.xpose.msra.mxu0 0.0
    %343 = vmatprep.subr.mxu0 0.0
    %344 = vmatpush1.xpose.msra.mxu0 0.0
    %345 = vmatprep.subr.mxu0 0.0
    %346 = vmatpush1.xpose.msra.mxu0 0.0
    %347 = vmatprep.mubr.f32.mxu0 0.0
    %348 = vmatmul.mubr.f32.gmra.mrb[0].mxu0 %v272
    %v349 = vpop.f32.mrb[0].mxu0
    %v350 = vadd.f32 0.0, %v349
    %v351 = vpop.f32.mrb[0].mxu0
    %352 = vmatprep.mubr.f32.mxu0 0.0
    %353 = vmatmul.mubr.f32.gmra.mrb[0].mxu0 %v275
    %v354 = vpop.f32.mrb[0].mxu0
    %v355 = vadd.f32 0.0, %v354
    %v356 = vpop.f32.mrb[0].mxu0
    %357 = vmatprep.mubr.f32.mxu0 0.0
    %358 = vmatmul.mubr.f32.gmra.mrb[0].mxu0 %v278
    %v359 = vpop.f32.mrb[0].mxu0
    %v360 = vadd.f32 0.0, %v359
    %v361 = vpop.f32.mrb[0].mxu0
    %362 = vmatprep.mubr.f32.mxu0 0.0
    %363 = vmatmul.mubr.f32.gmra.mrb[0].mxu0 %v281
    %v364 = vpop.f32.mrb[0].mxu0
    %v365 = vadd.f32 0.0, %v364
    %v366 = vpop.f32.mrb[0].mxu0
    %367 = vdwg.mxu0
    %v368 = vsel %vm258, 1.0, %v350
    %v369 = vsel %vm259, 1.0, %v355
    %v370 = vsel %vm260, 1.0, %v360
    %v371 = vsel %vm261, 1.0, %v365
    %v372 = vand.u32 2147483647, %v368
    %v373 = vand.u32 2147483647, %v369
    %v374 = vand.u32 2147483647, %v370
    %v375 = vand.u32 2147483647, %v371
    %v376 = vld [vmem:[%s3] sm:$0xff]
    %v377 = vld [vmem:[%s3 + $0x8] sm:$0xff]
    %v378 = vld [vmem:[%s3 + $0x10] sm:$0xff]
    %v379 = vld [vmem:[%s3 + $0x18] sm:$0xff]
    %v381 = vsel %vm266, %v372, 0
    %v384 = vsel %vm266, %v373, 0
    %v387 = vsel %vm266, %v374, 0
    %v390 = vsel %vm266, %v375, 0
    %392 = vmatprep.subr.mxu0 0.0
    %393 = vmatpush1.msra.mxu0 %v376
    %394 = vmatprep.subr.mxu0 0.0
    %395 = vmatpush1.msra.mxu0 %v377
    %396 = vmatprep.subr.mxu0 0.0
    %397 = vmatpush1.msra.mxu0 %v378
    %398 = vmatprep.subr.mxu0 0.0
    %399 = vmatpush1.msra.mxu0 %v379
    %400 = vmatprep.subr.mxu0 0.0
    %401 = vmatpush1.msra.mxu0 0.0
    %402 = vmatprep.subr.mxu0 0.0
    %403 = vmatpush1.msra.mxu0 0.0
    %404 = vmatprep.subr.mxu0 0.0
    %405 = vmatpush1.msra.mxu0 0.0
    %406 = vmatprep.subr.mxu0 0.0
    %407 = vmatpush1.msra.mxu0 0.0
    %408 = vmatprep.subr.mxu0 0.0
    %409 = vmatpush1.msra.mxu0 0.0
    %410 = vmatprep.subr.mxu0 0.0
    %411 = vmatpush1.msra.mxu0 0.0
    %412 = vmatprep.subr.mxu0 0.0
    %413 = vmatpush1.msra.mxu0 0.0
    %414 = vmatprep.subr.mxu0 0.0
    %415 = vmatpush1.msra.mxu0 0.0
    %416 = vmatprep.subr.mxu0 0.0
    %417 = vmatpush1.msra.mxu0 0.0
    %418 = vmatprep.subr.mxu0 0.0
    %419 = vmatpush1.msra.mxu0 0.0
    %420 = vmatprep.subr.mxu0 0.0
    %421 = vmatpush1.msra.mxu0 0.0
    %422 = vmatprep.subr.mxu0 0.0
    %423 = vmatpush1.msra.mxu0 0.0
    %424 = vmatprep.subr.mxu0 0.0
    %425 = vmatpush1.msra.mxu0 0.0
    %426 = vmatprep.subr.mxu0 0.0
    %427 = vmatpush1.msra.mxu0 0.0
    %428 = vmatprep.subr.mxu0 0.0
    %429 = vmatpush1.msra.mxu0 0.0
    %430 = vmatprep.subr.mxu0 0.0
    %431 = vmatpush1.msra.mxu0 0.0
    %432 = vmatprep.subr.mxu0 0.0
    %433 = vmatpush1.msra.mxu0 0.0
    %434 = vmatprep.subr.mxu0 0.0
    %435 = vmatpush1.msra.mxu0 0.0
    %436 = vmatprep.subr.mxu0 0.0
    %437 = vmatpush1.msra.mxu0 0.0
    %438 = vmatprep.subr.mxu0 0.0
    %439 = vmatpush1.msra.mxu0 0.0
    %440 = vmatprep.subr.mxu0 0.0
    %441 = vmatpush1.msra.mxu0 0.0
    %442 = vmatprep.subr.mxu0 0.0
    %443 = vmatpush1.msra.mxu0 0.0
    %444 = vmatprep.subr.mxu0 0.0
    %445 = vmatpush1.msra.mxu0 0.0
    %446 = vmatprep.subr.mxu0 0.0
    %447 = vmatpush1.msra.mxu0 0.0
    %448 = vmatprep.subr.mxu0 0.0
    %449 = vmatpush1.msra.mxu0 0.0
    %450 = vmatprep.subr.mxu0 0.0
    %451 = vmatpush1.msra.mxu0 0.0
    %452 = vmatprep.subr.mxu0 0.0
    %453 = vmatpush1.msra.mxu0 0.0
    %454 = vmatprep.subr.mxu0 0.0
    %455 = vmatpush1.msra.mxu0 0.0
    %456 = vmatprep.mubr.f32.mxu0 0.0
    %457 = vmatmul.mubr.f32.gmra.mrb[0].mxu0 %v381
    %v458 = vpop.f32.mrb[0].mxu0
    %v459 = vadd.f32 0.0, %v458
    %v460 = vpop.f32.mrb[0].mxu0
    %461 = vmatprep.mubr.f32.mxu0 0.0
    %462 = vmatmul.mubr.f32.gmra.mrb[0].mxu0 %v384
    %v463 = vpop.f32.mrb[0].mxu0
    %v464 = vadd.f32 0.0, %v463
    %v465 = vpop.f32.mrb[0].mxu0
    %466 = vmatprep.mubr.f32.mxu0 0.0
    %467 = vmatmul.mubr.f32.gmra.mrb[0].mxu0 %v387
    %v468 = vpop.f32.mrb[0].mxu0
    %v469 = vadd.f32 0.0, %v468
    %v470 = vpop.f32.mrb[0].mxu0
    %471 = vmatprep.mubr.f32.mxu0 0.0
    %472 = vmatmul.mubr.f32.gmra.mrb[0].mxu0 %v390
    %v473 = vpop.f32.mrb[0].mxu0
    %v474 = vadd.f32 0.0, %v473
    %v475 = vpop.f32.mrb[0].mxu0
    %476 = vdwg.mxu0
    %477 = vmatprep.subr.mxu0 0.0
    %478 = vmatpush1.msra.mxu0 %v459
    %479 = vmatprep.subr.mxu0 0.0
    %480 = vmatpush1.msra.mxu0 %v464
    %481 = vmatprep.subr.mxu0 0.0
    %482 = vmatpush1.msra.mxu0 %v469
    %483 = vmatprep.subr.mxu0 0.0
    %484 = vmatpush1.msra.mxu0 %v474
    %485 = vmatprep.subr.mxu0 0.0
    %486 = vmatpush1.msra.mxu0 0.0
    %487 = vmatprep.subr.mxu0 0.0
    %488 = vmatpush1.msra.mxu0 0.0
    %489 = vmatprep.subr.mxu0 0.0
    %490 = vmatpush1.msra.mxu0 0.0
    %491 = vmatprep.subr.mxu0 0.0
    %492 = vmatpush1.msra.mxu0 0.0
    %493 = vmatprep.subr.mxu0 0.0
    %494 = vmatpush1.msra.mxu0 0.0
    %495 = vmatprep.subr.mxu0 0.0
    %496 = vmatpush1.msra.mxu0 0.0
    %497 = vmatprep.subr.mxu0 0.0
    %498 = vmatpush1.msra.mxu0 0.0
    %499 = vmatprep.subr.mxu0 0.0
    %500 = vmatpush1.msra.mxu0 0.0
    %501 = vmatprep.subr.mxu0 0.0
    %502 = vmatpush1.msra.mxu0 0.0
    %503 = vmatprep.subr.mxu0 0.0
    %504 = vmatpush1.msra.mxu0 0.0
    %505 = vmatprep.subr.mxu0 0.0
    %506 = vmatpush1.msra.mxu0 0.0
    %507 = vmatprep.subr.mxu0 0.0
    %508 = vmatpush1.msra.mxu0 0.0
    %509 = vmatprep.subr.mxu0 0.0
    %510 = vmatpush1.msra.mxu0 0.0
    %511 = vmatprep.subr.mxu0 0.0
    %512 = vmatpush1.msra.mxu0 0.0
    %513 = vmatprep.subr.mxu0 0.0
    %514 = vmatpush1.msra.mxu0 0.0
    %515 = vmatprep.subr.mxu0 0.0
    %516 = vmatpush1.msra.mxu0 0.0
    %517 = vmatprep.subr.mxu0 0.0
    %518 = vmatpush1.msra.mxu0 0.0
    %519 = vmatprep.subr.mxu0 0.0
    %520 = vmatpush1.msra.mxu0 0.0
    %521 = vmatprep.subr.mxu0 0.0
    %522 = vmatpush1.msra.mxu0 0.0
    %523 = vmatprep.subr.mxu0 0.0
    %524 = vmatpush1.msra.mxu0 0.0
    %525 = vmatprep.subr.mxu0 0.0
    %526 = vmatpush1.msra.mxu0 0.0
    %527 = vmatprep.subr.mxu0 0.0
    %528 = vmatpush1.msra.mxu0 0.0
    %529 = vmatprep.subr.mxu0 0.0
    %530 = vmatpush1.msra.mxu0 0.0
    %531 = vmatprep.subr.mxu0 0.0
    %532 = vmatpush1.msra.mxu0 0.0
    %533 = vmatprep.subr.mxu0 0.0
    %534 = vmatpush1.msra.mxu0 0.0
    %535 = vmatprep.subr.mxu0 0.0
    %536 = vmatpush1.msra.mxu0 0.0
    %537 = vmatprep.subr.mxu0 0.0
    %538 = vmatpush1.msra.mxu0 0.0
    %539 = vmatprep.subr.mxu0 0.0
    %540 = vmatpush1.msra.mxu0 0.0
    %541 = vmatprep.mubr.f32.mxu0 0.0
    %542 = vmatmul.mubr.f32.gmra.mrb[0].mxu0 %v272
    %v543 = vpop.f32.mrb[0].mxu0
    %v544 = vadd.f32 0.0, %v543
    %v545 = vpop.f32.mrb[0].mxu0
    %546 = vmatprep.mubr.f32.mxu0 0.0
    %547 = vmatmul.mubr.f32.gmra.mrb[0].mxu0 %v275
    %v548 = vpop.f32.mrb[0].mxu0
    %v549 = vadd.f32 0.0, %v548
    %v550 = vpop.f32.mrb[0].mxu0
    %551 = vmatprep.mubr.f32.mxu0 0.0
    %552 = vmatmul.mubr.f32.gmra.mrb[0].mxu0 %v278
    %v553 = vpop.f32.mrb[0].mxu0
    %v554 = vadd.f32 0.0, %v553
    %v555 = vpop.f32.mrb[0].mxu0
    %556 = vmatprep.mubr.f32.mxu0 0.0
    %557 = vmatmul.mubr.f32.gmra.mrb[0].mxu0 %v281
    %v558 = vpop.f32.mrb[0].mxu0
    %v559 = vadd.f32 0.0, %v558
    %v560 = vpop.f32.mrb[0].mxu0
    %561 = vdwg.mxu0
    %v562 = vmax.f32 %v544, 0.0
    %v563 = vmax.f32 %v549, 0.0
    %v564 = vmax.f32 %v554, 0.0
    %v565 = vmax.f32 %v559, 0.0
    %v566 = vld [vmem:[%s4] sm:$0xff]
    %v567 = vld [vmem:[%s4 + $0x8] sm:$0xff]
    %v568 = vld [vmem:[%s4 + $0x10] sm:$0xff]
    %v569 = vld [vmem:[%s4 + $0x18] sm:$0xff]
    %v571 = vsel %vm266, %v562, 0
    %v574 = vsel %vm266, %v563, 0
    %v577 = vsel %vm266, %v564, 0
    %v580 = vsel %vm266, %v565, 0
    %582 = vmatprep.subr.mxu0 0.0
    %583 = vmatpush1.msra.mxu0 %v566
    %584 = vmatprep.subr.mxu0 0.0
    %585 = vmatpush1.msra.mxu0 %v567
    %586 = vmatprep.subr.mxu0 0.0
    %587 = vmatpush1.msra.mxu0 %v568
    %588 = vmatprep.subr.mxu0 0.0
    %589 = vmatpush1.msra.mxu0 %v569
    %590 = vmatprep.subr.mxu0 0.0
    %591 = vmatpush1.msra.mxu0 0.0
    %592 = vmatprep.subr.mxu0 0.0
    %593 = vmatpush1.msra.mxu0 0.0
    %594 = vmatprep.subr.mxu0 0.0
    %595 = vmatpush1.msra.mxu0 0.0
    %596 = vmatprep.subr.mxu0 0.0
    %597 = vmatpush1.msra.mxu0 0.0
    %598 = vmatprep.subr.mxu0 0.0
    %599 = vmatpush1.msra.mxu0 0.0
    %600 = vmatprep.subr.mxu0 0.0
    %601 = vmatpush1.msra.mxu0 0.0
    %602 = vmatprep.subr.mxu0 0.0
    %603 = vmatpush1.msra.mxu0 0.0
    %604 = vmatprep.subr.mxu0 0.0
    %605 = vmatpush1.msra.mxu0 0.0
    %606 = vmatprep.subr.mxu0 0.0
    %607 = vmatpush1.msra.mxu0 0.0
    %608 = vmatprep.subr.mxu0 0.0
    %609 = vmatpush1.msra.mxu0 0.0
    %610 = vmatprep.subr.mxu0 0.0
    %611 = vmatpush1.msra.mxu0 0.0
    %612 = vmatprep.subr.mxu0 0.0
    %613 = vmatpush1.msra.mxu0 0.0
    %614 = vmatprep.subr.mxu0 0.0
    %615 = vmatpush1.msra.mxu0 0.0
    %616 = vmatprep.subr.mxu0 0.0
    %617 = vmatpush1.msra.mxu0 0.0
    %618 = vmatprep.subr.mxu0 0.0
    %619 = vmatpush1.msra.mxu0 0.0
    %620 = vmatprep.subr.mxu0 0.0
    %621 = vmatpush1.msra.mxu0 0.0
    %622 = vmatprep.subr.mxu0 0.0
    %623 = vmatpush1.msra.mxu0 0.0
    %624 = vmatprep.subr.mxu0 0.0
    %625 = vmatpush1.msra.mxu0 0.0
    %626 = vmatprep.subr.mxu0 0.0
    %627 = vmatpush1.msra.mxu0 0.0
    %628 = vmatprep.subr.mxu0 0.0
    %629 = vmatpush1.msra.mxu0 0.0
    %630 = vmatprep.subr.mxu0 0.0
    %631 = vmatpush1.msra.mxu0 0.0
    %632 = vmatprep.subr.mxu0 0.0
    %633 = vmatpush1.msra.mxu0 0.0
    %634 = vmatprep.subr.mxu0 0.0
    %635 = vmatpush1.msra.mxu0 0.0
    %636 = vmatprep.subr.mxu0 0.0
    %637 = vmatpush1.msra.mxu0 0.0
    %638 = vmatprep.subr.mxu0 0.0
    %639 = vmatpush1.msra.mxu0 0.0
    %640 = vmatprep.subr.mxu0 0.0
    %641 = vmatpush1.msra.mxu0 0.0
    %642 = vmatprep.subr.mxu0 0.0
    %643 = vmatpush1.msra.mxu0 0.0
    %644 = vmatprep.subr.mxu0 0.0
    %645 = vmatpush1.msra.mxu0 0.0
    %646 = vmatprep.mubr.f32.mxu0 0.0
    %647 = vmatmul.mubr.f32.gmra.mrb[0].mxu0 %v571
    %v648 = vpop.f32.mrb[0].mxu0
    %v649 = vadd.f32 0.0, %v648
    %v650 = vpop.f32.mrb[0].mxu0
    %651 = vmatprep.mubr.f32.mxu0 0.0
    %652 = vmatmul.mubr.f32.gmra.mrb[0].mxu0 %v574
    %v653 = vpop.f32.mrb[0].mxu0
    %v654 = vadd.f32 0.0, %v653
    %v655 = vpop.f32.mrb[0].mxu0
    %656 = vmatprep.mubr.f32.mxu0 0.0
    %657 = vmatmul.mubr.f32.gmra.mrb[0].mxu0 %v577
    %v658 = vpop.f32.mrb[0].mxu0
    %v659 = vadd.f32 0.0, %v658
    %v660 = vpop.f32.mrb[0].mxu0
    %661 = vmatprep.mubr.f32.mxu0 0.0
    %662 = vmatmul.mubr.f32.gmra.mrb[0].mxu0 %v580
    %v663 = vpop.f32.mrb[0].mxu0
    %v664 = vadd.f32 0.0, %v663
    %v665 = vpop.f32.mrb[0].mxu0
    %666 = vdwg.mxu0
    %667 = vmatprep.subr.mxu0 0.0
    %668 = vmatpush1.msra.mxu0 %v649
    %669 = vmatprep.subr.mxu0 0.0
    %670 = vmatpush1.msra.mxu0 %v654
    %671 = vmatprep.subr.mxu0 0.0
    %672 = vmatpush1.msra.mxu0 %v659
    %673 = vmatprep.subr.mxu0 0.0
    %674 = vmatpush1.msra.mxu0 %v664
    %675 = vmatprep.subr.mxu0 0.0
    %676 = vmatpush1.msra.mxu0 0.0
    %677 = vmatprep.subr.mxu0 0.0
    %678 = vmatpush1.msra.mxu0 0.0
    %679 = vmatprep.subr.mxu0 0.0
    %680 = vmatpush1.msra.mxu0 0.0
    %681 = vmatprep.subr.mxu0 0.0
    %682 = vmatpush1.msra.mxu0 0.0
    %683 = vmatprep.subr.mxu0 0.0
    %684 = vmatpush1.msra.mxu0 0.0
    %685 = vmatprep.subr.mxu0 0.0
    %686 = vmatpush1.msra.mxu0 0.0
    %687 = vmatprep.subr.mxu0 0.0
    %688 = vmatpush1.msra.mxu0 0.0
    %689 = vmatprep.subr.mxu0 0.0
    %690 = vmatpush1.msra.mxu0 0.0
    %691 = vmatprep.subr.mxu0 0.0
    %692 = vmatpush1.msra.mxu0 0.0
    %693 = vmatprep.subr.mxu0 0.0
    %694 = vmatpush1.msra.mxu0 0.0
    %695 = vmatprep.subr.mxu0 0.0
    %696 = vmatpush1.msra.mxu0 0.0
    %697 = vmatprep.subr.mxu0 0.0
    %698 = vmatpush1.msra.mxu0 0.0
    %699 = vmatprep.subr.mxu0 0.0
    %700 = vmatpush1.msra.mxu0 0.0
    %701 = vmatprep.subr.mxu0 0.0
    %702 = vmatpush1.msra.mxu0 0.0
    %703 = vmatprep.subr.mxu0 0.0
    %704 = vmatpush1.msra.mxu0 0.0
    %705 = vmatprep.subr.mxu0 0.0
    %706 = vmatpush1.msra.mxu0 0.0
    %707 = vmatprep.subr.mxu0 0.0
    %708 = vmatpush1.msra.mxu0 0.0
    %709 = vmatprep.subr.mxu0 0.0
    %710 = vmatpush1.msra.mxu0 0.0
    %711 = vmatprep.subr.mxu0 0.0
    %712 = vmatpush1.msra.mxu0 0.0
    %713 = vmatprep.subr.mxu0 0.0
    %714 = vmatpush1.msra.mxu0 0.0
    %715 = vmatprep.subr.mxu0 0.0
    %716 = vmatpush1.msra.mxu0 0.0
    %717 = vmatprep.subr.mxu0 0.0
    %718 = vmatpush1.msra.mxu0 0.0
    %719 = vmatprep.subr.mxu0 0.0
    %720 = vmatpush1.msra.mxu0 0.0
    %721 = vmatprep.subr.mxu0 0.0
    %722 = vmatpush1.msra.mxu0 0.0
    %723 = vmatprep.subr.mxu0 0.0
    %724 = vmatpush1.msra.mxu0 0.0
    %725 = vmatprep.subr.mxu0 0.0
    %726 = vmatpush1.msra.mxu0 0.0
    %727 = vmatprep.subr.mxu0 0.0
    %728 = vmatpush1.msra.mxu0 0.0
    %729 = vmatprep.subr.mxu0 0.0
    %730 = vmatpush1.msra.mxu0 0.0
    %731 = vmatprep.mubr.f32.mxu0 0.0
    %732 = vmatmul.mubr.f32.gmra.mrb[0].mxu0 %v272
    %v733 = vpop.f32.mrb[0].mxu0
    %v734 = vadd.f32 0.0, %v733
    %v735 = vpop.f32.mrb[0].mxu0
    %736 = vmatprep.mubr.f32.mxu0 0.0
    %737 = vmatmul.mubr.f32.gmra.mrb[0].mxu0 %v275
    %v738 = vpop.f32.mrb[0].mxu0
    %v739 = vadd.f32 0.0, %v738
    %v740 = vpop.f32.mrb[0].mxu0
    %741 = vmatprep.mubr.f32.mxu0 0.0
    %742 = vmatmul.mubr.f32.gmra.mrb[0].mxu0 %v278
    %v743 = vpop.f32.mrb[0].mxu0
    %v744 = vadd.f32 0.0, %v743
    %v745 = vpop.f32.mrb[0].mxu0
    %746 = vmatprep.mubr.f32.mxu0 0.0
    %747 = vmatmul.mubr.f32.gmra.mrb[0].mxu0 %v281
    %v748 = vpop.f32.mrb[0].mxu0
    %v749 = vadd.f32 0.0, %v748
    %v750 = vpop.f32.mrb[0].mxu0
    %751 = vdwg.mxu0
    %v752 = vmax.f32 %v734, 0.0
    %v753 = vmax.f32 %v739, 0.0
    %v754 = vmax.f32 %v744, 0.0
    %v755 = vmax.f32 %v749, 0.0
    %756 = vxpose.xlu0.b32.start [1/16] %v752, 128
    %757 = vxpose.xlu0.b32.cont [2/16] %v753, 128
    %758 = vxpose.xlu0.b32.cont [3/16] %v754, 128
    %759 = vxpose.xlu0.b32.cont [4/16] %v755, 128
    %760 = vxpose.xlu0.b32.cont [5/16] 0.0, 128
    %761 = vxpose.xlu0.b32.cont [6/16] 0.0, 128
    %762 = vxpose.xlu0.b32.cont [7/16] 0.0, 128
    %763 = vxpose.xlu0.b32.cont [8/16] 0.0, 128
    %764 = vxpose.xlu0.b32.cont [9/16] 0.0, 128
    %765 = vxpose.xlu0.b32.cont [10/16] 0.0, 128
    %766 = vxpose.xlu0.b32.cont [11/16] 0.0, 128
    %767 = vxpose.xlu0.b32.cont [12/16] 0.0, 128
    %768 = vxpose.xlu0.b32.cont [13/16] 0.0, 128
    %769 = vxpose.xlu0.b32.cont [14/16] 0.0, 128
    %770 = vxpose.xlu0.b32.cont [15/16] 0.0, 128
    %771 = vxpose.xlu0.b32.end [16/16] 0.0, 128
    %v772 = vpop.trf.xlu0
    %v773 = vpop.trf.xlu0
    %v774 = vpop.trf.xlu0
    %v775 = vpop.trf.xlu0
    %v776 = vpop.trf.xlu0
    %v777 = vpop.trf.xlu0
    %v778 = vpop.trf.xlu0
    %v779 = vpop.trf.xlu0
    %v780 = vpop.trf.xlu0
    %v781 = vpop.trf.xlu0
    %v782 = vpop.trf.xlu0
    %v783 = vpop.trf.xlu0
    %v784 = vpop.trf.xlu0
    %v785 = vpop.trf.xlu0
    %v786 = vpop.trf.xlu0
    %v787 = vpop.trf.xlu0
    %v788 = vadd.f32 %v752, %v772
    %v789 = vadd.f32 %v753, %v773
    %v790 = vadd.f32 %v754, %v774
    %v791 = vadd.f32 %v755, %v775
    %v792 = vmul.f32 %v788, 0.5
    %v793 = vmul.f32 %v789, 0.5
    %v794 = vmul.f32 %v790, 0.5
    %v795 = vmul.f32 %v791, 0.5
    %v796 = vsel %vm258, 1.0, %v792
    %v797 = vsel %vm259, 1.0, %v793
    %v798 = vsel %vm260, 1.0, %v794
    %v799 = vsel %vm261, 1.0, %v795
    %v800 = vand.u32 2147483647, %v796
    %v801 = vand.u32 2147483647, %v797
    %v802 = vand.u32 2147483647, %v798
    %v803 = vand.u32 2147483647, %v799
    %804 = vst.msk [vmem:[#allocation6] sm:$0xff] %vm266, %v800
    %805 = vst.msk [vmem:[#allocation6 + $0x8] sm:$0xff] %vm266, %v801
    %806 = vst.msk [vmem:[#allocation6 + $0x10] sm:$0xff] %vm266, %v802
    %807 = vst.msk [vmem:[#allocation6 + $0x18] sm:$0xff] %vm266, %v803
    // Predicated region
    $region26: #{_lambda_.21} parent=1 // pred_check
      _
    $region27: #{_lambda_.21} parent=1 // pred_check_branch
      %809 = sbr.rel (0) target = $region29
    $region28: #{_lambda_.21} parent=1 // pred_region
      %s811 = ssub.s32 512, 512
      %812 = vsyncadd [#allocation4], %s811
      %s813 = sshll.u32 [#allocation5], 4
      %s814 = int_to_ptr.vmem [resolvable:$true] %s813
      %819 = dma.vmem_to_hbm [thread:$0]  %s814, 512, %s5, [#allocation4], 128, 128, 8
    $region29: #{_lambda_.21} parent=1 // pred_fallthru
      _
    // Predicated region
    $region30: #{_lambda_.21} parent=1 // pred_check
      _
    $region31: #{_lambda_.21} parent=1 // pred_check_branch
      %821 = sbr.rel (0) target = $region33
    $region32: #{_lambda_.21} parent=1 // pred_region
      %s823 = ssub.s32 512, 512
      %824 = vsyncadd [#allocation7], %s823
      %s825 = sshll.u32 [#allocation6], 4
      %s826 = int_to_ptr.vmem [resolvable:$true] %s825
      %831 = dma.vmem_to_hbm [thread:$0]  %s826, 512, %s6, [#allocation7], 128, 128, 8
    $region33: #{_lambda_.21} parent=1 // pred_fallthru
      _
    // Predicated region
    $region34: #{_lambda_.21} parent=1 // pred_check
      _
    $region35: #{_lambda_.21} parent=1 // pred_check_branch
      %833 = sbr.rel (0) target = $region37
    $region36: #{_lambda_.21} parent=1 // pred_region
      %834 = dma.done [#allocation4], 512
    $region37: #{_lambda_.21} parent=1 // pred_fallthru
      _
    // Predicated region
    $region38: #{_lambda_.21} parent=1 // pred_check
      _
    $region39: #{_lambda_.21} parent=1 // pred_check_branch
      %836 = sbr.rel (0) target = $region41
    $region40: #{_lambda_.21} parent=1 // pred_region
      %837 = dma.done [#allocation7], 512
    $region41: #{_lambda_.21} parent=1 // pred_fallthru
      _
    %838 = vsyncpa [#allocation3], 1
    %839 = vsyncpa [#allocation4], 1
    %840 = vsyncpa [#allocation7], 1

</llo_original>
